<compile_context>
chip_gen: v5e
topology: v5e:2x2
jax: 0.10.0
libtpu: 0.0.40
codegen_flags: <defaults>
</compile_context>

<pallas_src>
import functools

import jax
import jax.numpy as jnp
from jax.experimental import pallas as pl
from jax.experimental.pallas import tpu as pltpu

PRIMITIVES = [
    "none", "max_pool_3x3", "avg_pool_3x3", "skip_connect",
    "sep_conv_3x3", "sep_conv_5x5", "dil_conv_3x3", "dil_conv_5x5",
]

_BN_EPS = 1e-5


def _newcell_fused_kernel(x_ref, w1_ref, w2_ref, o_ref, pad_ref, *, N, H, W, C, Co):
    """Fused NewCell forward: 2x [ReLU -> dw3x3 -> pw1x1 -> BN] in one invocation.

    x_ref  : (N, H, W, C)       NHWC input.
    w1_ref : (9, C, C)          block-1 folded taps  W_k = diag(dw1_k) @ pw1.
    w2_ref : (9, C, Co)         block-2 folded taps  W_k = diag(dw2_k) @ pw2.
    o_ref  : (N, Co, H*W)       lane-dense output (== NCHW with H,W merged).
    pad_ref: (N, H+2, W+2, C)   VMEM scratch holding the zero-padded ReLU'd activation.
    """
    NHW = N * H * W

    def folded_sepconv(w_ref):
        # Depthwise 3x3 folded into the 1x1: one MXU matmul per tap, f32 accumulator.
        xp = pad_ref[...]                                   # (N, H+2, W+2, C)
        acc = None
        for k in range(9):                                  # static unroll
            dy, dx = divmod(k, 3)
            win = xp[:, dy:dy + H, dx:dx + W, :].reshape(NHW, C)
            term = jnp.dot(win, w_ref[k], preferred_element_type=jnp.float32)
            acc = term if acc is None else acc + term
        return acc                                          # (NHW, cout) f32

    def batchnorm(y):
        # BatchNorm2d(affine=False), training mode: batch stats, biased variance.
        m = jnp.mean(y, axis=0, keepdims=True)
        v = jnp.mean((y - m) ** 2, axis=0, keepdims=True)
        return (y - m) * jax.lax.rsqrt(v + _BN_EPS)

    # ---- block 1: ReLU -> (dw folded into pw) -> BN  (C -> C) -------------------
    # relu(pad(x)) == pad(relu(x)) since relu(0) == 0; zero borders once, reuse below.
    pad_ref[...] = jnp.zeros_like(pad_ref)
    pad_ref[:, 1:H + 1, 1:W + 1, :] = jnp.maximum(x_ref[...], 0.0)
    y1 = batchnorm(folded_sepconv(w1_ref))                  # (NHW, C)

    # ---- block 2: ReLU -> (dw folded into pw) -> BN  (C -> Co) ------------------
    # Only the interior is overwritten; the zero border from block 1 is still valid.
    pad_ref[:, 1:H + 1, 1:W + 1, :] = jnp.maximum(y1, 0.0).reshape(N, H, W, C)
    y2 = batchnorm(folded_sepconv(w2_ref))                  # (NHW, Co)

    # Lane-dense store: (N, H*W, Co) -> (N, Co, H*W)  (H*W = 256 full lanes).
    o_ref[...] = jnp.transpose(y2.reshape(N, H * W, Co), (0, 2, 1))


class NewCellPallas:
    """NewCell with chosen_op selecting PRIMITIVES[chosen_op[1]] == 'sep_conv_3x3'."""

    def __init__(self, c_in, c_out, chosen_op, stride=1, *, key):
        assert stride == 1, "only stride=1 (the NewCell default) is implemented"
        self.primitive = PRIMITIVES[chosen_op[1]]
        assert self.primitive == "sep_conv_3x3"
        self.c_in, self.c_out = c_in, c_out
        k1, k2, k3, k4 = jax.random.split(key, 4)
        # Deterministic synthetic weights (PyTorch shapes: dw (C,1,3,3), pw (Co,C,1,1)),
        # stored pre-transposed for NHWC use.
        self.dw1 = jax.random.normal(k1, (3, 3, c_in), jnp.float32) * 0.2
        self.pw1 = jax.random.normal(k2, (c_in, c_in), jnp.float32) * 0.2
        self.dw2 = jax.random.normal(k3, (3, 3, c_in), jnp.float32) * 0.2
        self.pw2 = jax.random.normal(k4, (c_in, c_out), jnp.float32) * 0.2

    def __call__(self, x_nchw):
        N, C, H, W = x_nchw.shape
        assert C == self.c_in
        Co = self.c_out
        x = jnp.transpose(x_nchw, (0, 2, 3, 1))                        # NCHW -> NHWC
        # Fold depthwise taps into the pointwise weights: (9, C, Cout) per block.
        w1 = self.dw1.reshape(9, C)[:, :, None] * self.pw1[None, :, :]
        w2 = self.dw2.reshape(9, C)[:, :, None] * self.pw2[None, :, :]

        kern = functools.partial(_newcell_fused_kernel, N=N, H=H, W=W, C=C, Co=Co)
        out = pl.pallas_call(
            kern,
            out_shape=jax.ShapeDtypeStruct((N, Co, H * W), jnp.float32),
            # Whole (small) arrays as single VMEM blocks; gridless single invocation
            # so BN's whole-batch statistics stay correct (tiling would need 2-pass BN).
            in_specs=[pl.BlockSpec(memory_space=pltpu.MemorySpace.VMEM)] * 3,
            out_specs=pl.BlockSpec(memory_space=pltpu.MemorySpace.VMEM),
            scratch_shapes=[pltpu.VMEM((N, H + 2, W + 2, C), jnp.float32)],
        )(x, w1, w2)
        return out.reshape(N, Co, H, W)                                # already NCHW


# --- pure-JAX reference (for correctness check) ---------------------------------
def _ref_block(x_nhwc, dw, pw):
    x = jnp.maximum(x_nhwc, 0.0)
    C = x.shape[-1]
    dwk = dw.reshape(3, 3, 1, C)
    y = jax.lax.conv_general_dilated(
        x, dwk, window_strides=(1, 1), padding="SAME",
        dimension_numbers=("NHWC", "HWIO", "NHWC"), feature_group_count=C)
    y = jnp.einsum("nhwc,co->nhwo", y, pw)
    m = jnp.mean(y, axis=(0, 1, 2), keepdims=True)
    v = jnp.mean((y - m) ** 2, axis=(0, 1, 2), keepdims=True)
    return (y - m) * jax.lax.rsqrt(v + _BN_EPS)


def _ref_newcell(cell, x_nchw):
    x = jnp.transpose(x_nchw, (0, 2, 3, 1))
    y = _ref_block(x, cell.dw1, cell.pw1)
    y = _ref_block(y, cell.dw2, cell.pw2)
    return jnp.transpose(y, (0, 3, 1, 2))


if __name__ == "__main__":
    key = jax.random.PRNGKey(0)
    kx, kp = jax.random.split(key)

    N, C_IN, C_OUT, H, W = 2, 8, 16, 16, 16
    x = jax.random.normal(kx, (N, C_IN, H, W), jnp.float32)   # NCHW like PyTorch

    chosen_op = (0, 4)  # PRIMITIVES[4] == 'sep_conv_3x3'
    cell = NewCellPallas(C_IN, C_OUT, chosen_op, stride=1, key=kp)

    out = jax.block_until_ready(cell(x))
    assert out.shape == (N, C_OUT, H, W), out.shape

    ref = jax.block_until_ready(_ref_newcell(cell, x))
    if not jnp.allclose(out, ref, rtol=5e-4, atol=5e-4):
        err = float(jnp.max(jnp.abs(out - ref)))
        raise AssertionError(f"Pallas output does not match JAX reference (max abs err {err})")

    print("KERNEL_OK")
</pallas_src>

<mosaic_0001>
module attributes {stable_mosaic.version = 11 : i64} {
  func.func @_newcell_fused_kernel(%arg0: memref<2x16x16x8xf32, #tpu.memory_space<vmem>>, %arg1: memref<9x8x8xf32, #tpu.memory_space<vmem>>, %arg2: memref<9x8x16xf32, #tpu.memory_space<vmem>>, %arg3: memref<2x16x256xf32, #tpu.memory_space<vmem>>, %arg4: memref<2x18x18x8xf32, #tpu.memory_space<vmem>>) attributes {dimension_semantics = [], scalar_prefetch = 0 : i64, scratch_operands = 1 : i64, tpu.core_type = #tpu.core_type<tc>} {
    %cst = arith.constant 0.000000e+00 : f32
    %0 = vector.broadcast %cst : f32 to vector<2x18x18x8xf32>
    %c0 = arith.constant 0 : index
    %c0_0 = arith.constant 0 : index
    %c0_1 = arith.constant 0 : index
    %c0_2 = arith.constant 0 : index
    %1 = vector.load %arg4[%c0, %c0_0, %c0_1, %c0_2] : memref<2x18x18x8xf32, #tpu.memory_space<vmem>>, vector<2x18x18x8xf32>
    tpu.vector_store %arg4[%c0, %c0_0, %c0_1, %c0_2], %0 {strides = array<i32>} : memref<2x18x18x8xf32, #tpu.memory_space<vmem>>, vector<2x18x18x8xf32>,
    %c0_3 = arith.constant 0 : index
    %c0_4 = arith.constant 0 : index
    %c0_5 = arith.constant 0 : index
    %c0_6 = arith.constant 0 : index
    %2 = vector.load %arg0[%c0_3, %c0_4, %c0_5, %c0_6] : memref<2x16x16x8xf32, #tpu.memory_space<vmem>>, vector<2x16x16x8xf32>
    %cst_7 = arith.constant 0.000000e+00 : f32
    %3 = vector.broadcast %cst_7 : f32 to vector<2x16x16x8xf32>
    %4 = arith.maximumf %2, %3 : vector<2x16x16x8xf32>
    %c0_8 = arith.constant 0 : index
    %c1 = arith.constant 1 : index
    %c1_9 = arith.constant 1 : index
    %c0_10 = arith.constant 0 : index
    %5 = vector.load %arg4[%c0_8, %c1, %c1_9, %c0_10] : memref<2x18x18x8xf32, #tpu.memory_space<vmem>>, vector<2x16x16x8xf32>
    tpu.vector_store %arg4[%c0_8, %c1, %c1_9, %c0_10], %4 {strides = array<i32>} : memref<2x18x18x8xf32, #tpu.memory_space<vmem>>, vector<2x16x16x8xf32>,
    %c0_11 = arith.constant 0 : index
    %c0_12 = arith.constant 0 : index
    %c0_13 = arith.constant 0 : index
    %c0_14 = arith.constant 0 : index
    %6 = vector.load %arg4[%c0_11, %c0_12, %c0_13, %c0_14] : memref<2x18x18x8xf32, #tpu.memory_space<vmem>>, vector<2x18x18x8xf32>
    %7 = vector.extract_strided_slice %6 {offsets = [0, 0, 0, 0], sizes = [2, 16, 16, 8], strides = [1, 1, 1, 1]} : vector<2x18x18x8xf32> to vector<2x16x16x8xf32>
    %8 = vector.shape_cast %7 : vector<2x16x16x8xf32> to vector<512x8xf32>
    %c0_15 = arith.constant 0 : index
    %c0_16 = arith.constant 0 : index
    %c0_17 = arith.constant 0 : index
    %9 = vector.load %arg1[%c0_15, %c0_16, %c0_17] : memref<9x8x8xf32, #tpu.memory_space<vmem>>, vector<1x8x8xf32>
    %10 = vector.shape_cast %9 : vector<1x8x8xf32> to vector<8x8xf32>
    %cst_18 = arith.constant dense<0.000000e+00> : vector<512x8xf32>
    %11 = tpu.matmul %8, %10, %cst_18 {dimension_numbers = #tpu.dot_dimension_numbers<[1], [0], [0], [1], [0, 0, 1, 1], [], []>} : vector<512x8xf32>, vector<8x8xf32>, vector<512x8xf32> -> vector<512x8xf32>
    %12 = vector.extract_strided_slice %6 {offsets = [0, 0, 1, 0], sizes = [2, 16, 16, 8], strides = [1, 1, 1, 1]} : vector<2x18x18x8xf32> to vector<2x16x16x8xf32>
    %13 = vector.shape_cast %12 : vector<2x16x16x8xf32> to vector<512x8xf32>
    %c1_19 = arith.constant 1 : index
    %c0_20 = arith.constant 0 : index
    %c0_21 = arith.constant 0 : index
    %14 = vector.load %arg1[%c1_19, %c0_20, %c0_21] : memref<9x8x8xf32, #tpu.memory_space<vmem>>, vector<1x8x8xf32>
    %15 = vector.shape_cast %14 : vector<1x8x8xf32> to vector<8x8xf32>
    %cst_22 = arith.constant dense<0.000000e+00> : vector<512x8xf32>
    %16 = tpu.matmul %13, %15, %cst_22 {dimension_numbers = #tpu.dot_dimension_numbers<[1], [0], [0], [1], [0, 0, 1, 1], [], []>} : vector<512x8xf32>, vector<8x8xf32>, vector<512x8xf32> -> vector<512x8xf32>
    %17 = arith.addf %11, %16 : vector<512x8xf32>
    %18 = vector.extract_strided_slice %6 {offsets = [0, 0, 2, 0], sizes = [2, 16, 16, 8], strides = [1, 1, 1, 1]} : vector<2x18x18x8xf32> to vector<2x16x16x8xf32>
    %19 = vector.shape_cast %18 : vector<2x16x16x8xf32> to vector<512x8xf32>
    %c2 = arith.constant 2 : index
    %c0_23 = arith.constant 0 : index
    %c0_24 = arith.constant 0 : index
    %20 = vector.load %arg1[%c2, %c0_23, %c0_24] : memref<9x8x8xf32, #tpu.memory_space<vmem>>, vector<1x8x8xf32>
    %21 = vector.shape_cast %20 : vector<1x8x8xf32> to vector<8x8xf32>
    %cst_25 = arith.constant dense<0.000000e+00> : vector<512x8xf32>
    %22 = tpu.matmul %19, %21, %cst_25 {dimension_numbers = #tpu.dot_dimension_numbers<[1], [0], [0], [1], [0, 0, 1, 1], [], []>} : vector<512x8xf32>, vector<8x8xf32>, vector<512x8xf32> -> vector<512x8xf32>
    %23 = arith.addf %17, %22 : vector<512x8xf32>
    %24 = vector.extract_strided_slice %6 {offsets = [0, 1, 0, 0], sizes = [2, 16, 16, 8], strides = [1, 1, 1, 1]} : vector<2x18x18x8xf32> to vector<2x16x16x8xf32>
    %25 = vector.shape_cast %24 : vector<2x16x16x8xf32> to vector<512x8xf32>
    %c3 = arith.constant 3 : index
    %c0_26 = arith.constant 0 : index
    %c0_27 = arith.constant 0 : index
    %26 = vector.load %arg1[%c3, %c0_26, %c0_27] : memref<9x8x8xf32, #tpu.memory_space<vmem>>, vector<1x8x8xf32>
    %27 = vector.shape_cast %26 : vector<1x8x8xf32> to vector<8x8xf32>
    %cst_28 = arith.constant dense<0.000000e+00> : vector<512x8xf32>
    %28 = tpu.matmul %25, %27, %cst_28 {dimension_numbers = #tpu.dot_dimension_numbers<[1], [0], [0], [1], [0, 0, 1, 1], [], []>} : vector<512x8xf32>, vector<8x8xf32>, vector<512x8xf32> -> vector<512x8xf32>
    %29 = arith.addf %23, %28 : vector<512x8xf32>
    %30 = vector.extract_strided_slice %6 {offsets = [0, 1, 1, 0], sizes = [2, 16, 16, 8], strides = [1, 1, 1, 1]} : vector<2x18x18x8xf32> to vector<2x16x16x8xf32>
    %31 = vector.shape_cast %30 : vector<2x16x16x8xf32> to vector<512x8xf32>
    %c4 = arith.constant 4 : index
    %c0_29 = arith.constant 0 : index
    %c0_30 = arith.constant 0 : index
    %32 = vector.load %arg1[%c4, %c0_29, %c0_30] : memref<9x8x8xf32, #tpu.memory_space<vmem>>, vector<1x8x8xf32>
    %33 = vector.shape_cast %32 : vector<1x8x8xf32> to vector<8x8xf32>
    %cst_31 = arith.constant dense<0.000000e+00> : vector<512x8xf32>
    %34 = tpu.matmul %31, %33, %cst_31 {dimension_numbers = #tpu.dot_dimension_numbers<[1], [0], [0], [1], [0, 0, 1, 1], [], []>} : vector<512x8xf32>, vector<8x8xf32>, vector<512x8xf32> -> vector<512x8xf32>
    %35 = arith.addf %29, %34 : vector<512x8xf32>
    %36 = vector.extract_strided_slice %6 {offsets = [0, 1, 2, 0], sizes = [2, 16, 16, 8], strides = [1, 1, 1, 1]} : vector<2x18x18x8xf32> to vector<2x16x16x8xf32>
    %37 = vector.shape_cast %36 : vector<2x16x16x8xf32> to vector<512x8xf32>
    %c5 = arith.constant 5 : index
    %c0_32 = arith.constant 0 : index
    %c0_33 = arith.constant 0 : index
    %38 = vector.load %arg1[%c5, %c0_32, %c0_33] : memref<9x8x8xf32, #tpu.memory_space<vmem>>, vector<1x8x8xf32>
    %39 = vector.shape_cast %38 : vector<1x8x8xf32> to vector<8x8xf32>
    %cst_34 = arith.constant dense<0.000000e+00> : vector<512x8xf32>
    %40 = tpu.matmul %37, %39, %cst_34 {dimension_numbers = #tpu.dot_dimension_numbers<[1], [0], [0], [1], [0, 0, 1, 1], [], []>} : vector<512x8xf32>, vector<8x8xf32>, vector<512x8xf32> -> vector<512x8xf32>
    %41 = arith.addf %35, %40 : vector<512x8xf32>
    %42 = vector.extract_strided_slice %6 {offsets = [0, 2, 0, 0], sizes = [2, 16, 16, 8], strides = [1, 1, 1, 1]} : vector<2x18x18x8xf32> to vector<2x16x16x8xf32>
    %43 = vector.shape_cast %42 : vector<2x16x16x8xf32> to vector<512x8xf32>
    %c6 = arith.constant 6 : index
    %c0_35 = arith.constant 0 : index
    %c0_36 = arith.constant 0 : index
    %44 = vector.load %arg1[%c6, %c0_35, %c0_36] : memref<9x8x8xf32, #tpu.memory_space<vmem>>, vector<1x8x8xf32>
    %45 = vector.shape_cast %44 : vector<1x8x8xf32> to vector<8x8xf32>
    %cst_37 = arith.constant dense<0.000000e+00> : vector<512x8xf32>
    %46 = tpu.matmul %43, %45, %cst_37 {dimension_numbers = #tpu.dot_dimension_numbers<[1], [0], [0], [1], [0, 0, 1, 1], [], []>} : vector<512x8xf32>, vector<8x8xf32>, vector<512x8xf32> -> vector<512x8xf32>
    %47 = arith.addf %41, %46 : vector<512x8xf32>
    %48 = vector.extract_strided_slice %6 {offsets = [0, 2, 1, 0], sizes = [2, 16, 16, 8], strides = [1, 1, 1, 1]} : vector<2x18x18x8xf32> to vector<2x16x16x8xf32>
    %49 = vector.shape_cast %48 : vector<2x16x16x8xf32> to vector<512x8xf32>
    %c7 = arith.constant 7 : index
    %c0_38 = arith.constant 0 : index
    %c0_39 = arith.constant 0 : index
    %50 = vector.load %arg1[%c7, %c0_38, %c0_39] : memref<9x8x8xf32, #tpu.memory_space<vmem>>, vector<1x8x8xf32>
    %51 = vector.shape_cast %50 : vector<1x8x8xf32> to vector<8x8xf32>
    %cst_40 = arith.constant dense<0.000000e+00> : vector<512x8xf32>
    %52 = tpu.matmul %49, %51, %cst_40 {dimension_numbers = #tpu.dot_dimension_numbers<[1], [0], [0], [1], [0, 0, 1, 1], [], []>} : vector<512x8xf32>, vector<8x8xf32>, vector<512x8xf32> -> vector<512x8xf32>
    %53 = arith.addf %47, %52 : vector<512x8xf32>
    %54 = vector.extract_strided_slice %6 {offsets = [0, 2, 2, 0], sizes = [2, 16, 16, 8], strides = [1, 1, 1, 1]} : vector<2x18x18x8xf32> to vector<2x16x16x8xf32>
    %55 = vector.shape_cast %54 : vector<2x16x16x8xf32> to vector<512x8xf32>
    %c8 = arith.constant 8 : index
    %c0_41 = arith.constant 0 : index
    %c0_42 = arith.constant 0 : index
    %56 = vector.load %arg1[%c8, %c0_41, %c0_42] : memref<9x8x8xf32, #tpu.memory_space<vmem>>, vector<1x8x8xf32>
    %57 = vector.shape_cast %56 : vector<1x8x8xf32> to vector<8x8xf32>
    %cst_43 = arith.constant dense<0.000000e+00> : vector<512x8xf32>
    %58 = tpu.matmul %55, %57, %cst_43 {dimension_numbers = #tpu.dot_dimension_numbers<[1], [0], [0], [1], [0, 0, 1, 1], [], []>} : vector<512x8xf32>, vector<8x8xf32>, vector<512x8xf32> -> vector<512x8xf32>
    %59 = arith.addf %53, %58 : vector<512x8xf32>
    %cst_44 = arith.constant dense<0.000000e+00> : vector<8xf32>
    %60 = vector.multi_reduction <add>, %59, %cst_44 [0] : vector<512x8xf32> to vector<8xf32>
    %61 = vector.shape_cast %60 : vector<8xf32> to vector<1x8xf32>
    %cst_45 = arith.constant 5.120000e+02 : f32
    %62 = vector.broadcast %cst_45 : f32 to vector<1x8xf32>
    %63 = arith.divf %61, %62 : vector<1x8xf32>
    %64 = vector.broadcast %63 : vector<1x8xf32> to vector<512x8xf32>
    %65 = arith.subf %59, %64 : vector<512x8xf32>
    %66 = arith.mulf %65, %65 : vector<512x8xf32>
    %cst_46 = arith.constant dense<0.000000e+00> : vector<8xf32>
    %67 = vector.multi_reduction <add>, %66, %cst_46 [0] : vector<512x8xf32> to vector<8xf32>
    %68 = vector.shape_cast %67 : vector<8xf32> to vector<1x8xf32>
    %cst_47 = arith.constant 5.120000e+02 : f32
    %69 = vector.broadcast %cst_47 : f32 to vector<1x8xf32>
    %70 = arith.divf %68, %69 : vector<1x8xf32>
    %71 = vector.broadcast %63 : vector<1x8xf32> to vector<512x8xf32>
    %72 = arith.subf %59, %71 : vector<512x8xf32>
    %cst_48 = arith.constant 9.99999974E-6 : f32
    %73 = vector.broadcast %cst_48 : f32 to vector<1x8xf32>
    %74 = arith.addf %70, %73 : vector<1x8xf32>
    %75 = math.rsqrt %74 : vector<1x8xf32>
    %76 = vector.broadcast %75 : vector<1x8xf32> to vector<512x8xf32>
    %77 = arith.mulf %72, %76 : vector<512x8xf32>
    %cst_49 = arith.constant 0.000000e+00 : f32
    %78 = vector.broadcast %cst_49 : f32 to vector<512x8xf32>
    %79 = arith.maximumf %77, %78 : vector<512x8xf32>
    %80 = vector.shape_cast %79 : vector<512x8xf32> to vector<2x16x16x8xf32>
    %c0_50 = arith.constant 0 : index
    %c1_51 = arith.constant 1 : index
    %c1_52 = arith.constant 1 : index
    %c0_53 = arith.constant 0 : index
    %81 = vector.load %arg4[%c0_50, %c1_51, %c1_52, %c0_53] : memref<2x18x18x8xf32, #tpu.memory_space<vmem>>, vector<2x16x16x8xf32>
    tpu.vector_store %arg4[%c0_50, %c1_51, %c1_52, %c0_53], %80 {strides = array<i32>} : memref<2x18x18x8xf32, #tpu.memory_space<vmem>>, vector<2x16x16x8xf32>,
    %c0_54 = arith.constant 0 : index
    %c0_55 = arith.constant 0 : index
    %c0_56 = arith.constant 0 : index
    %c0_57 = arith.constant 0 : index
    %82 = vector.load %arg4[%c0_54, %c0_55, %c0_56, %c0_57] : memref<2x18x18x8xf32, #tpu.memory_space<vmem>>, vector<2x18x18x8xf32>
    %83 = vector.extract_strided_slice %82 {offsets = [0, 0, 0, 0], sizes = [2, 16, 16, 8], strides = [1, 1, 1, 1]} : vector<2x18x18x8xf32> to vector<2x16x16x8xf32>
    %84 = vector.shape_cast %83 : vector<2x16x16x8xf32> to vector<512x8xf32>
    %c0_58 = arith.constant 0 : index
    %c0_59 = arith.constant 0 : index
    %c0_60 = arith.constant 0 : index
    %85 = vector.load %arg2[%c0_58, %c0_59, %c0_60] : memref<9x8x16xf32, #tpu.memory_space<vmem>>, vector<1x8x16xf32>
    %86 = vector.shape_cast %85 : vector<1x8x16xf32> to vector<8x16xf32>
    %cst_61 = arith.constant dense<0.000000e+00> : vector<512x16xf32>
    %87 = tpu.matmul %84, %86, %cst_61 {dimension_numbers = #tpu.dot_dimension_numbers<[1], [0], [0], [1], [0, 0, 1, 1], [], []>} : vector<512x8xf32>, vector<8x16xf32>, vector<512x16xf32> -> vector<512x16xf32>
    %88 = vector.extract_strided_slice %82 {offsets = [0, 0, 1, 0], sizes = [2, 16, 16, 8], strides = [1, 1, 1, 1]} : vector<2x18x18x8xf32> to vector<2x16x16x8xf32>
    %89 = vector.shape_cast %88 : vector<2x16x16x8xf32> to vector<512x8xf32>
    %c1_62 = arith.constant 1 : index
    %c0_63 = arith.constant 0 : index
    %c0_64 = arith.constant 0 : index
    %90 = vector.load %arg2[%c1_62, %c0_63, %c0_64] : memref<9x8x16xf32, #tpu.memory_space<vmem>>, vector<1x8x16xf32>
    %91 = vector.shape_cast %90 : vector<1x8x16xf32> to vector<8x16xf32>
    %cst_65 = arith.constant dense<0.000000e+00> : vector<512x16xf32>
    %92 = tpu.matmul %89, %91, %cst_65 {dimension_numbers = #tpu.dot_dimension_numbers<[1], [0], [0], [1], [0, 0, 1, 1], [], []>} : vector<512x8xf32>, vector<8x16xf32>, vector<512x16xf32> -> vector<512x16xf32>
    %93 = arith.addf %87, %92 : vector<512x16xf32>
    %94 = vector.extract_strided_slice %82 {offsets = [0, 0, 2, 0], sizes = [2, 16, 16, 8], strides = [1, 1, 1, 1]} : vector<2x18x18x8xf32> to vector<2x16x16x8xf32>
    %95 = vector.shape_cast %94 : vector<2x16x16x8xf32> to vector<512x8xf32>
    %c2_66 = arith.constant 2 : index
    %c0_67 = arith.constant 0 : index
    %c0_68 = arith.constant 0 : index
    %96 = vector.load %arg2[%c2_66, %c0_67, %c0_68] : memref<9x8x16xf32, #tpu.memory_space<vmem>>, vector<1x8x16xf32>
    %97 = vector.shape_cast %96 : vector<1x8x16xf32> to vector<8x16xf32>
    %cst_69 = arith.constant dense<0.000000e+00> : vector<512x16xf32>
    %98 = tpu.matmul %95, %97, %cst_69 {dimension_numbers = #tpu.dot_dimension_numbers<[1], [0], [0], [1], [0, 0, 1, 1], [], []>} : vector<512x8xf32>, vector<8x16xf32>, vector<512x16xf32> -> vector<512x16xf32>
    %99 = arith.addf %93, %98 : vector<512x16xf32>
    %100 = vector.extract_strided_slice %82 {offsets = [0, 1, 0, 0], sizes = [2, 16, 16, 8], strides = [1, 1, 1, 1]} : vector<2x18x18x8xf32> to vector<2x16x16x8xf32>
    %101 = vector.shape_cast %100 : vector<2x16x16x8xf32> to vector<512x8xf32>
    %c3_70 = arith.constant 3 : index
    %c0_71 = arith.constant 0 : index
    %c0_72 = arith.constant 0 : index
    %102 = vector.load %arg2[%c3_70, %c0_71, %c0_72] : memref<9x8x16xf32, #tpu.memory_space<vmem>>, vector<1x8x16xf32>
    %103 = vector.shape_cast %102 : vector<1x8x16xf32> to vector<8x16xf32>
    %cst_73 = arith.constant dense<0.000000e+00> : vector<512x16xf32>
    %104 = tpu.matmul %101, %103, %cst_73 {dimension_numbers = #tpu.dot_dimension_numbers<[1], [0], [0], [1], [0, 0, 1, 1], [], []>} : vector<512x8xf32>, vector<8x16xf32>, vector<512x16xf32> -> vector<512x16xf32>
    %105 = arith.addf %99, %104 : vector<512x16xf32>
    %106 = vector.extract_strided_slice %82 {offsets = [0, 1, 1, 0], sizes = [2, 16, 16, 8], strides = [1, 1, 1, 1]} : vector<2x18x18x8xf32> to vector<2x16x16x8xf32>
    %107 = vector.shape_cast %106 : vector<2x16x16x8xf32> to vector<512x8xf32>
    %c4_74 = arith.constant 4 : index
    %c0_75 = arith.constant 0 : index
    %c0_76 = arith.constant 0 : index
    %108 = vector.load %arg2[%c4_74, %c0_75, %c0_76] : memref<9x8x16xf32, #tpu.memory_space<vmem>>, vector<1x8x16xf32>
    %109 = vector.shape_cast %108 : vector<1x8x16xf32> to vector<8x16xf32>
    %cst_77 = arith.constant dense<0.000000e+00> : vector<512x16xf32>
    %110 = tpu.matmul %107, %109, %cst_77 {dimension_numbers = #tpu.dot_dimension_numbers<[1], [0], [0], [1], [0, 0, 1, 1], [], []>} : vector<512x8xf32>, vector<8x16xf32>, vector<512x16xf32> -> vector<512x16xf32>
    %111 = arith.addf %105, %110 : vector<512x16xf32>
    %112 = vector.extract_strided_slice %82 {offsets = [0, 1, 2, 0], sizes = [2, 16, 16, 8], strides = [1, 1, 1, 1]} : vector<2x18x18x8xf32> to vector<2x16x16x8xf32>
    %113 = vector.shape_cast %112 : vector<2x16x16x8xf32> to vector<512x8xf32>
    %c5_78 = arith.constant 5 : index
    %c0_79 = arith.constant 0 : index
    %c0_80 = arith.constant 0 : index
    %114 = vector.load %arg2[%c5_78, %c0_79, %c0_80] : memref<9x8x16xf32, #tpu.memory_space<vmem>>, vector<1x8x16xf32>
    %115 = vector.shape_cast %114 : vector<1x8x16xf32> to vector<8x16xf32>
    %cst_81 = arith.constant dense<0.000000e+00> : vector<512x16xf32>
    %116 = tpu.matmul %113, %115, %cst_81 {dimension_numbers = #tpu.dot_dimension_numbers<[1], [0], [0], [1], [0, 0, 1, 1], [], []>} : vector<512x8xf32>, vector<8x16xf32>, vector<512x16xf32> -> vector<512x16xf32>
    %117 = arith.addf %111, %116 : vector<512x16xf32>
    %118 = vector.extract_strided_slice %82 {offsets = [0, 2, 0, 0], sizes = [2, 16, 16, 8], strides = [1, 1, 1, 1]} : vector<2x18x18x8xf32> to vector<2x16x16x8xf32>
    %119 = vector.shape_cast %118 : vector<2x16x16x8xf32> to vector<512x8xf32>
    %c6_82 = arith.constant 6 : index
    %c0_83 = arith.constant 0 : index
    %c0_84 = arith.constant 0 : index
    %120 = vector.load %arg2[%c6_82, %c0_83, %c0_84] : memref<9x8x16xf32, #tpu.memory_space<vmem>>, vector<1x8x16xf32>
    %121 = vector.shape_cast %120 : vector<1x8x16xf32> to vector<8x16xf32>
    %cst_85 = arith.constant dense<0.000000e+00> : vector<512x16xf32>
    %122 = tpu.matmul %119, %121, %cst_85 {dimension_numbers = #tpu.dot_dimension_numbers<[1], [0], [0], [1], [0, 0, 1, 1], [], []>} : vector<512x8xf32>, vector<8x16xf32>, vector<512x16xf32> -> vector<512x16xf32>
    %123 = arith.addf %117, %122 : vector<512x16xf32>
    %124 = vector.extract_strided_slice %82 {offsets = [0, 2, 1, 0], sizes = [2, 16, 16, 8], strides = [1, 1, 1, 1]} : vector<2x18x18x8xf32> to vector<2x16x16x8xf32>
    %125 = vector.shape_cast %124 : vector<2x16x16x8xf32> to vector<512x8xf32>
    %c7_86 = arith.constant 7 : index
    %c0_87 = arith.constant 0 : index
    %c0_88 = arith.constant 0 : index
    %126 = vector.load %arg2[%c7_86, %c0_87, %c0_88] : memref<9x8x16xf32, #tpu.memory_space<vmem>>, vector<1x8x16xf32>
    %127 = vector.shape_cast %126 : vector<1x8x16xf32> to vector<8x16xf32>
    %cst_89 = arith.constant dense<0.000000e+00> : vector<512x16xf32>
    %128 = tpu.matmul %125, %127, %cst_89 {dimension_numbers = #tpu.dot_dimension_numbers<[1], [0], [0], [1], [0, 0, 1, 1], [], []>} : vector<512x8xf32>, vector<8x16xf32>, vector<512x16xf32> -> vector<512x16xf32>
    %129 = arith.addf %123, %128 : vector<512x16xf32>
    %130 = vector.extract_strided_slice %82 {offsets = [0, 2, 2, 0], sizes = [2, 16, 16, 8], strides = [1, 1, 1, 1]} : vector<2x18x18x8xf32> to vector<2x16x16x8xf32>
    %131 = vector.shape_cast %130 : vector<2x16x16x8xf32> to vector<512x8xf32>
    %c8_90 = arith.constant 8 : index
    %c0_91 = arith.constant 0 : index
    %c0_92 = arith.constant 0 : index
    %132 = vector.load %arg2[%c8_90, %c0_91, %c0_92] : memref<9x8x16xf32, #tpu.memory_space<vmem>>, vector<1x8x16xf32>
    %133 = vector.shape_cast %132 : vector<1x8x16xf32> to vector<8x16xf32>
    %cst_93 = arith.constant dense<0.000000e+00> : vector<512x16xf32>
    %134 = tpu.matmul %131, %133, %cst_93 {dimension_numbers = #tpu.dot_dimension_numbers<[1], [0], [0], [1], [0, 0, 1, 1], [], []>} : vector<512x8xf32>, vector<8x16xf32>, vector<512x16xf32> -> vector<512x16xf32>
    %135 = arith.addf %129, %134 : vector<512x16xf32>
    %cst_94 = arith.constant dense<0.000000e+00> : vector<16xf32>
    %136 = vector.multi_reduction <add>, %135, %cst_94 [0] : vector<512x16xf32> to vector<16xf32>
    %137 = vector.shape_cast %136 : vector<16xf32> to vector<1x16xf32>
    %cst_95 = arith.constant 5.120000e+02 : f32
    %138 = vector.broadcast %cst_95 : f32 to vector<1x16xf32>
    %139 = arith.divf %137, %138 : vector<1x16xf32>
    %140 = vector.broadcast %139 : vector<1x16xf32> to vector<512x16xf32>
    %141 = arith.subf %135, %140 : vector<512x16xf32>
    %142 = arith.mulf %141, %141 : vector<512x16xf32>
    %cst_96 = arith.constant dense<0.000000e+00> : vector<16xf32>
    %143 = vector.multi_reduction <add>, %142, %cst_96 [0] : vector<512x16xf32> to vector<16xf32>
    %144 = vector.shape_cast %143 : vector<16xf32> to vector<1x16xf32>
    %cst_97 = arith.constant 5.120000e+02 : f32
    %145 = vector.broadcast %cst_97 : f32 to vector<1x16xf32>
    %146 = arith.divf %144, %145 : vector<1x16xf32>
    %147 = vector.broadcast %139 : vector<1x16xf32> to vector<512x16xf32>
    %148 = arith.subf %135, %147 : vector<512x16xf32>
    %cst_98 = arith.constant 9.99999974E-6 : f32
    %149 = vector.broadcast %cst_98 : f32 to vector<1x16xf32>
    %150 = arith.addf %146, %149 : vector<1x16xf32>
    %151 = math.rsqrt %150 : vector<1x16xf32>
    %152 = vector.broadcast %151 : vector<1x16xf32> to vector<512x16xf32>
    %153 = arith.mulf %148, %152 : vector<512x16xf32>
    %154 = vector.shape_cast %153 : vector<512x16xf32> to vector<2x256x16xf32>
    %155 = tpu.transpose %154, [0, 2, 1] : vector<2x256x16xf32> -> vector<2x16x256xf32>
    %c0_99 = arith.constant 0 : index
    %c0_100 = arith.constant 0 : index
    %c0_101 = arith.constant 0 : index
    %156 = vector.load %arg3[%c0_99, %c0_100, %c0_101] : memref<2x16x256xf32, #tpu.memory_space<vmem>>, vector<2x16x256xf32>
    tpu.vector_store %arg3[%c0_99, %c0_100, %c0_101], %155 {strides = array<i32>} : memref<2x16x256xf32, #tpu.memory_space<vmem>>, vector<2x16x256xf32>,
    return
  }
}

</mosaic_0001>

<llo_original>
// kernel: tpu_custom_call.1
$region0: #{tpu_custom_call.1}
  #allocation0 [shape = 'u32[]', space=smem, size = 0x4, offset = 0x4, fixed_abs, tag = 'smem constant byte address 0x4 - core index']
  #allocation1 [shape = 'u32[72,128]{1,0:T(1,128)}', space=vmem, size = 0x9000, scoped, tag = 'internal scratch']
  #allocation2 [shape = 'f32[2,18,18,8]{3,2,1,0:T(8,128)}', space=vmem, size = 0x6c000, scoped, tag = 'scratch operand']
  %s0 = inlined_call_operand.vmem [shape: f32[2,16,16,8], index: 0, kind: input, shape index: {}]
  %s1 = inlined_call_operand.vmem [shape: f32[9,8,8], index: 1, kind: input, shape index: {}]
  %s2 = inlined_call_operand.vmem [shape: f32[9,8,16], index: 2, kind: input, shape index: {}]
  %s3 = inlined_call_operand.hbm [shape: f32[2,16,256], index: 3, kind: output, shape index: {}]
  %s4 = sld [smem:[#allocation0]]
  $region22: #{tpu_custom_call.1} parent=0
    _
  %s6 = ssub.s32 1, %s4
  %s7 = scalar_select 0, %s6, %s4
  $region1: #{tpu_custom_call.1} parent=0
    #allocation3 [shape = 'u8[32768]{0}', space=vmem, size = 0x8000, scoped, tag = 'output window, operand 0, single buffered']
    #allocation4 [shape = 's32[1]{0}', space=sflag, size = 0x4, scoped, tag = 'scoped memory for tpu_custom_call.1']
    %8 = vsyncpa [#allocation4], 0
    // Predicated region
    $region2: #{tpu_custom_call.1} parent=1 // pred_check
      _
    $region3: #{tpu_custom_call.1} parent=1 // pred_check_branch
      %10 = sbr.rel (0) target = $region5
    $region4: #{tpu_custom_call.1} parent=1 // pred_region
      _
    $region5: #{tpu_custom_call.1} parent=1 // pred_fallthru
      _
    // Predicated region
    $region6: #{tpu_custom_call.1} parent=1 // pred_check
      _
    $region7: #{tpu_custom_call.1} parent=1 // pred_check_branch
      %12 = sbr.rel (0) target = $region9
    $region8: #{tpu_custom_call.1} parent=1 // pred_region
      _
    $region9: #{tpu_custom_call.1} parent=1 // pred_fallthru
      _
    // Predicated region
    $region10: #{tpu_custom_call.1} parent=1 // pred_check
      _
    $region11: #{tpu_custom_call.1} parent=1 // pred_check_branch
      %14 = sbr.rel (0) target = $region13
    $region12: #{tpu_custom_call.1} parent=1 // pred_region
      _
    $region13: #{tpu_custom_call.1} parent=1 // pred_fallthru
      _
    %vm15 = vcmask 64512
    %16 = vst.msk [vmem:[#allocation2] sm:$0xff] %vm15, 0.0
    %17 = vst.msk [vmem:[#allocation2 + $0x8] sm:$0xff] %vm15, 0.0
    %vm18 = vcmask 58368
    %19 = vst.msk [vmem:[#allocation2 + $0x10] sm:$0x3] %vm18, 0.0
    %20 = vst.msk [vmem:[#allocation2 + $0x18] sm:$0xff] %vm15, 0.0
    %21 = vst.msk [vmem:[#allocation2 + $0x20] sm:$0xff] %vm15, 0.0
    %22 = vst.msk [vmem:[#allocation2 + $0x28] sm:$0x3] %vm18, 0.0
    %23 = vst.msk [vmem:[#allocation2 + $0x30] sm:$0xff] %vm15, 0.0
    %24 = vst.msk [vmem:[#allocation2 + $0x38] sm:$0xff] %vm15, 0.0
    %25 = vst.msk [vmem:[#allocation2 + $0x40] sm:$0x3] %vm18, 0.0
    %26 = vst.msk [vmem:[#allocation2 + $0x48] sm:$0xff] %vm15, 0.0
    %27 = vst.msk [vmem:[#allocation2 + $0x50] sm:$0xff] %vm15, 0.0
    %28 = vst.msk [vmem:[#allocation2 + $0x58] sm:$0x3] %vm18, 0.0
    %29 = vst.msk [vmem:[#allocation2 + $0x60] sm:$0xff] %vm15, 0.0
    %30 = vst.msk [vmem:[#allocation2 + $0x68] sm:$0xff] %vm15, 0.0
    %31 = vst.msk [vmem:[#allocation2 + $0x70] sm:$0x3] %vm18, 0.0
    %32 = vst.msk [vmem:[#allocation2 + $0x78] sm:$0xff] %vm15, 0.0
    %33 = vst.msk [vmem:[#allocation2 + $0x80] sm:$0xff] %vm15, 0.0
    %34 = vst.msk [vmem:[#allocation2 + $0x88] sm:$0x3] %vm18, 0.0
    %35 = vst.msk [vmem:[#allocation2 + $0x90] sm:$0xff] %vm15, 0.0
    %36 = vst.msk [vmem:[#allocation2 + $0x98] sm:$0xff] %vm15, 0.0
    %37 = vst.msk [vmem:[#allocation2 + $0xa0] sm:$0x3] %vm18, 0.0
    %38 = vst.msk [vmem:[#allocation2 + $0xa8] sm:$0xff] %vm15, 0.0
    %39 = vst.msk [vmem:[#allocation2 + $0xb0] sm:$0xff] %vm15, 0.0
    %40 = vst.msk [vmem:[#allocation2 + $0xb8] sm:$0x3] %vm18, 0.0
    %41 = vst.msk [vmem:[#allocation2 + $0xc0] sm:$0xff] %vm15, 0.0
    %42 = vst.msk [vmem:[#allocation2 + $0xc8] sm:$0xff] %vm15, 0.0
    %43 = vst.msk [vmem:[#allocation2 + $0xd0] sm:$0x3] %vm18, 0.0
    %44 = vst.msk [vmem:[#allocation2 + $0xd8] sm:$0xff] %vm15, 0.0
    %45 = vst.msk [vmem:[#allocation2 + $0xe0] sm:$0xff] %vm15, 0.0
    %46 = vst.msk [vmem:[#allocation2 + $0xe8] sm:$0x3] %vm18, 0.0
    %47 = vst.msk [vmem:[#allocation2 + $0xf0] sm:$0xff] %vm15, 0.0
    %48 = vst.msk [vmem:[#allocation2 + $0xf8] sm:$0xff] %vm15, 0.0
    %49 = vst.msk [vmem:[#allocation2 + $0x100] sm:$0x3] %vm18, 0.0
    %50 = vst.msk [vmem:[#allocation2 + $0x108] sm:$0xff] %vm15, 0.0
    %51 = vst.msk [vmem:[#allocation2 + $0x110] sm:$0xff] %vm15, 0.0
    %52 = vst.msk [vmem:[#allocation2 + $0x118] sm:$0x3] %vm18, 0.0
    %53 = vst.msk [vmem:[#allocation2 + $0x120] sm:$0xff] %vm15, 0.0
    %54 = vst.msk [vmem:[#allocation2 + $0x128] sm:$0xff] %vm15, 0.0
    %55 = vst.msk [vmem:[#allocation2 + $0x130] sm:$0x3] %vm18, 0.0
    %56 = vst.msk [vmem:[#allocation2 + $0x138] sm:$0xff] %vm15, 0.0
    %57 = vst.msk [vmem:[#allocation2 + $0x140] sm:$0xff] %vm15, 0.0
    %58 = vst.msk [vmem:[#allocation2 + $0x148] sm:$0x3] %vm18, 0.0
    %59 = vst.msk [vmem:[#allocation2 + $0x150] sm:$0xff] %vm15, 0.0
    %60 = vst.msk [vmem:[#allocation2 + $0x158] sm:$0xff] %vm15, 0.0
    %61 = vst.msk [vmem:[#allocation2 + $0x160] sm:$0x3] %vm18, 0.0
    %62 = vst.msk [vmem:[#allocation2 + $0x168] sm:$0xff] %vm15, 0.0
    %63 = vst.msk [vmem:[#allocation2 + $0x170] sm:$0xff] %vm15, 0.0
    %64 = vst.msk [vmem:[#allocation2 + $0x178] sm:$0x3] %vm18, 0.0
    %65 = vst.msk [vmem:[#allocation2 + $0x180] sm:$0xff] %vm15, 0.0
    %66 = vst.msk [vmem:[#allocation2 + $0x188] sm:$0xff] %vm15, 0.0
    %67 = vst.msk [vmem:[#allocation2 + $0x190] sm:$0x3] %vm18, 0.0
    %68 = vst.msk [vmem:[#allocation2 + $0x198] sm:$0xff] %vm15, 0.0
    %69 = vst.msk [vmem:[#allocation2 + $0x1a0] sm:$0xff] %vm15, 0.0
    %70 = vst.msk [vmem:[#allocation2 + $0x1a8] sm:$0x3] %vm18, 0.0
    %71 = vst.msk [vmem:[#allocation2 + $0x1b0] sm:$0xff] %vm15, 0.0
    %72 = vst.msk [vmem:[#allocation2 + $0x1b8] sm:$0xff] %vm15, 0.0
    %73 = vst.msk [vmem:[#allocation2 + $0x1c0] sm:$0x3] %vm18, 0.0
    %74 = vst.msk [vmem:[#allocation2 + $0x1c8] sm:$0xff] %vm15, 0.0
    %75 = vst.msk [vmem:[#allocation2 + $0x1d0] sm:$0xff] %vm15, 0.0
    %76 = vst.msk [vmem:[#allocation2 + $0x1d8] sm:$0x3] %vm18, 0.0
    %77 = vst.msk [vmem:[#allocation2 + $0x1e0] sm:$0xff] %vm15, 0.0
    %78 = vst.msk [vmem:[#allocation2 + $0x1e8] sm:$0xff] %vm15, 0.0
    %79 = vst.msk [vmem:[#allocation2 + $0x1f0] sm:$0x3] %vm18, 0.0
    %80 = vst.msk [vmem:[#allocation2 + $0x1f8] sm:$0xff] %vm15, 0.0
    %81 = vst.msk [vmem:[#allocation2 + $0x200] sm:$0xff] %vm15, 0.0
    %82 = vst.msk [vmem:[#allocation2 + $0x208] sm:$0x3] %vm18, 0.0
    %83 = vst.msk [vmem:[#allocation2 + $0x210] sm:$0xff] %vm15, 0.0
    %84 = vst.msk [vmem:[#allocation2 + $0x218] sm:$0xff] %vm15, 0.0
    %85 = vst.msk [vmem:[#allocation2 + $0x220] sm:$0x3] %vm18, 0.0
    %86 = vst.msk [vmem:[#allocation2 + $0x228] sm:$0xff] %vm15, 0.0
    %87 = vst.msk [vmem:[#allocation2 + $0x230] sm:$0xff] %vm15, 0.0
    %88 = vst.msk [vmem:[#allocation2 + $0x238] sm:$0x3] %vm18, 0.0
    %89 = vst.msk [vmem:[#allocation2 + $0x240] sm:$0xff] %vm15, 0.0
    %90 = vst.msk [vmem:[#allocation2 + $0x248] sm:$0xff] %vm15, 0.0
    %91 = vst.msk [vmem:[#allocation2 + $0x250] sm:$0x3] %vm18, 0.0
    %92 = vst.msk [vmem:[#allocation2 + $0x258] sm:$0xff] %vm15, 0.0
    %93 = vst.msk [vmem:[#allocation2 + $0x260] sm:$0xff] %vm15, 0.0
    %94 = vst.msk [vmem:[#allocation2 + $0x268] sm:$0x3] %vm18, 0.0
    %95 = vst.msk [vmem:[#allocation2 + $0x270] sm:$0xff] %vm15, 0.0
    %96 = vst.msk [vmem:[#allocation2 + $0x278] sm:$0xff] %vm15, 0.0
    %97 = vst.msk [vmem:[#allocation2 + $0x280] sm:$0x3] %vm18, 0.0
    %98 = vst.msk [vmem:[#allocation2 + $0x288] sm:$0xff] %vm15, 0.0
    %99 = vst.msk [vmem:[#allocation2 + $0x290] sm:$0xff] %vm15, 0.0
    %100 = vst.msk [vmem:[#allocation2 + $0x298] sm:$0x3] %vm18, 0.0
    %101 = vst.msk [vmem:[#allocation2 + $0x2a0] sm:$0xff] %vm15, 0.0
    %102 = vst.msk [vmem:[#allocation2 + $0x2a8] sm:$0xff] %vm15, 0.0
    %103 = vst.msk [vmem:[#allocation2 + $0x2b0] sm:$0x3] %vm18, 0.0
    %104 = vst.msk [vmem:[#allocation2 + $0x2b8] sm:$0xff] %vm15, 0.0
    %105 = vst.msk [vmem:[#allocation2 + $0x2c0] sm:$0xff] %vm15, 0.0
    %106 = vst.msk [vmem:[#allocation2 + $0x2c8] sm:$0x3] %vm18, 0.0
    %107 = vst.msk [vmem:[#allocation2 + $0x2d0] sm:$0xff] %vm15, 0.0
    %108 = vst.msk [vmem:[#allocation2 + $0x2d8] sm:$0xff] %vm15, 0.0
    %109 = vst.msk [vmem:[#allocation2 + $0x2e0] sm:$0x3] %vm18, 0.0
    %110 = vst.msk [vmem:[#allocation2 + $0x2e8] sm:$0xff] %vm15, 0.0
    %111 = vst.msk [vmem:[#allocation2 + $0x2f0] sm:$0xff] %vm15, 0.0
    %112 = vst.msk [vmem:[#allocation2 + $0x2f8] sm:$0x3] %vm18, 0.0
    %113 = vst.msk [vmem:[#allocation2 + $0x300] sm:$0xff] %vm15, 0.0
    %114 = vst.msk [vmem:[#allocation2 + $0x308] sm:$0xff] %vm15, 0.0
    %115 = vst.msk [vmem:[#allocation2 + $0x310] sm:$0x3] %vm18, 0.0
    %116 = vst.msk [vmem:[#allocation2 + $0x318] sm:$0xff] %vm15, 0.0
    %117 = vst.msk [vmem:[#allocation2 + $0x320] sm:$0xff] %vm15, 0.0
    %118 = vst.msk [vmem:[#allocation2 + $0x328] sm:$0x3] %vm18, 0.0
    %119 = vst.msk [vmem:[#allocation2 + $0x330] sm:$0xff] %vm15, 0.0
    %120 = vst.msk [vmem:[#allocation2 + $0x338] sm:$0xff] %vm15, 0.0
    %121 = vst.msk [vmem:[#allocation2 + $0x340] sm:$0x3] %vm18, 0.0
    %122 = vst.msk [vmem:[#allocation2 + $0x348] sm:$0xff] %vm15, 0.0
    %123 = vst.msk [vmem:[#allocation2 + $0x350] sm:$0xff] %vm15, 0.0
    %124 = vst.msk [vmem:[#allocation2 + $0x358] sm:$0x3] %vm18, 0.0
    %v125 = vld [vmem:[%s0] sm:$0xff]
    %v126 = vld [vmem:[%s0 + $0x8] sm:$0xff]
    %v127 = vld [vmem:[%s0 + $0x10] sm:$0xff]
    %v128 = vld [vmem:[%s0 + $0x18] sm:$0xff]
    %v129 = vld [vmem:[%s0 + $0x20] sm:$0xff]
    %v130 = vld [vmem:[%s0 + $0x28] sm:$0xff]
    %v131 = vld [vmem:[%s0 + $0x30] sm:$0xff]
    %v132 = vld [vmem:[%s0 + $0x38] sm:$0xff]
    %v133 = vld [vmem:[%s0 + $0x40] sm:$0xff]
    %v134 = vld [vmem:[%s0 + $0x48] sm:$0xff]
    %v135 = vld [vmem:[%s0 + $0x50] sm:$0xff]
    %v136 = vld [vmem:[%s0 + $0x58] sm:$0xff]
    %v137 = vld [vmem:[%s0 + $0x60] sm:$0xff]
    %v138 = vld [vmem:[%s0 + $0x68] sm:$0xff]
    %v139 = vld [vmem:[%s0 + $0x70] sm:$0xff]
    %v140 = vld [vmem:[%s0 + $0x78] sm:$0xff]
    %v141 = vld [vmem:[%s0 + $0x80] sm:$0xff]
    %v142 = vld [vmem:[%s0 + $0x88] sm:$0xff]
    %v143 = vld [vmem:[%s0 + $0x90] sm:$0xff]
    %v144 = vld [vmem:[%s0 + $0x98] sm:$0xff]
    %v145 = vld [vmem:[%s0 + $0xa0] sm:$0xff]
    %v146 = vld [vmem:[%s0 + $0xa8] sm:$0xff]
    %v147 = vld [vmem:[%s0 + $0xb0] sm:$0xff]
    %v148 = vld [vmem:[%s0 + $0xb8] sm:$0xff]
    %v149 = vld [vmem:[%s0 + $0xc0] sm:$0xff]
    %v150 = vld [vmem:[%s0 + $0xc8] sm:$0xff]
    %v151 = vld [vmem:[%s0 + $0xd0] sm:$0xff]
    %v152 = vld [vmem:[%s0 + $0xd8] sm:$0xff]
    %v153 = vld [vmem:[%s0 + $0xe0] sm:$0xff]
    %v154 = vld [vmem:[%s0 + $0xe8] sm:$0xff]
    %v155 = vld [vmem:[%s0 + $0xf0] sm:$0xff]
    %v156 = vld [vmem:[%s0 + $0xf8] sm:$0xff]
    %v157 = vld [vmem:[%s0 + $0x100] sm:$0xff]
    %v158 = vld [vmem:[%s0 + $0x108] sm:$0xff]
    %v159 = vld [vmem:[%s0 + $0x110] sm:$0xff]
    %v160 = vld [vmem:[%s0 + $0x118] sm:$0xff]
    %v161 = vld [vmem:[%s0 + $0x120] sm:$0xff]
    %v162 = vld [vmem:[%s0 + $0x128] sm:$0xff]
    %v163 = vld [vmem:[%s0 + $0x130] sm:$0xff]
    %v164 = vld [vmem:[%s0 + $0x138] sm:$0xff]
    %v165 = vld [vmem:[%s0 + $0x140] sm:$0xff]
    %v166 = vld [vmem:[%s0 + $0x148] sm:$0xff]
    %v167 = vld [vmem:[%s0 + $0x150] sm:$0xff]
    %v168 = vld [vmem:[%s0 + $0x158] sm:$0xff]
    %v169 = vld [vmem:[%s0 + $0x160] sm:$0xff]
    %v170 = vld [vmem:[%s0 + $0x168] sm:$0xff]
    %v171 = vld [vmem:[%s0 + $0x170] sm:$0xff]
    %v172 = vld [vmem:[%s0 + $0x178] sm:$0xff]
    %v173 = vld [vmem:[%s0 + $0x180] sm:$0xff]
    %v174 = vld [vmem:[%s0 + $0x188] sm:$0xff]
    %v175 = vld [vmem:[%s0 + $0x190] sm:$0xff]
    %v176 = vld [vmem:[%s0 + $0x198] sm:$0xff]
    %v177 = vld [vmem:[%s0 + $0x1a0] sm:$0xff]
    %v178 = vld [vmem:[%s0 + $0x1a8] sm:$0xff]
    %v179 = vld [vmem:[%s0 + $0x1b0] sm:$0xff]
    %v180 = vld [vmem:[%s0 + $0x1b8] sm:$0xff]
    %v181 = vld [vmem:[%s0 + $0x1c0] sm:$0xff]
    %v182 = vld [vmem:[%s0 + $0x1c8] sm:$0xff]
    %v183 = vld [vmem:[%s0 + $0x1d0] sm:$0xff]
    %v184 = vld [vmem:[%s0 + $0x1d8] sm:$0xff]
    %v185 = vld [vmem:[%s0 + $0x1e0] sm:$0xff]
    %v186 = vld [vmem:[%s0 + $0x1e8] sm:$0xff]
    %v187 = vld [vmem:[%s0 + $0x1f0] sm:$0xff]
    %v188 = vld [vmem:[%s0 + $0x1f8] sm:$0xff]
    %v189 = vmax.f32 %v125, 0.0
    %v190 = vmax.f32 %v126, 0.0
    %v191 = vmax.f32 %v127, 0.0
    %v192 = vmax.f32 %v128, 0.0
    %v193 = vmax.f32 %v129, 0.0
    %v194 = vmax.f32 %v130, 0.0
    %v195 = vmax.f32 %v131, 0.0
    %v196 = vmax.f32 %v132, 0.0
    %v197 = vmax.f32 %v133, 0.0
    %v198 = vmax.f32 %v134, 0.0
    %v199 = vmax.f32 %v135, 0.0
    %v200 = vmax.f32 %v136, 0.0
    %v201 = vmax.f32 %v137, 0.0
    %v202 = vmax.f32 %v138, 0.0
    %v203 = vmax.f32 %v139, 0.0
    %v204 = vmax.f32 %v140, 0.0
    %v205 = vmax.f32 %v141, 0.0
    %v206 = vmax.f32 %v142, 0.0
    %v207 = vmax.f32 %v143, 0.0
    %v208 = vmax.f32 %v144, 0.0
    %v209 = vmax.f32 %v145, 0.0
    %v210 = vmax.f32 %v146, 0.0
    %v211 = vmax.f32 %v147, 0.0
    %v212 = vmax.f32 %v148, 0.0
    %v213 = vmax.f32 %v149, 0.0
    %v214 = vmax.f32 %v150, 0.0
    %v215 = vmax.f32 %v151, 0.0
    %v216 = vmax.f32 %v152, 0.0
    %v217 = vmax.f32 %v153, 0.0
    %v218 = vmax.f32 %v154, 0.0
    %v219 = vmax.f32 %v155, 0.0
    %v220 = vmax.f32 %v156, 0.0
    %v221 = vmax.f32 %v157, 0.0
    %v222 = vmax.f32 %v158, 0.0
    %v223 = vmax.f32 %v159, 0.0
    %v224 = vmax.f32 %v160, 0.0
    %v225 = vmax.f32 %v161, 0.0
    %v226 = vmax.f32 %v162, 0.0
    %v227 = vmax.f32 %v163, 0.0
    %v228 = vmax.f32 %v164, 0.0
    %v229 = vmax.f32 %v165, 0.0
    %v230 = vmax.f32 %v166, 0.0
    %v231 = vmax.f32 %v167, 0.0
    %v232 = vmax.f32 %v168, 0.0
    %v233 = vmax.f32 %v169, 0.0
    %v234 = vmax.f32 %v170, 0.0
    %v235 = vmax.f32 %v171, 0.0
    %v236 = vmax.f32 %v172, 0.0
    %v237 = vmax.f32 %v173, 0.0
    %v238 = vmax.f32 %v174, 0.0
    %v239 = vmax.f32 %v175, 0.0
    %v240 = vmax.f32 %v176, 0.0
    %v241 = vmax.f32 %v177, 0.0
    %v242 = vmax.f32 %v178, 0.0
    %v243 = vmax.f32 %v179, 0.0
    %v244 = vmax.f32 %v180, 0.0
    %v245 = vmax.f32 %v181, 0.0
    %v246 = vmax.f32 %v182, 0.0
    %v247 = vmax.f32 %v183, 0.0
    %v248 = vmax.f32 %v184, 0.0
    %v249 = vmax.f32 %v185, 0.0
    %v250 = vmax.f32 %v186, 0.0
    %v251 = vmax.f32 %v187, 0.0
    %v252 = vmax.f32 %v188, 0.0
    %s253 = scalar_lea.vmem [#allocation2], 24
    %254 = vst.msk [vmem:[%s253 + $0x1] sm:$0xff] %vm15, %v189
    %255 = vst.msk [vmem:[%s253 + $0x9] sm:$0xff] %vm15, %v190
    %256 = vst.msk [vmem:[%s253 + $0x19] sm:$0xff] %vm15, %v191
    %257 = vst.msk [vmem:[%s253 + $0x21] sm:$0xff] %vm15, %v192
    %258 = vst.msk [vmem:[%s253 + $0x31] sm:$0xff] %vm15, %v193
    %259 = vst.msk [vmem:[%s253 + $0x39] sm:$0xff] %vm15, %v194
    %260 = vst.msk [vmem:[%s253 + $0x49] sm:$0xff] %vm15, %v195
    %261 = vst.msk [vmem:[%s253 + $0x51] sm:$0xff] %vm15, %v196
    %262 = vst.msk [vmem:[%s253 + $0x61] sm:$0xff] %vm15, %v197
    %263 = vst.msk [vmem:[%s253 + $0x69] sm:$0xff] %vm15, %v198
    %264 = vst.msk [vmem:[%s253 + $0x79] sm:$0xff] %vm15, %v199
    %265 = vst.msk [vmem:[%s253 + $0x81] sm:$0xff] %vm15, %v200
    %266 = vst.msk [vmem:[%s253 + $0x91] sm:$0xff] %vm15, %v201
    %267 = vst.msk [vmem:[%s253 + $0x99] sm:$0xff] %vm15, %v202
    %268 = vst.msk [vmem:[%s253 + $0xa9] sm:$0xff] %vm15, %v203
    %269 = vst.msk [vmem:[%s253 + $0xb1] sm:$0xff] %vm15, %v204
    %270 = vst.msk [vmem:[%s253 + $0xc1] sm:$0xff] %vm15, %v205
    %271 = vst.msk [vmem:[%s253 + $0xc9] sm:$0xff] %vm15, %v206
    %272 = vst.msk [vmem:[%s253 + $0xd9] sm:$0xff] %vm15, %v207
    %273 = vst.msk [vmem:[%s253 + $0xe1] sm:$0xff] %vm15, %v208
    %274 = vst.msk [vmem:[%s253 + $0xf1] sm:$0xff] %vm15, %v209
    %275 = vst.msk [vmem:[%s253 + $0xf9] sm:$0xff] %vm15, %v210
    %276 = vst.msk [vmem:[%s253 + $0x109] sm:$0xff] %vm15, %v211
    %277 = vst.msk [vmem:[%s253 + $0x111] sm:$0xff] %vm15, %v212
    %278 = vst.msk [vmem:[%s253 + $0x121] sm:$0xff] %vm15, %v213
    %279 = vst.msk [vmem:[%s253 + $0x129] sm:$0xff] %vm15, %v214
    %280 = vst.msk [vmem:[%s253 + $0x139] sm:$0xff] %vm15, %v215
    %281 = vst.msk [vmem:[%s253 + $0x141] sm:$0xff] %vm15, %v216
    %282 = vst.msk [vmem:[%s253 + $0x151] sm:$0xff] %vm15, %v217
    %283 = vst.msk [vmem:[%s253 + $0x159] sm:$0xff] %vm15, %v218
    %284 = vst.msk [vmem:[%s253 + $0x169] sm:$0xff] %vm15, %v219
    %285 = vst.msk [vmem:[%s253 + $0x171] sm:$0xff] %vm15, %v220
    %286 = vst.msk [vmem:[%s253 + $0x1b1] sm:$0xff] %vm15, %v221
    %287 = vst.msk [vmem:[%s253 + $0x1b9] sm:$0xff] %vm15, %v222
    %288 = vst.msk [vmem:[%s253 + $0x1c9] sm:$0xff] %vm15, %v223
    %289 = vst.msk [vmem:[%s253 + $0x1d1] sm:$0xff] %vm15, %v224
    %290 = vst.msk [vmem:[%s253 + $0x1e1] sm:$0xff] %vm15, %v225
    %291 = vst.msk [vmem:[%s253 + $0x1e9] sm:$0xff] %vm15, %v226
    %292 = vst.msk [vmem:[%s253 + $0x1f9] sm:$0xff] %vm15, %v227
    %293 = vst.msk [vmem:[%s253 + $0x201] sm:$0xff] %vm15, %v228
    %294 = vst.msk [vmem:[%s253 + $0x211] sm:$0xff] %vm15, %v229
    %295 = vst.msk [vmem:[%s253 + $0x219] sm:$0xff] %vm15, %v230
    %296 = vst.msk [vmem:[%s253 + $0x229] sm:$0xff] %vm15, %v231
    %297 = vst.msk [vmem:[%s253 + $0x231] sm:$0xff] %vm15, %v232
    %298 = vst.msk [vmem:[%s253 + $0x241] sm:$0xff] %vm15, %v233
    %299 = vst.msk [vmem:[%s253 + $0x249] sm:$0xff] %vm15, %v234
    %300 = vst.msk [vmem:[%s253 + $0x259] sm:$0xff] %vm15, %v235
    %301 = vst.msk [vmem:[%s253 + $0x261] sm:$0xff] %vm15, %v236
    %302 = vst.msk [vmem:[%s253 + $0x271] sm:$0xff] %vm15, %v237
    %303 = vst.msk [vmem:[%s253 + $0x279] sm:$0xff] %vm15, %v238
    %304 = vst.msk [vmem:[%s253 + $0x289] sm:$0xff] %vm15, %v239
    %305 = vst.msk [vmem:[%s253 + $0x291] sm:$0xff] %vm15, %v240
    %306 = vst.msk [vmem:[%s253 + $0x2a1] sm:$0xff] %vm15, %v241
    %307 = vst.msk [vmem:[%s253 + $0x2a9] sm:$0xff] %vm15, %v242
    %308 = vst.msk [vmem:[%s253 + $0x2b9] sm:$0xff] %vm15, %v243
    %309 = vst.msk [vmem:[%s253 + $0x2c1] sm:$0xff] %vm15, %v244
    %310 = vst.msk [vmem:[%s253 + $0x2d1] sm:$0xff] %vm15, %v245
    %311 = vst.msk [vmem:[%s253 + $0x2d9] sm:$0xff] %vm15, %v246
    %312 = vst.msk [vmem:[%s253 + $0x2e9] sm:$0xff] %vm15, %v247
    %313 = vst.msk [vmem:[%s253 + $0x2f1] sm:$0xff] %vm15, %v248
    %314 = vst.msk [vmem:[%s253 + $0x301] sm:$0xff] %vm15, %v249
    %315 = vst.msk [vmem:[%s253 + $0x309] sm:$0xff] %vm15, %v250
    %316 = vst.msk [vmem:[%s253 + $0x319] sm:$0xff] %vm15, %v251
    %317 = vst.msk [vmem:[%s253 + $0x321] sm:$0xff] %vm15, %v252
    %v318 = vld [vmem:[#allocation2] sm:$0xff]
    %v319 = vld [vmem:[#allocation2 + $0x8] sm:$0xff]
    %v320 = vld [vmem:[#allocation2 + $0x10] sm:$0x3]
    %v321 = vld [vmem:[#allocation2 + $0x18] sm:$0xff]
    %v322 = vld [vmem:[#allocation2 + $0x20] sm:$0xff]
    %v323 = vld [vmem:[#allocation2 + $0x28] sm:$0x3]
    %v324 = vld [vmem:[#allocation2 + $0x30] sm:$0xff]
    %v325 = vld [vmem:[#allocation2 + $0x38] sm:$0xff]
    %v326 = vld [vmem:[#allocation2 + $0x40] sm:$0x3]
    %v327 = vld [vmem:[#allocation2 + $0x48] sm:$0xff]
    %v328 = vld [vmem:[#allocation2 + $0x50] sm:$0xff]
    %v329 = vld [vmem:[#allocation2 + $0x58] sm:$0x3]
    %v330 = vld [vmem:[#allocation2 + $0x60] sm:$0xff]
    %v331 = vld [vmem:[#allocation2 + $0x68] sm:$0xff]
    %v332 = vld [vmem:[#allocation2 + $0x70] sm:$0x3]
    %v333 = vld [vmem:[#allocation2 + $0x78] sm:$0xff]
    %v334 = vld [vmem:[#allocation2 + $0x80] sm:$0xff]
    %v335 = vld [vmem:[#allocation2 + $0x88] sm:$0x3]
    %v336 = vld [vmem:[#allocation2 + $0x90] sm:$0xff]
    %v337 = vld [vmem:[#allocation2 + $0x98] sm:$0xff]
    %v338 = vld [vmem:[#allocation2 + $0xa0] sm:$0x3]
    %v339 = vld [vmem:[#allocation2 + $0xa8] sm:$0xff]
    %v340 = vld [vmem:[#allocation2 + $0xb0] sm:$0xff]
    %v341 = vld [vmem:[#allocation2 + $0xb8] sm:$0x3]
    %v342 = vld [vmem:[#allocation2 + $0xc0] sm:$0xff]
    %v343 = vld [vmem:[#allocation2 + $0xc8] sm:$0xff]
    %v344 = vld [vmem:[#allocation2 + $0xd0] sm:$0x3]
    %v345 = vld [vmem:[#allocation2 + $0xd8] sm:$0xff]
    %v346 = vld [vmem:[#allocation2 + $0xe0] sm:$0xff]
    %v347 = vld [vmem:[#allocation2 + $0xe8] sm:$0x3]
    %v348 = vld [vmem:[#allocation2 + $0xf0] sm:$0xff]
    %v349 = vld [vmem:[#allocation2 + $0xf8] sm:$0xff]
    %v350 = vld [vmem:[#allocation2 + $0x100] sm:$0x3]
    %v351 = vld [vmem:[#allocation2 + $0x108] sm:$0xff]
    %v352 = vld [vmem:[#allocation2 + $0x110] sm:$0xff]
    %v353 = vld [vmem:[#allocation2 + $0x118] sm:$0x3]
    %v354 = vld [vmem:[#allocation2 + $0x120] sm:$0xff]
    %v355 = vld [vmem:[#allocation2 + $0x128] sm:$0xff]
    %v356 = vld [vmem:[#allocation2 + $0x130] sm:$0x3]
    %v357 = vld [vmem:[#allocation2 + $0x138] sm:$0xff]
    %v358 = vld [vmem:[#allocation2 + $0x140] sm:$0xff]
    %v359 = vld [vmem:[#allocation2 + $0x148] sm:$0x3]
    %v360 = vld [vmem:[#allocation2 + $0x150] sm:$0xff]
    %v361 = vld [vmem:[#allocation2 + $0x158] sm:$0xff]
    %v362 = vld [vmem:[#allocation2 + $0x160] sm:$0x3]
    %v363 = vld [vmem:[#allocation2 + $0x168] sm:$0xff]
    %v364 = vld [vmem:[#allocation2 + $0x170] sm:$0xff]
    %v365 = vld [vmem:[#allocation2 + $0x178] sm:$0x3]
    %v366 = vld [vmem:[#allocation2 + $0x180] sm:$0xff]
    %v367 = vld [vmem:[#allocation2 + $0x188] sm:$0xff]
    %v368 = vld [vmem:[#allocation2 + $0x190] sm:$0x3]
    %v369 = vld [vmem:[#allocation2 + $0x198] sm:$0xff]
    %v370 = vld [vmem:[#allocation2 + $0x1a0] sm:$0xff]
    %v371 = vld [vmem:[#allocation2 + $0x1a8] sm:$0x3]
    %v372 = vld [vmem:[#allocation2 + $0x1b0] sm:$0xff]
    %v373 = vld [vmem:[#allocation2 + $0x1b8] sm:$0xff]
    %v374 = vld [vmem:[#allocation2 + $0x1c0] sm:$0x3]
    %v375 = vld [vmem:[#allocation2 + $0x1c8] sm:$0xff]
    %v376 = vld [vmem:[#allocation2 + $0x1d0] sm:$0xff]
    %v377 = vld [vmem:[#allocation2 + $0x1d8] sm:$0x3]
    %v378 = vld [vmem:[#allocation2 + $0x1e0] sm:$0xff]
    %v379 = vld [vmem:[#allocation2 + $0x1e8] sm:$0xff]
    %v380 = vld [vmem:[#allocation2 + $0x1f0] sm:$0x3]
    %v381 = vld [vmem:[#allocation2 + $0x1f8] sm:$0xff]
    %v382 = vld [vmem:[#allocation2 + $0x200] sm:$0xff]
    %v383 = vld [vmem:[#allocation2 + $0x208] sm:$0x3]
    %v384 = vld [vmem:[#allocation2 + $0x210] sm:$0xff]
    %v385 = vld [vmem:[#allocation2 + $0x218] sm:$0xff]
    %v386 = vld [vmem:[#allocation2 + $0x220] sm:$0x3]
    %v387 = vld [vmem:[#allocation2 + $0x228] sm:$0xff]
    %v388 = vld [vmem:[#allocation2 + $0x230] sm:$0xff]
    %v389 = vld [vmem:[#allocation2 + $0x238] sm:$0x3]
    %v390 = vld [vmem:[#allocation2 + $0x240] sm:$0xff]
    %v391 = vld [vmem:[#allocation2 + $0x248] sm:$0xff]
    %v392 = vld [vmem:[#allocation2 + $0x250] sm:$0x3]
    %v393 = vld [vmem:[#allocation2 + $0x258] sm:$0xff]
    %v394 = vld [vmem:[#allocation2 + $0x260] sm:$0xff]
    %v395 = vld [vmem:[#allocation2 + $0x268] sm:$0x3]
    %v396 = vld [vmem:[#allocation2 + $0x270] sm:$0xff]
    %v397 = vld [vmem:[#allocation2 + $0x278] sm:$0xff]
    %v398 = vld [vmem:[#allocation2 + $0x280] sm:$0x3]
    %v399 = vld [vmem:[#allocation2 + $0x288] sm:$0xff]
    %v400 = vld [vmem:[#allocation2 + $0x290] sm:$0xff]
    %v401 = vld [vmem:[#allocation2 + $0x298] sm:$0x3]
    %v402 = vld [vmem:[#allocation2 + $0x2a0] sm:$0xff]
    %v403 = vld [vmem:[#allocation2 + $0x2a8] sm:$0xff]
    %v404 = vld [vmem:[#allocation2 + $0x2b0] sm:$0x3]
    %v405 = vld [vmem:[#allocation2 + $0x2b8] sm:$0xff]
    %v406 = vld [vmem:[#allocation2 + $0x2c0] sm:$0xff]
    %v407 = vld [vmem:[#allocation2 + $0x2c8] sm:$0x3]
    %v408 = vld [vmem:[#allocation2 + $0x2d0] sm:$0xff]
    %v409 = vld [vmem:[#allocation2 + $0x2d8] sm:$0xff]
    %v410 = vld [vmem:[#allocation2 + $0x2e0] sm:$0x3]
    %v411 = vld [vmem:[#allocation2 + $0x2e8] sm:$0xff]
    %v412 = vld [vmem:[#allocation2 + $0x2f0] sm:$0xff]
    %v413 = vld [vmem:[#allocation2 + $0x2f8] sm:$0x3]
    %v414 = vld [vmem:[#allocation2 + $0x300] sm:$0xff]
    %v415 = vld [vmem:[#allocation2 + $0x308] sm:$0xff]
    %v416 = vld [vmem:[#allocation2 + $0x310] sm:$0x3]
    %v417 = vld [vmem:[#allocation2 + $0x318] sm:$0xff]
    %v418 = vld [vmem:[#allocation2 + $0x320] sm:$0xff]
    %v419 = vld [vmem:[#allocation2 + $0x328] sm:$0x3]
    %v420 = vld [vmem:[#allocation2 + $0x330] sm:$0xff]
    %v421 = vld [vmem:[#allocation2 + $0x338] sm:$0xff]
    %v422 = vld [vmem:[#allocation2 + $0x340] sm:$0x3]
    %v423 = vld [vmem:[#allocation2 + $0x348] sm:$0xff]
    %v424 = vld [vmem:[#allocation2 + $0x350] sm:$0xff]
    %v425 = vld [vmem:[#allocation2 + $0x358] sm:$0x3]
    %v426 = vld [vmem:[%s1] sm:$0xff]
    %vm523 = vcmask 1046528
    %v524 = vrot.slane %v318, 1
    %v525 = vrot.slane %v319, 1
    %v526 = vsel %vm523, %v524, %v525
    %v527 = vrot.slane %v320, 1
    %v528 = vsel %vm523, %v525, %v527
    %v529 = vrot.slane %v321, 1
    %v530 = vrot.slane %v322, 1
    %v531 = vsel %vm523, %v529, %v530
    %v532 = vrot.slane %v323, 1
    %v533 = vsel %vm523, %v530, %v532
    %v534 = vrot.slane %v324, 1
    %v535 = vrot.slane %v325, 1
    %v536 = vsel %vm523, %v534, %v535
    %v537 = vrot.slane %v326, 1
    %v538 = vsel %vm523, %v535, %v537
    %v539 = vrot.slane %v327, 1
    %v540 = vrot.slane %v328, 1
    %v541 = vsel %vm523, %v539, %v540
    %v542 = vrot.slane %v329, 1
    %v543 = vsel %vm523, %v540, %v542
    %v544 = vrot.slane %v330, 1
    %v545 = vrot.slane %v331, 1
    %v546 = vsel %vm523, %v544, %v545
    %v547 = vrot.slane %v332, 1
    %v548 = vsel %vm523, %v545, %v547
    %v549 = vrot.slane %v333, 1
    %v550 = vrot.slane %v334, 1
    %v551 = vsel %vm523, %v549, %v550
    %v552 = vrot.slane %v335, 1
    %v553 = vsel %vm523, %v550, %v552
    %v554 = vrot.slane %v336, 1
    %v555 = vrot.slane %v337, 1
    %v556 = vsel %vm523, %v554, %v555
    %v557 = vrot.slane %v338, 1
    %v558 = vsel %vm523, %v555, %v557
    %v559 = vrot.slane %v339, 1
    %v560 = vrot.slane %v340, 1
    %v561 = vsel %vm523, %v559, %v560
    %v562 = vrot.slane %v341, 1
    %v563 = vsel %vm523, %v560, %v562
    %v564 = vrot.slane %v342, 1
    %v565 = vrot.slane %v343, 1
    %v566 = vsel %vm523, %v564, %v565
    %v567 = vrot.slane %v344, 1
    %v568 = vsel %vm523, %v565, %v567
    %v569 = vrot.slane %v345, 1
    %v570 = vrot.slane %v346, 1
    %v571 = vsel %vm523, %v569, %v570
    %v572 = vrot.slane %v347, 1
    %v573 = vsel %vm523, %v570, %v572
    %v574 = vrot.slane %v348, 1
    %v575 = vrot.slane %v349, 1
    %v576 = vsel %vm523, %v574, %v575
    %v577 = vrot.slane %v350, 1
    %v578 = vsel %vm523, %v575, %v577
    %v579 = vrot.slane %v351, 1
    %v580 = vrot.slane %v352, 1
    %v581 = vsel %vm523, %v579, %v580
    %v582 = vrot.slane %v353, 1
    %v583 = vsel %vm523, %v580, %v582
    %v584 = vrot.slane %v354, 1
    %v585 = vrot.slane %v355, 1
    %v586 = vsel %vm523, %v584, %v585
    %v587 = vrot.slane %v356, 1
    %v588 = vsel %vm523, %v585, %v587
    %v589 = vrot.slane %v357, 1
    %v590 = vrot.slane %v358, 1
    %v591 = vsel %vm523, %v589, %v590
    %v592 = vrot.slane %v359, 1
    %v593 = vsel %vm523, %v590, %v592
    %v594 = vrot.slane %v360, 1
    %v595 = vrot.slane %v361, 1
    %v596 = vsel %vm523, %v594, %v595
    %v597 = vrot.slane %v362, 1
    %v598 = vsel %vm523, %v595, %v597
    %v599 = vrot.slane %v363, 1
    %v600 = vrot.slane %v364, 1
    %v601 = vsel %vm523, %v599, %v600
    %v602 = vrot.slane %v365, 1
    %v603 = vsel %vm523, %v600, %v602
    %v604 = vrot.slane %v372, 1
    %v605 = vrot.slane %v373, 1
    %v606 = vsel %vm523, %v604, %v605
    %v607 = vrot.slane %v374, 1
    %v608 = vsel %vm523, %v605, %v607
    %v609 = vrot.slane %v375, 1
    %v610 = vrot.slane %v376, 1
    %v611 = vsel %vm523, %v609, %v610
    %v612 = vrot.slane %v377, 1
    %v613 = vsel %vm523, %v610, %v612
    %v614 = vrot.slane %v378, 1
    %v615 = vrot.slane %v379, 1
    %v616 = vsel %vm523, %v614, %v615
    %v617 = vrot.slane %v380, 1
    %v618 = vsel %vm523, %v615, %v617
    %v619 = vrot.slane %v381, 1
    %v620 = vrot.slane %v382, 1
    %v621 = vsel %vm523, %v619, %v620
    %v622 = vrot.slane %v383, 1
    %v623 = vsel %vm523, %v620, %v622
    %v624 = vrot.slane %v384, 1
    %v625 = vrot.slane %v385, 1
    %v626 = vsel %vm523, %v624, %v625
    %v627 = vrot.slane %v386, 1
    %v628 = vsel %vm523, %v625, %v627
    %v629 = vrot.slane %v387, 1
    %v630 = vrot.slane %v388, 1
    %v631 = vsel %vm523, %v629, %v630
    %v632 = vrot.slane %v389, 1
    %v633 = vsel %vm523, %v630, %v632
    %v634 = vrot.slane %v390, 1
    %v635 = vrot.slane %v391, 1
    %v636 = vsel %vm523, %v634, %v635
    %v637 = vrot.slane %v392, 1
    %v638 = vsel %vm523, %v635, %v637
    %v639 = vrot.slane %v393, 1
    %v640 = vrot.slane %v394, 1
    %v641 = vsel %vm523, %v639, %v640
    %v642 = vrot.slane %v395, 1
    %v643 = vsel %vm523, %v640, %v642
    %v644 = vrot.slane %v396, 1
    %v645 = vrot.slane %v397, 1
    %v646 = vsel %vm523, %v644, %v645
    %v647 = vrot.slane %v398, 1
    %v648 = vsel %vm523, %v645, %v647
    %v649 = vrot.slane %v399, 1
    %v650 = vrot.slane %v400, 1
    %v651 = vsel %vm523, %v649, %v650
    %v652 = vrot.slane %v401, 1
    %v653 = vsel %vm523, %v650, %v652
    %v654 = vrot.slane %v402, 1
    %v655 = vrot.slane %v403, 1
    %v656 = vsel %vm523, %v654, %v655
    %v657 = vrot.slane %v404, 1
    %v658 = vsel %vm523, %v655, %v657
    %v659 = vrot.slane %v405, 1
    %v660 = vrot.slane %v406, 1
    %v661 = vsel %vm523, %v659, %v660
    %v662 = vrot.slane %v407, 1
    %v663 = vsel %vm523, %v660, %v662
    %v664 = vrot.slane %v408, 1
    %v665 = vrot.slane %v409, 1
    %v666 = vsel %vm523, %v664, %v665
    %v667 = vrot.slane %v410, 1
    %v668 = vsel %vm523, %v665, %v667
    %v669 = vrot.slane %v411, 1
    %v670 = vrot.slane %v412, 1
    %v671 = vsel %vm523, %v669, %v670
    %v672 = vrot.slane %v413, 1
    %v673 = vsel %vm523, %v670, %v672
    %v674 = vrot.slane %v414, 1
    %v675 = vrot.slane %v415, 1
    %v676 = vsel %vm523, %v674, %v675
    %v677 = vrot.slane %v416, 1
    %v678 = vsel %vm523, %v675, %v677
    %v679 = vrot.slane %v417, 1
    %v680 = vrot.slane %v418, 1
    %v681 = vsel %vm523, %v679, %v680
    %v682 = vrot.slane %v419, 1
    %v683 = vsel %vm523, %v680, %v682
    %s684 = scalar_lea.vmem %s1, 8
    %v685 = vld [vmem:[%s684] sm:$0xff]
    %v686 = vsel %vm15, %v526, 0
    %v688 = vsel %vm15, %v528, 0
    %v690 = vsel %vm15, %v531, 0
    %v692 = vsel %vm15, %v533, 0
    %v694 = vsel %vm15, %v536, 0
    %v696 = vsel %vm15, %v538, 0
    %v698 = vsel %vm15, %v541, 0
    %v700 = vsel %vm15, %v543, 0
    %v702 = vsel %vm15, %v546, 0
    %v704 = vsel %vm15, %v548, 0
    %v706 = vsel %vm15, %v551, 0
    %v708 = vsel %vm15, %v553, 0
    %v710 = vsel %vm15, %v556, 0
    %v712 = vsel %vm15, %v558, 0
    %v714 = vsel %vm15, %v561, 0
    %v716 = vsel %vm15, %v563, 0
    %v718 = vsel %vm15, %v566, 0
    %v720 = vsel %vm15, %v568, 0
    %v722 = vsel %vm15, %v571, 0
    %v724 = vsel %vm15, %v573, 0
    %v726 = vsel %vm15, %v576, 0
    %v728 = vsel %vm15, %v578, 0
    %v730 = vsel %vm15, %v581, 0
    %v732 = vsel %vm15, %v583, 0
    %v734 = vsel %vm15, %v586, 0
    %v736 = vsel %vm15, %v588, 0
    %v738 = vsel %vm15, %v591, 0
    %v740 = vsel %vm15, %v593, 0
    %v742 = vsel %vm15, %v596, 0
    %v744 = vsel %vm15, %v598, 0
    %v746 = vsel %vm15, %v601, 0
    %v748 = vsel %vm15, %v603, 0
    %v750 = vsel %vm15, %v606, 0
    %v752 = vsel %vm15, %v608, 0
    %v754 = vsel %vm15, %v611, 0
    %v756 = vsel %vm15, %v613, 0
    %v758 = vsel %vm15, %v616, 0
    %v760 = vsel %vm15, %v618, 0
    %v762 = vsel %vm15, %v621, 0
    %v764 = vsel %vm15, %v623, 0
    %v766 = vsel %vm15, %v626, 0
    %v768 = vsel %vm15, %v628, 0
    %v770 = vsel %vm15, %v631, 0
    %v772 = vsel %vm15, %v633, 0
    %v774 = vsel %vm15, %v636, 0
    %v776 = vsel %vm15, %v638, 0
    %v778 = vsel %vm15, %v641, 0
    %v780 = vsel %vm15, %v643, 0
    %v782 = vsel %vm15, %v646, 0
    %v784 = vsel %vm15, %v648, 0
    %v786 = vsel %vm15, %v651, 0
    %v788 = vsel %vm15, %v653, 0
    %v790 = vsel %vm15, %v656, 0
    %v792 = vsel %vm15, %v658, 0
    %v794 = vsel %vm15, %v661, 0
    %v796 = vsel %vm15, %v663, 0
    %v798 = vsel %vm15, %v666, 0
    %v800 = vsel %vm15, %v668, 0
    %v802 = vsel %vm15, %v671, 0
    %v804 = vsel %vm15, %v673, 0
    %v806 = vsel %vm15, %v676, 0
    %v808 = vsel %vm15, %v678, 0
    %v810 = vsel %vm15, %v681, 0
    %v812 = vsel %vm15, %v683, 0
    %814 = vmatpush.msra.mxu0 0.0
    %815 = vmatpush.msra.mxu0 0.0
    %816 = vmatpush.msra.mxu0 0.0
    %817 = vmatpush.msra.mxu0 0.0
    %818 = vmatpush.msra.mxu0 0.0
    %819 = vmatpush.msra.mxu0 0.0
    %820 = vmatpush.msra.mxu0 0.0
    %821 = vmatpush.msra.mxu0 0.0
    %822 = vmatpush.msra.mxu0 0.0
    %823 = vmatpush.msra.mxu0 0.0
    %824 = vmatpush.msra.mxu0 0.0
    %825 = vmatpush.msra.mxu0 0.0
    %826 = vmatpush.msra.mxu0 0.0
    %827 = vmatpush.msra.mxu0 0.0
    %828 = vmatpush.msra.mxu0 0.0
    %829 = vmatpush.msra.mxu0 %v685
    %830 = vmatmul.f32.gmra.mxu0 %v686
    %v831 = vpop.f32.mrf.mxu0
    %v832 = vadd.f32 0.0, %v831
    %833 = vmatmul.f32.gmra.mxu0 %v688
    %v834 = vpop.f32.mrf.mxu0
    %v835 = vadd.f32 0.0, %v834
    %836 = vmatmul.f32.gmra.mxu0 %v690
    %v837 = vpop.f32.mrf.mxu0
    %v838 = vadd.f32 0.0, %v837
    %839 = vmatmul.f32.gmra.mxu0 %v692
    %v840 = vpop.f32.mrf.mxu0
    %v841 = vadd.f32 0.0, %v840
    %842 = vmatmul.f32.gmra.mxu0 %v694
    %v843 = vpop.f32.mrf.mxu0
    %v844 = vadd.f32 0.0, %v843
    %845 = vmatmul.f32.gmra.mxu0 %v696
    %v846 = vpop.f32.mrf.mxu0
    %v847 = vadd.f32 0.0, %v846
    %848 = vmatmul.f32.gmra.mxu0 %v698
    %v849 = vpop.f32.mrf.mxu0
    %v850 = vadd.f32 0.0, %v849
    %851 = vmatmul.f32.gmra.mxu0 %v700
    %v852 = vpop.f32.mrf.mxu0
    %v853 = vadd.f32 0.0, %v852
    %854 = vmatmul.f32.gmra.mxu0 %v702
    %v855 = vpop.f32.mrf.mxu0
    %v856 = vadd.f32 0.0, %v855
    %857 = vmatmul.f32.gmra.mxu0 %v704
    %v858 = vpop.f32.mrf.mxu0
    %v859 = vadd.f32 0.0, %v858
    %860 = vmatmul.f32.gmra.mxu0 %v706
    %v861 = vpop.f32.mrf.mxu0
    %v862 = vadd.f32 0.0, %v861
    %863 = vmatmul.f32.gmra.mxu0 %v708
    %v864 = vpop.f32.mrf.mxu0
    %v865 = vadd.f32 0.0, %v864
    %866 = vmatmul.f32.gmra.mxu0 %v710
    %v867 = vpop.f32.mrf.mxu0
    %v868 = vadd.f32 0.0, %v867
    %869 = vmatmul.f32.gmra.mxu0 %v712
    %v870 = vpop.f32.mrf.mxu0
    %v871 = vadd.f32 0.0, %v870
    %872 = vmatmul.f32.gmra.mxu0 %v714
    %v873 = vpop.f32.mrf.mxu0
    %v874 = vadd.f32 0.0, %v873
    %875 = vmatmul.f32.gmra.mxu0 %v716
    %v876 = vpop.f32.mrf.mxu0
    %v877 = vadd.f32 0.0, %v876
    %878 = vmatmul.f32.gmra.mxu0 %v718
    %v879 = vpop.f32.mrf.mxu0
    %v880 = vadd.f32 0.0, %v879
    %881 = vmatmul.f32.gmra.mxu0 %v720
    %v882 = vpop.f32.mrf.mxu0
    %v883 = vadd.f32 0.0, %v882
    %884 = vmatmul.f32.gmra.mxu0 %v722
    %v885 = vpop.f32.mrf.mxu0
    %v886 = vadd.f32 0.0, %v885
    %887 = vmatmul.f32.gmra.mxu0 %v724
    %v888 = vpop.f32.mrf.mxu0
    %v889 = vadd.f32 0.0, %v888
    %890 = vmatmul.f32.gmra.mxu0 %v726
    %v891 = vpop.f32.mrf.mxu0
    %v892 = vadd.f32 0.0, %v891
    %893 = vmatmul.f32.gmra.mxu0 %v728
    %v894 = vpop.f32.mrf.mxu0
    %v895 = vadd.f32 0.0, %v894
    %896 = vmatmul.f32.gmra.mxu0 %v730
    %v897 = vpop.f32.mrf.mxu0
    %v898 = vadd.f32 0.0, %v897
    %899 = vmatmul.f32.gmra.mxu0 %v732
    %v900 = vpop.f32.mrf.mxu0
    %v901 = vadd.f32 0.0, %v900
    %902 = vmatmul.f32.gmra.mxu0 %v734
    %v903 = vpop.f32.mrf.mxu0
    %v904 = vadd.f32 0.0, %v903
    %905 = vmatmul.f32.gmra.mxu0 %v736
    %v906 = vpop.f32.mrf.mxu0
    %v907 = vadd.f32 0.0, %v906
    %908 = vmatmul.f32.gmra.mxu0 %v738
    %v909 = vpop.f32.mrf.mxu0
    %v910 = vadd.f32 0.0, %v909
    %911 = vmatmul.f32.gmra.mxu0 %v740
    %v912 = vpop.f32.mrf.mxu0
    %v913 = vadd.f32 0.0, %v912
    %914 = vmatmul.f32.gmra.mxu0 %v742
    %v915 = vpop.f32.mrf.mxu0
    %v916 = vadd.f32 0.0, %v915
    %917 = vmatmul.f32.gmra.mxu0 %v744
    %v918 = vpop.f32.mrf.mxu0
    %v919 = vadd.f32 0.0, %v918
    %920 = vmatmul.f32.gmra.mxu0 %v746
    %v921 = vpop.f32.mrf.mxu0
    %v922 = vadd.f32 0.0, %v921
    %923 = vmatmul.f32.gmra.mxu0 %v748
    %v924 = vpop.f32.mrf.mxu0
    %v925 = vadd.f32 0.0, %v924
    %926 = vmatmul.f32.gmra.mxu0 %v750
    %v927 = vpop.f32.mrf.mxu0
    %v928 = vadd.f32 0.0, %v927
    %929 = vmatmul.f32.gmra.mxu0 %v752
    %v930 = vpop.f32.mrf.mxu0
    %v931 = vadd.f32 0.0, %v930
    %932 = vmatmul.f32.gmra.mxu0 %v754
    %v933 = vpop.f32.mrf.mxu0
    %v934 = vadd.f32 0.0, %v933
    %935 = vmatmul.f32.gmra.mxu0 %v756
    %v936 = vpop.f32.mrf.mxu0
    %v937 = vadd.f32 0.0, %v936
    %938 = vmatmul.f32.gmra.mxu0 %v758
    %v939 = vpop.f32.mrf.mxu0
    %v940 = vadd.f32 0.0, %v939
    %941 = vmatmul.f32.gmra.mxu0 %v760
    %v942 = vpop.f32.mrf.mxu0
    %v943 = vadd.f32 0.0, %v942
    %944 = vmatmul.f32.gmra.mxu0 %v762
    %v945 = vpop.f32.mrf.mxu0
    %v946 = vadd.f32 0.0, %v945
    %947 = vmatmul.f32.gmra.mxu0 %v764
    %v948 = vpop.f32.mrf.mxu0
    %v949 = vadd.f32 0.0, %v948
    %950 = vmatmul.f32.gmra.mxu0 %v766
    %v951 = vpop.f32.mrf.mxu0
    %v952 = vadd.f32 0.0, %v951
    %953 = vmatmul.f32.gmra.mxu0 %v768
    %v954 = vpop.f32.mrf.mxu0
    %v955 = vadd.f32 0.0, %v954
    %956 = vmatmul.f32.gmra.mxu0 %v770
    %v957 = vpop.f32.mrf.mxu0
    %v958 = vadd.f32 0.0, %v957
    %959 = vmatmul.f32.gmra.mxu0 %v772
    %v960 = vpop.f32.mrf.mxu0
    %v961 = vadd.f32 0.0, %v960
    %962 = vmatmul.f32.gmra.mxu0 %v774
    %v963 = vpop.f32.mrf.mxu0
    %v964 = vadd.f32 0.0, %v963
    %965 = vmatmul.f32.gmra.mxu0 %v776
    %v966 = vpop.f32.mrf.mxu0
    %v967 = vadd.f32 0.0, %v966
    %968 = vmatmul.f32.gmra.mxu0 %v778
    %v969 = vpop.f32.mrf.mxu0
    %v970 = vadd.f32 0.0, %v969
    %971 = vmatmul.f32.gmra.mxu0 %v780
    %v972 = vpop.f32.mrf.mxu0
    %v973 = vadd.f32 0.0, %v972
    %974 = vmatmul.f32.gmra.mxu0 %v782
    %v975 = vpop.f32.mrf.mxu0
    %v976 = vadd.f32 0.0, %v975
    %977 = vmatmul.f32.gmra.mxu0 %v784
    %v978 = vpop.f32.mrf.mxu0
    %v979 = vadd.f32 0.0, %v978
    %980 = vmatmul.f32.gmra.mxu0 %v786
    %v981 = vpop.f32.mrf.mxu0
    %v982 = vadd.f32 0.0, %v981
    %983 = vmatmul.f32.gmra.mxu0 %v788
    %v984 = vpop.f32.mrf.mxu0
    %v985 = vadd.f32 0.0, %v984
    %986 = vmatmul.f32.gmra.mxu0 %v790
    %v987 = vpop.f32.mrf.mxu0
    %v988 = vadd.f32 0.0, %v987
    %989 = vmatmul.f32.gmra.mxu0 %v792
    %v990 = vpop.f32.mrf.mxu0
    %v991 = vadd.f32 0.0, %v990
    %992 = vmatmul.f32.gmra.mxu0 %v794
    %v993 = vpop.f32.mrf.mxu0
    %v994 = vadd.f32 0.0, %v993
    %995 = vmatmul.f32.gmra.mxu0 %v796
    %v996 = vpop.f32.mrf.mxu0
    %v997 = vadd.f32 0.0, %v996
    %998 = vmatmul.f32.gmra.mxu0 %v798
    %v999 = vpop.f32.mrf.mxu0
    %v1000 = vadd.f32 0.0, %v999
    %1001 = vmatmul.f32.gmra.mxu0 %v800
    %v1002 = vpop.f32.mrf.mxu0
    %v1003 = vadd.f32 0.0, %v1002
    %1004 = vmatmul.f32.gmra.mxu0 %v802
    %v1005 = vpop.f32.mrf.mxu0
    %v1006 = vadd.f32 0.0, %v1005
    %1007 = vmatmul.f32.gmra.mxu0 %v804
    %v1008 = vpop.f32.mrf.mxu0
    %v1009 = vadd.f32 0.0, %v1008
    %1010 = vmatmul.f32.gmra.mxu0 %v806
    %v1011 = vpop.f32.mrf.mxu0
    %v1012 = vadd.f32 0.0, %v1011
    %1013 = vmatmul.f32.gmra.mxu0 %v808
    %v1014 = vpop.f32.mrf.mxu0
    %v1015 = vadd.f32 0.0, %v1014
    %1016 = vmatmul.f32.gmra.mxu0 %v810
    %v1017 = vpop.f32.mrf.mxu0
    %v1018 = vadd.f32 0.0, %v1017
    %1019 = vmatmul.f32.gmra.mxu0 %v812
    %v1020 = vpop.f32.mrf.mxu0
    %v1021 = vadd.f32 0.0, %v1020
    %1022 = vdwg.mxu0
    %v1023 = vsel %vm15, %v318, 0
    %v1025 = vsel %vm15, %v319, 0
    %v1027 = vsel %vm15, %v321, 0
    %v1029 = vsel %vm15, %v322, 0
    %v1031 = vsel %vm15, %v324, 0
    %v1033 = vsel %vm15, %v325, 0
    %v1035 = vsel %vm15, %v327, 0
    %v1037 = vsel %vm15, %v328, 0
    %v1039 = vsel %vm15, %v330, 0
    %v1041 = vsel %vm15, %v331, 0
    %v1043 = vsel %vm15, %v333, 0
    %v1045 = vsel %vm15, %v334, 0
    %v1047 = vsel %vm15, %v336, 0
    %v1049 = vsel %vm15, %v337, 0
    %v1051 = vsel %vm15, %v339, 0
    %v1053 = vsel %vm15, %v340, 0
    %v1055 = vsel %vm15, %v342, 0
    %v1057 = vsel %vm15, %v343, 0
    %v1059 = vsel %vm15, %v345, 0
    %v1061 = vsel %vm15, %v346, 0
    %v1063 = vsel %vm15, %v348, 0
    %v1065 = vsel %vm15, %v349, 0
    %v1067 = vsel %vm15, %v351, 0
    %v1069 = vsel %vm15, %v352, 0
    %v1071 = vsel %vm15, %v354, 0
    %v1073 = vsel %vm15, %v355, 0
    %v1075 = vsel %vm15, %v357, 0
    %v1077 = vsel %vm15, %v358, 0
    %v1079 = vsel %vm15, %v360, 0
    %v1081 = vsel %vm15, %v361, 0
    %v1083 = vsel %vm15, %v363, 0
    %v1085 = vsel %vm15, %v364, 0
    %v1087 = vsel %vm15, %v372, 0
    %v1089 = vsel %vm15, %v373, 0
    %v1091 = vsel %vm15, %v375, 0
    %v1093 = vsel %vm15, %v376, 0
    %v1095 = vsel %vm15, %v378, 0
    %v1097 = vsel %vm15, %v379, 0
    %v1099 = vsel %vm15, %v381, 0
    %v1101 = vsel %vm15, %v382, 0
    %v1103 = vsel %vm15, %v384, 0
    %v1105 = vsel %vm15, %v385, 0
    %v1107 = vsel %vm15, %v387, 0
    %v1109 = vsel %vm15, %v388, 0
    %v1111 = vsel %vm15, %v390, 0
    %v1113 = vsel %vm15, %v391, 0
    %v1115 = vsel %vm15, %v393, 0
    %v1117 = vsel %vm15, %v394, 0
    %v1119 = vsel %vm15, %v396, 0
    %v1121 = vsel %vm15, %v397, 0
    %v1123 = vsel %vm15, %v399, 0
    %v1125 = vsel %vm15, %v400, 0
    %v1127 = vsel %vm15, %v402, 0
    %v1129 = vsel %vm15, %v403, 0
    %v1131 = vsel %vm15, %v405, 0
    %v1133 = vsel %vm15, %v406, 0
    %v1135 = vsel %vm15, %v408, 0
    %v1137 = vsel %vm15, %v409, 0
    %v1139 = vsel %vm15, %v411, 0
    %v1141 = vsel %vm15, %v412, 0
    %v1143 = vsel %vm15, %v414, 0
    %v1145 = vsel %vm15, %v415, 0
    %v1147 = vsel %vm15, %v417, 0
    %v1149 = vsel %vm15, %v418, 0
    %1151 = vmatpush.msra.mxu0 0.0
    %1152 = vmatpush.msra.mxu0 0.0
    %1153 = vmatpush.msra.mxu0 0.0
    %1154 = vmatpush.msra.mxu0 0.0
    %1155 = vmatpush.msra.mxu0 0.0
    %1156 = vmatpush.msra.mxu0 0.0
    %1157 = vmatpush.msra.mxu0 0.0
    %1158 = vmatpush.msra.mxu0 0.0
    %1159 = vmatpush.msra.mxu0 0.0
    %1160 = vmatpush.msra.mxu0 0.0
    %1161 = vmatpush.msra.mxu0 0.0
    %1162 = vmatpush.msra.mxu0 0.0
    %1163 = vmatpush.msra.mxu0 0.0
    %1164 = vmatpush.msra.mxu0 0.0
    %1165 = vmatpush.msra.mxu0 0.0
    %1166 = vmatpush.msra.mxu0 %v426
    %1167 = vmatmul.f32.gmra.mxu0 %v1023
    %v1168 = vpop.f32.mrf.mxu0
    %v1169 = vadd.f32 %v832, %v1168
    %1170 = vmatmul.f32.gmra.mxu0 %v1025
    %v1171 = vpop.f32.mrf.mxu0
    %v1172 = vadd.f32 %v835, %v1171
    %1173 = vmatmul.f32.gmra.mxu0 %v1027
    %v1174 = vpop.f32.mrf.mxu0
    %v1175 = vadd.f32 %v838, %v1174
    %1176 = vmatmul.f32.gmra.mxu0 %v1029
    %v1177 = vpop.f32.mrf.mxu0
    %v1178 = vadd.f32 %v841, %v1177
    %1179 = vmatmul.f32.gmra.mxu0 %v1031
    %v1180 = vpop.f32.mrf.mxu0
    %v1181 = vadd.f32 %v844, %v1180
    %1182 = vmatmul.f32.gmra.mxu0 %v1033
    %v1183 = vpop.f32.mrf.mxu0
    %v1184 = vadd.f32 %v847, %v1183
    %1185 = vmatmul.f32.gmra.mxu0 %v1035
    %v1186 = vpop.f32.mrf.mxu0
    %v1187 = vadd.f32 %v850, %v1186
    %1188 = vmatmul.f32.gmra.mxu0 %v1037
    %v1189 = vpop.f32.mrf.mxu0
    %v1190 = vadd.f32 %v853, %v1189
    %1191 = vmatmul.f32.gmra.mxu0 %v1039
    %v1192 = vpop.f32.mrf.mxu0
    %v1193 = vadd.f32 %v856, %v1192
    %1194 = vmatmul.f32.gmra.mxu0 %v1041
    %v1195 = vpop.f32.mrf.mxu0
    %v1196 = vadd.f32 %v859, %v1195
    %1197 = vmatmul.f32.gmra.mxu0 %v1043
    %v1198 = vpop.f32.mrf.mxu0
    %v1199 = vadd.f32 %v862, %v1198
    %1200 = vmatmul.f32.gmra.mxu0 %v1045
    %v1201 = vpop.f32.mrf.mxu0
    %v1202 = vadd.f32 %v865, %v1201
    %1203 = vmatmul.f32.gmra.mxu0 %v1047
    %v1204 = vpop.f32.mrf.mxu0
    %v1205 = vadd.f32 %v868, %v1204
    %1206 = vmatmul.f32.gmra.mxu0 %v1049
    %v1207 = vpop.f32.mrf.mxu0
    %v1208 = vadd.f32 %v871, %v1207
    %1209 = vmatmul.f32.gmra.mxu0 %v1051
    %v1210 = vpop.f32.mrf.mxu0
    %v1211 = vadd.f32 %v874, %v1210
    %1212 = vmatmul.f32.gmra.mxu0 %v1053
    %v1213 = vpop.f32.mrf.mxu0
    %v1214 = vadd.f32 %v877, %v1213
    %1215 = vmatmul.f32.gmra.mxu0 %v1055
    %v1216 = vpop.f32.mrf.mxu0
    %v1217 = vadd.f32 %v880, %v1216
    %1218 = vmatmul.f32.gmra.mxu0 %v1057
    %v1219 = vpop.f32.mrf.mxu0
    %v1220 = vadd.f32 %v883, %v1219
    %1221 = vmatmul.f32.gmra.mxu0 %v1059
    %v1222 = vpop.f32.mrf.mxu0
    %v1223 = vadd.f32 %v886, %v1222
    %1224 = vmatmul.f32.gmra.mxu0 %v1061
    %v1225 = vpop.f32.mrf.mxu0
    %v1226 = vadd.f32 %v889, %v1225
    %1227 = vmatmul.f32.gmra.mxu0 %v1063
    %v1228 = vpop.f32.mrf.mxu0
    %v1229 = vadd.f32 %v892, %v1228
    %1230 = vmatmul.f32.gmra.mxu0 %v1065
    %v1231 = vpop.f32.mrf.mxu0
    %v1232 = vadd.f32 %v895, %v1231
    %1233 = vmatmul.f32.gmra.mxu0 %v1067
    %v1234 = vpop.f32.mrf.mxu0
    %v1235 = vadd.f32 %v898, %v1234
    %1236 = vmatmul.f32.gmra.mxu0 %v1069
    %v1237 = vpop.f32.mrf.mxu0
    %v1238 = vadd.f32 %v901, %v1237
    %1239 = vmatmul.f32.gmra.mxu0 %v1071
    %v1240 = vpop.f32.mrf.mxu0
    %v1241 = vadd.f32 %v904, %v1240
    %1242 = vmatmul.f32.gmra.mxu0 %v1073
    %v1243 = vpop.f32.mrf.mxu0
    %v1244 = vadd.f32 %v907, %v1243
    %1245 = vmatmul.f32.gmra.mxu0 %v1075
    %v1246 = vpop.f32.mrf.mxu0
    %v1247 = vadd.f32 %v910, %v1246
    %1248 = vmatmul.f32.gmra.mxu0 %v1077
    %v1249 = vpop.f32.mrf.mxu0
    %v1250 = vadd.f32 %v913, %v1249
    %1251 = vmatmul.f32.gmra.mxu0 %v1079
    %v1252 = vpop.f32.mrf.mxu0
    %v1253 = vadd.f32 %v916, %v1252
    %1254 = vmatmul.f32.gmra.mxu0 %v1081
    %v1255 = vpop.f32.mrf.mxu0
    %v1256 = vadd.f32 %v919, %v1255
    %1257 = vmatmul.f32.gmra.mxu0 %v1083
    %v1258 = vpop.f32.mrf.mxu0
    %v1259 = vadd.f32 %v922, %v1258
    %1260 = vmatmul.f32.gmra.mxu0 %v1085
    %v1261 = vpop.f32.mrf.mxu0
    %v1262 = vadd.f32 %v925, %v1261
    %1263 = vmatmul.f32.gmra.mxu0 %v1087
    %v1264 = vpop.f32.mrf.mxu0
    %v1265 = vadd.f32 %v928, %v1264
    %1266 = vmatmul.f32.gmra.mxu0 %v1089
    %v1267 = vpop.f32.mrf.mxu0
    %v1268 = vadd.f32 %v931, %v1267
    %1269 = vmatmul.f32.gmra.mxu0 %v1091
    %v1270 = vpop.f32.mrf.mxu0
    %v1271 = vadd.f32 %v934, %v1270
    %1272 = vmatmul.f32.gmra.mxu0 %v1093
    %v1273 = vpop.f32.mrf.mxu0
    %v1274 = vadd.f32 %v937, %v1273
    %1275 = vmatmul.f32.gmra.mxu0 %v1095
    %v1276 = vpop.f32.mrf.mxu0
    %v1277 = vadd.f32 %v940, %v1276
    %1278 = vmatmul.f32.gmra.mxu0 %v1097
    %v1279 = vpop.f32.mrf.mxu0
    %v1280 = vadd.f32 %v943, %v1279
    %1281 = vmatmul.f32.gmra.mxu0 %v1099
    %v1282 = vpop.f32.mrf.mxu0
    %v1283 = vadd.f32 %v946, %v1282
    %1284 = vmatmul.f32.gmra.mxu0 %v1101
    %v1285 = vpop.f32.mrf.mxu0
    %v1286 = vadd.f32 %v949, %v1285
    %1287 = vmatmul.f32.gmra.mxu0 %v1103
    %v1288 = vpop.f32.mrf.mxu0
    %v1289 = vadd.f32 %v952, %v1288
    %1290 = vmatmul.f32.gmra.mxu0 %v1105
    %v1291 = vpop.f32.mrf.mxu0
    %v1292 = vadd.f32 %v955, %v1291
    %1293 = vmatmul.f32.gmra.mxu0 %v1107
    %v1294 = vpop.f32.mrf.mxu0
    %v1295 = vadd.f32 %v958, %v1294
    %1296 = vmatmul.f32.gmra.mxu0 %v1109
    %v1297 = vpop.f32.mrf.mxu0
    %v1298 = vadd.f32 %v961, %v1297
    %1299 = vmatmul.f32.gmra.mxu0 %v1111
    %v1300 = vpop.f32.mrf.mxu0
    %v1301 = vadd.f32 %v964, %v1300
    %1302 = vmatmul.f32.gmra.mxu0 %v1113
    %v1303 = vpop.f32.mrf.mxu0
    %v1304 = vadd.f32 %v967, %v1303
    %1305 = vmatmul.f32.gmra.mxu0 %v1115
    %v1306 = vpop.f32.mrf.mxu0
    %v1307 = vadd.f32 %v970, %v1306
    %1308 = vmatmul.f32.gmra.mxu0 %v1117
    %v1309 = vpop.f32.mrf.mxu0
    %v1310 = vadd.f32 %v973, %v1309
    %1311 = vmatmul.f32.gmra.mxu0 %v1119
    %v1312 = vpop.f32.mrf.mxu0
    %v1313 = vadd.f32 %v976, %v1312
    %1314 = vmatmul.f32.gmra.mxu0 %v1121
    %v1315 = vpop.f32.mrf.mxu0
    %v1316 = vadd.f32 %v979, %v1315
    %1317 = vmatmul.f32.gmra.mxu0 %v1123
    %v1318 = vpop.f32.mrf.mxu0
    %v1319 = vadd.f32 %v982, %v1318
    %1320 = vmatmul.f32.gmra.mxu0 %v1125
    %v1321 = vpop.f32.mrf.mxu0
    %v1322 = vadd.f32 %v985, %v1321
    %1323 = vmatmul.f32.gmra.mxu0 %v1127
    %v1324 = vpop.f32.mrf.mxu0
    %v1325 = vadd.f32 %v988, %v1324
    %1326 = vmatmul.f32.gmra.mxu0 %v1129
    %v1327 = vpop.f32.mrf.mxu0
    %v1328 = vadd.f32 %v991, %v1327
    %1329 = vmatmul.f32.gmra.mxu0 %v1131
    %v1330 = vpop.f32.mrf.mxu0
    %v1331 = vadd.f32 %v994, %v1330
    %1332 = vmatmul.f32.gmra.mxu0 %v1133
    %v1333 = vpop.f32.mrf.mxu0
    %v1334 = vadd.f32 %v997, %v1333
    %1335 = vmatmul.f32.gmra.mxu0 %v1135
    %v1336 = vpop.f32.mrf.mxu0
    %v1337 = vadd.f32 %v1000, %v1336
    %1338 = vmatmul.f32.gmra.mxu0 %v1137
    %v1339 = vpop.f32.mrf.mxu0
    %v1340 = vadd.f32 %v1003, %v1339
    %1341 = vmatmul.f32.gmra.mxu0 %v1139
    %v1342 = vpop.f32.mrf.mxu0
    %v1343 = vadd.f32 %v1006, %v1342
    %1344 = vmatmul.f32.gmra.mxu0 %v1141
    %v1345 = vpop.f32.mrf.mxu0
    %v1346 = vadd.f32 %v1009, %v1345
    %1347 = vmatmul.f32.gmra.mxu0 %v1143
    %v1348 = vpop.f32.mrf.mxu0
    %v1349 = vadd.f32 %v1012, %v1348
    %1350 = vmatmul.f32.gmra.mxu0 %v1145
    %v1351 = vpop.f32.mrf.mxu0
    %v1352 = vadd.f32 %v1015, %v1351
    %1353 = vmatmul.f32.gmra.mxu0 %v1147
    %v1354 = vpop.f32.mrf.mxu0
    %v1355 = vadd.f32 %v1018, %v1354
    %1356 = vmatmul.f32.gmra.mxu0 %v1149
    %v1357 = vpop.f32.mrf.mxu0
    %v1358 = vadd.f32 %v1021, %v1357
    %1359 = vdwg.mxu0
    %vm1360 = vcmask 1045504
    %v1361 = vrot.slane %v318, 2
    %v1362 = vrot.slane %v319, 2
    %v1363 = vsel %vm1360, %v1361, %v1362
    %v1364 = vrot.slane %v320, 2
    %v1365 = vsel %vm1360, %v1362, %v1364
    %v1366 = vrot.slane %v321, 2
    %v1367 = vrot.slane %v322, 2
    %v1368 = vsel %vm1360, %v1366, %v1367
    %v1369 = vrot.slane %v323, 2
    %v1370 = vsel %vm1360, %v1367, %v1369
    %v1371 = vrot.slane %v324, 2
    %v1372 = vrot.slane %v325, 2
    %v1373 = vsel %vm1360, %v1371, %v1372
    %v1374 = vrot.slane %v326, 2
    %v1375 = vsel %vm1360, %v1372, %v1374
    %v1376 = vrot.slane %v327, 2
    %v1377 = vrot.slane %v328, 2
    %v1378 = vsel %vm1360, %v1376, %v1377
    %v1379 = vrot.slane %v329, 2
    %v1380 = vsel %vm1360, %v1377, %v1379
    %v1381 = vrot.slane %v330, 2
    %v1382 = vrot.slane %v331, 2
    %v1383 = vsel %vm1360, %v1381, %v1382
    %v1384 = vrot.slane %v332, 2
    %v1385 = vsel %vm1360, %v1382, %v1384
    %v1386 = vrot.slane %v333, 2
    %v1387 = vrot.slane %v334, 2
    %v1388 = vsel %vm1360, %v1386, %v1387
    %v1389 = vrot.slane %v335, 2
    %v1390 = vsel %vm1360, %v1387, %v1389
    %v1391 = vrot.slane %v336, 2
    %v1392 = vrot.slane %v337, 2
    %v1393 = vsel %vm1360, %v1391, %v1392
    %v1394 = vrot.slane %v338, 2
    %v1395 = vsel %vm1360, %v1392, %v1394
    %v1396 = vrot.slane %v339, 2
    %v1397 = vrot.slane %v340, 2
    %v1398 = vsel %vm1360, %v1396, %v1397
    %v1399 = vrot.slane %v341, 2
    %v1400 = vsel %vm1360, %v1397, %v1399
    %v1401 = vrot.slane %v342, 2
    %v1402 = vrot.slane %v343, 2
    %v1403 = vsel %vm1360, %v1401, %v1402
    %v1404 = vrot.slane %v344, 2
    %v1405 = vsel %vm1360, %v1402, %v1404
    %v1406 = vrot.slane %v345, 2
    %v1407 = vrot.slane %v346, 2
    %v1408 = vsel %vm1360, %v1406, %v1407
    %v1409 = vrot.slane %v347, 2
    %v1410 = vsel %vm1360, %v1407, %v1409
    %v1411 = vrot.slane %v348, 2
    %v1412 = vrot.slane %v349, 2
    %v1413 = vsel %vm1360, %v1411, %v1412
    %v1414 = vrot.slane %v350, 2
    %v1415 = vsel %vm1360, %v1412, %v1414
    %v1416 = vrot.slane %v351, 2
    %v1417 = vrot.slane %v352, 2
    %v1418 = vsel %vm1360, %v1416, %v1417
    %v1419 = vrot.slane %v353, 2
    %v1420 = vsel %vm1360, %v1417, %v1419
    %v1421 = vrot.slane %v354, 2
    %v1422 = vrot.slane %v355, 2
    %v1423 = vsel %vm1360, %v1421, %v1422
    %v1424 = vrot.slane %v356, 2
    %v1425 = vsel %vm1360, %v1422, %v1424
    %v1426 = vrot.slane %v357, 2
    %v1427 = vrot.slane %v358, 2
    %v1428 = vsel %vm1360, %v1426, %v1427
    %v1429 = vrot.slane %v359, 2
    %v1430 = vsel %vm1360, %v1427, %v1429
    %v1431 = vrot.slane %v360, 2
    %v1432 = vrot.slane %v361, 2
    %v1433 = vsel %vm1360, %v1431, %v1432
    %v1434 = vrot.slane %v362, 2
    %v1435 = vsel %vm1360, %v1432, %v1434
    %v1436 = vrot.slane %v363, 2
    %v1437 = vrot.slane %v364, 2
    %v1438 = vsel %vm1360, %v1436, %v1437
    %v1439 = vrot.slane %v365, 2
    %v1440 = vsel %vm1360, %v1437, %v1439
    %v1441 = vrot.slane %v372, 2
    %v1442 = vrot.slane %v373, 2
    %v1443 = vsel %vm1360, %v1441, %v1442
    %v1444 = vrot.slane %v374, 2
    %v1445 = vsel %vm1360, %v1442, %v1444
    %v1446 = vrot.slane %v375, 2
    %v1447 = vrot.slane %v376, 2
    %v1448 = vsel %vm1360, %v1446, %v1447
    %v1449 = vrot.slane %v377, 2
    %v1450 = vsel %vm1360, %v1447, %v1449
    %v1451 = vrot.slane %v378, 2
    %v1452 = vrot.slane %v379, 2
    %v1453 = vsel %vm1360, %v1451, %v1452
    %v1454 = vrot.slane %v380, 2
    %v1455 = vsel %vm1360, %v1452, %v1454
    %v1456 = vrot.slane %v381, 2
    %v1457 = vrot.slane %v382, 2
    %v1458 = vsel %vm1360, %v1456, %v1457
    %v1459 = vrot.slane %v383, 2
    %v1460 = vsel %vm1360, %v1457, %v1459
    %v1461 = vrot.slane %v384, 2
    %v1462 = vrot.slane %v385, 2
    %v1463 = vsel %vm1360, %v1461, %v1462
    %v1464 = vrot.slane %v386, 2
    %v1465 = vsel %vm1360, %v1462, %v1464
    %v1466 = vrot.slane %v387, 2
    %v1467 = vrot.slane %v388, 2
    %v1468 = vsel %vm1360, %v1466, %v1467
    %v1469 = vrot.slane %v389, 2
    %v1470 = vsel %vm1360, %v1467, %v1469
    %v1471 = vrot.slane %v390, 2
    %v1472 = vrot.slane %v391, 2
    %v1473 = vsel %vm1360, %v1471, %v1472
    %v1474 = vrot.slane %v392, 2
    %v1475 = vsel %vm1360, %v1472, %v1474
    %v1476 = vrot.slane %v393, 2
    %v1477 = vrot.slane %v394, 2
    %v1478 = vsel %vm1360, %v1476, %v1477
    %v1479 = vrot.slane %v395, 2
    %v1480 = vsel %vm1360, %v1477, %v1479
    %v1481 = vrot.slane %v396, 2
    %v1482 = vrot.slane %v397, 2
    %v1483 = vsel %vm1360, %v1481, %v1482
    %v1484 = vrot.slane %v398, 2
    %v1485 = vsel %vm1360, %v1482, %v1484
    %v1486 = vrot.slane %v399, 2
    %v1487 = vrot.slane %v400, 2
    %v1488 = vsel %vm1360, %v1486, %v1487
    %v1489 = vrot.slane %v401, 2
    %v1490 = vsel %vm1360, %v1487, %v1489
    %v1491 = vrot.slane %v402, 2
    %v1492 = vrot.slane %v403, 2
    %v1493 = vsel %vm1360, %v1491, %v1492
    %v1494 = vrot.slane %v404, 2
    %v1495 = vsel %vm1360, %v1492, %v1494
    %v1496 = vrot.slane %v405, 2
    %v1497 = vrot.slane %v406, 2
    %v1498 = vsel %vm1360, %v1496, %v1497
    %v1499 = vrot.slane %v407, 2
    %v1500 = vsel %vm1360, %v1497, %v1499
    %v1501 = vrot.slane %v408, 2
    %v1502 = vrot.slane %v409, 2
    %v1503 = vsel %vm1360, %v1501, %v1502
    %v1504 = vrot.slane %v410, 2
    %v1505 = vsel %vm1360, %v1502, %v1504
    %v1506 = vrot.slane %v411, 2
    %v1507 = vrot.slane %v412, 2
    %v1508 = vsel %vm1360, %v1506, %v1507
    %v1509 = vrot.slane %v413, 2
    %v1510 = vsel %vm1360, %v1507, %v1509
    %v1511 = vrot.slane %v414, 2
    %v1512 = vrot.slane %v415, 2
    %v1513 = vsel %vm1360, %v1511, %v1512
    %v1514 = vrot.slane %v416, 2
    %v1515 = vsel %vm1360, %v1512, %v1514
    %v1516 = vrot.slane %v417, 2
    %v1517 = vrot.slane %v418, 2
    %v1518 = vsel %vm1360, %v1516, %v1517
    %v1519 = vrot.slane %v419, 2
    %v1520 = vsel %vm1360, %v1517, %v1519
    %s1521 = scalar_lea.vmem %s1, 16
    %v1522 = vld [vmem:[%s1521] sm:$0xff]
    %v1523 = vsel %vm15, %v1363, 0
    %v1525 = vsel %vm15, %v1365, 0
    %v1527 = vsel %vm15, %v1368, 0
    %v1529 = vsel %vm15, %v1370, 0
    %v1531 = vsel %vm15, %v1373, 0
    %v1533 = vsel %vm15, %v1375, 0
    %v1535 = vsel %vm15, %v1378, 0
    %v1537 = vsel %vm15, %v1380, 0
    %v1539 = vsel %vm15, %v1383, 0
    %v1541 = vsel %vm15, %v1385, 0
    %v1543 = vsel %vm15, %v1388, 0
    %v1545 = vsel %vm15, %v1390, 0
    %v1547 = vsel %vm15, %v1393, 0
    %v1549 = vsel %vm15, %v1395, 0
    %v1551 = vsel %vm15, %v1398, 0
    %v1553 = vsel %vm15, %v1400, 0
    %v1555 = vsel %vm15, %v1403, 0
    %v1557 = vsel %vm15, %v1405, 0
    %v1559 = vsel %vm15, %v1408, 0
    %v1561 = vsel %vm15, %v1410, 0
    %v1563 = vsel %vm15, %v1413, 0
    %v1565 = vsel %vm15, %v1415, 0
    %v1567 = vsel %vm15, %v1418, 0
    %v1569 = vsel %vm15, %v1420, 0
    %v1571 = vsel %vm15, %v1423, 0
    %v1573 = vsel %vm15, %v1425, 0
    %v1575 = vsel %vm15, %v1428, 0
    %v1577 = vsel %vm15, %v1430, 0
    %v1579 = vsel %vm15, %v1433, 0
    %v1581 = vsel %vm15, %v1435, 0
    %v1583 = vsel %vm15, %v1438, 0
    %v1585 = vsel %vm15, %v1440, 0
    %v1587 = vsel %vm15, %v1443, 0
    %v1589 = vsel %vm15, %v1445, 0
    %v1591 = vsel %vm15, %v1448, 0
    %v1593 = vsel %vm15, %v1450, 0
    %v1595 = vsel %vm15, %v1453, 0
    %v1597 = vsel %vm15, %v1455, 0
    %v1599 = vsel %vm15, %v1458, 0
    %v1601 = vsel %vm15, %v1460, 0
    %v1603 = vsel %vm15, %v1463, 0
    %v1605 = vsel %vm15, %v1465, 0
    %v1607 = vsel %vm15, %v1468, 0
    %v1609 = vsel %vm15, %v1470, 0
    %v1611 = vsel %vm15, %v1473, 0
    %v1613 = vsel %vm15, %v1475, 0
    %v1615 = vsel %vm15, %v1478, 0
    %v1617 = vsel %vm15, %v1480, 0
    %v1619 = vsel %vm15, %v1483, 0
    %v1621 = vsel %vm15, %v1485, 0
    %v1623 = vsel %vm15, %v1488, 0
    %v1625 = vsel %vm15, %v1490, 0
    %v1627 = vsel %vm15, %v1493, 0
    %v1629 = vsel %vm15, %v1495, 0
    %v1631 = vsel %vm15, %v1498, 0
    %v1633 = vsel %vm15, %v1500, 0
    %v1635 = vsel %vm15, %v1503, 0
    %v1637 = vsel %vm15, %v1505, 0
    %v1639 = vsel %vm15, %v1508, 0
    %v1641 = vsel %vm15, %v1510, 0
    %v1643 = vsel %vm15, %v1513, 0
    %v1645 = vsel %vm15, %v1515, 0
    %v1647 = vsel %vm15, %v1518, 0
    %v1649 = vsel %vm15, %v1520, 0
    %1651 = vmatpush.msra.mxu0 0.0
    %1652 = vmatpush.msra.mxu0 0.0
    %1653 = vmatpush.msra.mxu0 0.0
    %1654 = vmatpush.msra.mxu0 0.0
    %1655 = vmatpush.msra.mxu0 0.0
    %1656 = vmatpush.msra.mxu0 0.0
    %1657 = vmatpush.msra.mxu0 0.0
    %1658 = vmatpush.msra.mxu0 0.0
    %1659 = vmatpush.msra.mxu0 0.0
    %1660 = vmatpush.msra.mxu0 0.0
    %1661 = vmatpush.msra.mxu0 0.0
    %1662 = vmatpush.msra.mxu0 0.0
    %1663 = vmatpush.msra.mxu0 0.0
    %1664 = vmatpush.msra.mxu0 0.0
    %1665 = vmatpush.msra.mxu0 0.0
    %1666 = vmatpush.msra.mxu0 %v1522
    %1667 = vmatmul.f32.gmra.mxu0 %v1523
    %v1668 = vpop.f32.mrf.mxu0
    %v1669 = vadd.f32 0.0, %v1668
    %1670 = vmatmul.f32.gmra.mxu0 %v1525
    %v1671 = vpop.f32.mrf.mxu0
    %v1672 = vadd.f32 0.0, %v1671
    %1673 = vmatmul.f32.gmra.mxu0 %v1527
    %v1674 = vpop.f32.mrf.mxu0
    %v1675 = vadd.f32 0.0, %v1674
    %1676 = vmatmul.f32.gmra.mxu0 %v1529
    %v1677 = vpop.f32.mrf.mxu0
    %v1678 = vadd.f32 0.0, %v1677
    %1679 = vmatmul.f32.gmra.mxu0 %v1531
    %v1680 = vpop.f32.mrf.mxu0
    %v1681 = vadd.f32 0.0, %v1680
    %1682 = vmatmul.f32.gmra.mxu0 %v1533
    %v1683 = vpop.f32.mrf.mxu0
    %v1684 = vadd.f32 0.0, %v1683
    %1685 = vmatmul.f32.gmra.mxu0 %v1535
    %v1686 = vpop.f32.mrf.mxu0
    %v1687 = vadd.f32 0.0, %v1686
    %1688 = vmatmul.f32.gmra.mxu0 %v1537
    %v1689 = vpop.f32.mrf.mxu0
    %v1690 = vadd.f32 0.0, %v1689
    %1691 = vmatmul.f32.gmra.mxu0 %v1539
    %v1692 = vpop.f32.mrf.mxu0
    %v1693 = vadd.f32 0.0, %v1692
    %1694 = vmatmul.f32.gmra.mxu0 %v1541
    %v1695 = vpop.f32.mrf.mxu0
    %v1696 = vadd.f32 0.0, %v1695
    %1697 = vmatmul.f32.gmra.mxu0 %v1543
    %v1698 = vpop.f32.mrf.mxu0
    %v1699 = vadd.f32 0.0, %v1698
    %1700 = vmatmul.f32.gmra.mxu0 %v1545
    %v1701 = vpop.f32.mrf.mxu0
    %v1702 = vadd.f32 0.0, %v1701
    %1703 = vmatmul.f32.gmra.mxu0 %v1547
    %v1704 = vpop.f32.mrf.mxu0
    %v1705 = vadd.f32 0.0, %v1704
    %1706 = vmatmul.f32.gmra.mxu0 %v1549
    %v1707 = vpop.f32.mrf.mxu0
    %v1708 = vadd.f32 0.0, %v1707
    %1709 = vmatmul.f32.gmra.mxu0 %v1551
    %v1710 = vpop.f32.mrf.mxu0
    %v1711 = vadd.f32 0.0, %v1710
    %1712 = vmatmul.f32.gmra.mxu0 %v1553
    %v1713 = vpop.f32.mrf.mxu0
    %v1714 = vadd.f32 0.0, %v1713
    %1715 = vmatmul.f32.gmra.mxu0 %v1555
    %v1716 = vpop.f32.mrf.mxu0
    %v1717 = vadd.f32 0.0, %v1716
    %1718 = vmatmul.f32.gmra.mxu0 %v1557
    %v1719 = vpop.f32.mrf.mxu0
    %v1720 = vadd.f32 0.0, %v1719
    %1721 = vmatmul.f32.gmra.mxu0 %v1559
    %v1722 = vpop.f32.mrf.mxu0
    %v1723 = vadd.f32 0.0, %v1722
    %1724 = vmatmul.f32.gmra.mxu0 %v1561
    %v1725 = vpop.f32.mrf.mxu0
    %v1726 = vadd.f32 0.0, %v1725
    %1727 = vmatmul.f32.gmra.mxu0 %v1563
    %v1728 = vpop.f32.mrf.mxu0
    %v1729 = vadd.f32 0.0, %v1728
    %1730 = vmatmul.f32.gmra.mxu0 %v1565
    %v1731 = vpop.f32.mrf.mxu0
    %v1732 = vadd.f32 0.0, %v1731
    %1733 = vmatmul.f32.gmra.mxu0 %v1567
    %v1734 = vpop.f32.mrf.mxu0
    %v1735 = vadd.f32 0.0, %v1734
    %1736 = vmatmul.f32.gmra.mxu0 %v1569
    %v1737 = vpop.f32.mrf.mxu0
    %v1738 = vadd.f32 0.0, %v1737
    %1739 = vmatmul.f32.gmra.mxu0 %v1571
    %v1740 = vpop.f32.mrf.mxu0
    %v1741 = vadd.f32 0.0, %v1740
    %1742 = vmatmul.f32.gmra.mxu0 %v1573
    %v1743 = vpop.f32.mrf.mxu0
    %v1744 = vadd.f32 0.0, %v1743
    %1745 = vmatmul.f32.gmra.mxu0 %v1575
    %v1746 = vpop.f32.mrf.mxu0
    %v1747 = vadd.f32 0.0, %v1746
    %1748 = vmatmul.f32.gmra.mxu0 %v1577
    %v1749 = vpop.f32.mrf.mxu0
    %v1750 = vadd.f32 0.0, %v1749
    %1751 = vmatmul.f32.gmra.mxu0 %v1579
    %v1752 = vpop.f32.mrf.mxu0
    %v1753 = vadd.f32 0.0, %v1752
    %1754 = vmatmul.f32.gmra.mxu0 %v1581
    %v1755 = vpop.f32.mrf.mxu0
    %v1756 = vadd.f32 0.0, %v1755
    %1757 = vmatmul.f32.gmra.mxu0 %v1583
    %v1758 = vpop.f32.mrf.mxu0
    %v1759 = vadd.f32 0.0, %v1758
    %1760 = vmatmul.f32.gmra.mxu0 %v1585
    %v1761 = vpop.f32.mrf.mxu0
    %v1762 = vadd.f32 0.0, %v1761
    %1763 = vmatmul.f32.gmra.mxu0 %v1587
    %v1764 = vpop.f32.mrf.mxu0
    %v1765 = vadd.f32 0.0, %v1764
    %1766 = vmatmul.f32.gmra.mxu0 %v1589
    %v1767 = vpop.f32.mrf.mxu0
    %v1768 = vadd.f32 0.0, %v1767
    %1769 = vmatmul.f32.gmra.mxu0 %v1591
    %v1770 = vpop.f32.mrf.mxu0
    %v1771 = vadd.f32 0.0, %v1770
    %1772 = vmatmul.f32.gmra.mxu0 %v1593
    %v1773 = vpop.f32.mrf.mxu0
    %v1774 = vadd.f32 0.0, %v1773
    %1775 = vmatmul.f32.gmra.mxu0 %v1595
    %v1776 = vpop.f32.mrf.mxu0
    %v1777 = vadd.f32 0.0, %v1776
    %1778 = vmatmul.f32.gmra.mxu0 %v1597
    %v1779 = vpop.f32.mrf.mxu0
    %v1780 = vadd.f32 0.0, %v1779
    %1781 = vmatmul.f32.gmra.mxu0 %v1599
    %v1782 = vpop.f32.mrf.mxu0
    %v1783 = vadd.f32 0.0, %v1782
    %1784 = vmatmul.f32.gmra.mxu0 %v1601
    %v1785 = vpop.f32.mrf.mxu0
    %v1786 = vadd.f32 0.0, %v1785
    %1787 = vmatmul.f32.gmra.mxu0 %v1603
    %v1788 = vpop.f32.mrf.mxu0
    %v1789 = vadd.f32 0.0, %v1788
    %1790 = vmatmul.f32.gmra.mxu0 %v1605
    %v1791 = vpop.f32.mrf.mxu0
    %v1792 = vadd.f32 0.0, %v1791
    %1793 = vmatmul.f32.gmra.mxu0 %v1607
    %v1794 = vpop.f32.mrf.mxu0
    %v1795 = vadd.f32 0.0, %v1794
    %1796 = vmatmul.f32.gmra.mxu0 %v1609
    %v1797 = vpop.f32.mrf.mxu0
    %v1798 = vadd.f32 0.0, %v1797
    %1799 = vmatmul.f32.gmra.mxu0 %v1611
    %v1800 = vpop.f32.mrf.mxu0
    %v1801 = vadd.f32 0.0, %v1800
    %1802 = vmatmul.f32.gmra.mxu0 %v1613
    %v1803 = vpop.f32.mrf.mxu0
    %v1804 = vadd.f32 0.0, %v1803
    %1805 = vmatmul.f32.gmra.mxu0 %v1615
    %v1806 = vpop.f32.mrf.mxu0
    %v1807 = vadd.f32 0.0, %v1806
    %1808 = vmatmul.f32.gmra.mxu0 %v1617
    %v1809 = vpop.f32.mrf.mxu0
    %v1810 = vadd.f32 0.0, %v1809
    %1811 = vmatmul.f32.gmra.mxu0 %v1619
    %v1812 = vpop.f32.mrf.mxu0
    %v1813 = vadd.f32 0.0, %v1812
    %1814 = vmatmul.f32.gmra.mxu0 %v1621
    %v1815 = vpop.f32.mrf.mxu0
    %v1816 = vadd.f32 0.0, %v1815
    %1817 = vmatmul.f32.gmra.mxu0 %v1623
    %v1818 = vpop.f32.mrf.mxu0
    %v1819 = vadd.f32 0.0, %v1818
    %1820 = vmatmul.f32.gmra.mxu0 %v1625
    %v1821 = vpop.f32.mrf.mxu0
    %v1822 = vadd.f32 0.0, %v1821
    %1823 = vmatmul.f32.gmra.mxu0 %v1627
    %v1824 = vpop.f32.mrf.mxu0
    %v1825 = vadd.f32 0.0, %v1824
    %1826 = vmatmul.f32.gmra.mxu0 %v1629
    %v1827 = vpop.f32.mrf.mxu0
    %v1828 = vadd.f32 0.0, %v1827
    %1829 = vmatmul.f32.gmra.mxu0 %v1631
    %v1830 = vpop.f32.mrf.mxu0
    %v1831 = vadd.f32 0.0, %v1830
    %1832 = vmatmul.f32.gmra.mxu0 %v1633
    %v1833 = vpop.f32.mrf.mxu0
    %v1834 = vadd.f32 0.0, %v1833
    %1835 = vmatmul.f32.gmra.mxu0 %v1635
    %v1836 = vpop.f32.mrf.mxu0
    %v1837 = vadd.f32 0.0, %v1836
    %1838 = vmatmul.f32.gmra.mxu0 %v1637
    %v1839 = vpop.f32.mrf.mxu0
    %v1840 = vadd.f32 0.0, %v1839
    %1841 = vmatmul.f32.gmra.mxu0 %v1639
    %v1842 = vpop.f32.mrf.mxu0
    %v1843 = vadd.f32 0.0, %v1842
    %1844 = vmatmul.f32.gmra.mxu0 %v1641
    %v1845 = vpop.f32.mrf.mxu0
    %v1846 = vadd.f32 0.0, %v1845
    %1847 = vmatmul.f32.gmra.mxu0 %v1643
    %v1848 = vpop.f32.mrf.mxu0
    %v1849 = vadd.f32 0.0, %v1848
    %1850 = vmatmul.f32.gmra.mxu0 %v1645
    %v1851 = vpop.f32.mrf.mxu0
    %v1852 = vadd.f32 0.0, %v1851
    %1853 = vmatmul.f32.gmra.mxu0 %v1647
    %v1854 = vpop.f32.mrf.mxu0
    %v1855 = vadd.f32 0.0, %v1854
    %1856 = vmatmul.f32.gmra.mxu0 %v1649
    %v1857 = vpop.f32.mrf.mxu0
    %v1858 = vadd.f32 0.0, %v1857
    %1859 = vdwg.mxu0
    %v1860 = vadd.f32 %v1169, %v1669
    %v1861 = vadd.f32 %v1172, %v1672
    %v1862 = vadd.f32 %v1175, %v1675
    %v1863 = vadd.f32 %v1178, %v1678
    %v1864 = vadd.f32 %v1181, %v1681
    %v1865 = vadd.f32 %v1184, %v1684
    %v1866 = vadd.f32 %v1187, %v1687
    %v1867 = vadd.f32 %v1190, %v1690
    %v1868 = vadd.f32 %v1193, %v1693
    %v1869 = vadd.f32 %v1196, %v1696
    %v1870 = vadd.f32 %v1199, %v1699
    %v1871 = vadd.f32 %v1202, %v1702
    %v1872 = vadd.f32 %v1205, %v1705
    %v1873 = vadd.f32 %v1208, %v1708
    %v1874 = vadd.f32 %v1211, %v1711
    %v1875 = vadd.f32 %v1214, %v1714
    %v1876 = vadd.f32 %v1217, %v1717
    %v1877 = vadd.f32 %v1220, %v1720
    %v1878 = vadd.f32 %v1223, %v1723
    %v1879 = vadd.f32 %v1226, %v1726
    %v1880 = vadd.f32 %v1229, %v1729
    %v1881 = vadd.f32 %v1232, %v1732
    %v1882 = vadd.f32 %v1235, %v1735
    %v1883 = vadd.f32 %v1238, %v1738
    %v1884 = vadd.f32 %v1241, %v1741
    %v1885 = vadd.f32 %v1244, %v1744
    %v1886 = vadd.f32 %v1247, %v1747
    %v1887 = vadd.f32 %v1250, %v1750
    %v1888 = vadd.f32 %v1253, %v1753
    %v1889 = vadd.f32 %v1256, %v1756
    %v1890 = vadd.f32 %v1259, %v1759
    %v1891 = vadd.f32 %v1262, %v1762
    %v1892 = vadd.f32 %v1265, %v1765
    %v1893 = vadd.f32 %v1268, %v1768
    %v1894 = vadd.f32 %v1271, %v1771
    %v1895 = vadd.f32 %v1274, %v1774
    %v1896 = vadd.f32 %v1277, %v1777
    %v1897 = vadd.f32 %v1280, %v1780
    %v1898 = vadd.f32 %v1283, %v1783
    %v1899 = vadd.f32 %v1286, %v1786
    %v1900 = vadd.f32 %v1289, %v1789
    %v1901 = vadd.f32 %v1292, %v1792
    %v1902 = vadd.f32 %v1295, %v1795
    %v1903 = vadd.f32 %v1298, %v1798
    %v1904 = vadd.f32 %v1301, %v1801
    %v1905 = vadd.f32 %v1304, %v1804
    %v1906 = vadd.f32 %v1307, %v1807
    %v1907 = vadd.f32 %v1310, %v1810
    %v1908 = vadd.f32 %v1313, %v1813
    %v1909 = vadd.f32 %v1316, %v1816
    %v1910 = vadd.f32 %v1319, %v1819
    %v1911 = vadd.f32 %v1322, %v1822
    %v1912 = vadd.f32 %v1325, %v1825
    %v1913 = vadd.f32 %v1328, %v1828
    %v1914 = vadd.f32 %v1331, %v1831
    %v1915 = vadd.f32 %v1334, %v1834
    %v1916 = vadd.f32 %v1337, %v1837
    %v1917 = vadd.f32 %v1340, %v1840
    %v1918 = vadd.f32 %v1343, %v1843
    %v1919 = vadd.f32 %v1346, %v1846
    %v1920 = vadd.f32 %v1349, %v1849
    %v1921 = vadd.f32 %v1352, %v1852
    %v1922 = vadd.f32 %v1355, %v1855
    %v1923 = vadd.f32 %v1358, %v1858
    %s1924 = scalar_lea.vmem %s1, 24
    %v1925 = vld [vmem:[%s1924] sm:$0xff]
    %v1927 = vsel %vm15, %v366, 0
    %v1930 = vsel %vm15, %v367, 0
    %v1933 = vsel %vm15, %v420, 0
    %v1936 = vsel %vm15, %v421, 0
    %1938 = vmatpush.msra.mxu0 0.0
    %1939 = vmatpush.msra.mxu0 0.0
    %1940 = vmatpush.msra.mxu0 0.0
    %1941 = vmatpush.msra.mxu0 0.0
    %1942 = vmatpush.msra.mxu0 0.0
    %1943 = vmatpush.msra.mxu0 0.0
    %1944 = vmatpush.msra.mxu0 0.0
    %1945 = vmatpush.msra.mxu0 0.0
    %1946 = vmatpush.msra.mxu0 0.0
    %1947 = vmatpush.msra.mxu0 0.0
    %1948 = vmatpush.msra.mxu0 0.0
    %1949 = vmatpush.msra.mxu0 0.0
    %1950 = vmatpush.msra.mxu0 0.0
    %1951 = vmatpush.msra.mxu0 0.0
    %1952 = vmatpush.msra.mxu0 0.0
    %1953 = vmatpush.msra.mxu0 %v1925
    %1954 = vmatmul.f32.gmra.mxu0 %v1027
    %v1955 = vpop.f32.mrf.mxu0
    %v1956 = vadd.f32 0.0, %v1955
    %1957 = vmatmul.f32.gmra.mxu0 %v1029
    %v1958 = vpop.f32.mrf.mxu0
    %v1959 = vadd.f32 0.0, %v1958
    %1960 = vmatmul.f32.gmra.mxu0 %v1031
    %v1961 = vpop.f32.mrf.mxu0
    %v1962 = vadd.f32 0.0, %v1961
    %1963 = vmatmul.f32.gmra.mxu0 %v1033
    %v1964 = vpop.f32.mrf.mxu0
    %v1965 = vadd.f32 0.0, %v1964
    %1966 = vmatmul.f32.gmra.mxu0 %v1035
    %v1967 = vpop.f32.mrf.mxu0
    %v1968 = vadd.f32 0.0, %v1967
    %1969 = vmatmul.f32.gmra.mxu0 %v1037
    %v1970 = vpop.f32.mrf.mxu0
    %v1971 = vadd.f32 0.0, %v1970
    %1972 = vmatmul.f32.gmra.mxu0 %v1039
    %v1973 = vpop.f32.mrf.mxu0
    %v1974 = vadd.f32 0.0, %v1973
    %1975 = vmatmul.f32.gmra.mxu0 %v1041
    %v1976 = vpop.f32.mrf.mxu0
    %v1977 = vadd.f32 0.0, %v1976
    %1978 = vmatmul.f32.gmra.mxu0 %v1043
    %v1979 = vpop.f32.mrf.mxu0
    %v1980 = vadd.f32 0.0, %v1979
    %1981 = vmatmul.f32.gmra.mxu0 %v1045
    %v1982 = vpop.f32.mrf.mxu0
    %v1983 = vadd.f32 0.0, %v1982
    %1984 = vmatmul.f32.gmra.mxu0 %v1047
    %v1985 = vpop.f32.mrf.mxu0
    %v1986 = vadd.f32 0.0, %v1985
    %1987 = vmatmul.f32.gmra.mxu0 %v1049
    %v1988 = vpop.f32.mrf.mxu0
    %v1989 = vadd.f32 0.0, %v1988
    %1990 = vmatmul.f32.gmra.mxu0 %v1051
    %v1991 = vpop.f32.mrf.mxu0
    %v1992 = vadd.f32 0.0, %v1991
    %1993 = vmatmul.f32.gmra.mxu0 %v1053
    %v1994 = vpop.f32.mrf.mxu0
    %v1995 = vadd.f32 0.0, %v1994
    %1996 = vmatmul.f32.gmra.mxu0 %v1055
    %v1997 = vpop.f32.mrf.mxu0
    %v1998 = vadd.f32 0.0, %v1997
    %1999 = vmatmul.f32.gmra.mxu0 %v1057
    %v2000 = vpop.f32.mrf.mxu0
    %v2001 = vadd.f32 0.0, %v2000
    %2002 = vmatmul.f32.gmra.mxu0 %v1059
    %v2003 = vpop.f32.mrf.mxu0
    %v2004 = vadd.f32 0.0, %v2003
    %2005 = vmatmul.f32.gmra.mxu0 %v1061
    %v2006 = vpop.f32.mrf.mxu0
    %v2007 = vadd.f32 0.0, %v2006
    %2008 = vmatmul.f32.gmra.mxu0 %v1063
    %v2009 = vpop.f32.mrf.mxu0
    %v2010 = vadd.f32 0.0, %v2009
    %2011 = vmatmul.f32.gmra.mxu0 %v1065
    %v2012 = vpop.f32.mrf.mxu0
    %v2013 = vadd.f32 0.0, %v2012
    %2014 = vmatmul.f32.gmra.mxu0 %v1067
    %v2015 = vpop.f32.mrf.mxu0
    %v2016 = vadd.f32 0.0, %v2015
    %2017 = vmatmul.f32.gmra.mxu0 %v1069
    %v2018 = vpop.f32.mrf.mxu0
    %v2019 = vadd.f32 0.0, %v2018
    %2020 = vmatmul.f32.gmra.mxu0 %v1071
    %v2021 = vpop.f32.mrf.mxu0
    %v2022 = vadd.f32 0.0, %v2021
    %2023 = vmatmul.f32.gmra.mxu0 %v1073
    %v2024 = vpop.f32.mrf.mxu0
    %v2025 = vadd.f32 0.0, %v2024
    %2026 = vmatmul.f32.gmra.mxu0 %v1075
    %v2027 = vpop.f32.mrf.mxu0
    %v2028 = vadd.f32 0.0, %v2027
    %2029 = vmatmul.f32.gmra.mxu0 %v1077
    %v2030 = vpop.f32.mrf.mxu0
    %v2031 = vadd.f32 0.0, %v2030
    %2032 = vmatmul.f32.gmra.mxu0 %v1079
    %v2033 = vpop.f32.mrf.mxu0
    %v2034 = vadd.f32 0.0, %v2033
    %2035 = vmatmul.f32.gmra.mxu0 %v1081
    %v2036 = vpop.f32.mrf.mxu0
    %v2037 = vadd.f32 0.0, %v2036
    %2038 = vmatmul.f32.gmra.mxu0 %v1083
    %v2039 = vpop.f32.mrf.mxu0
    %v2040 = vadd.f32 0.0, %v2039
    %2041 = vmatmul.f32.gmra.mxu0 %v1085
    %v2042 = vpop.f32.mrf.mxu0
    %v2043 = vadd.f32 0.0, %v2042
    %2044 = vmatmul.f32.gmra.mxu0 %v1927
    %v2045 = vpop.f32.mrf.mxu0
    %v2046 = vadd.f32 0.0, %v2045
    %2047 = vmatmul.f32.gmra.mxu0 %v1930
    %v2048 = vpop.f32.mrf.mxu0
    %v2049 = vadd.f32 0.0, %v2048
    %2050 = vmatmul.f32.gmra.mxu0 %v1091
    %v2051 = vpop.f32.mrf.mxu0
    %v2052 = vadd.f32 0.0, %v2051
    %2053 = vmatmul.f32.gmra.mxu0 %v1093
    %v2054 = vpop.f32.mrf.mxu0
    %v2055 = vadd.f32 0.0, %v2054
    %2056 = vmatmul.f32.gmra.mxu0 %v1095
    %v2057 = vpop.f32.mrf.mxu0
    %v2058 = vadd.f32 0.0, %v2057
    %2059 = vmatmul.f32.gmra.mxu0 %v1097
    %v2060 = vpop.f32.mrf.mxu0
    %v2061 = vadd.f32 0.0, %v2060
    %2062 = vmatmul.f32.gmra.mxu0 %v1099
    %v2063 = vpop.f32.mrf.mxu0
    %v2064 = vadd.f32 0.0, %v2063
    %2065 = vmatmul.f32.gmra.mxu0 %v1101
    %v2066 = vpop.f32.mrf.mxu0
    %v2067 = vadd.f32 0.0, %v2066
    %2068 = vmatmul.f32.gmra.mxu0 %v1103
    %v2069 = vpop.f32.mrf.mxu0
    %v2070 = vadd.f32 0.0, %v2069
    %2071 = vmatmul.f32.gmra.mxu0 %v1105
    %v2072 = vpop.f32.mrf.mxu0
    %v2073 = vadd.f32 0.0, %v2072
    %2074 = vmatmul.f32.gmra.mxu0 %v1107
    %v2075 = vpop.f32.mrf.mxu0
    %v2076 = vadd.f32 0.0, %v2075
    %2077 = vmatmul.f32.gmra.mxu0 %v1109
    %v2078 = vpop.f32.mrf.mxu0
    %v2079 = vadd.f32 0.0, %v2078
    %2080 = vmatmul.f32.gmra.mxu0 %v1111
    %v2081 = vpop.f32.mrf.mxu0
    %v2082 = vadd.f32 0.0, %v2081
    %2083 = vmatmul.f32.gmra.mxu0 %v1113
    %v2084 = vpop.f32.mrf.mxu0
    %v2085 = vadd.f32 0.0, %v2084
    %2086 = vmatmul.f32.gmra.mxu0 %v1115
    %v2087 = vpop.f32.mrf.mxu0
    %v2088 = vadd.f32 0.0, %v2087
    %2089 = vmatmul.f32.gmra.mxu0 %v1117
    %v2090 = vpop.f32.mrf.mxu0
    %v2091 = vadd.f32 0.0, %v2090
    %2092 = vmatmul.f32.gmra.mxu0 %v1119
    %v2093 = vpop.f32.mrf.mxu0
    %v2094 = vadd.f32 0.0, %v2093
    %2095 = vmatmul.f32.gmra.mxu0 %v1121
    %v2096 = vpop.f32.mrf.mxu0
    %v2097 = vadd.f32 0.0, %v2096
    %2098 = vmatmul.f32.gmra.mxu0 %v1123
    %v2099 = vpop.f32.mrf.mxu0
    %v2100 = vadd.f32 0.0, %v2099
    %2101 = vmatmul.f32.gmra.mxu0 %v1125
    %v2102 = vpop.f32.mrf.mxu0
    %v2103 = vadd.f32 0.0, %v2102
    %2104 = vmatmul.f32.gmra.mxu0 %v1127
    %v2105 = vpop.f32.mrf.mxu0
    %v2106 = vadd.f32 0.0, %v2105
    %2107 = vmatmul.f32.gmra.mxu0 %v1129
    %v2108 = vpop.f32.mrf.mxu0
    %v2109 = vadd.f32 0.0, %v2108
    %2110 = vmatmul.f32.gmra.mxu0 %v1131
    %v2111 = vpop.f32.mrf.mxu0
    %v2112 = vadd.f32 0.0, %v2111
    %2113 = vmatmul.f32.gmra.mxu0 %v1133
    %v2114 = vpop.f32.mrf.mxu0
    %v2115 = vadd.f32 0.0, %v2114
    %2116 = vmatmul.f32.gmra.mxu0 %v1135
    %v2117 = vpop.f32.mrf.mxu0
    %v2118 = vadd.f32 0.0, %v2117
    %2119 = vmatmul.f32.gmra.mxu0 %v1137
    %v2120 = vpop.f32.mrf.mxu0
    %v2121 = vadd.f32 0.0, %v2120
    %2122 = vmatmul.f32.gmra.mxu0 %v1139
    %v2123 = vpop.f32.mrf.mxu0
    %v2124 = vadd.f32 0.0, %v2123
    %2125 = vmatmul.f32.gmra.mxu0 %v1141
    %v2126 = vpop.f32.mrf.mxu0
    %v2127 = vadd.f32 0.0, %v2126
    %2128 = vmatmul.f32.gmra.mxu0 %v1143
    %v2129 = vpop.f32.mrf.mxu0
    %v2130 = vadd.f32 0.0, %v2129
    %2131 = vmatmul.f32.gmra.mxu0 %v1145
    %v2132 = vpop.f32.mrf.mxu0
    %v2133 = vadd.f32 0.0, %v2132
    %2134 = vmatmul.f32.gmra.mxu0 %v1147
    %v2135 = vpop.f32.mrf.mxu0
    %v2136 = vadd.f32 0.0, %v2135
    %2137 = vmatmul.f32.gmra.mxu0 %v1149
    %v2138 = vpop.f32.mrf.mxu0
    %v2139 = vadd.f32 0.0, %v2138
    %2140 = vmatmul.f32.gmra.mxu0 %v1933
    %v2141 = vpop.f32.mrf.mxu0
    %v2142 = vadd.f32 0.0, %v2141
    %2143 = vmatmul.f32.gmra.mxu0 %v1936
    %v2144 = vpop.f32.mrf.mxu0
    %v2145 = vadd.f32 0.0, %v2144
    %2146 = vdwg.mxu0
    %v2147 = vadd.f32 %v1860, %v1956
    %v2148 = vadd.f32 %v1861, %v1959
    %v2149 = vadd.f32 %v1862, %v1962
    %v2150 = vadd.f32 %v1863, %v1965
    %v2151 = vadd.f32 %v1864, %v1968
    %v2152 = vadd.f32 %v1865, %v1971
    %v2153 = vadd.f32 %v1866, %v1974
    %v2154 = vadd.f32 %v1867, %v1977
    %v2155 = vadd.f32 %v1868, %v1980
    %v2156 = vadd.f32 %v1869, %v1983
    %v2157 = vadd.f32 %v1870, %v1986
    %v2158 = vadd.f32 %v1871, %v1989
    %v2159 = vadd.f32 %v1872, %v1992
    %v2160 = vadd.f32 %v1873, %v1995
    %v2161 = vadd.f32 %v1874, %v1998
    %v2162 = vadd.f32 %v1875, %v2001
    %v2163 = vadd.f32 %v1876, %v2004
    %v2164 = vadd.f32 %v1877, %v2007
    %v2165 = vadd.f32 %v1878, %v2010
    %v2166 = vadd.f32 %v1879, %v2013
    %v2167 = vadd.f32 %v1880, %v2016
    %v2168 = vadd.f32 %v1881, %v2019
    %v2169 = vadd.f32 %v1882, %v2022
    %v2170 = vadd.f32 %v1883, %v2025
    %v2171 = vadd.f32 %v1884, %v2028
    %v2172 = vadd.f32 %v1885, %v2031
    %v2173 = vadd.f32 %v1886, %v2034
    %v2174 = vadd.f32 %v1887, %v2037
    %v2175 = vadd.f32 %v1888, %v2040
    %v2176 = vadd.f32 %v1889, %v2043
    %v2177 = vadd.f32 %v1890, %v2046
    %v2178 = vadd.f32 %v1891, %v2049
    %v2179 = vadd.f32 %v1892, %v2052
    %v2180 = vadd.f32 %v1893, %v2055
    %v2181 = vadd.f32 %v1894, %v2058
    %v2182 = vadd.f32 %v1895, %v2061
    %v2183 = vadd.f32 %v1896, %v2064
    %v2184 = vadd.f32 %v1897, %v2067
    %v2185 = vadd.f32 %v1898, %v2070
    %v2186 = vadd.f32 %v1899, %v2073
    %v2187 = vadd.f32 %v1900, %v2076
    %v2188 = vadd.f32 %v1901, %v2079
    %v2189 = vadd.f32 %v1902, %v2082
    %v2190 = vadd.f32 %v1903, %v2085
    %v2191 = vadd.f32 %v1904, %v2088
    %v2192 = vadd.f32 %v1905, %v2091
    %v2193 = vadd.f32 %v1906, %v2094
    %v2194 = vadd.f32 %v1907, %v2097
    %v2195 = vadd.f32 %v1908, %v2100
    %v2196 = vadd.f32 %v1909, %v2103
    %v2197 = vadd.f32 %v1910, %v2106
    %v2198 = vadd.f32 %v1911, %v2109
    %v2199 = vadd.f32 %v1912, %v2112
    %v2200 = vadd.f32 %v1913, %v2115
    %v2201 = vadd.f32 %v1914, %v2118
    %v2202 = vadd.f32 %v1915, %v2121
    %v2203 = vadd.f32 %v1916, %v2124
    %v2204 = vadd.f32 %v1917, %v2127
    %v2205 = vadd.f32 %v1918, %v2130
    %v2206 = vadd.f32 %v1919, %v2133
    %v2207 = vadd.f32 %v1920, %v2136
    %v2208 = vadd.f32 %v1921, %v2139
    %v2209 = vadd.f32 %v1922, %v2142
    %v2210 = vadd.f32 %v1923, %v2145
    %v2213 = vrot.slane %v366, 1
    %v2214 = vrot.slane %v367, 1
    %v2215 = vsel %vm523, %v2213, %v2214
    %v2216 = vrot.slane %v368, 1
    %v2217 = vsel %vm523, %v2214, %v2216
    %v2218 = vrot.slane %v420, 1
    %v2219 = vrot.slane %v421, 1
    %v2220 = vsel %vm523, %v2218, %v2219
    %v2221 = vrot.slane %v422, 1
    %v2222 = vsel %vm523, %v2219, %v2221
    %s2223 = scalar_lea.vmem %s1, 32
    %v2224 = vld [vmem:[%s2223] sm:$0xff]
    %v2225 = vsel %vm15, %v2215, 0
    %v2227 = vsel %vm15, %v2217, 0
    %v2229 = vsel %vm15, %v2220, 0
    %v2231 = vsel %vm15, %v2222, 0
    %2233 = vmatpush.msra.mxu0 0.0
    %2234 = vmatpush.msra.mxu0 0.0
    %2235 = vmatpush.msra.mxu0 0.0
    %2236 = vmatpush.msra.mxu0 0.0
    %2237 = vmatpush.msra.mxu0 0.0
    %2238 = vmatpush.msra.mxu0 0.0
    %2239 = vmatpush.msra.mxu0 0.0
    %2240 = vmatpush.msra.mxu0 0.0
    %2241 = vmatpush.msra.mxu0 0.0
    %2242 = vmatpush.msra.mxu0 0.0
    %2243 = vmatpush.msra.mxu0 0.0
    %2244 = vmatpush.msra.mxu0 0.0
    %2245 = vmatpush.msra.mxu0 0.0
    %2246 = vmatpush.msra.mxu0 0.0
    %2247 = vmatpush.msra.mxu0 0.0
    %2248 = vmatpush.msra.mxu0 %v2224
    %2249 = vmatmul.f32.gmra.mxu0 %v690
    %v2250 = vpop.f32.mrf.mxu0
    %v2251 = vadd.f32 0.0, %v2250
    %2252 = vmatmul.f32.gmra.mxu0 %v692
    %v2253 = vpop.f32.mrf.mxu0
    %v2254 = vadd.f32 0.0, %v2253
    %2255 = vmatmul.f32.gmra.mxu0 %v694
    %v2256 = vpop.f32.mrf.mxu0
    %v2257 = vadd.f32 0.0, %v2256
    %2258 = vmatmul.f32.gmra.mxu0 %v696
    %v2259 = vpop.f32.mrf.mxu0
    %v2260 = vadd.f32 0.0, %v2259
    %2261 = vmatmul.f32.gmra.mxu0 %v698
    %v2262 = vpop.f32.mrf.mxu0
    %v2263 = vadd.f32 0.0, %v2262
    %2264 = vmatmul.f32.gmra.mxu0 %v700
    %v2265 = vpop.f32.mrf.mxu0
    %v2266 = vadd.f32 0.0, %v2265
    %2267 = vmatmul.f32.gmra.mxu0 %v702
    %v2268 = vpop.f32.mrf.mxu0
    %v2269 = vadd.f32 0.0, %v2268
    %2270 = vmatmul.f32.gmra.mxu0 %v704
    %v2271 = vpop.f32.mrf.mxu0
    %v2272 = vadd.f32 0.0, %v2271
    %2273 = vmatmul.f32.gmra.mxu0 %v706
    %v2274 = vpop.f32.mrf.mxu0
    %v2275 = vadd.f32 0.0, %v2274
    %2276 = vmatmul.f32.gmra.mxu0 %v708
    %v2277 = vpop.f32.mrf.mxu0
    %v2278 = vadd.f32 0.0, %v2277
    %2279 = vmatmul.f32.gmra.mxu0 %v710
    %v2280 = vpop.f32.mrf.mxu0
    %v2281 = vadd.f32 0.0, %v2280
    %2282 = vmatmul.f32.gmra.mxu0 %v712
    %v2283 = vpop.f32.mrf.mxu0
    %v2284 = vadd.f32 0.0, %v2283
    %2285 = vmatmul.f32.gmra.mxu0 %v714
    %v2286 = vpop.f32.mrf.mxu0
    %v2287 = vadd.f32 0.0, %v2286
    %2288 = vmatmul.f32.gmra.mxu0 %v716
    %v2289 = vpop.f32.mrf.mxu0
    %v2290 = vadd.f32 0.0, %v2289
    %2291 = vmatmul.f32.gmra.mxu0 %v718
    %v2292 = vpop.f32.mrf.mxu0
    %v2293 = vadd.f32 0.0, %v2292
    %2294 = vmatmul.f32.gmra.mxu0 %v720
    %v2295 = vpop.f32.mrf.mxu0
    %v2296 = vadd.f32 0.0, %v2295
    %2297 = vmatmul.f32.gmra.mxu0 %v722
    %v2298 = vpop.f32.mrf.mxu0
    %v2299 = vadd.f32 0.0, %v2298
    %2300 = vmatmul.f32.gmra.mxu0 %v724
    %v2301 = vpop.f32.mrf.mxu0
    %v2302 = vadd.f32 0.0, %v2301
    %2303 = vmatmul.f32.gmra.mxu0 %v726
    %v2304 = vpop.f32.mrf.mxu0
    %v2305 = vadd.f32 0.0, %v2304
    %2306 = vmatmul.f32.gmra.mxu0 %v728
    %v2307 = vpop.f32.mrf.mxu0
    %v2308 = vadd.f32 0.0, %v2307
    %2309 = vmatmul.f32.gmra.mxu0 %v730
    %v2310 = vpop.f32.mrf.mxu0
    %v2311 = vadd.f32 0.0, %v2310
    %2312 = vmatmul.f32.gmra.mxu0 %v732
    %v2313 = vpop.f32.mrf.mxu0
    %v2314 = vadd.f32 0.0, %v2313
    %2315 = vmatmul.f32.gmra.mxu0 %v734
    %v2316 = vpop.f32.mrf.mxu0
    %v2317 = vadd.f32 0.0, %v2316
    %2318 = vmatmul.f32.gmra.mxu0 %v736
    %v2319 = vpop.f32.mrf.mxu0
    %v2320 = vadd.f32 0.0, %v2319
    %2321 = vmatmul.f32.gmra.mxu0 %v738
    %v2322 = vpop.f32.mrf.mxu0
    %v2323 = vadd.f32 0.0, %v2322
    %2324 = vmatmul.f32.gmra.mxu0 %v740
    %v2325 = vpop.f32.mrf.mxu0
    %v2326 = vadd.f32 0.0, %v2325
    %2327 = vmatmul.f32.gmra.mxu0 %v742
    %v2328 = vpop.f32.mrf.mxu0
    %v2329 = vadd.f32 0.0, %v2328
    %2330 = vmatmul.f32.gmra.mxu0 %v744
    %v2331 = vpop.f32.mrf.mxu0
    %v2332 = vadd.f32 0.0, %v2331
    %2333 = vmatmul.f32.gmra.mxu0 %v746
    %v2334 = vpop.f32.mrf.mxu0
    %v2335 = vadd.f32 0.0, %v2334
    %2336 = vmatmul.f32.gmra.mxu0 %v748
    %v2337 = vpop.f32.mrf.mxu0
    %v2338 = vadd.f32 0.0, %v2337
    %2339 = vmatmul.f32.gmra.mxu0 %v2225
    %v2340 = vpop.f32.mrf.mxu0
    %v2341 = vadd.f32 0.0, %v2340
    %2342 = vmatmul.f32.gmra.mxu0 %v2227
    %v2343 = vpop.f32.mrf.mxu0
    %v2344 = vadd.f32 0.0, %v2343
    %2345 = vmatmul.f32.gmra.mxu0 %v754
    %v2346 = vpop.f32.mrf.mxu0
    %v2347 = vadd.f32 0.0, %v2346
    %2348 = vmatmul.f32.gmra.mxu0 %v756
    %v2349 = vpop.f32.mrf.mxu0
    %v2350 = vadd.f32 0.0, %v2349
    %2351 = vmatmul.f32.gmra.mxu0 %v758
    %v2352 = vpop.f32.mrf.mxu0
    %v2353 = vadd.f32 0.0, %v2352
    %2354 = vmatmul.f32.gmra.mxu0 %v760
    %v2355 = vpop.f32.mrf.mxu0
    %v2356 = vadd.f32 0.0, %v2355
    %2357 = vmatmul.f32.gmra.mxu0 %v762
    %v2358 = vpop.f32.mrf.mxu0
    %v2359 = vadd.f32 0.0, %v2358
    %2360 = vmatmul.f32.gmra.mxu0 %v764
    %v2361 = vpop.f32.mrf.mxu0
    %v2362 = vadd.f32 0.0, %v2361
    %2363 = vmatmul.f32.gmra.mxu0 %v766
    %v2364 = vpop.f32.mrf.mxu0
    %v2365 = vadd.f32 0.0, %v2364
    %2366 = vmatmul.f32.gmra.mxu0 %v768
    %v2367 = vpop.f32.mrf.mxu0
    %v2368 = vadd.f32 0.0, %v2367
    %2369 = vmatmul.f32.gmra.mxu0 %v770
    %v2370 = vpop.f32.mrf.mxu0
    %v2371 = vadd.f32 0.0, %v2370
    %2372 = vmatmul.f32.gmra.mxu0 %v772
    %v2373 = vpop.f32.mrf.mxu0
    %v2374 = vadd.f32 0.0, %v2373
    %2375 = vmatmul.f32.gmra.mxu0 %v774
    %v2376 = vpop.f32.mrf.mxu0
    %v2377 = vadd.f32 0.0, %v2376
    %2378 = vmatmul.f32.gmra.mxu0 %v776
    %v2379 = vpop.f32.mrf.mxu0
    %v2380 = vadd.f32 0.0, %v2379
    %2381 = vmatmul.f32.gmra.mxu0 %v778
    %v2382 = vpop.f32.mrf.mxu0
    %v2383 = vadd.f32 0.0, %v2382
    %2384 = vmatmul.f32.gmra.mxu0 %v780
    %v2385 = vpop.f32.mrf.mxu0
    %v2386 = vadd.f32 0.0, %v2385
    %2387 = vmatmul.f32.gmra.mxu0 %v782
    %v2388 = vpop.f32.mrf.mxu0
    %v2389 = vadd.f32 0.0, %v2388
    %2390 = vmatmul.f32.gmra.mxu0 %v784
    %v2391 = vpop.f32.mrf.mxu0
    %v2392 = vadd.f32 0.0, %v2391
    %2393 = vmatmul.f32.gmra.mxu0 %v786
    %v2394 = vpop.f32.mrf.mxu0
    %v2395 = vadd.f32 0.0, %v2394
    %2396 = vmatmul.f32.gmra.mxu0 %v788
    %v2397 = vpop.f32.mrf.mxu0
    %v2398 = vadd.f32 0.0, %v2397
    %2399 = vmatmul.f32.gmra.mxu0 %v790
    %v2400 = vpop.f32.mrf.mxu0
    %v2401 = vadd.f32 0.0, %v2400
    %2402 = vmatmul.f32.gmra.mxu0 %v792
    %v2403 = vpop.f32.mrf.mxu0
    %v2404 = vadd.f32 0.0, %v2403
    %2405 = vmatmul.f32.gmra.mxu0 %v794
    %v2406 = vpop.f32.mrf.mxu0
    %v2407 = vadd.f32 0.0, %v2406
    %2408 = vmatmul.f32.gmra.mxu0 %v796
    %v2409 = vpop.f32.mrf.mxu0
    %v2410 = vadd.f32 0.0, %v2409
    %2411 = vmatmul.f32.gmra.mxu0 %v798
    %v2412 = vpop.f32.mrf.mxu0
    %v2413 = vadd.f32 0.0, %v2412
    %2414 = vmatmul.f32.gmra.mxu0 %v800
    %v2415 = vpop.f32.mrf.mxu0
    %v2416 = vadd.f32 0.0, %v2415
    %2417 = vmatmul.f32.gmra.mxu0 %v802
    %v2418 = vpop.f32.mrf.mxu0
    %v2419 = vadd.f32 0.0, %v2418
    %2420 = vmatmul.f32.gmra.mxu0 %v804
    %v2421 = vpop.f32.mrf.mxu0
    %v2422 = vadd.f32 0.0, %v2421
    %2423 = vmatmul.f32.gmra.mxu0 %v806
    %v2424 = vpop.f32.mrf.mxu0
    %v2425 = vadd.f32 0.0, %v2424
    %2426 = vmatmul.f32.gmra.mxu0 %v808
    %v2427 = vpop.f32.mrf.mxu0
    %v2428 = vadd.f32 0.0, %v2427
    %2429 = vmatmul.f32.gmra.mxu0 %v810
    %v2430 = vpop.f32.mrf.mxu0
    %v2431 = vadd.f32 0.0, %v2430
    %2432 = vmatmul.f32.gmra.mxu0 %v812
    %v2433 = vpop.f32.mrf.mxu0
    %v2434 = vadd.f32 0.0, %v2433
    %2435 = vmatmul.f32.gmra.mxu0 %v2229
    %v2436 = vpop.f32.mrf.mxu0
    %v2437 = vadd.f32 0.0, %v2436
    %2438 = vmatmul.f32.gmra.mxu0 %v2231
    %v2439 = vpop.f32.mrf.mxu0
    %v2440 = vadd.f32 0.0, %v2439
    %2441 = vdwg.mxu0
    %v2442 = vadd.f32 %v2147, %v2251
    %v2443 = vadd.f32 %v2148, %v2254
    %v2444 = vadd.f32 %v2149, %v2257
    %v2445 = vadd.f32 %v2150, %v2260
    %v2446 = vadd.f32 %v2151, %v2263
    %v2447 = vadd.f32 %v2152, %v2266
    %v2448 = vadd.f32 %v2153, %v2269
    %v2449 = vadd.f32 %v2154, %v2272
    %v2450 = vadd.f32 %v2155, %v2275
    %v2451 = vadd.f32 %v2156, %v2278
    %v2452 = vadd.f32 %v2157, %v2281
    %v2453 = vadd.f32 %v2158, %v2284
    %v2454 = vadd.f32 %v2159, %v2287
    %v2455 = vadd.f32 %v2160, %v2290
    %v2456 = vadd.f32 %v2161, %v2293
    %v2457 = vadd.f32 %v2162, %v2296
    %v2458 = vadd.f32 %v2163, %v2299
    %v2459 = vadd.f32 %v2164, %v2302
    %v2460 = vadd.f32 %v2165, %v2305
    %v2461 = vadd.f32 %v2166, %v2308
    %v2462 = vadd.f32 %v2167, %v2311
    %v2463 = vadd.f32 %v2168, %v2314
    %v2464 = vadd.f32 %v2169, %v2317
    %v2465 = vadd.f32 %v2170, %v2320
    %v2466 = vadd.f32 %v2171, %v2323
    %v2467 = vadd.f32 %v2172, %v2326
    %v2468 = vadd.f32 %v2173, %v2329
    %v2469 = vadd.f32 %v2174, %v2332
    %v2470 = vadd.f32 %v2175, %v2335
    %v2471 = vadd.f32 %v2176, %v2338
    %v2472 = vadd.f32 %v2177, %v2341
    %v2473 = vadd.f32 %v2178, %v2344
    %v2474 = vadd.f32 %v2179, %v2347
    %v2475 = vadd.f32 %v2180, %v2350
    %v2476 = vadd.f32 %v2181, %v2353
    %v2477 = vadd.f32 %v2182, %v2356
    %v2478 = vadd.f32 %v2183, %v2359
    %v2479 = vadd.f32 %v2184, %v2362
    %v2480 = vadd.f32 %v2185, %v2365
    %v2481 = vadd.f32 %v2186, %v2368
    %v2482 = vadd.f32 %v2187, %v2371
    %v2483 = vadd.f32 %v2188, %v2374
    %v2484 = vadd.f32 %v2189, %v2377
    %v2485 = vadd.f32 %v2190, %v2380
    %v2486 = vadd.f32 %v2191, %v2383
    %v2487 = vadd.f32 %v2192, %v2386
    %v2488 = vadd.f32 %v2193, %v2389
    %v2489 = vadd.f32 %v2194, %v2392
    %v2490 = vadd.f32 %v2195, %v2395
    %v2491 = vadd.f32 %v2196, %v2398
    %v2492 = vadd.f32 %v2197, %v2401
    %v2493 = vadd.f32 %v2198, %v2404
    %v2494 = vadd.f32 %v2199, %v2407
    %v2495 = vadd.f32 %v2200, %v2410
    %v2496 = vadd.f32 %v2201, %v2413
    %v2497 = vadd.f32 %v2202, %v2416
    %v2498 = vadd.f32 %v2203, %v2419
    %v2499 = vadd.f32 %v2204, %v2422
    %v2500 = vadd.f32 %v2205, %v2425
    %v2501 = vadd.f32 %v2206, %v2428
    %v2502 = vadd.f32 %v2207, %v2431
    %v2503 = vadd.f32 %v2208, %v2434
    %v2504 = vadd.f32 %v2209, %v2437
    %v2505 = vadd.f32 %v2210, %v2440
    %v2506 = vrot.slane %v366, 2
    %v2507 = vrot.slane %v367, 2
    %v2508 = vsel %vm1360, %v2506, %v2507
    %v2509 = vrot.slane %v368, 2
    %v2510 = vsel %vm1360, %v2507, %v2509
    %v2511 = vrot.slane %v420, 2
    %v2512 = vrot.slane %v421, 2
    %v2513 = vsel %vm1360, %v2511, %v2512
    %v2514 = vrot.slane %v422, 2
    %v2515 = vsel %vm1360, %v2512, %v2514
    %s2516 = scalar_lea.vmem %s1, 40
    %v2517 = vld [vmem:[%s2516] sm:$0xff]
    %v2518 = vsel %vm15, %v2508, 0
    %v2520 = vsel %vm15, %v2510, 0
    %v2522 = vsel %vm15, %v2513, 0
    %v2524 = vsel %vm15, %v2515, 0
    %2526 = vmatpush.msra.mxu0 0.0
    %2527 = vmatpush.msra.mxu0 0.0
    %2528 = vmatpush.msra.mxu0 0.0
    %2529 = vmatpush.msra.mxu0 0.0
    %2530 = vmatpush.msra.mxu0 0.0
    %2531 = vmatpush.msra.mxu0 0.0
    %2532 = vmatpush.msra.mxu0 0.0
    %2533 = vmatpush.msra.mxu0 0.0
    %2534 = vmatpush.msra.mxu0 0.0
    %2535 = vmatpush.msra.mxu0 0.0
    %2536 = vmatpush.msra.mxu0 0.0
    %2537 = vmatpush.msra.mxu0 0.0
    %2538 = vmatpush.msra.mxu0 0.0
    %2539 = vmatpush.msra.mxu0 0.0
    %2540 = vmatpush.msra.mxu0 0.0
    %2541 = vmatpush.msra.mxu0 %v2517
    %2542 = vmatmul.f32.gmra.mxu0 %v1527
    %v2543 = vpop.f32.mrf.mxu0
    %v2544 = vadd.f32 0.0, %v2543
    %2545 = vmatmul.f32.gmra.mxu0 %v1529
    %v2546 = vpop.f32.mrf.mxu0
    %v2547 = vadd.f32 0.0, %v2546
    %2548 = vmatmul.f32.gmra.mxu0 %v1531
    %v2549 = vpop.f32.mrf.mxu0
    %v2550 = vadd.f32 0.0, %v2549
    %2551 = vmatmul.f32.gmra.mxu0 %v1533
    %v2552 = vpop.f32.mrf.mxu0
    %v2553 = vadd.f32 0.0, %v2552
    %2554 = vmatmul.f32.gmra.mxu0 %v1535
    %v2555 = vpop.f32.mrf.mxu0
    %v2556 = vadd.f32 0.0, %v2555
    %2557 = vmatmul.f32.gmra.mxu0 %v1537
    %v2558 = vpop.f32.mrf.mxu0
    %v2559 = vadd.f32 0.0, %v2558
    %2560 = vmatmul.f32.gmra.mxu0 %v1539
    %v2561 = vpop.f32.mrf.mxu0
    %v2562 = vadd.f32 0.0, %v2561
    %2563 = vmatmul.f32.gmra.mxu0 %v1541
    %v2564 = vpop.f32.mrf.mxu0
    %v2565 = vadd.f32 0.0, %v2564
    %2566 = vmatmul.f32.gmra.mxu0 %v1543
    %v2567 = vpop.f32.mrf.mxu0
    %v2568 = vadd.f32 0.0, %v2567
    %2569 = vmatmul.f32.gmra.mxu0 %v1545
    %v2570 = vpop.f32.mrf.mxu0
    %v2571 = vadd.f32 0.0, %v2570
    %2572 = vmatmul.f32.gmra.mxu0 %v1547
    %v2573 = vpop.f32.mrf.mxu0
    %v2574 = vadd.f32 0.0, %v2573
    %2575 = vmatmul.f32.gmra.mxu0 %v1549
    %v2576 = vpop.f32.mrf.mxu0
    %v2577 = vadd.f32 0.0, %v2576
    %2578 = vmatmul.f32.gmra.mxu0 %v1551
    %v2579 = vpop.f32.mrf.mxu0
    %v2580 = vadd.f32 0.0, %v2579
    %2581 = vmatmul.f32.gmra.mxu0 %v1553
    %v2582 = vpop.f32.mrf.mxu0
    %v2583 = vadd.f32 0.0, %v2582
    %2584 = vmatmul.f32.gmra.mxu0 %v1555
    %v2585 = vpop.f32.mrf.mxu0
    %v2586 = vadd.f32 0.0, %v2585
    %2587 = vmatmul.f32.gmra.mxu0 %v1557
    %v2588 = vpop.f32.mrf.mxu0
    %v2589 = vadd.f32 0.0, %v2588
    %2590 = vmatmul.f32.gmra.mxu0 %v1559
    %v2591 = vpop.f32.mrf.mxu0
    %v2592 = vadd.f32 0.0, %v2591
    %2593 = vmatmul.f32.gmra.mxu0 %v1561
    %v2594 = vpop.f32.mrf.mxu0
    %v2595 = vadd.f32 0.0, %v2594
    %2596 = vmatmul.f32.gmra.mxu0 %v1563
    %v2597 = vpop.f32.mrf.mxu0
    %v2598 = vadd.f32 0.0, %v2597
    %2599 = vmatmul.f32.gmra.mxu0 %v1565
    %v2600 = vpop.f32.mrf.mxu0
    %v2601 = vadd.f32 0.0, %v2600
    %2602 = vmatmul.f32.gmra.mxu0 %v1567
    %v2603 = vpop.f32.mrf.mxu0
    %v2604 = vadd.f32 0.0, %v2603
    %2605 = vmatmul.f32.gmra.mxu0 %v1569
    %v2606 = vpop.f32.mrf.mxu0
    %v2607 = vadd.f32 0.0, %v2606
    %2608 = vmatmul.f32.gmra.mxu0 %v1571
    %v2609 = vpop.f32.mrf.mxu0
    %v2610 = vadd.f32 0.0, %v2609
    %2611 = vmatmul.f32.gmra.mxu0 %v1573
    %v2612 = vpop.f32.mrf.mxu0
    %v2613 = vadd.f32 0.0, %v2612
    %2614 = vmatmul.f32.gmra.mxu0 %v1575
    %v2615 = vpop.f32.mrf.mxu0
    %v2616 = vadd.f32 0.0, %v2615
    %2617 = vmatmul.f32.gmra.mxu0 %v1577
    %v2618 = vpop.f32.mrf.mxu0
    %v2619 = vadd.f32 0.0, %v2618
    %2620 = vmatmul.f32.gmra.mxu0 %v1579
    %v2621 = vpop.f32.mrf.mxu0
    %v2622 = vadd.f32 0.0, %v2621
    %2623 = vmatmul.f32.gmra.mxu0 %v1581
    %v2624 = vpop.f32.mrf.mxu0
    %v2625 = vadd.f32 0.0, %v2624
    %2626 = vmatmul.f32.gmra.mxu0 %v1583
    %v2627 = vpop.f32.mrf.mxu0
    %v2628 = vadd.f32 0.0, %v2627
    %2629 = vmatmul.f32.gmra.mxu0 %v1585
    %v2630 = vpop.f32.mrf.mxu0
    %v2631 = vadd.f32 0.0, %v2630
    %2632 = vmatmul.f32.gmra.mxu0 %v2518
    %v2633 = vpop.f32.mrf.mxu0
    %v2634 = vadd.f32 0.0, %v2633
    %2635 = vmatmul.f32.gmra.mxu0 %v2520
    %v2636 = vpop.f32.mrf.mxu0
    %v2637 = vadd.f32 0.0, %v2636
    %2638 = vmatmul.f32.gmra.mxu0 %v1591
    %v2639 = vpop.f32.mrf.mxu0
    %v2640 = vadd.f32 0.0, %v2639
    %2641 = vmatmul.f32.gmra.mxu0 %v1593
    %v2642 = vpop.f32.mrf.mxu0
    %v2643 = vadd.f32 0.0, %v2642
    %2644 = vmatmul.f32.gmra.mxu0 %v1595
    %v2645 = vpop.f32.mrf.mxu0
    %v2646 = vadd.f32 0.0, %v2645
    %2647 = vmatmul.f32.gmra.mxu0 %v1597
    %v2648 = vpop.f32.mrf.mxu0
    %v2649 = vadd.f32 0.0, %v2648
    %2650 = vmatmul.f32.gmra.mxu0 %v1599
    %v2651 = vpop.f32.mrf.mxu0
    %v2652 = vadd.f32 0.0, %v2651
    %2653 = vmatmul.f32.gmra.mxu0 %v1601
    %v2654 = vpop.f32.mrf.mxu0
    %v2655 = vadd.f32 0.0, %v2654
    %2656 = vmatmul.f32.gmra.mxu0 %v1603
    %v2657 = vpop.f32.mrf.mxu0
    %v2658 = vadd.f32 0.0, %v2657
    %2659 = vmatmul.f32.gmra.mxu0 %v1605
    %v2660 = vpop.f32.mrf.mxu0
    %v2661 = vadd.f32 0.0, %v2660
    %2662 = vmatmul.f32.gmra.mxu0 %v1607
    %v2663 = vpop.f32.mrf.mxu0
    %v2664 = vadd.f32 0.0, %v2663
    %2665 = vmatmul.f32.gmra.mxu0 %v1609
    %v2666 = vpop.f32.mrf.mxu0
    %v2667 = vadd.f32 0.0, %v2666
    %2668 = vmatmul.f32.gmra.mxu0 %v1611
    %v2669 = vpop.f32.mrf.mxu0
    %v2670 = vadd.f32 0.0, %v2669
    %2671 = vmatmul.f32.gmra.mxu0 %v1613
    %v2672 = vpop.f32.mrf.mxu0
    %v2673 = vadd.f32 0.0, %v2672
    %2674 = vmatmul.f32.gmra.mxu0 %v1615
    %v2675 = vpop.f32.mrf.mxu0
    %v2676 = vadd.f32 0.0, %v2675
    %2677 = vmatmul.f32.gmra.mxu0 %v1617
    %v2678 = vpop.f32.mrf.mxu0
    %v2679 = vadd.f32 0.0, %v2678
    %2680 = vmatmul.f32.gmra.mxu0 %v1619
    %v2681 = vpop.f32.mrf.mxu0
    %v2682 = vadd.f32 0.0, %v2681
    %2683 = vmatmul.f32.gmra.mxu0 %v1621
    %v2684 = vpop.f32.mrf.mxu0
    %v2685 = vadd.f32 0.0, %v2684
    %2686 = vmatmul.f32.gmra.mxu0 %v1623
    %v2687 = vpop.f32.mrf.mxu0
    %v2688 = vadd.f32 0.0, %v2687
    %2689 = vmatmul.f32.gmra.mxu0 %v1625
    %v2690 = vpop.f32.mrf.mxu0
    %v2691 = vadd.f32 0.0, %v2690
    %2692 = vmatmul.f32.gmra.mxu0 %v1627
    %v2693 = vpop.f32.mrf.mxu0
    %v2694 = vadd.f32 0.0, %v2693
    %2695 = vmatmul.f32.gmra.mxu0 %v1629
    %v2696 = vpop.f32.mrf.mxu0
    %v2697 = vadd.f32 0.0, %v2696
    %2698 = vmatmul.f32.gmra.mxu0 %v1631
    %v2699 = vpop.f32.mrf.mxu0
    %v2700 = vadd.f32 0.0, %v2699
    %2701 = vmatmul.f32.gmra.mxu0 %v1633
    %v2702 = vpop.f32.mrf.mxu0
    %v2703 = vadd.f32 0.0, %v2702
    %2704 = vmatmul.f32.gmra.mxu0 %v1635
    %v2705 = vpop.f32.mrf.mxu0
    %v2706 = vadd.f32 0.0, %v2705
    %2707 = vmatmul.f32.gmra.mxu0 %v1637
    %v2708 = vpop.f32.mrf.mxu0
    %v2709 = vadd.f32 0.0, %v2708
    %2710 = vmatmul.f32.gmra.mxu0 %v1639
    %v2711 = vpop.f32.mrf.mxu0
    %v2712 = vadd.f32 0.0, %v2711
    %2713 = vmatmul.f32.gmra.mxu0 %v1641
    %v2714 = vpop.f32.mrf.mxu0
    %v2715 = vadd.f32 0.0, %v2714
    %2716 = vmatmul.f32.gmra.mxu0 %v1643
    %v2717 = vpop.f32.mrf.mxu0
    %v2718 = vadd.f32 0.0, %v2717
    %2719 = vmatmul.f32.gmra.mxu0 %v1645
    %v2720 = vpop.f32.mrf.mxu0
    %v2721 = vadd.f32 0.0, %v2720
    %2722 = vmatmul.f32.gmra.mxu0 %v1647
    %v2723 = vpop.f32.mrf.mxu0
    %v2724 = vadd.f32 0.0, %v2723
    %2725 = vmatmul.f32.gmra.mxu0 %v1649
    %v2726 = vpop.f32.mrf.mxu0
    %v2727 = vadd.f32 0.0, %v2726
    %2728 = vmatmul.f32.gmra.mxu0 %v2522
    %v2729 = vpop.f32.mrf.mxu0
    %v2730 = vadd.f32 0.0, %v2729
    %2731 = vmatmul.f32.gmra.mxu0 %v2524
    %v2732 = vpop.f32.mrf.mxu0
    %v2733 = vadd.f32 0.0, %v2732
    %2734 = vdwg.mxu0
    %v2735 = vadd.f32 %v2442, %v2544
    %v2736 = vadd.f32 %v2443, %v2547
    %v2737 = vadd.f32 %v2444, %v2550
    %v2738 = vadd.f32 %v2445, %v2553
    %v2739 = vadd.f32 %v2446, %v2556
    %v2740 = vadd.f32 %v2447, %v2559
    %v2741 = vadd.f32 %v2448, %v2562
    %v2742 = vadd.f32 %v2449, %v2565
    %v2743 = vadd.f32 %v2450, %v2568
    %v2744 = vadd.f32 %v2451, %v2571
    %v2745 = vadd.f32 %v2452, %v2574
    %v2746 = vadd.f32 %v2453, %v2577
    %v2747 = vadd.f32 %v2454, %v2580
    %v2748 = vadd.f32 %v2455, %v2583
    %v2749 = vadd.f32 %v2456, %v2586
    %v2750 = vadd.f32 %v2457, %v2589
    %v2751 = vadd.f32 %v2458, %v2592
    %v2752 = vadd.f32 %v2459, %v2595
    %v2753 = vadd.f32 %v2460, %v2598
    %v2754 = vadd.f32 %v2461, %v2601
    %v2755 = vadd.f32 %v2462, %v2604
    %v2756 = vadd.f32 %v2463, %v2607
    %v2757 = vadd.f32 %v2464, %v2610
    %v2758 = vadd.f32 %v2465, %v2613
    %v2759 = vadd.f32 %v2466, %v2616
    %v2760 = vadd.f32 %v2467, %v2619
    %v2761 = vadd.f32 %v2468, %v2622
    %v2762 = vadd.f32 %v2469, %v2625
    %v2763 = vadd.f32 %v2470, %v2628
    %v2764 = vadd.f32 %v2471, %v2631
    %v2765 = vadd.f32 %v2472, %v2634
    %v2766 = vadd.f32 %v2473, %v2637
    %v2767 = vadd.f32 %v2474, %v2640
    %v2768 = vadd.f32 %v2475, %v2643
    %v2769 = vadd.f32 %v2476, %v2646
    %v2770 = vadd.f32 %v2477, %v2649
    %v2771 = vadd.f32 %v2478, %v2652
    %v2772 = vadd.f32 %v2479, %v2655
    %v2773 = vadd.f32 %v2480, %v2658
    %v2774 = vadd.f32 %v2481, %v2661
    %v2775 = vadd.f32 %v2482, %v2664
    %v2776 = vadd.f32 %v2483, %v2667
    %v2777 = vadd.f32 %v2484, %v2670
    %v2778 = vadd.f32 %v2485, %v2673
    %v2779 = vadd.f32 %v2486, %v2676
    %v2780 = vadd.f32 %v2487, %v2679
    %v2781 = vadd.f32 %v2488, %v2682
    %v2782 = vadd.f32 %v2489, %v2685
    %v2783 = vadd.f32 %v2490, %v2688
    %v2784 = vadd.f32 %v2491, %v2691
    %v2785 = vadd.f32 %v2492, %v2694
    %v2786 = vadd.f32 %v2493, %v2697
    %v2787 = vadd.f32 %v2494, %v2700
    %v2788 = vadd.f32 %v2495, %v2703
    %v2789 = vadd.f32 %v2496, %v2706
    %v2790 = vadd.f32 %v2497, %v2709
    %v2791 = vadd.f32 %v2498, %v2712
    %v2792 = vadd.f32 %v2499, %v2715
    %v2793 = vadd.f32 %v2500, %v2718
    %v2794 = vadd.f32 %v2501, %v2721
    %v2795 = vadd.f32 %v2502, %v2724
    %v2796 = vadd.f32 %v2503, %v2727
    %v2797 = vadd.f32 %v2504, %v2730
    %v2798 = vadd.f32 %v2505, %v2733
    %s2799 = scalar_lea.vmem %s1, 48
    %v2800 = vld [vmem:[%s2799] sm:$0xff]
    %v2802 = vsel %vm15, %v369, 0
    %v2805 = vsel %vm15, %v370, 0
    %v2808 = vsel %vm15, %v423, 0
    %v2811 = vsel %vm15, %v424, 0
    %2813 = vmatpush.msra.mxu0 0.0
    %2814 = vmatpush.msra.mxu0 0.0
    %2815 = vmatpush.msra.mxu0 0.0
    %2816 = vmatpush.msra.mxu0 0.0
    %2817 = vmatpush.msra.mxu0 0.0
    %2818 = vmatpush.msra.mxu0 0.0
    %2819 = vmatpush.msra.mxu0 0.0
    %2820 = vmatpush.msra.mxu0 0.0
    %2821 = vmatpush.msra.mxu0 0.0
    %2822 = vmatpush.msra.mxu0 0.0
    %2823 = vmatpush.msra.mxu0 0.0
    %2824 = vmatpush.msra.mxu0 0.0
    %2825 = vmatpush.msra.mxu0 0.0
    %2826 = vmatpush.msra.mxu0 0.0
    %2827 = vmatpush.msra.mxu0 0.0
    %2828 = vmatpush.msra.mxu0 %v2800
    %2829 = vmatmul.f32.gmra.mxu0 %v1031
    %v2830 = vpop.f32.mrf.mxu0
    %v2831 = vadd.f32 0.0, %v2830
    %2832 = vmatmul.f32.gmra.mxu0 %v1033
    %v2833 = vpop.f32.mrf.mxu0
    %v2834 = vadd.f32 0.0, %v2833
    %2835 = vmatmul.f32.gmra.mxu0 %v1035
    %v2836 = vpop.f32.mrf.mxu0
    %v2837 = vadd.f32 0.0, %v2836
    %2838 = vmatmul.f32.gmra.mxu0 %v1037
    %v2839 = vpop.f32.mrf.mxu0
    %v2840 = vadd.f32 0.0, %v2839
    %2841 = vmatmul.f32.gmra.mxu0 %v1039
    %v2842 = vpop.f32.mrf.mxu0
    %v2843 = vadd.f32 0.0, %v2842
    %2844 = vmatmul.f32.gmra.mxu0 %v1041
    %v2845 = vpop.f32.mrf.mxu0
    %v2846 = vadd.f32 0.0, %v2845
    %2847 = vmatmul.f32.gmra.mxu0 %v1043
    %v2848 = vpop.f32.mrf.mxu0
    %v2849 = vadd.f32 0.0, %v2848
    %2850 = vmatmul.f32.gmra.mxu0 %v1045
    %v2851 = vpop.f32.mrf.mxu0
    %v2852 = vadd.f32 0.0, %v2851
    %2853 = vmatmul.f32.gmra.mxu0 %v1047
    %v2854 = vpop.f32.mrf.mxu0
    %v2855 = vadd.f32 0.0, %v2854
    %2856 = vmatmul.f32.gmra.mxu0 %v1049
    %v2857 = vpop.f32.mrf.mxu0
    %v2858 = vadd.f32 0.0, %v2857
    %2859 = vmatmul.f32.gmra.mxu0 %v1051
    %v2860 = vpop.f32.mrf.mxu0
    %v2861 = vadd.f32 0.0, %v2860
    %2862 = vmatmul.f32.gmra.mxu0 %v1053
    %v2863 = vpop.f32.mrf.mxu0
    %v2864 = vadd.f32 0.0, %v2863
    %2865 = vmatmul.f32.gmra.mxu0 %v1055
    %v2866 = vpop.f32.mrf.mxu0
    %v2867 = vadd.f32 0.0, %v2866
    %2868 = vmatmul.f32.gmra.mxu0 %v1057
    %v2869 = vpop.f32.mrf.mxu0
    %v2870 = vadd.f32 0.0, %v2869
    %2871 = vmatmul.f32.gmra.mxu0 %v1059
    %v2872 = vpop.f32.mrf.mxu0
    %v2873 = vadd.f32 0.0, %v2872
    %2874 = vmatmul.f32.gmra.mxu0 %v1061
    %v2875 = vpop.f32.mrf.mxu0
    %v2876 = vadd.f32 0.0, %v2875
    %2877 = vmatmul.f32.gmra.mxu0 %v1063
    %v2878 = vpop.f32.mrf.mxu0
    %v2879 = vadd.f32 0.0, %v2878
    %2880 = vmatmul.f32.gmra.mxu0 %v1065
    %v2881 = vpop.f32.mrf.mxu0
    %v2882 = vadd.f32 0.0, %v2881
    %2883 = vmatmul.f32.gmra.mxu0 %v1067
    %v2884 = vpop.f32.mrf.mxu0
    %v2885 = vadd.f32 0.0, %v2884
    %2886 = vmatmul.f32.gmra.mxu0 %v1069
    %v2887 = vpop.f32.mrf.mxu0
    %v2888 = vadd.f32 0.0, %v2887
    %2889 = vmatmul.f32.gmra.mxu0 %v1071
    %v2890 = vpop.f32.mrf.mxu0
    %v2891 = vadd.f32 0.0, %v2890
    %2892 = vmatmul.f32.gmra.mxu0 %v1073
    %v2893 = vpop.f32.mrf.mxu0
    %v2894 = vadd.f32 0.0, %v2893
    %2895 = vmatmul.f32.gmra.mxu0 %v1075
    %v2896 = vpop.f32.mrf.mxu0
    %v2897 = vadd.f32 0.0, %v2896
    %2898 = vmatmul.f32.gmra.mxu0 %v1077
    %v2899 = vpop.f32.mrf.mxu0
    %v2900 = vadd.f32 0.0, %v2899
    %2901 = vmatmul.f32.gmra.mxu0 %v1079
    %v2902 = vpop.f32.mrf.mxu0
    %v2903 = vadd.f32 0.0, %v2902
    %2904 = vmatmul.f32.gmra.mxu0 %v1081
    %v2905 = vpop.f32.mrf.mxu0
    %v2906 = vadd.f32 0.0, %v2905
    %2907 = vmatmul.f32.gmra.mxu0 %v1083
    %v2908 = vpop.f32.mrf.mxu0
    %v2909 = vadd.f32 0.0, %v2908
    %2910 = vmatmul.f32.gmra.mxu0 %v1085
    %v2911 = vpop.f32.mrf.mxu0
    %v2912 = vadd.f32 0.0, %v2911
    %2913 = vmatmul.f32.gmra.mxu0 %v1927
    %v2914 = vpop.f32.mrf.mxu0
    %v2915 = vadd.f32 0.0, %v2914
    %2916 = vmatmul.f32.gmra.mxu0 %v1930
    %v2917 = vpop.f32.mrf.mxu0
    %v2918 = vadd.f32 0.0, %v2917
    %2919 = vmatmul.f32.gmra.mxu0 %v2802
    %v2920 = vpop.f32.mrf.mxu0
    %v2921 = vadd.f32 0.0, %v2920
    %2922 = vmatmul.f32.gmra.mxu0 %v2805
    %v2923 = vpop.f32.mrf.mxu0
    %v2924 = vadd.f32 0.0, %v2923
    %2925 = vmatmul.f32.gmra.mxu0 %v1095
    %v2926 = vpop.f32.mrf.mxu0
    %v2927 = vadd.f32 0.0, %v2926
    %2928 = vmatmul.f32.gmra.mxu0 %v1097
    %v2929 = vpop.f32.mrf.mxu0
    %v2930 = vadd.f32 0.0, %v2929
    %2931 = vmatmul.f32.gmra.mxu0 %v1099
    %v2932 = vpop.f32.mrf.mxu0
    %v2933 = vadd.f32 0.0, %v2932
    %2934 = vmatmul.f32.gmra.mxu0 %v1101
    %v2935 = vpop.f32.mrf.mxu0
    %v2936 = vadd.f32 0.0, %v2935
    %2937 = vmatmul.f32.gmra.mxu0 %v1103
    %v2938 = vpop.f32.mrf.mxu0
    %v2939 = vadd.f32 0.0, %v2938
    %2940 = vmatmul.f32.gmra.mxu0 %v1105
    %v2941 = vpop.f32.mrf.mxu0
    %v2942 = vadd.f32 0.0, %v2941
    %2943 = vmatmul.f32.gmra.mxu0 %v1107
    %v2944 = vpop.f32.mrf.mxu0
    %v2945 = vadd.f32 0.0, %v2944
    %2946 = vmatmul.f32.gmra.mxu0 %v1109
    %v2947 = vpop.f32.mrf.mxu0
    %v2948 = vadd.f32 0.0, %v2947
    %2949 = vmatmul.f32.gmra.mxu0 %v1111
    %v2950 = vpop.f32.mrf.mxu0
    %v2951 = vadd.f32 0.0, %v2950
    %2952 = vmatmul.f32.gmra.mxu0 %v1113
    %v2953 = vpop.f32.mrf.mxu0
    %v2954 = vadd.f32 0.0, %v2953
    %2955 = vmatmul.f32.gmra.mxu0 %v1115
    %v2956 = vpop.f32.mrf.mxu0
    %v2957 = vadd.f32 0.0, %v2956
    %2958 = vmatmul.f32.gmra.mxu0 %v1117
    %v2959 = vpop.f32.mrf.mxu0
    %v2960 = vadd.f32 0.0, %v2959
    %2961 = vmatmul.f32.gmra.mxu0 %v1119
    %v2962 = vpop.f32.mrf.mxu0
    %v2963 = vadd.f32 0.0, %v2962
    %2964 = vmatmul.f32.gmra.mxu0 %v1121
    %v2965 = vpop.f32.mrf.mxu0
    %v2966 = vadd.f32 0.0, %v2965
    %2967 = vmatmul.f32.gmra.mxu0 %v1123
    %v2968 = vpop.f32.mrf.mxu0
    %v2969 = vadd.f32 0.0, %v2968
    %2970 = vmatmul.f32.gmra.mxu0 %v1125
    %v2971 = vpop.f32.mrf.mxu0
    %v2972 = vadd.f32 0.0, %v2971
    %2973 = vmatmul.f32.gmra.mxu0 %v1127
    %v2974 = vpop.f32.mrf.mxu0
    %v2975 = vadd.f32 0.0, %v2974
    %2976 = vmatmul.f32.gmra.mxu0 %v1129
    %v2977 = vpop.f32.mrf.mxu0
    %v2978 = vadd.f32 0.0, %v2977
    %2979 = vmatmul.f32.gmra.mxu0 %v1131
    %v2980 = vpop.f32.mrf.mxu0
    %v2981 = vadd.f32 0.0, %v2980
    %2982 = vmatmul.f32.gmra.mxu0 %v1133
    %v2983 = vpop.f32.mrf.mxu0
    %v2984 = vadd.f32 0.0, %v2983
    %2985 = vmatmul.f32.gmra.mxu0 %v1135
    %v2986 = vpop.f32.mrf.mxu0
    %v2987 = vadd.f32 0.0, %v2986
    %2988 = vmatmul.f32.gmra.mxu0 %v1137
    %v2989 = vpop.f32.mrf.mxu0
    %v2990 = vadd.f32 0.0, %v2989
    %2991 = vmatmul.f32.gmra.mxu0 %v1139
    %v2992 = vpop.f32.mrf.mxu0
    %v2993 = vadd.f32 0.0, %v2992
    %2994 = vmatmul.f32.gmra.mxu0 %v1141
    %v2995 = vpop.f32.mrf.mxu0
    %v2996 = vadd.f32 0.0, %v2995
    %2997 = vmatmul.f32.gmra.mxu0 %v1143
    %v2998 = vpop.f32.mrf.mxu0
    %v2999 = vadd.f32 0.0, %v2998
    %3000 = vmatmul.f32.gmra.mxu0 %v1145
    %v3001 = vpop.f32.mrf.mxu0
    %v3002 = vadd.f32 0.0, %v3001
    %3003 = vmatmul.f32.gmra.mxu0 %v1147
    %v3004 = vpop.f32.mrf.mxu0
    %v3005 = vadd.f32 0.0, %v3004
    %3006 = vmatmul.f32.gmra.mxu0 %v1149
    %v3007 = vpop.f32.mrf.mxu0
    %v3008 = vadd.f32 0.0, %v3007
    %3009 = vmatmul.f32.gmra.mxu0 %v1933
    %v3010 = vpop.f32.mrf.mxu0
    %v3011 = vadd.f32 0.0, %v3010
    %3012 = vmatmul.f32.gmra.mxu0 %v1936
    %v3013 = vpop.f32.mrf.mxu0
    %v3014 = vadd.f32 0.0, %v3013
    %3015 = vmatmul.f32.gmra.mxu0 %v2808
    %v3016 = vpop.f32.mrf.mxu0
    %v3017 = vadd.f32 0.0, %v3016
    %3018 = vmatmul.f32.gmra.mxu0 %v2811
    %v3019 = vpop.f32.mrf.mxu0
    %v3020 = vadd.f32 0.0, %v3019
    %3021 = vdwg.mxu0
    %v3022 = vadd.f32 %v2735, %v2831
    %v3023 = vadd.f32 %v2736, %v2834
    %v3024 = vadd.f32 %v2737, %v2837
    %v3025 = vadd.f32 %v2738, %v2840
    %v3026 = vadd.f32 %v2739, %v2843
    %v3027 = vadd.f32 %v2740, %v2846
    %v3028 = vadd.f32 %v2741, %v2849
    %v3029 = vadd.f32 %v2742, %v2852
    %v3030 = vadd.f32 %v2743, %v2855
    %v3031 = vadd.f32 %v2744, %v2858
    %v3032 = vadd.f32 %v2745, %v2861
    %v3033 = vadd.f32 %v2746, %v2864
    %v3034 = vadd.f32 %v2747, %v2867
    %v3035 = vadd.f32 %v2748, %v2870
    %v3036 = vadd.f32 %v2749, %v2873
    %v3037 = vadd.f32 %v2750, %v2876
    %v3038 = vadd.f32 %v2751, %v2879
    %v3039 = vadd.f32 %v2752, %v2882
    %v3040 = vadd.f32 %v2753, %v2885
    %v3041 = vadd.f32 %v2754, %v2888
    %v3042 = vadd.f32 %v2755, %v2891
    %v3043 = vadd.f32 %v2756, %v2894
    %v3044 = vadd.f32 %v2757, %v2897
    %v3045 = vadd.f32 %v2758, %v2900
    %v3046 = vadd.f32 %v2759, %v2903
    %v3047 = vadd.f32 %v2760, %v2906
    %v3048 = vadd.f32 %v2761, %v2909
    %v3049 = vadd.f32 %v2762, %v2912
    %v3050 = vadd.f32 %v2763, %v2915
    %v3051 = vadd.f32 %v2764, %v2918
    %v3052 = vadd.f32 %v2765, %v2921
    %v3053 = vadd.f32 %v2766, %v2924
    %v3054 = vadd.f32 %v2767, %v2927
    %v3055 = vadd.f32 %v2768, %v2930
    %v3056 = vadd.f32 %v2769, %v2933
    %v3057 = vadd.f32 %v2770, %v2936
    %v3058 = vadd.f32 %v2771, %v2939
    %v3059 = vadd.f32 %v2772, %v2942
    %v3060 = vadd.f32 %v2773, %v2945
    %v3061 = vadd.f32 %v2774, %v2948
    %v3062 = vadd.f32 %v2775, %v2951
    %v3063 = vadd.f32 %v2776, %v2954
    %v3064 = vadd.f32 %v2777, %v2957
    %v3065 = vadd.f32 %v2778, %v2960
    %v3066 = vadd.f32 %v2779, %v2963
    %v3067 = vadd.f32 %v2780, %v2966
    %v3068 = vadd.f32 %v2781, %v2969
    %v3069 = vadd.f32 %v2782, %v2972
    %v3070 = vadd.f32 %v2783, %v2975
    %v3071 = vadd.f32 %v2784, %v2978
    %v3072 = vadd.f32 %v2785, %v2981
    %v3073 = vadd.f32 %v2786, %v2984
    %v3074 = vadd.f32 %v2787, %v2987
    %v3075 = vadd.f32 %v2788, %v2990
    %v3076 = vadd.f32 %v2789, %v2993
    %v3077 = vadd.f32 %v2790, %v2996
    %v3078 = vadd.f32 %v2791, %v2999
    %v3079 = vadd.f32 %v2792, %v3002
    %v3080 = vadd.f32 %v2793, %v3005
    %v3081 = vadd.f32 %v2794, %v3008
    %v3082 = vadd.f32 %v2795, %v3011
    %v3083 = vadd.f32 %v2796, %v3014
    %v3084 = vadd.f32 %v2797, %v3017
    %v3085 = vadd.f32 %v2798, %v3020
    %v3088 = vrot.slane %v369, 1
    %v3089 = vrot.slane %v370, 1
    %v3090 = vsel %vm523, %v3088, %v3089
    %v3091 = vrot.slane %v371, 1
    %v3092 = vsel %vm523, %v3089, %v3091
    %v3093 = vrot.slane %v423, 1
    %v3094 = vrot.slane %v424, 1
    %v3095 = vsel %vm523, %v3093, %v3094
    %v3096 = vrot.slane %v425, 1
    %v3097 = vsel %vm523, %v3094, %v3096
    %s3098 = scalar_lea.vmem %s1, 56
    %v3099 = vld [vmem:[%s3098] sm:$0xff]
    %v3100 = vsel %vm15, %v3090, 0
    %v3102 = vsel %vm15, %v3092, 0
    %v3104 = vsel %vm15, %v3095, 0
    %v3106 = vsel %vm15, %v3097, 0
    %3108 = vmatpush.msra.mxu0 0.0
    %3109 = vmatpush.msra.mxu0 0.0
    %3110 = vmatpush.msra.mxu0 0.0
    %3111 = vmatpush.msra.mxu0 0.0
    %3112 = vmatpush.msra.mxu0 0.0
    %3113 = vmatpush.msra.mxu0 0.0
    %3114 = vmatpush.msra.mxu0 0.0
    %3115 = vmatpush.msra.mxu0 0.0
    %3116 = vmatpush.msra.mxu0 0.0
    %3117 = vmatpush.msra.mxu0 0.0
    %3118 = vmatpush.msra.mxu0 0.0
    %3119 = vmatpush.msra.mxu0 0.0
    %3120 = vmatpush.msra.mxu0 0.0
    %3121 = vmatpush.msra.mxu0 0.0
    %3122 = vmatpush.msra.mxu0 0.0
    %3123 = vmatpush.msra.mxu0 %v3099
    %3124 = vmatmul.f32.gmra.mxu0 %v694
    %v3125 = vpop.f32.mrf.mxu0
    %v3126 = vadd.f32 0.0, %v3125
    %3127 = vmatmul.f32.gmra.mxu0 %v696
    %v3128 = vpop.f32.mrf.mxu0
    %v3129 = vadd.f32 0.0, %v3128
    %3130 = vmatmul.f32.gmra.mxu0 %v698
    %v3131 = vpop.f32.mrf.mxu0
    %v3132 = vadd.f32 0.0, %v3131
    %3133 = vmatmul.f32.gmra.mxu0 %v700
    %v3134 = vpop.f32.mrf.mxu0
    %v3135 = vadd.f32 0.0, %v3134
    %3136 = vmatmul.f32.gmra.mxu0 %v702
    %v3137 = vpop.f32.mrf.mxu0
    %v3138 = vadd.f32 0.0, %v3137
    %3139 = vmatmul.f32.gmra.mxu0 %v704
    %v3140 = vpop.f32.mrf.mxu0
    %v3141 = vadd.f32 0.0, %v3140
    %3142 = vmatmul.f32.gmra.mxu0 %v706
    %v3143 = vpop.f32.mrf.mxu0
    %v3144 = vadd.f32 0.0, %v3143
    %3145 = vmatmul.f32.gmra.mxu0 %v708
    %v3146 = vpop.f32.mrf.mxu0
    %v3147 = vadd.f32 0.0, %v3146
    %3148 = vmatmul.f32.gmra.mxu0 %v710
    %v3149 = vpop.f32.mrf.mxu0
    %v3150 = vadd.f32 0.0, %v3149
    %3151 = vmatmul.f32.gmra.mxu0 %v712
    %v3152 = vpop.f32.mrf.mxu0
    %v3153 = vadd.f32 0.0, %v3152
    %3154 = vmatmul.f32.gmra.mxu0 %v714
    %v3155 = vpop.f32.mrf.mxu0
    %v3156 = vadd.f32 0.0, %v3155
    %3157 = vmatmul.f32.gmra.mxu0 %v716
    %v3158 = vpop.f32.mrf.mxu0
    %v3159 = vadd.f32 0.0, %v3158
    %3160 = vmatmul.f32.gmra.mxu0 %v718
    %v3161 = vpop.f32.mrf.mxu0
    %v3162 = vadd.f32 0.0, %v3161
    %3163 = vmatmul.f32.gmra.mxu0 %v720
    %v3164 = vpop.f32.mrf.mxu0
    %v3165 = vadd.f32 0.0, %v3164
    %3166 = vmatmul.f32.gmra.mxu0 %v722
    %v3167 = vpop.f32.mrf.mxu0
    %v3168 = vadd.f32 0.0, %v3167
    %3169 = vmatmul.f32.gmra.mxu0 %v724
    %v3170 = vpop.f32.mrf.mxu0
    %v3171 = vadd.f32 0.0, %v3170
    %3172 = vmatmul.f32.gmra.mxu0 %v726
    %v3173 = vpop.f32.mrf.mxu0
    %v3174 = vadd.f32 0.0, %v3173
    %3175 = vmatmul.f32.gmra.mxu0 %v728
    %v3176 = vpop.f32.mrf.mxu0
    %v3177 = vadd.f32 0.0, %v3176
    %3178 = vmatmul.f32.gmra.mxu0 %v730
    %v3179 = vpop.f32.mrf.mxu0
    %v3180 = vadd.f32 0.0, %v3179
    %3181 = vmatmul.f32.gmra.mxu0 %v732
    %v3182 = vpop.f32.mrf.mxu0
    %v3183 = vadd.f32 0.0, %v3182
    %3184 = vmatmul.f32.gmra.mxu0 %v734
    %v3185 = vpop.f32.mrf.mxu0
    %v3186 = vadd.f32 0.0, %v3185
    %3187 = vmatmul.f32.gmra.mxu0 %v736
    %v3188 = vpop.f32.mrf.mxu0
    %v3189 = vadd.f32 0.0, %v3188
    %3190 = vmatmul.f32.gmra.mxu0 %v738
    %v3191 = vpop.f32.mrf.mxu0
    %v3192 = vadd.f32 0.0, %v3191
    %3193 = vmatmul.f32.gmra.mxu0 %v740
    %v3194 = vpop.f32.mrf.mxu0
    %v3195 = vadd.f32 0.0, %v3194
    %3196 = vmatmul.f32.gmra.mxu0 %v742
    %v3197 = vpop.f32.mrf.mxu0
    %v3198 = vadd.f32 0.0, %v3197
    %3199 = vmatmul.f32.gmra.mxu0 %v744
    %v3200 = vpop.f32.mrf.mxu0
    %v3201 = vadd.f32 0.0, %v3200
    %3202 = vmatmul.f32.gmra.mxu0 %v746
    %v3203 = vpop.f32.mrf.mxu0
    %v3204 = vadd.f32 0.0, %v3203
    %3205 = vmatmul.f32.gmra.mxu0 %v748
    %v3206 = vpop.f32.mrf.mxu0
    %v3207 = vadd.f32 0.0, %v3206
    %3208 = vmatmul.f32.gmra.mxu0 %v2225
    %v3209 = vpop.f32.mrf.mxu0
    %v3210 = vadd.f32 0.0, %v3209
    %3211 = vmatmul.f32.gmra.mxu0 %v2227
    %v3212 = vpop.f32.mrf.mxu0
    %v3213 = vadd.f32 0.0, %v3212
    %3214 = vmatmul.f32.gmra.mxu0 %v3100
    %v3215 = vpop.f32.mrf.mxu0
    %v3216 = vadd.f32 0.0, %v3215
    %3217 = vmatmul.f32.gmra.mxu0 %v3102
    %v3218 = vpop.f32.mrf.mxu0
    %v3219 = vadd.f32 0.0, %v3218
    %3220 = vmatmul.f32.gmra.mxu0 %v758
    %v3221 = vpop.f32.mrf.mxu0
    %v3222 = vadd.f32 0.0, %v3221
    %3223 = vmatmul.f32.gmra.mxu0 %v760
    %v3224 = vpop.f32.mrf.mxu0
    %v3225 = vadd.f32 0.0, %v3224
    %3226 = vmatmul.f32.gmra.mxu0 %v762
    %v3227 = vpop.f32.mrf.mxu0
    %v3228 = vadd.f32 0.0, %v3227
    %3229 = vmatmul.f32.gmra.mxu0 %v764
    %v3230 = vpop.f32.mrf.mxu0
    %v3231 = vadd.f32 0.0, %v3230
    %3232 = vmatmul.f32.gmra.mxu0 %v766
    %v3233 = vpop.f32.mrf.mxu0
    %v3234 = vadd.f32 0.0, %v3233
    %3235 = vmatmul.f32.gmra.mxu0 %v768
    %v3236 = vpop.f32.mrf.mxu0
    %v3237 = vadd.f32 0.0, %v3236
    %3238 = vmatmul.f32.gmra.mxu0 %v770
    %v3239 = vpop.f32.mrf.mxu0
    %v3240 = vadd.f32 0.0, %v3239
    %3241 = vmatmul.f32.gmra.mxu0 %v772
    %v3242 = vpop.f32.mrf.mxu0
    %v3243 = vadd.f32 0.0, %v3242
    %3244 = vmatmul.f32.gmra.mxu0 %v774
    %v3245 = vpop.f32.mrf.mxu0
    %v3246 = vadd.f32 0.0, %v3245
    %3247 = vmatmul.f32.gmra.mxu0 %v776
    %v3248 = vpop.f32.mrf.mxu0
    %v3249 = vadd.f32 0.0, %v3248
    %3250 = vmatmul.f32.gmra.mxu0 %v778
    %v3251 = vpop.f32.mrf.mxu0
    %v3252 = vadd.f32 0.0, %v3251
    %3253 = vmatmul.f32.gmra.mxu0 %v780
    %v3254 = vpop.f32.mrf.mxu0
    %v3255 = vadd.f32 0.0, %v3254
    %3256 = vmatmul.f32.gmra.mxu0 %v782
    %v3257 = vpop.f32.mrf.mxu0
    %v3258 = vadd.f32 0.0, %v3257
    %3259 = vmatmul.f32.gmra.mxu0 %v784
    %v3260 = vpop.f32.mrf.mxu0
    %v3261 = vadd.f32 0.0, %v3260
    %3262 = vmatmul.f32.gmra.mxu0 %v786
    %v3263 = vpop.f32.mrf.mxu0
    %v3264 = vadd.f32 0.0, %v3263
    %3265 = vmatmul.f32.gmra.mxu0 %v788
    %v3266 = vpop.f32.mrf.mxu0
    %v3267 = vadd.f32 0.0, %v3266
    %3268 = vmatmul.f32.gmra.mxu0 %v790
    %v3269 = vpop.f32.mrf.mxu0
    %v3270 = vadd.f32 0.0, %v3269
    %3271 = vmatmul.f32.gmra.mxu0 %v792
    %v3272 = vpop.f32.mrf.mxu0
    %v3273 = vadd.f32 0.0, %v3272
    %3274 = vmatmul.f32.gmra.mxu0 %v794
    %v3275 = vpop.f32.mrf.mxu0
    %v3276 = vadd.f32 0.0, %v3275
    %3277 = vmatmul.f32.gmra.mxu0 %v796
    %v3278 = vpop.f32.mrf.mxu0
    %v3279 = vadd.f32 0.0, %v3278
    %3280 = vmatmul.f32.gmra.mxu0 %v798
    %v3281 = vpop.f32.mrf.mxu0
    %v3282 = vadd.f32 0.0, %v3281
    %3283 = vmatmul.f32.gmra.mxu0 %v800
    %v3284 = vpop.f32.mrf.mxu0
    %v3285 = vadd.f32 0.0, %v3284
    %3286 = vmatmul.f32.gmra.mxu0 %v802
    %v3287 = vpop.f32.mrf.mxu0
    %v3288 = vadd.f32 0.0, %v3287
    %3289 = vmatmul.f32.gmra.mxu0 %v804
    %v3290 = vpop.f32.mrf.mxu0
    %v3291 = vadd.f32 0.0, %v3290
    %3292 = vmatmul.f32.gmra.mxu0 %v806
    %v3293 = vpop.f32.mrf.mxu0
    %v3294 = vadd.f32 0.0, %v3293
    %3295 = vmatmul.f32.gmra.mxu0 %v808
    %v3296 = vpop.f32.mrf.mxu0
    %v3297 = vadd.f32 0.0, %v3296
    %3298 = vmatmul.f32.gmra.mxu0 %v810
    %v3299 = vpop.f32.mrf.mxu0
    %v3300 = vadd.f32 0.0, %v3299
    %3301 = vmatmul.f32.gmra.mxu0 %v812
    %v3302 = vpop.f32.mrf.mxu0
    %v3303 = vadd.f32 0.0, %v3302
    %3304 = vmatmul.f32.gmra.mxu0 %v2229
    %v3305 = vpop.f32.mrf.mxu0
    %v3306 = vadd.f32 0.0, %v3305
    %3307 = vmatmul.f32.gmra.mxu0 %v2231
    %v3308 = vpop.f32.mrf.mxu0
    %v3309 = vadd.f32 0.0, %v3308
    %3310 = vmatmul.f32.gmra.mxu0 %v3104
    %v3311 = vpop.f32.mrf.mxu0
    %v3312 = vadd.f32 0.0, %v3311
    %3313 = vmatmul.f32.gmra.mxu0 %v3106
    %v3314 = vpop.f32.mrf.mxu0
    %v3315 = vadd.f32 0.0, %v3314
    %3316 = vdwg.mxu0
    %v3317 = vadd.f32 %v3022, %v3126
    %v3318 = vadd.f32 %v3023, %v3129
    %v3319 = vadd.f32 %v3024, %v3132
    %v3320 = vadd.f32 %v3025, %v3135
    %v3321 = vadd.f32 %v3026, %v3138
    %v3322 = vadd.f32 %v3027, %v3141
    %v3323 = vadd.f32 %v3028, %v3144
    %v3324 = vadd.f32 %v3029, %v3147
    %v3325 = vadd.f32 %v3030, %v3150
    %v3326 = vadd.f32 %v3031, %v3153
    %v3327 = vadd.f32 %v3032, %v3156
    %v3328 = vadd.f32 %v3033, %v3159
    %v3329 = vadd.f32 %v3034, %v3162
    %v3330 = vadd.f32 %v3035, %v3165
    %v3331 = vadd.f32 %v3036, %v3168
    %v3332 = vadd.f32 %v3037, %v3171
    %v3333 = vadd.f32 %v3038, %v3174
    %v3334 = vadd.f32 %v3039, %v3177
    %v3335 = vadd.f32 %v3040, %v3180
    %v3336 = vadd.f32 %v3041, %v3183
    %v3337 = vadd.f32 %v3042, %v3186
    %v3338 = vadd.f32 %v3043, %v3189
    %v3339 = vadd.f32 %v3044, %v3192
    %v3340 = vadd.f32 %v3045, %v3195
    %v3341 = vadd.f32 %v3046, %v3198
    %v3342 = vadd.f32 %v3047, %v3201
    %v3343 = vadd.f32 %v3048, %v3204
    %v3344 = vadd.f32 %v3049, %v3207
    %v3345 = vadd.f32 %v3050, %v3210
    %v3346 = vadd.f32 %v3051, %v3213
    %v3347 = vadd.f32 %v3052, %v3216
    %v3348 = vadd.f32 %v3053, %v3219
    %v3349 = vadd.f32 %v3054, %v3222
    %v3350 = vadd.f32 %v3055, %v3225
    %v3351 = vadd.f32 %v3056, %v3228
    %v3352 = vadd.f32 %v3057, %v3231
    %v3353 = vadd.f32 %v3058, %v3234
    %v3354 = vadd.f32 %v3059, %v3237
    %v3355 = vadd.f32 %v3060, %v3240
    %v3356 = vadd.f32 %v3061, %v3243
    %v3357 = vadd.f32 %v3062, %v3246
    %v3358 = vadd.f32 %v3063, %v3249
    %v3359 = vadd.f32 %v3064, %v3252
    %v3360 = vadd.f32 %v3065, %v3255
    %v3361 = vadd.f32 %v3066, %v3258
    %v3362 = vadd.f32 %v3067, %v3261
    %v3363 = vadd.f32 %v3068, %v3264
    %v3364 = vadd.f32 %v3069, %v3267
    %v3365 = vadd.f32 %v3070, %v3270
    %v3366 = vadd.f32 %v3071, %v3273
    %v3367 = vadd.f32 %v3072, %v3276
    %v3368 = vadd.f32 %v3073, %v3279
    %v3369 = vadd.f32 %v3074, %v3282
    %v3370 = vadd.f32 %v3075, %v3285
    %v3371 = vadd.f32 %v3076, %v3288
    %v3372 = vadd.f32 %v3077, %v3291
    %v3373 = vadd.f32 %v3078, %v3294
    %v3374 = vadd.f32 %v3079, %v3297
    %v3375 = vadd.f32 %v3080, %v3300
    %v3376 = vadd.f32 %v3081, %v3303
    %v3377 = vadd.f32 %v3082, %v3306
    %v3378 = vadd.f32 %v3083, %v3309
    %v3379 = vadd.f32 %v3084, %v3312
    %v3380 = vadd.f32 %v3085, %v3315
    %v3381 = vrot.slane %v369, 2
    %v3382 = vrot.slane %v370, 2
    %v3383 = vsel %vm1360, %v3381, %v3382
    %v3384 = vrot.slane %v371, 2
    %v3385 = vsel %vm1360, %v3382, %v3384
    %v3386 = vrot.slane %v423, 2
    %v3387 = vrot.slane %v424, 2
    %v3388 = vsel %vm1360, %v3386, %v3387
    %v3389 = vrot.slane %v425, 2
    %v3390 = vsel %vm1360, %v3387, %v3389
    %s3391 = scalar_lea.vmem %s1, 64
    %v3392 = vld [vmem:[%s3391] sm:$0xff]
    %v3393 = vsel %vm15, %v3383, 0
    %v3395 = vsel %vm15, %v3385, 0
    %v3397 = vsel %vm15, %v3388, 0
    %v3399 = vsel %vm15, %v3390, 0
    %3401 = vmatpush.msra.mxu0 0.0
    %3402 = vmatpush.msra.mxu0 0.0
    %3403 = vmatpush.msra.mxu0 0.0
    %3404 = vmatpush.msra.mxu0 0.0
    %3405 = vmatpush.msra.mxu0 0.0
    %3406 = vmatpush.msra.mxu0 0.0
    %3407 = vmatpush.msra.mxu0 0.0
    %3408 = vmatpush.msra.mxu0 0.0
    %3409 = vmatpush.msra.mxu0 0.0
    %3410 = vmatpush.msra.mxu0 0.0
    %3411 = vmatpush.msra.mxu0 0.0
    %3412 = vmatpush.msra.mxu0 0.0
    %3413 = vmatpush.msra.mxu0 0.0
    %3414 = vmatpush.msra.mxu0 0.0
    %3415 = vmatpush.msra.mxu0 0.0
    %3416 = vmatpush.msra.mxu0 %v3392
    %3417 = vmatmul.f32.gmra.mxu0 %v1531
    %v3418 = vpop.f32.mrf.mxu0
    %v3419 = vadd.f32 0.0, %v3418
    %3420 = vmatmul.f32.gmra.mxu0 %v1533
    %v3421 = vpop.f32.mrf.mxu0
    %v3422 = vadd.f32 0.0, %v3421
    %3423 = vmatmul.f32.gmra.mxu0 %v1535
    %v3424 = vpop.f32.mrf.mxu0
    %v3425 = vadd.f32 0.0, %v3424
    %3426 = vmatmul.f32.gmra.mxu0 %v1537
    %v3427 = vpop.f32.mrf.mxu0
    %v3428 = vadd.f32 0.0, %v3427
    %3429 = vmatmul.f32.gmra.mxu0 %v1539
    %v3430 = vpop.f32.mrf.mxu0
    %v3431 = vadd.f32 0.0, %v3430
    %3432 = vmatmul.f32.gmra.mxu0 %v1541
    %v3433 = vpop.f32.mrf.mxu0
    %v3434 = vadd.f32 0.0, %v3433
    %3435 = vmatmul.f32.gmra.mxu0 %v1543
    %v3436 = vpop.f32.mrf.mxu0
    %v3437 = vadd.f32 0.0, %v3436
    %3438 = vmatmul.f32.gmra.mxu0 %v1545
    %v3439 = vpop.f32.mrf.mxu0
    %v3440 = vadd.f32 0.0, %v3439
    %3441 = vmatmul.f32.gmra.mxu0 %v1547
    %v3442 = vpop.f32.mrf.mxu0
    %v3443 = vadd.f32 0.0, %v3442
    %3444 = vmatmul.f32.gmra.mxu0 %v1549
    %v3445 = vpop.f32.mrf.mxu0
    %v3446 = vadd.f32 0.0, %v3445
    %3447 = vmatmul.f32.gmra.mxu0 %v1551
    %v3448 = vpop.f32.mrf.mxu0
    %v3449 = vadd.f32 0.0, %v3448
    %3450 = vmatmul.f32.gmra.mxu0 %v1553
    %v3451 = vpop.f32.mrf.mxu0
    %v3452 = vadd.f32 0.0, %v3451
    %3453 = vmatmul.f32.gmra.mxu0 %v1555
    %v3454 = vpop.f32.mrf.mxu0
    %v3455 = vadd.f32 0.0, %v3454
    %3456 = vmatmul.f32.gmra.mxu0 %v1557
    %v3457 = vpop.f32.mrf.mxu0
    %v3458 = vadd.f32 0.0, %v3457
    %3459 = vmatmul.f32.gmra.mxu0 %v1559
    %v3460 = vpop.f32.mrf.mxu0
    %v3461 = vadd.f32 0.0, %v3460
    %3462 = vmatmul.f32.gmra.mxu0 %v1561
    %v3463 = vpop.f32.mrf.mxu0
    %v3464 = vadd.f32 0.0, %v3463
    %3465 = vmatmul.f32.gmra.mxu0 %v1563
    %v3466 = vpop.f32.mrf.mxu0
    %v3467 = vadd.f32 0.0, %v3466
    %3468 = vmatmul.f32.gmra.mxu0 %v1565
    %v3469 = vpop.f32.mrf.mxu0
    %v3470 = vadd.f32 0.0, %v3469
    %3471 = vmatmul.f32.gmra.mxu0 %v1567
    %v3472 = vpop.f32.mrf.mxu0
    %v3473 = vadd.f32 0.0, %v3472
    %3474 = vmatmul.f32.gmra.mxu0 %v1569
    %v3475 = vpop.f32.mrf.mxu0
    %v3476 = vadd.f32 0.0, %v3475
    %3477 = vmatmul.f32.gmra.mxu0 %v1571
    %v3478 = vpop.f32.mrf.mxu0
    %v3479 = vadd.f32 0.0, %v3478
    %3480 = vmatmul.f32.gmra.mxu0 %v1573
    %v3481 = vpop.f32.mrf.mxu0
    %v3482 = vadd.f32 0.0, %v3481
    %3483 = vmatmul.f32.gmra.mxu0 %v1575
    %v3484 = vpop.f32.mrf.mxu0
    %v3485 = vadd.f32 0.0, %v3484
    %3486 = vmatmul.f32.gmra.mxu0 %v1577
    %v3487 = vpop.f32.mrf.mxu0
    %v3488 = vadd.f32 0.0, %v3487
    %3489 = vmatmul.f32.gmra.mxu0 %v1579
    %v3490 = vpop.f32.mrf.mxu0
    %v3491 = vadd.f32 0.0, %v3490
    %3492 = vmatmul.f32.gmra.mxu0 %v1581
    %v3493 = vpop.f32.mrf.mxu0
    %v3494 = vadd.f32 0.0, %v3493
    %3495 = vmatmul.f32.gmra.mxu0 %v1583
    %v3496 = vpop.f32.mrf.mxu0
    %v3497 = vadd.f32 0.0, %v3496
    %3498 = vmatmul.f32.gmra.mxu0 %v1585
    %v3499 = vpop.f32.mrf.mxu0
    %v3500 = vadd.f32 0.0, %v3499
    %3501 = vmatmul.f32.gmra.mxu0 %v2518
    %v3502 = vpop.f32.mrf.mxu0
    %v3503 = vadd.f32 0.0, %v3502
    %3504 = vmatmul.f32.gmra.mxu0 %v2520
    %v3505 = vpop.f32.mrf.mxu0
    %v3506 = vadd.f32 0.0, %v3505
    %3507 = vmatmul.f32.gmra.mxu0 %v3393
    %v3508 = vpop.f32.mrf.mxu0
    %v3509 = vadd.f32 0.0, %v3508
    %3510 = vmatmul.f32.gmra.mxu0 %v3395
    %v3511 = vpop.f32.mrf.mxu0
    %v3512 = vadd.f32 0.0, %v3511
    %3513 = vmatmul.f32.gmra.mxu0 %v1595
    %v3514 = vpop.f32.mrf.mxu0
    %v3515 = vadd.f32 0.0, %v3514
    %3516 = vmatmul.f32.gmra.mxu0 %v1597
    %v3517 = vpop.f32.mrf.mxu0
    %v3518 = vadd.f32 0.0, %v3517
    %3519 = vmatmul.f32.gmra.mxu0 %v1599
    %v3520 = vpop.f32.mrf.mxu0
    %v3521 = vadd.f32 0.0, %v3520
    %3522 = vmatmul.f32.gmra.mxu0 %v1601
    %v3523 = vpop.f32.mrf.mxu0
    %v3524 = vadd.f32 0.0, %v3523
    %3525 = vmatmul.f32.gmra.mxu0 %v1603
    %v3526 = vpop.f32.mrf.mxu0
    %v3527 = vadd.f32 0.0, %v3526
    %3528 = vmatmul.f32.gmra.mxu0 %v1605
    %v3529 = vpop.f32.mrf.mxu0
    %v3530 = vadd.f32 0.0, %v3529
    %3531 = vmatmul.f32.gmra.mxu0 %v1607
    %v3532 = vpop.f32.mrf.mxu0
    %v3533 = vadd.f32 0.0, %v3532
    %3534 = vmatmul.f32.gmra.mxu0 %v1609
    %v3535 = vpop.f32.mrf.mxu0
    %v3536 = vadd.f32 0.0, %v3535
    %3537 = vmatmul.f32.gmra.mxu0 %v1611
    %v3538 = vpop.f32.mrf.mxu0
    %v3539 = vadd.f32 0.0, %v3538
    %3540 = vmatmul.f32.gmra.mxu0 %v1613
    %v3541 = vpop.f32.mrf.mxu0
    %v3542 = vadd.f32 0.0, %v3541
    %3543 = vmatmul.f32.gmra.mxu0 %v1615
    %v3544 = vpop.f32.mrf.mxu0
    %v3545 = vadd.f32 0.0, %v3544
    %3546 = vmatmul.f32.gmra.mxu0 %v1617
    %v3547 = vpop.f32.mrf.mxu0
    %v3548 = vadd.f32 0.0, %v3547
    %3549 = vmatmul.f32.gmra.mxu0 %v1619
    %v3550 = vpop.f32.mrf.mxu0
    %v3551 = vadd.f32 0.0, %v3550
    %3552 = vmatmul.f32.gmra.mxu0 %v1621
    %v3553 = vpop.f32.mrf.mxu0
    %v3554 = vadd.f32 0.0, %v3553
    %3555 = vmatmul.f32.gmra.mxu0 %v1623
    %v3556 = vpop.f32.mrf.mxu0
    %v3557 = vadd.f32 0.0, %v3556
    %3558 = vmatmul.f32.gmra.mxu0 %v1625
    %v3559 = vpop.f32.mrf.mxu0
    %v3560 = vadd.f32 0.0, %v3559
    %3561 = vmatmul.f32.gmra.mxu0 %v1627
    %v3562 = vpop.f32.mrf.mxu0
    %v3563 = vadd.f32 0.0, %v3562
    %3564 = vmatmul.f32.gmra.mxu0 %v1629
    %v3565 = vpop.f32.mrf.mxu0
    %v3566 = vadd.f32 0.0, %v3565
    %3567 = vmatmul.f32.gmra.mxu0 %v1631
    %v3568 = vpop.f32.mrf.mxu0
    %v3569 = vadd.f32 0.0, %v3568
    %3570 = vmatmul.f32.gmra.mxu0 %v1633
    %v3571 = vpop.f32.mrf.mxu0
    %v3572 = vadd.f32 0.0, %v3571
    %3573 = vmatmul.f32.gmra.mxu0 %v1635
    %v3574 = vpop.f32.mrf.mxu0
    %v3575 = vadd.f32 0.0, %v3574
    %3576 = vmatmul.f32.gmra.mxu0 %v1637
    %v3577 = vpop.f32.mrf.mxu0
    %v3578 = vadd.f32 0.0, %v3577
    %3579 = vmatmul.f32.gmra.mxu0 %v1639
    %v3580 = vpop.f32.mrf.mxu0
    %v3581 = vadd.f32 0.0, %v3580
    %3582 = vmatmul.f32.gmra.mxu0 %v1641
    %v3583 = vpop.f32.mrf.mxu0
    %v3584 = vadd.f32 0.0, %v3583
    %3585 = vmatmul.f32.gmra.mxu0 %v1643
    %v3586 = vpop.f32.mrf.mxu0
    %v3587 = vadd.f32 0.0, %v3586
    %3588 = vmatmul.f32.gmra.mxu0 %v1645
    %v3589 = vpop.f32.mrf.mxu0
    %v3590 = vadd.f32 0.0, %v3589
    %3591 = vmatmul.f32.gmra.mxu0 %v1647
    %v3592 = vpop.f32.mrf.mxu0
    %v3593 = vadd.f32 0.0, %v3592
    %3594 = vmatmul.f32.gmra.mxu0 %v1649
    %v3595 = vpop.f32.mrf.mxu0
    %v3596 = vadd.f32 0.0, %v3595
    %3597 = vmatmul.f32.gmra.mxu0 %v2522
    %v3598 = vpop.f32.mrf.mxu0
    %v3599 = vadd.f32 0.0, %v3598
    %3600 = vmatmul.f32.gmra.mxu0 %v2524
    %v3601 = vpop.f32.mrf.mxu0
    %v3602 = vadd.f32 0.0, %v3601
    %3603 = vmatmul.f32.gmra.mxu0 %v3397
    %v3604 = vpop.f32.mrf.mxu0
    %v3605 = vadd.f32 0.0, %v3604
    %3606 = vmatmul.f32.gmra.mxu0 %v3399
    %v3607 = vpop.f32.mrf.mxu0
    %v3608 = vadd.f32 0.0, %v3607
    %3609 = vdwg.mxu0
    %v3610 = vadd.f32 %v3317, %v3419
    %v3611 = vadd.f32 %v3318, %v3422
    %v3612 = vadd.f32 %v3319, %v3425
    %v3613 = vadd.f32 %v3320, %v3428
    %v3614 = vadd.f32 %v3321, %v3431
    %v3615 = vadd.f32 %v3322, %v3434
    %v3616 = vadd.f32 %v3323, %v3437
    %v3617 = vadd.f32 %v3324, %v3440
    %v3618 = vadd.f32 %v3325, %v3443
    %v3619 = vadd.f32 %v3326, %v3446
    %v3620 = vadd.f32 %v3327, %v3449
    %v3621 = vadd.f32 %v3328, %v3452
    %v3622 = vadd.f32 %v3329, %v3455
    %v3623 = vadd.f32 %v3330, %v3458
    %v3624 = vadd.f32 %v3331, %v3461
    %v3625 = vadd.f32 %v3332, %v3464
    %v3626 = vadd.f32 %v3333, %v3467
    %v3627 = vadd.f32 %v3334, %v3470
    %v3628 = vadd.f32 %v3335, %v3473
    %v3629 = vadd.f32 %v3336, %v3476
    %v3630 = vadd.f32 %v3337, %v3479
    %v3631 = vadd.f32 %v3338, %v3482
    %v3632 = vadd.f32 %v3339, %v3485
    %v3633 = vadd.f32 %v3340, %v3488
    %v3634 = vadd.f32 %v3341, %v3491
    %v3635 = vadd.f32 %v3342, %v3494
    %v3636 = vadd.f32 %v3343, %v3497
    %v3637 = vadd.f32 %v3344, %v3500
    %v3638 = vadd.f32 %v3345, %v3503
    %v3639 = vadd.f32 %v3346, %v3506
    %v3640 = vadd.f32 %v3347, %v3509
    %v3641 = vadd.f32 %v3348, %v3512
    %v3642 = vadd.f32 %v3349, %v3515
    %v3643 = vadd.f32 %v3350, %v3518
    %v3644 = vadd.f32 %v3351, %v3521
    %v3645 = vadd.f32 %v3352, %v3524
    %v3646 = vadd.f32 %v3353, %v3527
    %v3647 = vadd.f32 %v3354, %v3530
    %v3648 = vadd.f32 %v3355, %v3533
    %v3649 = vadd.f32 %v3356, %v3536
    %v3650 = vadd.f32 %v3357, %v3539
    %v3651 = vadd.f32 %v3358, %v3542
    %v3652 = vadd.f32 %v3359, %v3545
    %v3653 = vadd.f32 %v3360, %v3548
    %v3654 = vadd.f32 %v3361, %v3551
    %v3655 = vadd.f32 %v3362, %v3554
    %v3656 = vadd.f32 %v3363, %v3557
    %v3657 = vadd.f32 %v3364, %v3560
    %v3658 = vadd.f32 %v3365, %v3563
    %v3659 = vadd.f32 %v3366, %v3566
    %v3660 = vadd.f32 %v3367, %v3569
    %v3661 = vadd.f32 %v3368, %v3572
    %v3662 = vadd.f32 %v3369, %v3575
    %v3663 = vadd.f32 %v3370, %v3578
    %v3664 = vadd.f32 %v3371, %v3581
    %v3665 = vadd.f32 %v3372, %v3584
    %v3666 = vadd.f32 %v3373, %v3587
    %v3667 = vadd.f32 %v3374, %v3590
    %v3668 = vadd.f32 %v3375, %v3593
    %v3669 = vadd.f32 %v3376, %v3596
    %v3670 = vadd.f32 %v3377, %v3599
    %v3671 = vadd.f32 %v3378, %v3602
    %v3672 = vadd.f32 %v3379, %v3605
    %v3673 = vadd.f32 %v3380, %v3608
    %v3674 = vsel %vm15, %v3610, 0.0
    %v3675 = vsel %vm15, %v3611, 0.0
    %v3676 = vadd.f32 %v3674, %v3675
    %v3677 = vsel %vm15, %v3612, 0.0
    %v3678 = vadd.f32 %v3676, %v3677
    %v3679 = vsel %vm15, %v3613, 0.0
    %v3680 = vadd.f32 %v3678, %v3679
    %v3681 = vsel %vm15, %v3614, 0.0
    %v3682 = vadd.f32 %v3680, %v3681
    %v3683 = vsel %vm15, %v3615, 0.0
    %v3684 = vadd.f32 %v3682, %v3683
    %v3685 = vsel %vm15, %v3616, 0.0
    %v3686 = vadd.f32 %v3684, %v3685
    %v3687 = vsel %vm15, %v3617, 0.0
    %v3688 = vadd.f32 %v3686, %v3687
    %v3689 = vsel %vm15, %v3618, 0.0
    %v3690 = vadd.f32 %v3688, %v3689
    %v3691 = vsel %vm15, %v3619, 0.0
    %v3692 = vadd.f32 %v3690, %v3691
    %v3693 = vsel %vm15, %v3620, 0.0
    %v3694 = vadd.f32 %v3692, %v3693
    %v3695 = vsel %vm15, %v3621, 0.0
    %v3696 = vadd.f32 %v3694, %v3695
    %v3697 = vsel %vm15, %v3622, 0.0
    %v3698 = vadd.f32 %v3696, %v3697
    %v3699 = vsel %vm15, %v3623, 0.0
    %v3700 = vadd.f32 %v3698, %v3699
    %v3701 = vsel %vm15, %v3624, 0.0
    %v3702 = vadd.f32 %v3700, %v3701
    %v3703 = vsel %vm15, %v3625, 0.0
    %v3704 = vadd.f32 %v3702, %v3703
    %v3705 = vsel %vm15, %v3626, 0.0
    %v3706 = vadd.f32 %v3704, %v3705
    %v3707 = vsel %vm15, %v3627, 0.0
    %v3708 = vadd.f32 %v3706, %v3707
    %v3709 = vsel %vm15, %v3628, 0.0
    %v3710 = vadd.f32 %v3708, %v3709
    %v3711 = vsel %vm15, %v3629, 0.0
    %v3712 = vadd.f32 %v3710, %v3711
    %v3713 = vsel %vm15, %v3630, 0.0
    %v3714 = vadd.f32 %v3712, %v3713
    %v3715 = vsel %vm15, %v3631, 0.0
    %v3716 = vadd.f32 %v3714, %v3715
    %v3717 = vsel %vm15, %v3632, 0.0
    %v3718 = vadd.f32 %v3716, %v3717
    %v3719 = vsel %vm15, %v3633, 0.0
    %v3720 = vadd.f32 %v3718, %v3719
    %v3721 = vsel %vm15, %v3634, 0.0
    %v3722 = vadd.f32 %v3720, %v3721
    %v3723 = vsel %vm15, %v3635, 0.0
    %v3724 = vadd.f32 %v3722, %v3723
    %v3725 = vsel %vm15, %v3636, 0.0
    %v3726 = vadd.f32 %v3724, %v3725
    %v3727 = vsel %vm15, %v3637, 0.0
    %v3728 = vadd.f32 %v3726, %v3727
    %v3729 = vsel %vm15, %v3638, 0.0
    %v3730 = vadd.f32 %v3728, %v3729
    %v3731 = vsel %vm15, %v3639, 0.0
    %v3732 = vadd.f32 %v3730, %v3731
    %v3733 = vsel %vm15, %v3640, 0.0
    %v3734 = vadd.f32 %v3732, %v3733
    %v3735 = vsel %vm15, %v3641, 0.0
    %v3736 = vadd.f32 %v3734, %v3735
    %v3737 = vsel %vm15, %v3642, 0.0
    %v3738 = vadd.f32 %v3736, %v3737
    %v3739 = vsel %vm15, %v3643, 0.0
    %v3740 = vadd.f32 %v3738, %v3739
    %v3741 = vsel %vm15, %v3644, 0.0
    %v3742 = vadd.f32 %v3740, %v3741
    %v3743 = vsel %vm15, %v3645, 0.0
    %v3744 = vadd.f32 %v3742, %v3743
    %v3745 = vsel %vm15, %v3646, 0.0
    %v3746 = vadd.f32 %v3744, %v3745
    %v3747 = vsel %vm15, %v3647, 0.0
    %v3748 = vadd.f32 %v3746, %v3747
    %v3749 = vsel %vm15, %v3648, 0.0
    %v3750 = vadd.f32 %v3748, %v3749
    %v3751 = vsel %vm15, %v3649, 0.0
    %v3752 = vadd.f32 %v3750, %v3751
    %v3753 = vsel %vm15, %v3650, 0.0
    %v3754 = vadd.f32 %v3752, %v3753
    %v3755 = vsel %vm15, %v3651, 0.0
    %v3756 = vadd.f32 %v3754, %v3755
    %v3757 = vsel %vm15, %v3652, 0.0
    %v3758 = vadd.f32 %v3756, %v3757
    %v3759 = vsel %vm15, %v3653, 0.0
    %v3760 = vadd.f32 %v3758, %v3759
    %v3761 = vsel %vm15, %v3654, 0.0
    %v3762 = vadd.f32 %v3760, %v3761
    %v3763 = vsel %vm15, %v3655, 0.0
    %v3764 = vadd.f32 %v3762, %v3763
    %v3765 = vsel %vm15, %v3656, 0.0
    %v3766 = vadd.f32 %v3764, %v3765
    %v3767 = vsel %vm15, %v3657, 0.0
    %v3768 = vadd.f32 %v3766, %v3767
    %v3769 = vsel %vm15, %v3658, 0.0
    %v3770 = vadd.f32 %v3768, %v3769
    %v3771 = vsel %vm15, %v3659, 0.0
    %v3772 = vadd.f32 %v3770, %v3771
    %v3773 = vsel %vm15, %v3660, 0.0
    %v3774 = vadd.f32 %v3772, %v3773
    %v3775 = vsel %vm15, %v3661, 0.0
    %v3776 = vadd.f32 %v3774, %v3775
    %v3777 = vsel %vm15, %v3662, 0.0
    %v3778 = vadd.f32 %v3776, %v3777
    %v3779 = vsel %vm15, %v3663, 0.0
    %v3780 = vadd.f32 %v3778, %v3779
    %v3781 = vsel %vm15, %v3664, 0.0
    %v3782 = vadd.f32 %v3780, %v3781
    %v3783 = vsel %vm15, %v3665, 0.0
    %v3784 = vadd.f32 %v3782, %v3783
    %v3785 = vsel %vm15, %v3666, 0.0
    %v3786 = vadd.f32 %v3784, %v3785
    %v3787 = vsel %vm15, %v3667, 0.0
    %v3788 = vadd.f32 %v3786, %v3787
    %v3789 = vsel %vm15, %v3668, 0.0
    %v3790 = vadd.f32 %v3788, %v3789
    %v3791 = vsel %vm15, %v3669, 0.0
    %v3792 = vadd.f32 %v3790, %v3791
    %v3793 = vsel %vm15, %v3670, 0.0
    %v3794 = vadd.f32 %v3792, %v3793
    %v3795 = vsel %vm15, %v3671, 0.0
    %v3796 = vadd.f32 %v3794, %v3795
    %v3797 = vsel %vm15, %v3672, 0.0
    %v3798 = vadd.f32 %v3796, %v3797
    %v3799 = vsel %vm15, %v3673, 0.0
    %v3800 = vadd.f32 %v3798, %v3799
    %v3801 = vrot.slane %v3800, 4
    %v3802 = vadd.f32 %v3800, %v3801
    %v3803 = vrot.slane %v3802, 2
    %v3804 = vadd.f32 %v3802, %v3803
    %v3805 = vrot.slane %v3804, 1
    %v3806 = vadd.f32 %v3804, %v3805
    %v3807 = vrcp.pop 512.0
    %v3808 = vmul.f32 512.0, %v3807
    %v3809 = vsub.f32 1.0, %v3808
    %v3810 = vmul.f32 %v3807, %v3809
    %v3811 = vadd.f32 %v3807, %v3810
    %vm3812 = vweird.f32 %v3807
    %v3813 = vsel %vm3812, %v3807, %v3811
    %v3814 = vmul.f32 %v3806, %v3813
    %v3815 = vsub.f32 %v3610, %v3814
    %v3816 = vsub.f32 %v3611, %v3814
    %v3817 = vsub.f32 %v3612, %v3814
    %v3818 = vsub.f32 %v3613, %v3814
    %v3819 = vsub.f32 %v3614, %v3814
    %v3820 = vsub.f32 %v3615, %v3814
    %v3821 = vsub.f32 %v3616, %v3814
    %v3822 = vsub.f32 %v3617, %v3814
    %v3823 = vsub.f32 %v3618, %v3814
    %v3824 = vsub.f32 %v3619, %v3814
    %v3825 = vsub.f32 %v3620, %v3814
    %v3826 = vsub.f32 %v3621, %v3814
    %v3827 = vsub.f32 %v3622, %v3814
    %v3828 = vsub.f32 %v3623, %v3814
    %v3829 = vsub.f32 %v3624, %v3814
    %v3830 = vsub.f32 %v3625, %v3814
    %v3831 = vsub.f32 %v3626, %v3814
    %v3832 = vsub.f32 %v3627, %v3814
    %v3833 = vsub.f32 %v3628, %v3814
    %v3834 = vsub.f32 %v3629, %v3814
    %v3835 = vsub.f32 %v3630, %v3814
    %v3836 = vsub.f32 %v3631, %v3814
    %v3837 = vsub.f32 %v3632, %v3814
    %v3838 = vsub.f32 %v3633, %v3814
    %v3839 = vsub.f32 %v3634, %v3814
    %v3840 = vsub.f32 %v3635, %v3814
    %v3841 = vsub.f32 %v3636, %v3814
    %v3842 = vsub.f32 %v3637, %v3814
    %v3843 = vsub.f32 %v3638, %v3814
    %v3844 = vsub.f32 %v3639, %v3814
    %v3845 = vsub.f32 %v3640, %v3814
    %v3846 = vsub.f32 %v3641, %v3814
    %v3847 = vsub.f32 %v3642, %v3814
    %v3848 = vsub.f32 %v3643, %v3814
    %v3849 = vsub.f32 %v3644, %v3814
    %v3850 = vsub.f32 %v3645, %v3814
    %v3851 = vsub.f32 %v3646, %v3814
    %v3852 = vsub.f32 %v3647, %v3814
    %v3853 = vsub.f32 %v3648, %v3814
    %v3854 = vsub.f32 %v3649, %v3814
    %v3855 = vsub.f32 %v3650, %v3814
    %v3856 = vsub.f32 %v3651, %v3814
    %v3857 = vsub.f32 %v3652, %v3814
    %v3858 = vsub.f32 %v3653, %v3814
    %v3859 = vsub.f32 %v3654, %v3814
    %v3860 = vsub.f32 %v3655, %v3814
    %v3861 = vsub.f32 %v3656, %v3814
    %v3862 = vsub.f32 %v3657, %v3814
    %v3863 = vsub.f32 %v3658, %v3814
    %v3864 = vsub.f32 %v3659, %v3814
    %v3865 = vsub.f32 %v3660, %v3814
    %v3866 = vsub.f32 %v3661, %v3814
    %v3867 = vsub.f32 %v3662, %v3814
    %v3868 = vsub.f32 %v3663, %v3814
    %v3869 = vsub.f32 %v3664, %v3814
    %v3870 = vsub.f32 %v3665, %v3814
    %v3871 = vsub.f32 %v3666, %v3814
    %v3872 = vsub.f32 %v3667, %v3814
    %v3873 = vsub.f32 %v3668, %v3814
    %v3874 = vsub.f32 %v3669, %v3814
    %v3875 = vsub.f32 %v3670, %v3814
    %v3876 = vsub.f32 %v3671, %v3814
    %v3877 = vsub.f32 %v3672, %v3814
    %v3878 = vsub.f32 %v3673, %v3814
    %v3879 = vmul.f32 %v3815, %v3815
    %v3880 = vmul.f32 %v3816, %v3816
    %v3881 = vmul.f32 %v3817, %v3817
    %v3882 = vmul.f32 %v3818, %v3818
    %v3883 = vmul.f32 %v3819, %v3819
    %v3884 = vmul.f32 %v3820, %v3820
    %v3885 = vmul.f32 %v3821, %v3821
    %v3886 = vmul.f32 %v3822, %v3822
    %v3887 = vmul.f32 %v3823, %v3823
    %v3888 = vmul.f32 %v3824, %v3824
    %v3889 = vmul.f32 %v3825, %v3825
    %v3890 = vmul.f32 %v3826, %v3826
    %v3891 = vmul.f32 %v3827, %v3827
    %v3892 = vmul.f32 %v3828, %v3828
    %v3893 = vmul.f32 %v3829, %v3829
    %v3894 = vmul.f32 %v3830, %v3830
    %v3895 = vmul.f32 %v3831, %v3831
    %v3896 = vmul.f32 %v3832, %v3832
    %v3897 = vmul.f32 %v3833, %v3833
    %v3898 = vmul.f32 %v3834, %v3834
    %v3899 = vmul.f32 %v3835, %v3835
    %v3900 = vmul.f32 %v3836, %v3836
    %v3901 = vmul.f32 %v3837, %v3837
    %v3902 = vmul.f32 %v3838, %v3838
    %v3903 = vmul.f32 %v3839, %v3839
    %v3904 = vmul.f32 %v3840, %v3840
    %v3905 = vmul.f32 %v3841, %v3841
    %v3906 = vmul.f32 %v3842, %v3842
    %v3907 = vmul.f32 %v3843, %v3843
    %v3908 = vmul.f32 %v3844, %v3844
    %v3909 = vmul.f32 %v3845, %v3845
    %v3910 = vmul.f32 %v3846, %v3846
    %v3911 = vmul.f32 %v3847, %v3847
    %v3912 = vmul.f32 %v3848, %v3848
    %v3913 = vmul.f32 %v3849, %v3849
    %v3914 = vmul.f32 %v3850, %v3850
    %v3915 = vmul.f32 %v3851, %v3851
    %v3916 = vmul.f32 %v3852, %v3852
    %v3917 = vmul.f32 %v3853, %v3853
    %v3918 = vmul.f32 %v3854, %v3854
    %v3919 = vmul.f32 %v3855, %v3855
    %v3920 = vmul.f32 %v3856, %v3856
    %v3921 = vmul.f32 %v3857, %v3857
    %v3922 = vmul.f32 %v3858, %v3858
    %v3923 = vmul.f32 %v3859, %v3859
    %v3924 = vmul.f32 %v3860, %v3860
    %v3925 = vmul.f32 %v3861, %v3861
    %v3926 = vmul.f32 %v3862, %v3862
    %v3927 = vmul.f32 %v3863, %v3863
    %v3928 = vmul.f32 %v3864, %v3864
    %v3929 = vmul.f32 %v3865, %v3865
    %v3930 = vmul.f32 %v3866, %v3866
    %v3931 = vmul.f32 %v3867, %v3867
    %v3932 = vmul.f32 %v3868, %v3868
    %v3933 = vmul.f32 %v3869, %v3869
    %v3934 = vmul.f32 %v3870, %v3870
    %v3935 = vmul.f32 %v3871, %v3871
    %v3936 = vmul.f32 %v3872, %v3872
    %v3937 = vmul.f32 %v3873, %v3873
    %v3938 = vmul.f32 %v3874, %v3874
    %v3939 = vmul.f32 %v3875, %v3875
    %v3940 = vmul.f32 %v3876, %v3876
    %v3941 = vmul.f32 %v3877, %v3877
    %v3942 = vmul.f32 %v3878, %v3878
    %v3943 = vsel %vm15, %v3879, 0.0
    %v3944 = vsel %vm15, %v3880, 0.0
    %v3945 = vadd.f32 %v3943, %v3944
    %v3946 = vsel %vm15, %v3881, 0.0
    %v3947 = vadd.f32 %v3945, %v3946
    %v3948 = vsel %vm15, %v3882, 0.0
    %v3949 = vadd.f32 %v3947, %v3948
    %v3950 = vsel %vm15, %v3883, 0.0
    %v3951 = vadd.f32 %v3949, %v3950
    %v3952 = vsel %vm15, %v3884, 0.0
    %v3953 = vadd.f32 %v3951, %v3952
    %v3954 = vsel %vm15, %v3885, 0.0
    %v3955 = vadd.f32 %v3953, %v3954
    %v3956 = vsel %vm15, %v3886, 0.0
    %v3957 = vadd.f32 %v3955, %v3956
    %v3958 = vsel %vm15, %v3887, 0.0
    %v3959 = vadd.f32 %v3957, %v3958
    %v3960 = vsel %vm15, %v3888, 0.0
    %v3961 = vadd.f32 %v3959, %v3960
    %v3962 = vsel %vm15, %v3889, 0.0
    %v3963 = vadd.f32 %v3961, %v3962
    %v3964 = vsel %vm15, %v3890, 0.0
    %v3965 = vadd.f32 %v3963, %v3964
    %v3966 = vsel %vm15, %v3891, 0.0
    %v3967 = vadd.f32 %v3965, %v3966
    %v3968 = vsel %vm15, %v3892, 0.0
    %v3969 = vadd.f32 %v3967, %v3968
    %v3970 = vsel %vm15, %v3893, 0.0
    %v3971 = vadd.f32 %v3969, %v3970
    %v3972 = vsel %vm15, %v3894, 0.0
    %v3973 = vadd.f32 %v3971, %v3972
    %v3974 = vsel %vm15, %v3895, 0.0
    %v3975 = vadd.f32 %v3973, %v3974
    %v3976 = vsel %vm15, %v3896, 0.0
    %v3977 = vadd.f32 %v3975, %v3976
    %v3978 = vsel %vm15, %v3897, 0.0
    %v3979 = vadd.f32 %v3977, %v3978
    %v3980 = vsel %vm15, %v3898, 0.0
    %v3981 = vadd.f32 %v3979, %v3980
    %v3982 = vsel %vm15, %v3899, 0.0
    %v3983 = vadd.f32 %v3981, %v3982
    %v3984 = vsel %vm15, %v3900, 0.0
    %v3985 = vadd.f32 %v3983, %v3984
    %v3986 = vsel %vm15, %v3901, 0.0
    %v3987 = vadd.f32 %v3985, %v3986
    %v3988 = vsel %vm15, %v3902, 0.0
    %v3989 = vadd.f32 %v3987, %v3988
    %v3990 = vsel %vm15, %v3903, 0.0
    %v3991 = vadd.f32 %v3989, %v3990
    %v3992 = vsel %vm15, %v3904, 0.0
    %v3993 = vadd.f32 %v3991, %v3992
    %v3994 = vsel %vm15, %v3905, 0.0
    %v3995 = vadd.f32 %v3993, %v3994
    %v3996 = vsel %vm15, %v3906, 0.0
    %v3997 = vadd.f32 %v3995, %v3996
    %v3998 = vsel %vm15, %v3907, 0.0
    %v3999 = vadd.f32 %v3997, %v3998
    %v4000 = vsel %vm15, %v3908, 0.0
    %v4001 = vadd.f32 %v3999, %v4000
    %v4002 = vsel %vm15, %v3909, 0.0
    %v4003 = vadd.f32 %v4001, %v4002
    %v4004 = vsel %vm15, %v3910, 0.0
    %v4005 = vadd.f32 %v4003, %v4004
    %v4006 = vsel %vm15, %v3911, 0.0
    %v4007 = vadd.f32 %v4005, %v4006
    %v4008 = vsel %vm15, %v3912, 0.0
    %v4009 = vadd.f32 %v4007, %v4008
    %v4010 = vsel %vm15, %v3913, 0.0
    %v4011 = vadd.f32 %v4009, %v4010
    %v4012 = vsel %vm15, %v3914, 0.0
    %v4013 = vadd.f32 %v4011, %v4012
    %v4014 = vsel %vm15, %v3915, 0.0
    %v4015 = vadd.f32 %v4013, %v4014
    %v4016 = vsel %vm15, %v3916, 0.0
    %v4017 = vadd.f32 %v4015, %v4016
    %v4018 = vsel %vm15, %v3917, 0.0
    %v4019 = vadd.f32 %v4017, %v4018
    %v4020 = vsel %vm15, %v3918, 0.0
    %v4021 = vadd.f32 %v4019, %v4020
    %v4022 = vsel %vm15, %v3919, 0.0
    %v4023 = vadd.f32 %v4021, %v4022
    %v4024 = vsel %vm15, %v3920, 0.0
    %v4025 = vadd.f32 %v4023, %v4024
    %v4026 = vsel %vm15, %v3921, 0.0
    %v4027 = vadd.f32 %v4025, %v4026
    %v4028 = vsel %vm15, %v3922, 0.0
    %v4029 = vadd.f32 %v4027, %v4028
    %v4030 = vsel %vm15, %v3923, 0.0
    %v4031 = vadd.f32 %v4029, %v4030
    %v4032 = vsel %vm15, %v3924, 0.0
    %v4033 = vadd.f32 %v4031, %v4032
    %v4034 = vsel %vm15, %v3925, 0.0
    %v4035 = vadd.f32 %v4033, %v4034
    %v4036 = vsel %vm15, %v3926, 0.0
    %v4037 = vadd.f32 %v4035, %v4036
    %v4038 = vsel %vm15, %v3927, 0.0
    %v4039 = vadd.f32 %v4037, %v4038
    %v4040 = vsel %vm15, %v3928, 0.0
    %v4041 = vadd.f32 %v4039, %v4040
    %v4042 = vsel %vm15, %v3929, 0.0
    %v4043 = vadd.f32 %v4041, %v4042
    %v4044 = vsel %vm15, %v3930, 0.0
    %v4045 = vadd.f32 %v4043, %v4044
    %v4046 = vsel %vm15, %v3931, 0.0
    %v4047 = vadd.f32 %v4045, %v4046
    %v4048 = vsel %vm15, %v3932, 0.0
    %v4049 = vadd.f32 %v4047, %v4048
    %v4050 = vsel %vm15, %v3933, 0.0
    %v4051 = vadd.f32 %v4049, %v4050
    %v4052 = vsel %vm15, %v3934, 0.0
    %v4053 = vadd.f32 %v4051, %v4052
    %v4054 = vsel %vm15, %v3935, 0.0
    %v4055 = vadd.f32 %v4053, %v4054
    %v4056 = vsel %vm15, %v3936, 0.0
    %v4057 = vadd.f32 %v4055, %v4056
    %v4058 = vsel %vm15, %v3937, 0.0
    %v4059 = vadd.f32 %v4057, %v4058
    %v4060 = vsel %vm15, %v3938, 0.0
    %v4061 = vadd.f32 %v4059, %v4060
    %v4062 = vsel %vm15, %v3939, 0.0
    %v4063 = vadd.f32 %v4061, %v4062
    %v4064 = vsel %vm15, %v3940, 0.0
    %v4065 = vadd.f32 %v4063, %v4064
    %v4066 = vsel %vm15, %v3941, 0.0
    %v4067 = vadd.f32 %v4065, %v4066
    %v4068 = vsel %vm15, %v3942, 0.0
    %v4069 = vadd.f32 %v4067, %v4068
    %v4070 = vrot.slane %v4069, 4
    %v4071 = vadd.f32 %v4069, %v4070
    %v4072 = vrot.slane %v4071, 2
    %v4073 = vadd.f32 %v4071, %v4072
    %v4074 = vrot.slane %v4073, 1
    %v4075 = vadd.f32 %v4073, %v4074
    %v4076 = vmul.f32 %v4075, %v3813
    %v4077 = vadd.f32 %v4076, 1e-05
    %v4078 = vrsqrt.pop %v4077
    %v4079 = vmul.f32 %v4078, %v4077
    %v4080 = vmul.f32 %v4079, %v4078
    %v4081 = vmul.f32 0.5, %v4080
    %v4082 = vsub.f32 1.5, %v4081
    %v4083 = vmul.f32 %v4078, %v4082
    %vm4084 = vweird.f32 %v4077
    %vm4085 = vweird.f32 %v4078
    %vm4086 = vmor %vm4084, %vm4085
    %v4087 = vsel %vm4086, %v4078, %v4083
    %v4088 = vmul.f32 %v3815, %v4087
    %v4089 = vmul.f32 %v3816, %v4087
    %v4090 = vmul.f32 %v3817, %v4087
    %v4091 = vmul.f32 %v3818, %v4087
    %v4092 = vmul.f32 %v3819, %v4087
    %v4093 = vmul.f32 %v3820, %v4087
    %v4094 = vmul.f32 %v3821, %v4087
    %v4095 = vmul.f32 %v3822, %v4087
    %v4096 = vmul.f32 %v3823, %v4087
    %v4097 = vmul.f32 %v3824, %v4087
    %v4098 = vmul.f32 %v3825, %v4087
    %v4099 = vmul.f32 %v3826, %v4087
    %v4100 = vmul.f32 %v3827, %v4087
    %v4101 = vmul.f32 %v3828, %v4087
    %v4102 = vmul.f32 %v3829, %v4087
    %v4103 = vmul.f32 %v3830, %v4087
    %v4104 = vmul.f32 %v3831, %v4087
    %v4105 = vmul.f32 %v3832, %v4087
    %v4106 = vmul.f32 %v3833, %v4087
    %v4107 = vmul.f32 %v3834, %v4087
    %v4108 = vmul.f32 %v3835, %v4087
    %v4109 = vmul.f32 %v3836, %v4087
    %v4110 = vmul.f32 %v3837, %v4087
    %v4111 = vmul.f32 %v3838, %v4087
    %v4112 = vmul.f32 %v3839, %v4087
    %v4113 = vmul.f32 %v3840, %v4087
    %v4114 = vmul.f32 %v3841, %v4087
    %v4115 = vmul.f32 %v3842, %v4087
    %v4116 = vmul.f32 %v3843, %v4087
    %v4117 = vmul.f32 %v3844, %v4087
    %v4118 = vmul.f32 %v3845, %v4087
    %v4119 = vmul.f32 %v3846, %v4087
    %v4120 = vmul.f32 %v3847, %v4087
    %v4121 = vmul.f32 %v3848, %v4087
    %v4122 = vmul.f32 %v3849, %v4087
    %v4123 = vmul.f32 %v3850, %v4087
    %v4124 = vmul.f32 %v3851, %v4087
    %v4125 = vmul.f32 %v3852, %v4087
    %v4126 = vmul.f32 %v3853, %v4087
    %v4127 = vmul.f32 %v3854, %v4087
    %v4128 = vmul.f32 %v3855, %v4087
    %v4129 = vmul.f32 %v3856, %v4087
    %v4130 = vmul.f32 %v3857, %v4087
    %v4131 = vmul.f32 %v3858, %v4087
    %v4132 = vmul.f32 %v3859, %v4087
    %v4133 = vmul.f32 %v3860, %v4087
    %v4134 = vmul.f32 %v3861, %v4087
    %v4135 = vmul.f32 %v3862, %v4087
    %v4136 = vmul.f32 %v3863, %v4087
    %v4137 = vmul.f32 %v3864, %v4087
    %v4138 = vmul.f32 %v3865, %v4087
    %v4139 = vmul.f32 %v3866, %v4087
    %v4140 = vmul.f32 %v3867, %v4087
    %v4141 = vmul.f32 %v3868, %v4087
    %v4142 = vmul.f32 %v3869, %v4087
    %v4143 = vmul.f32 %v3870, %v4087
    %v4144 = vmul.f32 %v3871, %v4087
    %v4145 = vmul.f32 %v3872, %v4087
    %v4146 = vmul.f32 %v3873, %v4087
    %v4147 = vmul.f32 %v3874, %v4087
    %v4148 = vmul.f32 %v3875, %v4087
    %v4149 = vmul.f32 %v3876, %v4087
    %v4150 = vmul.f32 %v3877, %v4087
    %v4151 = vmul.f32 %v3878, %v4087
    %v4152 = vmax.f32 %v4088, 0.0
    %v4153 = vmax.f32 %v4089, 0.0
    %v4154 = vmax.f32 %v4090, 0.0
    %v4155 = vmax.f32 %v4091, 0.0
    %v4156 = vmax.f32 %v4092, 0.0
    %v4157 = vmax.f32 %v4093, 0.0
    %v4158 = vmax.f32 %v4094, 0.0
    %v4159 = vmax.f32 %v4095, 0.0
    %v4160 = vmax.f32 %v4096, 0.0
    %v4161 = vmax.f32 %v4097, 0.0
    %v4162 = vmax.f32 %v4098, 0.0
    %v4163 = vmax.f32 %v4099, 0.0
    %v4164 = vmax.f32 %v4100, 0.0
    %v4165 = vmax.f32 %v4101, 0.0
    %v4166 = vmax.f32 %v4102, 0.0
    %v4167 = vmax.f32 %v4103, 0.0
    %v4168 = vmax.f32 %v4104, 0.0
    %v4169 = vmax.f32 %v4105, 0.0
    %v4170 = vmax.f32 %v4106, 0.0
    %v4171 = vmax.f32 %v4107, 0.0
    %v4172 = vmax.f32 %v4108, 0.0
    %v4173 = vmax.f32 %v4109, 0.0
    %v4174 = vmax.f32 %v4110, 0.0
    %v4175 = vmax.f32 %v4111, 0.0
    %v4176 = vmax.f32 %v4112, 0.0
    %v4177 = vmax.f32 %v4113, 0.0
    %v4178 = vmax.f32 %v4114, 0.0
    %v4179 = vmax.f32 %v4115, 0.0
    %v4180 = vmax.f32 %v4116, 0.0
    %v4181 = vmax.f32 %v4117, 0.0
    %v4182 = vmax.f32 %v4118, 0.0
    %v4183 = vmax.f32 %v4119, 0.0
    %v4184 = vmax.f32 %v4120, 0.0
    %v4185 = vmax.f32 %v4121, 0.0
    %v4186 = vmax.f32 %v4122, 0.0
    %v4187 = vmax.f32 %v4123, 0.0
    %v4188 = vmax.f32 %v4124, 0.0
    %v4189 = vmax.f32 %v4125, 0.0
    %v4190 = vmax.f32 %v4126, 0.0
    %v4191 = vmax.f32 %v4127, 0.0
    %v4192 = vmax.f32 %v4128, 0.0
    %v4193 = vmax.f32 %v4129, 0.0
    %v4194 = vmax.f32 %v4130, 0.0
    %v4195 = vmax.f32 %v4131, 0.0
    %v4196 = vmax.f32 %v4132, 0.0
    %v4197 = vmax.f32 %v4133, 0.0
    %v4198 = vmax.f32 %v4134, 0.0
    %v4199 = vmax.f32 %v4135, 0.0
    %v4200 = vmax.f32 %v4136, 0.0
    %v4201 = vmax.f32 %v4137, 0.0
    %v4202 = vmax.f32 %v4138, 0.0
    %v4203 = vmax.f32 %v4139, 0.0
    %v4204 = vmax.f32 %v4140, 0.0
    %v4205 = vmax.f32 %v4141, 0.0
    %v4206 = vmax.f32 %v4142, 0.0
    %v4207 = vmax.f32 %v4143, 0.0
    %v4208 = vmax.f32 %v4144, 0.0
    %v4209 = vmax.f32 %v4145, 0.0
    %v4210 = vmax.f32 %v4146, 0.0
    %v4211 = vmax.f32 %v4147, 0.0
    %v4212 = vmax.f32 %v4148, 0.0
    %v4213 = vmax.f32 %v4149, 0.0
    %v4214 = vmax.f32 %v4150, 0.0
    %v4215 = vmax.f32 %v4151, 0.0
    %4216 = vst.msk [vmem:[%s253 + $0x1] sm:$0xff] %vm15, %v4152
    %4217 = vst.msk [vmem:[%s253 + $0x9] sm:$0xff] %vm15, %v4153
    %4218 = vst.msk [vmem:[%s253 + $0x19] sm:$0xff] %vm15, %v4154
    %4219 = vst.msk [vmem:[%s253 + $0x21] sm:$0xff] %vm15, %v4155
    %4220 = vst.msk [vmem:[%s253 + $0x31] sm:$0xff] %vm15, %v4156
    %4221 = vst.msk [vmem:[%s253 + $0x39] sm:$0xff] %vm15, %v4157
    %4222 = vst.msk [vmem:[%s253 + $0x49] sm:$0xff] %vm15, %v4158
    %4223 = vst.msk [vmem:[%s253 + $0x51] sm:$0xff] %vm15, %v4159
    %4224 = vst.msk [vmem:[%s253 + $0x61] sm:$0xff] %vm15, %v4160
    %4225 = vst.msk [vmem:[%s253 + $0x69] sm:$0xff] %vm15, %v4161
    %4226 = vst.msk [vmem:[%s253 + $0x79] sm:$0xff] %vm15, %v4162
    %4227 = vst.msk [vmem:[%s253 + $0x81] sm:$0xff] %vm15, %v4163
    %4228 = vst.msk [vmem:[%s253 + $0x91] sm:$0xff] %vm15, %v4164
    %4229 = vst.msk [vmem:[%s253 + $0x99] sm:$0xff] %vm15, %v4165
    %4230 = vst.msk [vmem:[%s253 + $0xa9] sm:$0xff] %vm15, %v4166
    %4231 = vst.msk [vmem:[%s253 + $0xb1] sm:$0xff] %vm15, %v4167
    %4232 = vst.msk [vmem:[%s253 + $0xc1] sm:$0xff] %vm15, %v4168
    %4233 = vst.msk [vmem:[%s253 + $0xc9] sm:$0xff] %vm15, %v4169
    %4234 = vst.msk [vmem:[%s253 + $0xd9] sm:$0xff] %vm15, %v4170
    %4235 = vst.msk [vmem:[%s253 + $0xe1] sm:$0xff] %vm15, %v4171
    %4236 = vst.msk [vmem:[%s253 + $0xf1] sm:$0xff] %vm15, %v4172
    %4237 = vst.msk [vmem:[%s253 + $0xf9] sm:$0xff] %vm15, %v4173
    %4238 = vst.msk [vmem:[%s253 + $0x109] sm:$0xff] %vm15, %v4174
    %4239 = vst.msk [vmem:[%s253 + $0x111] sm:$0xff] %vm15, %v4175
    %4240 = vst.msk [vmem:[%s253 + $0x121] sm:$0xff] %vm15, %v4176
    %4241 = vst.msk [vmem:[%s253 + $0x129] sm:$0xff] %vm15, %v4177
    %4242 = vst.msk [vmem:[%s253 + $0x139] sm:$0xff] %vm15, %v4178
    %4243 = vst.msk [vmem:[%s253 + $0x141] sm:$0xff] %vm15, %v4179
    %4244 = vst.msk [vmem:[%s253 + $0x151] sm:$0xff] %vm15, %v4180
    %4245 = vst.msk [vmem:[%s253 + $0x159] sm:$0xff] %vm15, %v4181
    %4246 = vst.msk [vmem:[%s253 + $0x169] sm:$0xff] %vm15, %v4182
    %4247 = vst.msk [vmem:[%s253 + $0x171] sm:$0xff] %vm15, %v4183
    %4248 = vst.msk [vmem:[%s253 + $0x1b1] sm:$0xff] %vm15, %v4184
    %4249 = vst.msk [vmem:[%s253 + $0x1b9] sm:$0xff] %vm15, %v4185
    %4250 = vst.msk [vmem:[%s253 + $0x1c9] sm:$0xff] %vm15, %v4186
    %4251 = vst.msk [vmem:[%s253 + $0x1d1] sm:$0xff] %vm15, %v4187
    %4252 = vst.msk [vmem:[%s253 + $0x1e1] sm:$0xff] %vm15, %v4188
    %4253 = vst.msk [vmem:[%s253 + $0x1e9] sm:$0xff] %vm15, %v4189
    %4254 = vst.msk [vmem:[%s253 + $0x1f9] sm:$0xff] %vm15, %v4190
    %4255 = vst.msk [vmem:[%s253 + $0x201] sm:$0xff] %vm15, %v4191
    %4256 = vst.msk [vmem:[%s253 + $0x211] sm:$0xff] %vm15, %v4192
    %4257 = vst.msk [vmem:[%s253 + $0x219] sm:$0xff] %vm15, %v4193
    %4258 = vst.msk [vmem:[%s253 + $0x229] sm:$0xff] %vm15, %v4194
    %4259 = vst.msk [vmem:[%s253 + $0x231] sm:$0xff] %vm15, %v4195
    %4260 = vst.msk [vmem:[%s253 + $0x241] sm:$0xff] %vm15, %v4196
    %4261 = vst.msk [vmem:[%s253 + $0x249] sm:$0xff] %vm15, %v4197
    %4262 = vst.msk [vmem:[%s253 + $0x259] sm:$0xff] %vm15, %v4198
    %4263 = vst.msk [vmem:[%s253 + $0x261] sm:$0xff] %vm15, %v4199
    %4264 = vst.msk [vmem:[%s253 + $0x271] sm:$0xff] %vm15, %v4200
    %4265 = vst.msk [vmem:[%s253 + $0x279] sm:$0xff] %vm15, %v4201
    %4266 = vst.msk [vmem:[%s253 + $0x289] sm:$0xff] %vm15, %v4202
    %4267 = vst.msk [vmem:[%s253 + $0x291] sm:$0xff] %vm15, %v4203
    %4268 = vst.msk [vmem:[%s253 + $0x2a1] sm:$0xff] %vm15, %v4204
    %4269 = vst.msk [vmem:[%s253 + $0x2a9] sm:$0xff] %vm15, %v4205
    %4270 = vst.msk [vmem:[%s253 + $0x2b9] sm:$0xff] %vm15, %v4206
    %4271 = vst.msk [vmem:[%s253 + $0x2c1] sm:$0xff] %vm15, %v4207
    %4272 = vst.msk [vmem:[%s253 + $0x2d1] sm:$0xff] %vm15, %v4208
    %4273 = vst.msk [vmem:[%s253 + $0x2d9] sm:$0xff] %vm15, %v4209
    %4274 = vst.msk [vmem:[%s253 + $0x2e9] sm:$0xff] %vm15, %v4210
    %4275 = vst.msk [vmem:[%s253 + $0x2f1] sm:$0xff] %vm15, %v4211
    %4276 = vst.msk [vmem:[%s253 + $0x301] sm:$0xff] %vm15, %v4212
    %4277 = vst.msk [vmem:[%s253 + $0x309] sm:$0xff] %vm15, %v4213
    %4278 = vst.msk [vmem:[%s253 + $0x319] sm:$0xff] %vm15, %v4214
    %4279 = vst.msk [vmem:[%s253 + $0x321] sm:$0xff] %vm15, %v4215
    %v4280 = vld [vmem:[#allocation2] sm:$0xff]
    %v4281 = vld [vmem:[#allocation2 + $0x8] sm:$0xff]
    %v4282 = vld [vmem:[#allocation2 + $0x10] sm:$0x3]
    %v4283 = vld [vmem:[#allocation2 + $0x18] sm:$0xff]
    %v4284 = vld [vmem:[#allocation2 + $0x20] sm:$0xff]
    %v4285 = vld [vmem:[#allocation2 + $0x28] sm:$0x3]
    %v4286 = vld [vmem:[#allocation2 + $0x30] sm:$0xff]
    %v4287 = vld [vmem:[#allocation2 + $0x38] sm:$0xff]
    %v4288 = vld [vmem:[#allocation2 + $0x40] sm:$0x3]
    %v4289 = vld [vmem:[#allocation2 + $0x48] sm:$0xff]
    %v4290 = vld [vmem:[#allocation2 + $0x50] sm:$0xff]
    %v4291 = vld [vmem:[#allocation2 + $0x58] sm:$0x3]
    %v4292 = vld [vmem:[#allocation2 + $0x60] sm:$0xff]
    %v4293 = vld [vmem:[#allocation2 + $0x68] sm:$0xff]
    %v4294 = vld [vmem:[#allocation2 + $0x70] sm:$0x3]
    %v4295 = vld [vmem:[#allocation2 + $0x78] sm:$0xff]
    %v4296 = vld [vmem:[#allocation2 + $0x80] sm:$0xff]
    %v4297 = vld [vmem:[#allocation2 + $0x88] sm:$0x3]
    %v4298 = vld [vmem:[#allocation2 + $0x90] sm:$0xff]
    %v4299 = vld [vmem:[#allocation2 + $0x98] sm:$0xff]
    %v4300 = vld [vmem:[#allocation2 + $0xa0] sm:$0x3]
    %v4301 = vld [vmem:[#allocation2 + $0xa8] sm:$0xff]
    %v4302 = vld [vmem:[#allocation2 + $0xb0] sm:$0xff]
    %v4303 = vld [vmem:[#allocation2 + $0xb8] sm:$0x3]
    %v4304 = vld [vmem:[#allocation2 + $0xc0] sm:$0xff]
    %v4305 = vld [vmem:[#allocation2 + $0xc8] sm:$0xff]
    %v4306 = vld [vmem:[#allocation2 + $0xd0] sm:$0x3]
    %v4307 = vld [vmem:[#allocation2 + $0xd8] sm:$0xff]
    %v4308 = vld [vmem:[#allocation2 + $0xe0] sm:$0xff]
    %v4309 = vld [vmem:[#allocation2 + $0xe8] sm:$0x3]
    %v4310 = vld [vmem:[#allocation2 + $0xf0] sm:$0xff]
    %v4311 = vld [vmem:[#allocation2 + $0xf8] sm:$0xff]
    %v4312 = vld [vmem:[#allocation2 + $0x100] sm:$0x3]
    %v4313 = vld [vmem:[#allocation2 + $0x108] sm:$0xff]
    %v4314 = vld [vmem:[#allocation2 + $0x110] sm:$0xff]
    %v4315 = vld [vmem:[#allocation2 + $0x118] sm:$0x3]
    %v4316 = vld [vmem:[#allocation2 + $0x120] sm:$0xff]
    %v4317 = vld [vmem:[#allocation2 + $0x128] sm:$0xff]
    %v4318 = vld [vmem:[#allocation2 + $0x130] sm:$0x3]
    %v4319 = vld [vmem:[#allocation2 + $0x138] sm:$0xff]
    %v4320 = vld [vmem:[#allocation2 + $0x140] sm:$0xff]
    %v4321 = vld [vmem:[#allocation2 + $0x148] sm:$0x3]
    %v4322 = vld [vmem:[#allocation2 + $0x150] sm:$0xff]
    %v4323 = vld [vmem:[#allocation2 + $0x158] sm:$0xff]
    %v4324 = vld [vmem:[#allocation2 + $0x160] sm:$0x3]
    %v4325 = vld [vmem:[#allocation2 + $0x168] sm:$0xff]
    %v4326 = vld [vmem:[#allocation2 + $0x170] sm:$0xff]
    %v4327 = vld [vmem:[#allocation2 + $0x178] sm:$0x3]
    %v4328 = vld [vmem:[#allocation2 + $0x180] sm:$0xff]
    %v4329 = vld [vmem:[#allocation2 + $0x188] sm:$0xff]
    %v4330 = vld [vmem:[#allocation2 + $0x190] sm:$0x3]
    %v4331 = vld [vmem:[#allocation2 + $0x198] sm:$0xff]
    %v4332 = vld [vmem:[#allocation2 + $0x1a0] sm:$0xff]
    %v4333 = vld [vmem:[#allocation2 + $0x1a8] sm:$0x3]
    %v4334 = vld [vmem:[#allocation2 + $0x1b0] sm:$0xff]
    %v4335 = vld [vmem:[#allocation2 + $0x1b8] sm:$0xff]
    %v4336 = vld [vmem:[#allocation2 + $0x1c0] sm:$0x3]
    %v4337 = vld [vmem:[#allocation2 + $0x1c8] sm:$0xff]
    %v4338 = vld [vmem:[#allocation2 + $0x1d0] sm:$0xff]
    %v4339 = vld [vmem:[#allocation2 + $0x1d8] sm:$0x3]
    %v4340 = vld [vmem:[#allocation2 + $0x1e0] sm:$0xff]
    %v4341 = vld [vmem:[#allocation2 + $0x1e8] sm:$0xff]
    %v4342 = vld [vmem:[#allocation2 + $0x1f0] sm:$0x3]
    %v4343 = vld [vmem:[#allocation2 + $0x1f8] sm:$0xff]
    %v4344 = vld [vmem:[#allocation2 + $0x200] sm:$0xff]
    %v4345 = vld [vmem:[#allocation2 + $0x208] sm:$0x3]
    %v4346 = vld [vmem:[#allocation2 + $0x210] sm:$0xff]
    %v4347 = vld [vmem:[#allocation2 + $0x218] sm:$0xff]
    %v4348 = vld [vmem:[#allocation2 + $0x220] sm:$0x3]
    %v4349 = vld [vmem:[#allocation2 + $0x228] sm:$0xff]
    %v4350 = vld [vmem:[#allocation2 + $0x230] sm:$0xff]
    %v4351 = vld [vmem:[#allocation2 + $0x238] sm:$0x3]
    %v4352 = vld [vmem:[#allocation2 + $0x240] sm:$0xff]
    %v4353 = vld [vmem:[#allocation2 + $0x248] sm:$0xff]
    %v4354 = vld [vmem:[#allocation2 + $0x250] sm:$0x3]
    %v4355 = vld [vmem:[#allocation2 + $0x258] sm:$0xff]
    %v4356 = vld [vmem:[#allocation2 + $0x260] sm:$0xff]
    %v4357 = vld [vmem:[#allocation2 + $0x268] sm:$0x3]
    %v4358 = vld [vmem:[#allocation2 + $0x270] sm:$0xff]
    %v4359 = vld [vmem:[#allocation2 + $0x278] sm:$0xff]
    %v4360 = vld [vmem:[#allocation2 + $0x280] sm:$0x3]
    %v4361 = vld [vmem:[#allocation2 + $0x288] sm:$0xff]
    %v4362 = vld [vmem:[#allocation2 + $0x290] sm:$0xff]
    %v4363 = vld [vmem:[#allocation2 + $0x298] sm:$0x3]
    %v4364 = vld [vmem:[#allocation2 + $0x2a0] sm:$0xff]
    %v4365 = vld [vmem:[#allocation2 + $0x2a8] sm:$0xff]
    %v4366 = vld [vmem:[#allocation2 + $0x2b0] sm:$0x3]
    %v4367 = vld [vmem:[#allocation2 + $0x2b8] sm:$0xff]
    %v4368 = vld [vmem:[#allocation2 + $0x2c0] sm:$0xff]
    %v4369 = vld [vmem:[#allocation2 + $0x2c8] sm:$0x3]
    %v4370 = vld [vmem:[#allocation2 + $0x2d0] sm:$0xff]
    %v4371 = vld [vmem:[#allocation2 + $0x2d8] sm:$0xff]
    %v4372 = vld [vmem:[#allocation2 + $0x2e0] sm:$0x3]
    %v4373 = vld [vmem:[#allocation2 + $0x2e8] sm:$0xff]
    %v4374 = vld [vmem:[#allocation2 + $0x2f0] sm:$0xff]
    %v4375 = vld [vmem:[#allocation2 + $0x2f8] sm:$0x3]
    %v4376 = vld [vmem:[#allocation2 + $0x300] sm:$0xff]
    %v4377 = vld [vmem:[#allocation2 + $0x308] sm:$0xff]
    %v4378 = vld [vmem:[#allocation2 + $0x310] sm:$0x3]
    %v4379 = vld [vmem:[#allocation2 + $0x318] sm:$0xff]
    %v4380 = vld [vmem:[#allocation2 + $0x320] sm:$0xff]
    %v4381 = vld [vmem:[#allocation2 + $0x328] sm:$0x3]
    %v4382 = vld [vmem:[#allocation2 + $0x330] sm:$0xff]
    %v4383 = vld [vmem:[#allocation2 + $0x338] sm:$0xff]
    %v4384 = vld [vmem:[#allocation2 + $0x340] sm:$0x3]
    %v4385 = vld [vmem:[#allocation2 + $0x348] sm:$0xff]
    %v4386 = vld [vmem:[#allocation2 + $0x350] sm:$0xff]
    %v4387 = vld [vmem:[#allocation2 + $0x358] sm:$0x3]
    %v4388 = vld [vmem:[%s2] sm:$0xff]
    %v4485 = vrot.slane %v4280, 1
    %v4486 = vrot.slane %v4281, 1
    %v4487 = vsel %vm523, %v4485, %v4486
    %v4488 = vrot.slane %v4282, 1
    %v4489 = vsel %vm523, %v4486, %v4488
    %v4490 = vrot.slane %v4283, 1
    %v4491 = vrot.slane %v4284, 1
    %v4492 = vsel %vm523, %v4490, %v4491
    %v4493 = vrot.slane %v4285, 1
    %v4494 = vsel %vm523, %v4491, %v4493
    %v4495 = vrot.slane %v4286, 1
    %v4496 = vrot.slane %v4287, 1
    %v4497 = vsel %vm523, %v4495, %v4496
    %v4498 = vrot.slane %v4288, 1
    %v4499 = vsel %vm523, %v4496, %v4498
    %v4500 = vrot.slane %v4289, 1
    %v4501 = vrot.slane %v4290, 1
    %v4502 = vsel %vm523, %v4500, %v4501
    %v4503 = vrot.slane %v4291, 1
    %v4504 = vsel %vm523, %v4501, %v4503
    %v4505 = vrot.slane %v4292, 1
    %v4506 = vrot.slane %v4293, 1
    %v4507 = vsel %vm523, %v4505, %v4506
    %v4508 = vrot.slane %v4294, 1
    %v4509 = vsel %vm523, %v4506, %v4508
    %v4510 = vrot.slane %v4295, 1
    %v4511 = vrot.slane %v4296, 1
    %v4512 = vsel %vm523, %v4510, %v4511
    %v4513 = vrot.slane %v4297, 1
    %v4514 = vsel %vm523, %v4511, %v4513
    %v4515 = vrot.slane %v4298, 1
    %v4516 = vrot.slane %v4299, 1
    %v4517 = vsel %vm523, %v4515, %v4516
    %v4518 = vrot.slane %v4300, 1
    %v4519 = vsel %vm523, %v4516, %v4518
    %v4520 = vrot.slane %v4301, 1
    %v4521 = vrot.slane %v4302, 1
    %v4522 = vsel %vm523, %v4520, %v4521
    %v4523 = vrot.slane %v4303, 1
    %v4524 = vsel %vm523, %v4521, %v4523
    %v4525 = vrot.slane %v4304, 1
    %v4526 = vrot.slane %v4305, 1
    %v4527 = vsel %vm523, %v4525, %v4526
    %v4528 = vrot.slane %v4306, 1
    %v4529 = vsel %vm523, %v4526, %v4528
    %v4530 = vrot.slane %v4307, 1
    %v4531 = vrot.slane %v4308, 1
    %v4532 = vsel %vm523, %v4530, %v4531
    %v4533 = vrot.slane %v4309, 1
    %v4534 = vsel %vm523, %v4531, %v4533
    %v4535 = vrot.slane %v4310, 1
    %v4536 = vrot.slane %v4311, 1
    %v4537 = vsel %vm523, %v4535, %v4536
    %v4538 = vrot.slane %v4312, 1
    %v4539 = vsel %vm523, %v4536, %v4538
    %v4540 = vrot.slane %v4313, 1
    %v4541 = vrot.slane %v4314, 1
    %v4542 = vsel %vm523, %v4540, %v4541
    %v4543 = vrot.slane %v4315, 1
    %v4544 = vsel %vm523, %v4541, %v4543
    %v4545 = vrot.slane %v4316, 1
    %v4546 = vrot.slane %v4317, 1
    %v4547 = vsel %vm523, %v4545, %v4546
    %v4548 = vrot.slane %v4318, 1
    %v4549 = vsel %vm523, %v4546, %v4548
    %v4550 = vrot.slane %v4319, 1
    %v4551 = vrot.slane %v4320, 1
    %v4552 = vsel %vm523, %v4550, %v4551
    %v4553 = vrot.slane %v4321, 1
    %v4554 = vsel %vm523, %v4551, %v4553
    %v4555 = vrot.slane %v4322, 1
    %v4556 = vrot.slane %v4323, 1
    %v4557 = vsel %vm523, %v4555, %v4556
    %v4558 = vrot.slane %v4324, 1
    %v4559 = vsel %vm523, %v4556, %v4558
    %v4560 = vrot.slane %v4325, 1
    %v4561 = vrot.slane %v4326, 1
    %v4562 = vsel %vm523, %v4560, %v4561
    %v4563 = vrot.slane %v4327, 1
    %v4564 = vsel %vm523, %v4561, %v4563
    %v4565 = vrot.slane %v4334, 1
    %v4566 = vrot.slane %v4335, 1
    %v4567 = vsel %vm523, %v4565, %v4566
    %v4568 = vrot.slane %v4336, 1
    %v4569 = vsel %vm523, %v4566, %v4568
    %v4570 = vrot.slane %v4337, 1
    %v4571 = vrot.slane %v4338, 1
    %v4572 = vsel %vm523, %v4570, %v4571
    %v4573 = vrot.slane %v4339, 1
    %v4574 = vsel %vm523, %v4571, %v4573
    %v4575 = vrot.slane %v4340, 1
    %v4576 = vrot.slane %v4341, 1
    %v4577 = vsel %vm523, %v4575, %v4576
    %v4578 = vrot.slane %v4342, 1
    %v4579 = vsel %vm523, %v4576, %v4578
    %v4580 = vrot.slane %v4343, 1
    %v4581 = vrot.slane %v4344, 1
    %v4582 = vsel %vm523, %v4580, %v4581
    %v4583 = vrot.slane %v4345, 1
    %v4584 = vsel %vm523, %v4581, %v4583
    %v4585 = vrot.slane %v4346, 1
    %v4586 = vrot.slane %v4347, 1
    %v4587 = vsel %vm523, %v4585, %v4586
    %v4588 = vrot.slane %v4348, 1
    %v4589 = vsel %vm523, %v4586, %v4588
    %v4590 = vrot.slane %v4349, 1
    %v4591 = vrot.slane %v4350, 1
    %v4592 = vsel %vm523, %v4590, %v4591
    %v4593 = vrot.slane %v4351, 1
    %v4594 = vsel %vm523, %v4591, %v4593
    %v4595 = vrot.slane %v4352, 1
    %v4596 = vrot.slane %v4353, 1
    %v4597 = vsel %vm523, %v4595, %v4596
    %v4598 = vrot.slane %v4354, 1
    %v4599 = vsel %vm523, %v4596, %v4598
    %v4600 = vrot.slane %v4355, 1
    %v4601 = vrot.slane %v4356, 1
    %v4602 = vsel %vm523, %v4600, %v4601
    %v4603 = vrot.slane %v4357, 1
    %v4604 = vsel %vm523, %v4601, %v4603
    %v4605 = vrot.slane %v4358, 1
    %v4606 = vrot.slane %v4359, 1
    %v4607 = vsel %vm523, %v4605, %v4606
    %v4608 = vrot.slane %v4360, 1
    %v4609 = vsel %vm523, %v4606, %v4608
    %v4610 = vrot.slane %v4361, 1
    %v4611 = vrot.slane %v4362, 1
    %v4612 = vsel %vm523, %v4610, %v4611
    %v4613 = vrot.slane %v4363, 1
    %v4614 = vsel %vm523, %v4611, %v4613
    %v4615 = vrot.slane %v4364, 1
    %v4616 = vrot.slane %v4365, 1
    %v4617 = vsel %vm523, %v4615, %v4616
    %v4618 = vrot.slane %v4366, 1
    %v4619 = vsel %vm523, %v4616, %v4618
    %v4620 = vrot.slane %v4367, 1
    %v4621 = vrot.slane %v4368, 1
    %v4622 = vsel %vm523, %v4620, %v4621
    %v4623 = vrot.slane %v4369, 1
    %v4624 = vsel %vm523, %v4621, %v4623
    %v4625 = vrot.slane %v4370, 1
    %v4626 = vrot.slane %v4371, 1
    %v4627 = vsel %vm523, %v4625, %v4626
    %v4628 = vrot.slane %v4372, 1
    %v4629 = vsel %vm523, %v4626, %v4628
    %v4630 = vrot.slane %v4373, 1
    %v4631 = vrot.slane %v4374, 1
    %v4632 = vsel %vm523, %v4630, %v4631
    %v4633 = vrot.slane %v4375, 1
    %v4634 = vsel %vm523, %v4631, %v4633
    %v4635 = vrot.slane %v4376, 1
    %v4636 = vrot.slane %v4377, 1
    %v4637 = vsel %vm523, %v4635, %v4636
    %v4638 = vrot.slane %v4378, 1
    %v4639 = vsel %vm523, %v4636, %v4638
    %v4640 = vrot.slane %v4379, 1
    %v4641 = vrot.slane %v4380, 1
    %v4642 = vsel %vm523, %v4640, %v4641
    %v4643 = vrot.slane %v4381, 1
    %v4644 = vsel %vm523, %v4641, %v4643
    %s4645 = scalar_lea.vmem %s2, 8
    %v4646 = vld [vmem:[%s4645] sm:$0xff]
    %v4647 = vsel %vm15, %v4487, 0
    %v4649 = vsel %vm15, %v4489, 0
    %v4651 = vsel %vm15, %v4492, 0
    %v4653 = vsel %vm15, %v4494, 0
    %v4655 = vsel %vm15, %v4497, 0
    %v4657 = vsel %vm15, %v4499, 0
    %v4659 = vsel %vm15, %v4502, 0
    %v4661 = vsel %vm15, %v4504, 0
    %v4663 = vsel %vm15, %v4507, 0
    %v4665 = vsel %vm15, %v4509, 0
    %v4667 = vsel %vm15, %v4512, 0
    %v4669 = vsel %vm15, %v4514, 0
    %v4671 = vsel %vm15, %v4517, 0
    %v4673 = vsel %vm15, %v4519, 0
    %v4675 = vsel %vm15, %v4522, 0
    %v4677 = vsel %vm15, %v4524, 0
    %v4679 = vsel %vm15, %v4527, 0
    %v4681 = vsel %vm15, %v4529, 0
    %v4683 = vsel %vm15, %v4532, 0
    %v4685 = vsel %vm15, %v4534, 0
    %v4687 = vsel %vm15, %v4537, 0
    %v4689 = vsel %vm15, %v4539, 0
    %v4691 = vsel %vm15, %v4542, 0
    %v4693 = vsel %vm15, %v4544, 0
    %v4695 = vsel %vm15, %v4547, 0
    %v4697 = vsel %vm15, %v4549, 0
    %v4699 = vsel %vm15, %v4552, 0
    %v4701 = vsel %vm15, %v4554, 0
    %v4703 = vsel %vm15, %v4557, 0
    %v4705 = vsel %vm15, %v4559, 0
    %v4707 = vsel %vm15, %v4562, 0
    %v4709 = vsel %vm15, %v4564, 0
    %v4711 = vsel %vm15, %v4567, 0
    %v4713 = vsel %vm15, %v4569, 0
    %v4715 = vsel %vm15, %v4572, 0
    %v4717 = vsel %vm15, %v4574, 0
    %v4719 = vsel %vm15, %v4577, 0
    %v4721 = vsel %vm15, %v4579, 0
    %v4723 = vsel %vm15, %v4582, 0
    %v4725 = vsel %vm15, %v4584, 0
    %v4727 = vsel %vm15, %v4587, 0
    %v4729 = vsel %vm15, %v4589, 0
    %v4731 = vsel %vm15, %v4592, 0
    %v4733 = vsel %vm15, %v4594, 0
    %v4735 = vsel %vm15, %v4597, 0
    %v4737 = vsel %vm15, %v4599, 0
    %v4739 = vsel %vm15, %v4602, 0
    %v4741 = vsel %vm15, %v4604, 0
    %v4743 = vsel %vm15, %v4607, 0
    %v4745 = vsel %vm15, %v4609, 0
    %v4747 = vsel %vm15, %v4612, 0
    %v4749 = vsel %vm15, %v4614, 0
    %v4751 = vsel %vm15, %v4617, 0
    %v4753 = vsel %vm15, %v4619, 0
    %v4755 = vsel %vm15, %v4622, 0
    %v4757 = vsel %vm15, %v4624, 0
    %v4759 = vsel %vm15, %v4627, 0
    %v4761 = vsel %vm15, %v4629, 0
    %v4763 = vsel %vm15, %v4632, 0
    %v4765 = vsel %vm15, %v4634, 0
    %v4767 = vsel %vm15, %v4637, 0
    %v4769 = vsel %vm15, %v4639, 0
    %v4771 = vsel %vm15, %v4642, 0
    %v4773 = vsel %vm15, %v4644, 0
    %4775 = vmatpush.msra.mxu0 0.0
    %4776 = vmatpush.msra.mxu0 0.0
    %4777 = vmatpush.msra.mxu0 0.0
    %4778 = vmatpush.msra.mxu0 0.0
    %4779 = vmatpush.msra.mxu0 0.0
    %4780 = vmatpush.msra.mxu0 0.0
    %4781 = vmatpush.msra.mxu0 0.0
    %4782 = vmatpush.msra.mxu0 0.0
    %4783 = vmatpush.msra.mxu0 0.0
    %4784 = vmatpush.msra.mxu0 0.0
    %4785 = vmatpush.msra.mxu0 0.0
    %4786 = vmatpush.msra.mxu0 0.0
    %4787 = vmatpush.msra.mxu0 0.0
    %4788 = vmatpush.msra.mxu0 0.0
    %4789 = vmatpush.msra.mxu0 0.0
    %4790 = vmatpush.msra.mxu0 %v4646
    %4791 = vmatmul.f32.gmra.mxu0 %v4647
    %v4792 = vpop.f32.mrf.mxu0
    %v4793 = vadd.f32 0.0, %v4792
    %4794 = vmatmul.f32.gmra.mxu0 %v4649
    %v4795 = vpop.f32.mrf.mxu0
    %v4796 = vadd.f32 0.0, %v4795
    %4797 = vmatmul.f32.gmra.mxu0 %v4651
    %v4798 = vpop.f32.mrf.mxu0
    %v4799 = vadd.f32 0.0, %v4798
    %4800 = vmatmul.f32.gmra.mxu0 %v4653
    %v4801 = vpop.f32.mrf.mxu0
    %v4802 = vadd.f32 0.0, %v4801
    %4803 = vmatmul.f32.gmra.mxu0 %v4655
    %v4804 = vpop.f32.mrf.mxu0
    %v4805 = vadd.f32 0.0, %v4804
    %4806 = vmatmul.f32.gmra.mxu0 %v4657
    %v4807 = vpop.f32.mrf.mxu0
    %v4808 = vadd.f32 0.0, %v4807
    %4809 = vmatmul.f32.gmra.mxu0 %v4659
    %v4810 = vpop.f32.mrf.mxu0
    %v4811 = vadd.f32 0.0, %v4810
    %4812 = vmatmul.f32.gmra.mxu0 %v4661
    %v4813 = vpop.f32.mrf.mxu0
    %v4814 = vadd.f32 0.0, %v4813
    %4815 = vmatmul.f32.gmra.mxu0 %v4663
    %v4816 = vpop.f32.mrf.mxu0
    %v4817 = vadd.f32 0.0, %v4816
    %4818 = vmatmul.f32.gmra.mxu0 %v4665
    %v4819 = vpop.f32.mrf.mxu0
    %v4820 = vadd.f32 0.0, %v4819
    %4821 = vmatmul.f32.gmra.mxu0 %v4667
    %v4822 = vpop.f32.mrf.mxu0
    %v4823 = vadd.f32 0.0, %v4822
    %4824 = vmatmul.f32.gmra.mxu0 %v4669
    %v4825 = vpop.f32.mrf.mxu0
    %v4826 = vadd.f32 0.0, %v4825
    %4827 = vmatmul.f32.gmra.mxu0 %v4671
    %v4828 = vpop.f32.mrf.mxu0
    %v4829 = vadd.f32 0.0, %v4828
    %4830 = vmatmul.f32.gmra.mxu0 %v4673
    %v4831 = vpop.f32.mrf.mxu0
    %v4832 = vadd.f32 0.0, %v4831
    %4833 = vmatmul.f32.gmra.mxu0 %v4675
    %v4834 = vpop.f32.mrf.mxu0
    %v4835 = vadd.f32 0.0, %v4834
    %4836 = vmatmul.f32.gmra.mxu0 %v4677
    %v4837 = vpop.f32.mrf.mxu0
    %v4838 = vadd.f32 0.0, %v4837
    %4839 = vmatmul.f32.gmra.mxu0 %v4679
    %v4840 = vpop.f32.mrf.mxu0
    %v4841 = vadd.f32 0.0, %v4840
    %4842 = vmatmul.f32.gmra.mxu0 %v4681
    %v4843 = vpop.f32.mrf.mxu0
    %v4844 = vadd.f32 0.0, %v4843
    %4845 = vmatmul.f32.gmra.mxu0 %v4683
    %v4846 = vpop.f32.mrf.mxu0
    %v4847 = vadd.f32 0.0, %v4846
    %4848 = vmatmul.f32.gmra.mxu0 %v4685
    %v4849 = vpop.f32.mrf.mxu0
    %v4850 = vadd.f32 0.0, %v4849
    %4851 = vmatmul.f32.gmra.mxu0 %v4687
    %v4852 = vpop.f32.mrf.mxu0
    %v4853 = vadd.f32 0.0, %v4852
    %4854 = vmatmul.f32.gmra.mxu0 %v4689
    %v4855 = vpop.f32.mrf.mxu0
    %v4856 = vadd.f32 0.0, %v4855
    %4857 = vmatmul.f32.gmra.mxu0 %v4691
    %v4858 = vpop.f32.mrf.mxu0
    %v4859 = vadd.f32 0.0, %v4858
    %4860 = vmatmul.f32.gmra.mxu0 %v4693
    %v4861 = vpop.f32.mrf.mxu0
    %v4862 = vadd.f32 0.0, %v4861
    %4863 = vmatmul.f32.gmra.mxu0 %v4695
    %v4864 = vpop.f32.mrf.mxu0
    %v4865 = vadd.f32 0.0, %v4864
    %4866 = vmatmul.f32.gmra.mxu0 %v4697
    %v4867 = vpop.f32.mrf.mxu0
    %v4868 = vadd.f32 0.0, %v4867
    %4869 = vmatmul.f32.gmra.mxu0 %v4699
    %v4870 = vpop.f32.mrf.mxu0
    %v4871 = vadd.f32 0.0, %v4870
    %4872 = vmatmul.f32.gmra.mxu0 %v4701
    %v4873 = vpop.f32.mrf.mxu0
    %v4874 = vadd.f32 0.0, %v4873
    %4875 = vmatmul.f32.gmra.mxu0 %v4703
    %v4876 = vpop.f32.mrf.mxu0
    %v4877 = vadd.f32 0.0, %v4876
    %4878 = vmatmul.f32.gmra.mxu0 %v4705
    %v4879 = vpop.f32.mrf.mxu0
    %v4880 = vadd.f32 0.0, %v4879
    %4881 = vmatmul.f32.gmra.mxu0 %v4707
    %v4882 = vpop.f32.mrf.mxu0
    %v4883 = vadd.f32 0.0, %v4882
    %4884 = vmatmul.f32.gmra.mxu0 %v4709
    %v4885 = vpop.f32.mrf.mxu0
    %v4886 = vadd.f32 0.0, %v4885
    %4887 = vmatmul.f32.gmra.mxu0 %v4711
    %v4888 = vpop.f32.mrf.mxu0
    %v4889 = vadd.f32 0.0, %v4888
    %4890 = vmatmul.f32.gmra.mxu0 %v4713
    %v4891 = vpop.f32.mrf.mxu0
    %v4892 = vadd.f32 0.0, %v4891
    %4893 = vmatmul.f32.gmra.mxu0 %v4715
    %v4894 = vpop.f32.mrf.mxu0
    %v4895 = vadd.f32 0.0, %v4894
    %4896 = vmatmul.f32.gmra.mxu0 %v4717
    %v4897 = vpop.f32.mrf.mxu0
    %v4898 = vadd.f32 0.0, %v4897
    %4899 = vmatmul.f32.gmra.mxu0 %v4719
    %v4900 = vpop.f32.mrf.mxu0
    %v4901 = vadd.f32 0.0, %v4900
    %4902 = vmatmul.f32.gmra.mxu0 %v4721
    %v4903 = vpop.f32.mrf.mxu0
    %v4904 = vadd.f32 0.0, %v4903
    %4905 = vmatmul.f32.gmra.mxu0 %v4723
    %v4906 = vpop.f32.mrf.mxu0
    %v4907 = vadd.f32 0.0, %v4906
    %4908 = vmatmul.f32.gmra.mxu0 %v4725
    %v4909 = vpop.f32.mrf.mxu0
    %v4910 = vadd.f32 0.0, %v4909
    %4911 = vmatmul.f32.gmra.mxu0 %v4727
    %v4912 = vpop.f32.mrf.mxu0
    %v4913 = vadd.f32 0.0, %v4912
    %4914 = vmatmul.f32.gmra.mxu0 %v4729
    %v4915 = vpop.f32.mrf.mxu0
    %v4916 = vadd.f32 0.0, %v4915
    %4917 = vmatmul.f32.gmra.mxu0 %v4731
    %v4918 = vpop.f32.mrf.mxu0
    %v4919 = vadd.f32 0.0, %v4918
    %4920 = vmatmul.f32.gmra.mxu0 %v4733
    %v4921 = vpop.f32.mrf.mxu0
    %v4922 = vadd.f32 0.0, %v4921
    %4923 = vmatmul.f32.gmra.mxu0 %v4735
    %v4924 = vpop.f32.mrf.mxu0
    %v4925 = vadd.f32 0.0, %v4924
    %4926 = vmatmul.f32.gmra.mxu0 %v4737
    %v4927 = vpop.f32.mrf.mxu0
    %v4928 = vadd.f32 0.0, %v4927
    %4929 = vmatmul.f32.gmra.mxu0 %v4739
    %v4930 = vpop.f32.mrf.mxu0
    %v4931 = vadd.f32 0.0, %v4930
    %4932 = vmatmul.f32.gmra.mxu0 %v4741
    %v4933 = vpop.f32.mrf.mxu0
    %v4934 = vadd.f32 0.0, %v4933
    %4935 = vmatmul.f32.gmra.mxu0 %v4743
    %v4936 = vpop.f32.mrf.mxu0
    %v4937 = vadd.f32 0.0, %v4936
    %4938 = vmatmul.f32.gmra.mxu0 %v4745
    %v4939 = vpop.f32.mrf.mxu0
    %v4940 = vadd.f32 0.0, %v4939
    %4941 = vmatmul.f32.gmra.mxu0 %v4747
    %v4942 = vpop.f32.mrf.mxu0
    %v4943 = vadd.f32 0.0, %v4942
    %4944 = vmatmul.f32.gmra.mxu0 %v4749
    %v4945 = vpop.f32.mrf.mxu0
    %v4946 = vadd.f32 0.0, %v4945
    %4947 = vmatmul.f32.gmra.mxu0 %v4751
    %v4948 = vpop.f32.mrf.mxu0
    %v4949 = vadd.f32 0.0, %v4948
    %4950 = vmatmul.f32.gmra.mxu0 %v4753
    %v4951 = vpop.f32.mrf.mxu0
    %v4952 = vadd.f32 0.0, %v4951
    %4953 = vmatmul.f32.gmra.mxu0 %v4755
    %v4954 = vpop.f32.mrf.mxu0
    %v4955 = vadd.f32 0.0, %v4954
    %4956 = vmatmul.f32.gmra.mxu0 %v4757
    %v4957 = vpop.f32.mrf.mxu0
    %v4958 = vadd.f32 0.0, %v4957
    %4959 = vmatmul.f32.gmra.mxu0 %v4759
    %v4960 = vpop.f32.mrf.mxu0
    %v4961 = vadd.f32 0.0, %v4960
    %4962 = vmatmul.f32.gmra.mxu0 %v4761
    %v4963 = vpop.f32.mrf.mxu0
    %v4964 = vadd.f32 0.0, %v4963
    %4965 = vmatmul.f32.gmra.mxu0 %v4763
    %v4966 = vpop.f32.mrf.mxu0
    %v4967 = vadd.f32 0.0, %v4966
    %4968 = vmatmul.f32.gmra.mxu0 %v4765
    %v4969 = vpop.f32.mrf.mxu0
    %v4970 = vadd.f32 0.0, %v4969
    %4971 = vmatmul.f32.gmra.mxu0 %v4767
    %v4972 = vpop.f32.mrf.mxu0
    %v4973 = vadd.f32 0.0, %v4972
    %4974 = vmatmul.f32.gmra.mxu0 %v4769
    %v4975 = vpop.f32.mrf.mxu0
    %v4976 = vadd.f32 0.0, %v4975
    %4977 = vmatmul.f32.gmra.mxu0 %v4771
    %v4978 = vpop.f32.mrf.mxu0
    %v4979 = vadd.f32 0.0, %v4978
    %4980 = vmatmul.f32.gmra.mxu0 %v4773
    %v4981 = vpop.f32.mrf.mxu0
    %v4982 = vadd.f32 0.0, %v4981
    %4983 = vdwg.mxu0
    %v4984 = vsel %vm15, %v4280, 0
    %v4986 = vsel %vm15, %v4281, 0
    %v4988 = vsel %vm15, %v4283, 0
    %v4990 = vsel %vm15, %v4284, 0
    %v4992 = vsel %vm15, %v4286, 0
    %v4994 = vsel %vm15, %v4287, 0
    %v4996 = vsel %vm15, %v4289, 0
    %v4998 = vsel %vm15, %v4290, 0
    %v5000 = vsel %vm15, %v4292, 0
    %v5002 = vsel %vm15, %v4293, 0
    %v5004 = vsel %vm15, %v4295, 0
    %v5006 = vsel %vm15, %v4296, 0
    %v5008 = vsel %vm15, %v4298, 0
    %v5010 = vsel %vm15, %v4299, 0
    %v5012 = vsel %vm15, %v4301, 0
    %v5014 = vsel %vm15, %v4302, 0
    %v5016 = vsel %vm15, %v4304, 0
    %v5018 = vsel %vm15, %v4305, 0
    %v5020 = vsel %vm15, %v4307, 0
    %v5022 = vsel %vm15, %v4308, 0
    %v5024 = vsel %vm15, %v4310, 0
    %v5026 = vsel %vm15, %v4311, 0
    %v5028 = vsel %vm15, %v4313, 0
    %v5030 = vsel %vm15, %v4314, 0
    %v5032 = vsel %vm15, %v4316, 0
    %v5034 = vsel %vm15, %v4317, 0
    %v5036 = vsel %vm15, %v4319, 0
    %v5038 = vsel %vm15, %v4320, 0
    %v5040 = vsel %vm15, %v4322, 0
    %v5042 = vsel %vm15, %v4323, 0
    %v5044 = vsel %vm15, %v4325, 0
    %v5046 = vsel %vm15, %v4326, 0
    %v5048 = vsel %vm15, %v4334, 0
    %v5050 = vsel %vm15, %v4335, 0
    %v5052 = vsel %vm15, %v4337, 0
    %v5054 = vsel %vm15, %v4338, 0
    %v5056 = vsel %vm15, %v4340, 0
    %v5058 = vsel %vm15, %v4341, 0
    %v5060 = vsel %vm15, %v4343, 0
    %v5062 = vsel %vm15, %v4344, 0
    %v5064 = vsel %vm15, %v4346, 0
    %v5066 = vsel %vm15, %v4347, 0
    %v5068 = vsel %vm15, %v4349, 0
    %v5070 = vsel %vm15, %v4350, 0
    %v5072 = vsel %vm15, %v4352, 0
    %v5074 = vsel %vm15, %v4353, 0
    %v5076 = vsel %vm15, %v4355, 0
    %v5078 = vsel %vm15, %v4356, 0
    %v5080 = vsel %vm15, %v4358, 0
    %v5082 = vsel %vm15, %v4359, 0
    %v5084 = vsel %vm15, %v4361, 0
    %v5086 = vsel %vm15, %v4362, 0
    %v5088 = vsel %vm15, %v4364, 0
    %v5090 = vsel %vm15, %v4365, 0
    %v5092 = vsel %vm15, %v4367, 0
    %v5094 = vsel %vm15, %v4368, 0
    %v5096 = vsel %vm15, %v4370, 0
    %v5098 = vsel %vm15, %v4371, 0
    %v5100 = vsel %vm15, %v4373, 0
    %v5102 = vsel %vm15, %v4374, 0
    %v5104 = vsel %vm15, %v4376, 0
    %v5106 = vsel %vm15, %v4377, 0
    %v5108 = vsel %vm15, %v4379, 0
    %v5110 = vsel %vm15, %v4380, 0
    %5112 = vmatpush.msra.mxu0 0.0
    %5113 = vmatpush.msra.mxu0 0.0
    %5114 = vmatpush.msra.mxu0 0.0
    %5115 = vmatpush.msra.mxu0 0.0
    %5116 = vmatpush.msra.mxu0 0.0
    %5117 = vmatpush.msra.mxu0 0.0
    %5118 = vmatpush.msra.mxu0 0.0
    %5119 = vmatpush.msra.mxu0 0.0
    %5120 = vmatpush.msra.mxu0 0.0
    %5121 = vmatpush.msra.mxu0 0.0
    %5122 = vmatpush.msra.mxu0 0.0
    %5123 = vmatpush.msra.mxu0 0.0
    %5124 = vmatpush.msra.mxu0 0.0
    %5125 = vmatpush.msra.mxu0 0.0
    %5126 = vmatpush.msra.mxu0 0.0
    %5127 = vmatpush.msra.mxu0 %v4388
    %5128 = vmatmul.f32.gmra.mxu0 %v4984
    %v5129 = vpop.f32.mrf.mxu0
    %v5130 = vadd.f32 %v4793, %v5129
    %5131 = vmatmul.f32.gmra.mxu0 %v4986
    %v5132 = vpop.f32.mrf.mxu0
    %v5133 = vadd.f32 %v4796, %v5132
    %5134 = vmatmul.f32.gmra.mxu0 %v4988
    %v5135 = vpop.f32.mrf.mxu0
    %v5136 = vadd.f32 %v4799, %v5135
    %5137 = vmatmul.f32.gmra.mxu0 %v4990
    %v5138 = vpop.f32.mrf.mxu0
    %v5139 = vadd.f32 %v4802, %v5138
    %5140 = vmatmul.f32.gmra.mxu0 %v4992
    %v5141 = vpop.f32.mrf.mxu0
    %v5142 = vadd.f32 %v4805, %v5141
    %5143 = vmatmul.f32.gmra.mxu0 %v4994
    %v5144 = vpop.f32.mrf.mxu0
    %v5145 = vadd.f32 %v4808, %v5144
    %5146 = vmatmul.f32.gmra.mxu0 %v4996
    %v5147 = vpop.f32.mrf.mxu0
    %v5148 = vadd.f32 %v4811, %v5147
    %5149 = vmatmul.f32.gmra.mxu0 %v4998
    %v5150 = vpop.f32.mrf.mxu0
    %v5151 = vadd.f32 %v4814, %v5150
    %5152 = vmatmul.f32.gmra.mxu0 %v5000
    %v5153 = vpop.f32.mrf.mxu0
    %v5154 = vadd.f32 %v4817, %v5153
    %5155 = vmatmul.f32.gmra.mxu0 %v5002
    %v5156 = vpop.f32.mrf.mxu0
    %v5157 = vadd.f32 %v4820, %v5156
    %5158 = vmatmul.f32.gmra.mxu0 %v5004
    %v5159 = vpop.f32.mrf.mxu0
    %v5160 = vadd.f32 %v4823, %v5159
    %5161 = vmatmul.f32.gmra.mxu0 %v5006
    %v5162 = vpop.f32.mrf.mxu0
    %v5163 = vadd.f32 %v4826, %v5162
    %5164 = vmatmul.f32.gmra.mxu0 %v5008
    %v5165 = vpop.f32.mrf.mxu0
    %v5166 = vadd.f32 %v4829, %v5165
    %5167 = vmatmul.f32.gmra.mxu0 %v5010
    %v5168 = vpop.f32.mrf.mxu0
    %v5169 = vadd.f32 %v4832, %v5168
    %5170 = vmatmul.f32.gmra.mxu0 %v5012
    %v5171 = vpop.f32.mrf.mxu0
    %v5172 = vadd.f32 %v4835, %v5171
    %5173 = vmatmul.f32.gmra.mxu0 %v5014
    %v5174 = vpop.f32.mrf.mxu0
    %v5175 = vadd.f32 %v4838, %v5174
    %5176 = vmatmul.f32.gmra.mxu0 %v5016
    %v5177 = vpop.f32.mrf.mxu0
    %v5178 = vadd.f32 %v4841, %v5177
    %5179 = vmatmul.f32.gmra.mxu0 %v5018
    %v5180 = vpop.f32.mrf.mxu0
    %v5181 = vadd.f32 %v4844, %v5180
    %5182 = vmatmul.f32.gmra.mxu0 %v5020
    %v5183 = vpop.f32.mrf.mxu0
    %v5184 = vadd.f32 %v4847, %v5183
    %5185 = vmatmul.f32.gmra.mxu0 %v5022
    %v5186 = vpop.f32.mrf.mxu0
    %v5187 = vadd.f32 %v4850, %v5186
    %5188 = vmatmul.f32.gmra.mxu0 %v5024
    %v5189 = vpop.f32.mrf.mxu0
    %v5190 = vadd.f32 %v4853, %v5189
    %5191 = vmatmul.f32.gmra.mxu0 %v5026
    %v5192 = vpop.f32.mrf.mxu0
    %v5193 = vadd.f32 %v4856, %v5192
    %5194 = vmatmul.f32.gmra.mxu0 %v5028
    %v5195 = vpop.f32.mrf.mxu0
    %v5196 = vadd.f32 %v4859, %v5195
    %5197 = vmatmul.f32.gmra.mxu0 %v5030
    %v5198 = vpop.f32.mrf.mxu0
    %v5199 = vadd.f32 %v4862, %v5198
    %5200 = vmatmul.f32.gmra.mxu0 %v5032
    %v5201 = vpop.f32.mrf.mxu0
    %v5202 = vadd.f32 %v4865, %v5201
    %5203 = vmatmul.f32.gmra.mxu0 %v5034
    %v5204 = vpop.f32.mrf.mxu0
    %v5205 = vadd.f32 %v4868, %v5204
    %5206 = vmatmul.f32.gmra.mxu0 %v5036
    %v5207 = vpop.f32.mrf.mxu0
    %v5208 = vadd.f32 %v4871, %v5207
    %5209 = vmatmul.f32.gmra.mxu0 %v5038
    %v5210 = vpop.f32.mrf.mxu0
    %v5211 = vadd.f32 %v4874, %v5210
    %5212 = vmatmul.f32.gmra.mxu0 %v5040
    %v5213 = vpop.f32.mrf.mxu0
    %v5214 = vadd.f32 %v4877, %v5213
    %5215 = vmatmul.f32.gmra.mxu0 %v5042
    %v5216 = vpop.f32.mrf.mxu0
    %v5217 = vadd.f32 %v4880, %v5216
    %5218 = vmatmul.f32.gmra.mxu0 %v5044
    %v5219 = vpop.f32.mrf.mxu0
    %v5220 = vadd.f32 %v4883, %v5219
    %5221 = vmatmul.f32.gmra.mxu0 %v5046
    %v5222 = vpop.f32.mrf.mxu0
    %v5223 = vadd.f32 %v4886, %v5222
    %5224 = vmatmul.f32.gmra.mxu0 %v5048
    %v5225 = vpop.f32.mrf.mxu0
    %v5226 = vadd.f32 %v4889, %v5225
    %5227 = vmatmul.f32.gmra.mxu0 %v5050
    %v5228 = vpop.f32.mrf.mxu0
    %v5229 = vadd.f32 %v4892, %v5228
    %5230 = vmatmul.f32.gmra.mxu0 %v5052
    %v5231 = vpop.f32.mrf.mxu0
    %v5232 = vadd.f32 %v4895, %v5231
    %5233 = vmatmul.f32.gmra.mxu0 %v5054
    %v5234 = vpop.f32.mrf.mxu0
    %v5235 = vadd.f32 %v4898, %v5234
    %5236 = vmatmul.f32.gmra.mxu0 %v5056
    %v5237 = vpop.f32.mrf.mxu0
    %v5238 = vadd.f32 %v4901, %v5237
    %5239 = vmatmul.f32.gmra.mxu0 %v5058
    %v5240 = vpop.f32.mrf.mxu0
    %v5241 = vadd.f32 %v4904, %v5240
    %5242 = vmatmul.f32.gmra.mxu0 %v5060
    %v5243 = vpop.f32.mrf.mxu0
    %v5244 = vadd.f32 %v4907, %v5243
    %5245 = vmatmul.f32.gmra.mxu0 %v5062
    %v5246 = vpop.f32.mrf.mxu0
    %v5247 = vadd.f32 %v4910, %v5246
    %5248 = vmatmul.f32.gmra.mxu0 %v5064
    %v5249 = vpop.f32.mrf.mxu0
    %v5250 = vadd.f32 %v4913, %v5249
    %5251 = vmatmul.f32.gmra.mxu0 %v5066
    %v5252 = vpop.f32.mrf.mxu0
    %v5253 = vadd.f32 %v4916, %v5252
    %5254 = vmatmul.f32.gmra.mxu0 %v5068
    %v5255 = vpop.f32.mrf.mxu0
    %v5256 = vadd.f32 %v4919, %v5255
    %5257 = vmatmul.f32.gmra.mxu0 %v5070
    %v5258 = vpop.f32.mrf.mxu0
    %v5259 = vadd.f32 %v4922, %v5258
    %5260 = vmatmul.f32.gmra.mxu0 %v5072
    %v5261 = vpop.f32.mrf.mxu0
    %v5262 = vadd.f32 %v4925, %v5261
    %5263 = vmatmul.f32.gmra.mxu0 %v5074
    %v5264 = vpop.f32.mrf.mxu0
    %v5265 = vadd.f32 %v4928, %v5264
    %5266 = vmatmul.f32.gmra.mxu0 %v5076
    %v5267 = vpop.f32.mrf.mxu0
    %v5268 = vadd.f32 %v4931, %v5267
    %5269 = vmatmul.f32.gmra.mxu0 %v5078
    %v5270 = vpop.f32.mrf.mxu0
    %v5271 = vadd.f32 %v4934, %v5270
    %5272 = vmatmul.f32.gmra.mxu0 %v5080
    %v5273 = vpop.f32.mrf.mxu0
    %v5274 = vadd.f32 %v4937, %v5273
    %5275 = vmatmul.f32.gmra.mxu0 %v5082
    %v5276 = vpop.f32.mrf.mxu0
    %v5277 = vadd.f32 %v4940, %v5276
    %5278 = vmatmul.f32.gmra.mxu0 %v5084
    %v5279 = vpop.f32.mrf.mxu0
    %v5280 = vadd.f32 %v4943, %v5279
    %5281 = vmatmul.f32.gmra.mxu0 %v5086
    %v5282 = vpop.f32.mrf.mxu0
    %v5283 = vadd.f32 %v4946, %v5282
    %5284 = vmatmul.f32.gmra.mxu0 %v5088
    %v5285 = vpop.f32.mrf.mxu0
    %v5286 = vadd.f32 %v4949, %v5285
    %5287 = vmatmul.f32.gmra.mxu0 %v5090
    %v5288 = vpop.f32.mrf.mxu0
    %v5289 = vadd.f32 %v4952, %v5288
    %5290 = vmatmul.f32.gmra.mxu0 %v5092
    %v5291 = vpop.f32.mrf.mxu0
    %v5292 = vadd.f32 %v4955, %v5291
    %5293 = vmatmul.f32.gmra.mxu0 %v5094
    %v5294 = vpop.f32.mrf.mxu0
    %v5295 = vadd.f32 %v4958, %v5294
    %5296 = vmatmul.f32.gmra.mxu0 %v5096
    %v5297 = vpop.f32.mrf.mxu0
    %v5298 = vadd.f32 %v4961, %v5297
    %5299 = vmatmul.f32.gmra.mxu0 %v5098
    %v5300 = vpop.f32.mrf.mxu0
    %v5301 = vadd.f32 %v4964, %v5300
    %5302 = vmatmul.f32.gmra.mxu0 %v5100
    %v5303 = vpop.f32.mrf.mxu0
    %v5304 = vadd.f32 %v4967, %v5303
    %5305 = vmatmul.f32.gmra.mxu0 %v5102
    %v5306 = vpop.f32.mrf.mxu0
    %v5307 = vadd.f32 %v4970, %v5306
    %5308 = vmatmul.f32.gmra.mxu0 %v5104
    %v5309 = vpop.f32.mrf.mxu0
    %v5310 = vadd.f32 %v4973, %v5309
    %5311 = vmatmul.f32.gmra.mxu0 %v5106
    %v5312 = vpop.f32.mrf.mxu0
    %v5313 = vadd.f32 %v4976, %v5312
    %5314 = vmatmul.f32.gmra.mxu0 %v5108
    %v5315 = vpop.f32.mrf.mxu0
    %v5316 = vadd.f32 %v4979, %v5315
    %5317 = vmatmul.f32.gmra.mxu0 %v5110
    %v5318 = vpop.f32.mrf.mxu0
    %v5319 = vadd.f32 %v4982, %v5318
    %5320 = vdwg.mxu0
    %v5321 = vrot.slane %v4280, 2
    %v5322 = vrot.slane %v4281, 2
    %v5323 = vsel %vm1360, %v5321, %v5322
    %v5324 = vrot.slane %v4282, 2
    %v5325 = vsel %vm1360, %v5322, %v5324
    %v5326 = vrot.slane %v4283, 2
    %v5327 = vrot.slane %v4284, 2
    %v5328 = vsel %vm1360, %v5326, %v5327
    %v5329 = vrot.slane %v4285, 2
    %v5330 = vsel %vm1360, %v5327, %v5329
    %v5331 = vrot.slane %v4286, 2
    %v5332 = vrot.slane %v4287, 2
    %v5333 = vsel %vm1360, %v5331, %v5332
    %v5334 = vrot.slane %v4288, 2
    %v5335 = vsel %vm1360, %v5332, %v5334
    %v5336 = vrot.slane %v4289, 2
    %v5337 = vrot.slane %v4290, 2
    %v5338 = vsel %vm1360, %v5336, %v5337
    %v5339 = vrot.slane %v4291, 2
    %v5340 = vsel %vm1360, %v5337, %v5339
    %v5341 = vrot.slane %v4292, 2
    %v5342 = vrot.slane %v4293, 2
    %v5343 = vsel %vm1360, %v5341, %v5342
    %v5344 = vrot.slane %v4294, 2
    %v5345 = vsel %vm1360, %v5342, %v5344
    %v5346 = vrot.slane %v4295, 2
    %v5347 = vrot.slane %v4296, 2
    %v5348 = vsel %vm1360, %v5346, %v5347
    %v5349 = vrot.slane %v4297, 2
    %v5350 = vsel %vm1360, %v5347, %v5349
    %v5351 = vrot.slane %v4298, 2
    %v5352 = vrot.slane %v4299, 2
    %v5353 = vsel %vm1360, %v5351, %v5352
    %v5354 = vrot.slane %v4300, 2
    %v5355 = vsel %vm1360, %v5352, %v5354
    %v5356 = vrot.slane %v4301, 2
    %v5357 = vrot.slane %v4302, 2
    %v5358 = vsel %vm1360, %v5356, %v5357
    %v5359 = vrot.slane %v4303, 2
    %v5360 = vsel %vm1360, %v5357, %v5359
    %v5361 = vrot.slane %v4304, 2
    %v5362 = vrot.slane %v4305, 2
    %v5363 = vsel %vm1360, %v5361, %v5362
    %v5364 = vrot.slane %v4306, 2
    %v5365 = vsel %vm1360, %v5362, %v5364
    %v5366 = vrot.slane %v4307, 2
    %v5367 = vrot.slane %v4308, 2
    %v5368 = vsel %vm1360, %v5366, %v5367
    %v5369 = vrot.slane %v4309, 2
    %v5370 = vsel %vm1360, %v5367, %v5369
    %v5371 = vrot.slane %v4310, 2
    %v5372 = vrot.slane %v4311, 2
    %v5373 = vsel %vm1360, %v5371, %v5372
    %v5374 = vrot.slane %v4312, 2
    %v5375 = vsel %vm1360, %v5372, %v5374
    %v5376 = vrot.slane %v4313, 2
    %v5377 = vrot.slane %v4314, 2
    %v5378 = vsel %vm1360, %v5376, %v5377
    %v5379 = vrot.slane %v4315, 2
    %v5380 = vsel %vm1360, %v5377, %v5379
    %v5381 = vrot.slane %v4316, 2
    %v5382 = vrot.slane %v4317, 2
    %v5383 = vsel %vm1360, %v5381, %v5382
    %v5384 = vrot.slane %v4318, 2
    %v5385 = vsel %vm1360, %v5382, %v5384
    %v5386 = vrot.slane %v4319, 2
    %v5387 = vrot.slane %v4320, 2
    %v5388 = vsel %vm1360, %v5386, %v5387
    %v5389 = vrot.slane %v4321, 2
    %v5390 = vsel %vm1360, %v5387, %v5389
    %v5391 = vrot.slane %v4322, 2
    %v5392 = vrot.slane %v4323, 2
    %v5393 = vsel %vm1360, %v5391, %v5392
    %v5394 = vrot.slane %v4324, 2
    %v5395 = vsel %vm1360, %v5392, %v5394
    %v5396 = vrot.slane %v4325, 2
    %v5397 = vrot.slane %v4326, 2
    %v5398 = vsel %vm1360, %v5396, %v5397
    %v5399 = vrot.slane %v4327, 2
    %v5400 = vsel %vm1360, %v5397, %v5399
    %v5401 = vrot.slane %v4334, 2
    %v5402 = vrot.slane %v4335, 2
    %v5403 = vsel %vm1360, %v5401, %v5402
    %v5404 = vrot.slane %v4336, 2
    %v5405 = vsel %vm1360, %v5402, %v5404
    %v5406 = vrot.slane %v4337, 2
    %v5407 = vrot.slane %v4338, 2
    %v5408 = vsel %vm1360, %v5406, %v5407
    %v5409 = vrot.slane %v4339, 2
    %v5410 = vsel %vm1360, %v5407, %v5409
    %v5411 = vrot.slane %v4340, 2
    %v5412 = vrot.slane %v4341, 2
    %v5413 = vsel %vm1360, %v5411, %v5412
    %v5414 = vrot.slane %v4342, 2
    %v5415 = vsel %vm1360, %v5412, %v5414
    %v5416 = vrot.slane %v4343, 2
    %v5417 = vrot.slane %v4344, 2
    %v5418 = vsel %vm1360, %v5416, %v5417
    %v5419 = vrot.slane %v4345, 2
    %v5420 = vsel %vm1360, %v5417, %v5419
    %v5421 = vrot.slane %v4346, 2
    %v5422 = vrot.slane %v4347, 2
    %v5423 = vsel %vm1360, %v5421, %v5422
    %v5424 = vrot.slane %v4348, 2
    %v5425 = vsel %vm1360, %v5422, %v5424
    %v5426 = vrot.slane %v4349, 2
    %v5427 = vrot.slane %v4350, 2
    %v5428 = vsel %vm1360, %v5426, %v5427
    %v5429 = vrot.slane %v4351, 2
    %v5430 = vsel %vm1360, %v5427, %v5429
    %v5431 = vrot.slane %v4352, 2
    %v5432 = vrot.slane %v4353, 2
    %v5433 = vsel %vm1360, %v5431, %v5432
    %v5434 = vrot.slane %v4354, 2
    %v5435 = vsel %vm1360, %v5432, %v5434
    %v5436 = vrot.slane %v4355, 2
    %v5437 = vrot.slane %v4356, 2
    %v5438 = vsel %vm1360, %v5436, %v5437
    %v5439 = vrot.slane %v4357, 2
    %v5440 = vsel %vm1360, %v5437, %v5439
    %v5441 = vrot.slane %v4358, 2
    %v5442 = vrot.slane %v4359, 2
    %v5443 = vsel %vm1360, %v5441, %v5442
    %v5444 = vrot.slane %v4360, 2
    %v5445 = vsel %vm1360, %v5442, %v5444
    %v5446 = vrot.slane %v4361, 2
    %v5447 = vrot.slane %v4362, 2
    %v5448 = vsel %vm1360, %v5446, %v5447
    %v5449 = vrot.slane %v4363, 2
    %v5450 = vsel %vm1360, %v5447, %v5449
    %v5451 = vrot.slane %v4364, 2
    %v5452 = vrot.slane %v4365, 2
    %v5453 = vsel %vm1360, %v5451, %v5452
    %v5454 = vrot.slane %v4366, 2
    %v5455 = vsel %vm1360, %v5452, %v5454
    %v5456 = vrot.slane %v4367, 2
    %v5457 = vrot.slane %v4368, 2
    %v5458 = vsel %vm1360, %v5456, %v5457
    %v5459 = vrot.slane %v4369, 2
    %v5460 = vsel %vm1360, %v5457, %v5459
    %v5461 = vrot.slane %v4370, 2
    %v5462 = vrot.slane %v4371, 2
    %v5463 = vsel %vm1360, %v5461, %v5462
    %v5464 = vrot.slane %v4372, 2
    %v5465 = vsel %vm1360, %v5462, %v5464
    %v5466 = vrot.slane %v4373, 2
    %v5467 = vrot.slane %v4374, 2
    %v5468 = vsel %vm1360, %v5466, %v5467
    %v5469 = vrot.slane %v4375, 2
    %v5470 = vsel %vm1360, %v5467, %v5469
    %v5471 = vrot.slane %v4376, 2
    %v5472 = vrot.slane %v4377, 2
    %v5473 = vsel %vm1360, %v5471, %v5472
    %v5474 = vrot.slane %v4378, 2
    %v5475 = vsel %vm1360, %v5472, %v5474
    %v5476 = vrot.slane %v4379, 2
    %v5477 = vrot.slane %v4380, 2
    %v5478 = vsel %vm1360, %v5476, %v5477
    %v5479 = vrot.slane %v4381, 2
    %v5480 = vsel %vm1360, %v5477, %v5479
    %s5481 = scalar_lea.vmem %s2, 16
    %v5482 = vld [vmem:[%s5481] sm:$0xff]
    %v5483 = vsel %vm15, %v5323, 0
    %v5485 = vsel %vm15, %v5325, 0
    %v5487 = vsel %vm15, %v5328, 0
    %v5489 = vsel %vm15, %v5330, 0
    %v5491 = vsel %vm15, %v5333, 0
    %v5493 = vsel %vm15, %v5335, 0
    %v5495 = vsel %vm15, %v5338, 0
    %v5497 = vsel %vm15, %v5340, 0
    %v5499 = vsel %vm15, %v5343, 0
    %v5501 = vsel %vm15, %v5345, 0
    %v5503 = vsel %vm15, %v5348, 0
    %v5505 = vsel %vm15, %v5350, 0
    %v5507 = vsel %vm15, %v5353, 0
    %v5509 = vsel %vm15, %v5355, 0
    %v5511 = vsel %vm15, %v5358, 0
    %v5513 = vsel %vm15, %v5360, 0
    %v5515 = vsel %vm15, %v5363, 0
    %v5517 = vsel %vm15, %v5365, 0
    %v5519 = vsel %vm15, %v5368, 0
    %v5521 = vsel %vm15, %v5370, 0
    %v5523 = vsel %vm15, %v5373, 0
    %v5525 = vsel %vm15, %v5375, 0
    %v5527 = vsel %vm15, %v5378, 0
    %v5529 = vsel %vm15, %v5380, 0
    %v5531 = vsel %vm15, %v5383, 0
    %v5533 = vsel %vm15, %v5385, 0
    %v5535 = vsel %vm15, %v5388, 0
    %v5537 = vsel %vm15, %v5390, 0
    %v5539 = vsel %vm15, %v5393, 0
    %v5541 = vsel %vm15, %v5395, 0
    %v5543 = vsel %vm15, %v5398, 0
    %v5545 = vsel %vm15, %v5400, 0
    %v5547 = vsel %vm15, %v5403, 0
    %v5549 = vsel %vm15, %v5405, 0
    %v5551 = vsel %vm15, %v5408, 0
    %v5553 = vsel %vm15, %v5410, 0
    %v5555 = vsel %vm15, %v5413, 0
    %v5557 = vsel %vm15, %v5415, 0
    %v5559 = vsel %vm15, %v5418, 0
    %v5561 = vsel %vm15, %v5420, 0
    %v5563 = vsel %vm15, %v5423, 0
    %v5565 = vsel %vm15, %v5425, 0
    %v5567 = vsel %vm15, %v5428, 0
    %v5569 = vsel %vm15, %v5430, 0
    %v5571 = vsel %vm15, %v5433, 0
    %v5573 = vsel %vm15, %v5435, 0
    %v5575 = vsel %vm15, %v5438, 0
    %v5577 = vsel %vm15, %v5440, 0
    %v5579 = vsel %vm15, %v5443, 0
    %v5581 = vsel %vm15, %v5445, 0
    %v5583 = vsel %vm15, %v5448, 0
    %v5585 = vsel %vm15, %v5450, 0
    %v5587 = vsel %vm15, %v5453, 0
    %v5589 = vsel %vm15, %v5455, 0
    %v5591 = vsel %vm15, %v5458, 0
    %v5593 = vsel %vm15, %v5460, 0
    %v5595 = vsel %vm15, %v5463, 0
    %v5597 = vsel %vm15, %v5465, 0
    %v5599 = vsel %vm15, %v5468, 0
    %v5601 = vsel %vm15, %v5470, 0
    %v5603 = vsel %vm15, %v5473, 0
    %v5605 = vsel %vm15, %v5475, 0
    %v5607 = vsel %vm15, %v5478, 0
    %v5609 = vsel %vm15, %v5480, 0
    %5611 = vmatpush.msra.mxu0 0.0
    %5612 = vmatpush.msra.mxu0 0.0
    %5613 = vmatpush.msra.mxu0 0.0
    %5614 = vmatpush.msra.mxu0 0.0
    %5615 = vmatpush.msra.mxu0 0.0
    %5616 = vmatpush.msra.mxu0 0.0
    %5617 = vmatpush.msra.mxu0 0.0
    %5618 = vmatpush.msra.mxu0 0.0
    %5619 = vmatpush.msra.mxu0 0.0
    %5620 = vmatpush.msra.mxu0 0.0
    %5621 = vmatpush.msra.mxu0 0.0
    %5622 = vmatpush.msra.mxu0 0.0
    %5623 = vmatpush.msra.mxu0 0.0
    %5624 = vmatpush.msra.mxu0 0.0
    %5625 = vmatpush.msra.mxu0 0.0
    %5626 = vmatpush.msra.mxu0 %v5482
    %5627 = vmatmul.f32.gmra.mxu0 %v5483
    %v5628 = vpop.f32.mrf.mxu0
    %v5629 = vadd.f32 0.0, %v5628
    %5630 = vmatmul.f32.gmra.mxu0 %v5485
    %v5631 = vpop.f32.mrf.mxu0
    %v5632 = vadd.f32 0.0, %v5631
    %5633 = vmatmul.f32.gmra.mxu0 %v5487
    %v5634 = vpop.f32.mrf.mxu0
    %v5635 = vadd.f32 0.0, %v5634
    %5636 = vmatmul.f32.gmra.mxu0 %v5489
    %v5637 = vpop.f32.mrf.mxu0
    %v5638 = vadd.f32 0.0, %v5637
    %5639 = vmatmul.f32.gmra.mxu0 %v5491
    %v5640 = vpop.f32.mrf.mxu0
    %v5641 = vadd.f32 0.0, %v5640
    %5642 = vmatmul.f32.gmra.mxu0 %v5493
    %v5643 = vpop.f32.mrf.mxu0
    %v5644 = vadd.f32 0.0, %v5643
    %5645 = vmatmul.f32.gmra.mxu0 %v5495
    %v5646 = vpop.f32.mrf.mxu0
    %v5647 = vadd.f32 0.0, %v5646
    %5648 = vmatmul.f32.gmra.mxu0 %v5497
    %v5649 = vpop.f32.mrf.mxu0
    %v5650 = vadd.f32 0.0, %v5649
    %5651 = vmatmul.f32.gmra.mxu0 %v5499
    %v5652 = vpop.f32.mrf.mxu0
    %v5653 = vadd.f32 0.0, %v5652
    %5654 = vmatmul.f32.gmra.mxu0 %v5501
    %v5655 = vpop.f32.mrf.mxu0
    %v5656 = vadd.f32 0.0, %v5655
    %5657 = vmatmul.f32.gmra.mxu0 %v5503
    %v5658 = vpop.f32.mrf.mxu0
    %v5659 = vadd.f32 0.0, %v5658
    %5660 = vmatmul.f32.gmra.mxu0 %v5505
    %v5661 = vpop.f32.mrf.mxu0
    %v5662 = vadd.f32 0.0, %v5661
    %5663 = vmatmul.f32.gmra.mxu0 %v5507
    %v5664 = vpop.f32.mrf.mxu0
    %v5665 = vadd.f32 0.0, %v5664
    %5666 = vmatmul.f32.gmra.mxu0 %v5509
    %v5667 = vpop.f32.mrf.mxu0
    %v5668 = vadd.f32 0.0, %v5667
    %5669 = vmatmul.f32.gmra.mxu0 %v5511
    %v5670 = vpop.f32.mrf.mxu0
    %v5671 = vadd.f32 0.0, %v5670
    %5672 = vmatmul.f32.gmra.mxu0 %v5513
    %v5673 = vpop.f32.mrf.mxu0
    %v5674 = vadd.f32 0.0, %v5673
    %5675 = vmatmul.f32.gmra.mxu0 %v5515
    %v5676 = vpop.f32.mrf.mxu0
    %v5677 = vadd.f32 0.0, %v5676
    %5678 = vmatmul.f32.gmra.mxu0 %v5517
    %v5679 = vpop.f32.mrf.mxu0
    %v5680 = vadd.f32 0.0, %v5679
    %5681 = vmatmul.f32.gmra.mxu0 %v5519
    %v5682 = vpop.f32.mrf.mxu0
    %v5683 = vadd.f32 0.0, %v5682
    %5684 = vmatmul.f32.gmra.mxu0 %v5521
    %v5685 = vpop.f32.mrf.mxu0
    %v5686 = vadd.f32 0.0, %v5685
    %5687 = vmatmul.f32.gmra.mxu0 %v5523
    %v5688 = vpop.f32.mrf.mxu0
    %v5689 = vadd.f32 0.0, %v5688
    %5690 = vmatmul.f32.gmra.mxu0 %v5525
    %v5691 = vpop.f32.mrf.mxu0
    %v5692 = vadd.f32 0.0, %v5691
    %5693 = vmatmul.f32.gmra.mxu0 %v5527
    %v5694 = vpop.f32.mrf.mxu0
    %v5695 = vadd.f32 0.0, %v5694
    %5696 = vmatmul.f32.gmra.mxu0 %v5529
    %v5697 = vpop.f32.mrf.mxu0
    %v5698 = vadd.f32 0.0, %v5697
    %5699 = vmatmul.f32.gmra.mxu0 %v5531
    %v5700 = vpop.f32.mrf.mxu0
    %v5701 = vadd.f32 0.0, %v5700
    %5702 = vmatmul.f32.gmra.mxu0 %v5533
    %v5703 = vpop.f32.mrf.mxu0
    %v5704 = vadd.f32 0.0, %v5703
    %5705 = vmatmul.f32.gmra.mxu0 %v5535
    %v5706 = vpop.f32.mrf.mxu0
    %v5707 = vadd.f32 0.0, %v5706
    %5708 = vmatmul.f32.gmra.mxu0 %v5537
    %v5709 = vpop.f32.mrf.mxu0
    %v5710 = vadd.f32 0.0, %v5709
    %5711 = vmatmul.f32.gmra.mxu0 %v5539
    %v5712 = vpop.f32.mrf.mxu0
    %v5713 = vadd.f32 0.0, %v5712
    %5714 = vmatmul.f32.gmra.mxu0 %v5541
    %v5715 = vpop.f32.mrf.mxu0
    %v5716 = vadd.f32 0.0, %v5715
    %5717 = vmatmul.f32.gmra.mxu0 %v5543
    %v5718 = vpop.f32.mrf.mxu0
    %v5719 = vadd.f32 0.0, %v5718
    %5720 = vmatmul.f32.gmra.mxu0 %v5545
    %v5721 = vpop.f32.mrf.mxu0
    %v5722 = vadd.f32 0.0, %v5721
    %5723 = vmatmul.f32.gmra.mxu0 %v5547
    %v5724 = vpop.f32.mrf.mxu0
    %v5725 = vadd.f32 0.0, %v5724
    %5726 = vmatmul.f32.gmra.mxu0 %v5549
    %v5727 = vpop.f32.mrf.mxu0
    %v5728 = vadd.f32 0.0, %v5727
    %5729 = vmatmul.f32.gmra.mxu0 %v5551
    %v5730 = vpop.f32.mrf.mxu0
    %v5731 = vadd.f32 0.0, %v5730
    %5732 = vmatmul.f32.gmra.mxu0 %v5553
    %v5733 = vpop.f32.mrf.mxu0
    %v5734 = vadd.f32 0.0, %v5733
    %5735 = vmatmul.f32.gmra.mxu0 %v5555
    %v5736 = vpop.f32.mrf.mxu0
    %v5737 = vadd.f32 0.0, %v5736
    %5738 = vmatmul.f32.gmra.mxu0 %v5557
    %v5739 = vpop.f32.mrf.mxu0
    %v5740 = vadd.f32 0.0, %v5739
    %5741 = vmatmul.f32.gmra.mxu0 %v5559
    %v5742 = vpop.f32.mrf.mxu0
    %v5743 = vadd.f32 0.0, %v5742
    %5744 = vmatmul.f32.gmra.mxu0 %v5561
    %v5745 = vpop.f32.mrf.mxu0
    %v5746 = vadd.f32 0.0, %v5745
    %5747 = vmatmul.f32.gmra.mxu0 %v5563
    %v5748 = vpop.f32.mrf.mxu0
    %v5749 = vadd.f32 0.0, %v5748
    %5750 = vmatmul.f32.gmra.mxu0 %v5565
    %v5751 = vpop.f32.mrf.mxu0
    %v5752 = vadd.f32 0.0, %v5751
    %5753 = vmatmul.f32.gmra.mxu0 %v5567
    %v5754 = vpop.f32.mrf.mxu0
    %v5755 = vadd.f32 0.0, %v5754
    %5756 = vmatmul.f32.gmra.mxu0 %v5569
    %v5757 = vpop.f32.mrf.mxu0
    %v5758 = vadd.f32 0.0, %v5757
    %5759 = vmatmul.f32.gmra.mxu0 %v5571
    %v5760 = vpop.f32.mrf.mxu0
    %v5761 = vadd.f32 0.0, %v5760
    %5762 = vmatmul.f32.gmra.mxu0 %v5573
    %v5763 = vpop.f32.mrf.mxu0
    %v5764 = vadd.f32 0.0, %v5763
    %5765 = vmatmul.f32.gmra.mxu0 %v5575
    %v5766 = vpop.f32.mrf.mxu0
    %v5767 = vadd.f32 0.0, %v5766
    %5768 = vmatmul.f32.gmra.mxu0 %v5577
    %v5769 = vpop.f32.mrf.mxu0
    %v5770 = vadd.f32 0.0, %v5769
    %5771 = vmatmul.f32.gmra.mxu0 %v5579
    %v5772 = vpop.f32.mrf.mxu0
    %v5773 = vadd.f32 0.0, %v5772
    %5774 = vmatmul.f32.gmra.mxu0 %v5581
    %v5775 = vpop.f32.mrf.mxu0
    %v5776 = vadd.f32 0.0, %v5775
    %5777 = vmatmul.f32.gmra.mxu0 %v5583
    %v5778 = vpop.f32.mrf.mxu0
    %v5779 = vadd.f32 0.0, %v5778
    %5780 = vmatmul.f32.gmra.mxu0 %v5585
    %v5781 = vpop.f32.mrf.mxu0
    %v5782 = vadd.f32 0.0, %v5781
    %5783 = vmatmul.f32.gmra.mxu0 %v5587
    %v5784 = vpop.f32.mrf.mxu0
    %v5785 = vadd.f32 0.0, %v5784
    %5786 = vmatmul.f32.gmra.mxu0 %v5589
    %v5787 = vpop.f32.mrf.mxu0
    %v5788 = vadd.f32 0.0, %v5787
    %5789 = vmatmul.f32.gmra.mxu0 %v5591
    %v5790 = vpop.f32.mrf.mxu0
    %v5791 = vadd.f32 0.0, %v5790
    %5792 = vmatmul.f32.gmra.mxu0 %v5593
    %v5793 = vpop.f32.mrf.mxu0
    %v5794 = vadd.f32 0.0, %v5793
    %5795 = vmatmul.f32.gmra.mxu0 %v5595
    %v5796 = vpop.f32.mrf.mxu0
    %v5797 = vadd.f32 0.0, %v5796
    %5798 = vmatmul.f32.gmra.mxu0 %v5597
    %v5799 = vpop.f32.mrf.mxu0
    %v5800 = vadd.f32 0.0, %v5799
    %5801 = vmatmul.f32.gmra.mxu0 %v5599
    %v5802 = vpop.f32.mrf.mxu0
    %v5803 = vadd.f32 0.0, %v5802
    %5804 = vmatmul.f32.gmra.mxu0 %v5601
    %v5805 = vpop.f32.mrf.mxu0
    %v5806 = vadd.f32 0.0, %v5805
    %5807 = vmatmul.f32.gmra.mxu0 %v5603
    %v5808 = vpop.f32.mrf.mxu0
    %v5809 = vadd.f32 0.0, %v5808
    %5810 = vmatmul.f32.gmra.mxu0 %v5605
    %v5811 = vpop.f32.mrf.mxu0
    %v5812 = vadd.f32 0.0, %v5811
    %5813 = vmatmul.f32.gmra.mxu0 %v5607
    %v5814 = vpop.f32.mrf.mxu0
    %v5815 = vadd.f32 0.0, %v5814
    %5816 = vmatmul.f32.gmra.mxu0 %v5609
    %v5817 = vpop.f32.mrf.mxu0
    %v5818 = vadd.f32 0.0, %v5817
    %5819 = vdwg.mxu0
    %v5820 = vadd.f32 %v5130, %v5629
    %v5821 = vadd.f32 %v5133, %v5632
    %v5822 = vadd.f32 %v5136, %v5635
    %v5823 = vadd.f32 %v5139, %v5638
    %v5824 = vadd.f32 %v5142, %v5641
    %v5825 = vadd.f32 %v5145, %v5644
    %v5826 = vadd.f32 %v5148, %v5647
    %v5827 = vadd.f32 %v5151, %v5650
    %v5828 = vadd.f32 %v5154, %v5653
    %v5829 = vadd.f32 %v5157, %v5656
    %v5830 = vadd.f32 %v5160, %v5659
    %v5831 = vadd.f32 %v5163, %v5662
    %v5832 = vadd.f32 %v5166, %v5665
    %v5833 = vadd.f32 %v5169, %v5668
    %v5834 = vadd.f32 %v5172, %v5671
    %v5835 = vadd.f32 %v5175, %v5674
    %v5836 = vadd.f32 %v5178, %v5677
    %v5837 = vadd.f32 %v5181, %v5680
    %v5838 = vadd.f32 %v5184, %v5683
    %v5839 = vadd.f32 %v5187, %v5686
    %v5840 = vadd.f32 %v5190, %v5689
    %v5841 = vadd.f32 %v5193, %v5692
    %v5842 = vadd.f32 %v5196, %v5695
    %v5843 = vadd.f32 %v5199, %v5698
    %v5844 = vadd.f32 %v5202, %v5701
    %v5845 = vadd.f32 %v5205, %v5704
    %v5846 = vadd.f32 %v5208, %v5707
    %v5847 = vadd.f32 %v5211, %v5710
    %v5848 = vadd.f32 %v5214, %v5713
    %v5849 = vadd.f32 %v5217, %v5716
    %v5850 = vadd.f32 %v5220, %v5719
    %v5851 = vadd.f32 %v5223, %v5722
    %v5852 = vadd.f32 %v5226, %v5725
    %v5853 = vadd.f32 %v5229, %v5728
    %v5854 = vadd.f32 %v5232, %v5731
    %v5855 = vadd.f32 %v5235, %v5734
    %v5856 = vadd.f32 %v5238, %v5737
    %v5857 = vadd.f32 %v5241, %v5740
    %v5858 = vadd.f32 %v5244, %v5743
    %v5859 = vadd.f32 %v5247, %v5746
    %v5860 = vadd.f32 %v5250, %v5749
    %v5861 = vadd.f32 %v5253, %v5752
    %v5862 = vadd.f32 %v5256, %v5755
    %v5863 = vadd.f32 %v5259, %v5758
    %v5864 = vadd.f32 %v5262, %v5761
    %v5865 = vadd.f32 %v5265, %v5764
    %v5866 = vadd.f32 %v5268, %v5767
    %v5867 = vadd.f32 %v5271, %v5770
    %v5868 = vadd.f32 %v5274, %v5773
    %v5869 = vadd.f32 %v5277, %v5776
    %v5870 = vadd.f32 %v5280, %v5779
    %v5871 = vadd.f32 %v5283, %v5782
    %v5872 = vadd.f32 %v5286, %v5785
    %v5873 = vadd.f32 %v5289, %v5788
    %v5874 = vadd.f32 %v5292, %v5791
    %v5875 = vadd.f32 %v5295, %v5794
    %v5876 = vadd.f32 %v5298, %v5797
    %v5877 = vadd.f32 %v5301, %v5800
    %v5878 = vadd.f32 %v5304, %v5803
    %v5879 = vadd.f32 %v5307, %v5806
    %v5880 = vadd.f32 %v5310, %v5809
    %v5881 = vadd.f32 %v5313, %v5812
    %v5882 = vadd.f32 %v5316, %v5815
    %v5883 = vadd.f32 %v5319, %v5818
    %s5884 = scalar_lea.vmem %s2, 24
    %v5885 = vld [vmem:[%s5884] sm:$0xff]
    %v5887 = vsel %vm15, %v4328, 0
    %v5890 = vsel %vm15, %v4329, 0
    %v5893 = vsel %vm15, %v4382, 0
    %v5896 = vsel %vm15, %v4383, 0
    %5898 = vmatpush.msra.mxu0 0.0
    %5899 = vmatpush.msra.mxu0 0.0
    %5900 = vmatpush.msra.mxu0 0.0
    %5901 = vmatpush.msra.mxu0 0.0
    %5902 = vmatpush.msra.mxu0 0.0
    %5903 = vmatpush.msra.mxu0 0.0
    %5904 = vmatpush.msra.mxu0 0.0
    %5905 = vmatpush.msra.mxu0 0.0
    %5906 = vmatpush.msra.mxu0 0.0
    %5907 = vmatpush.msra.mxu0 0.0
    %5908 = vmatpush.msra.mxu0 0.0
    %5909 = vmatpush.msra.mxu0 0.0
    %5910 = vmatpush.msra.mxu0 0.0
    %5911 = vmatpush.msra.mxu0 0.0
    %5912 = vmatpush.msra.mxu0 0.0
    %5913 = vmatpush.msra.mxu0 %v5885
    %5914 = vmatmul.f32.gmra.mxu0 %v4988
    %v5915 = vpop.f32.mrf.mxu0
    %v5916 = vadd.f32 0.0, %v5915
    %5917 = vmatmul.f32.gmra.mxu0 %v4990
    %v5918 = vpop.f32.mrf.mxu0
    %v5919 = vadd.f32 0.0, %v5918
    %5920 = vmatmul.f32.gmra.mxu0 %v4992
    %v5921 = vpop.f32.mrf.mxu0
    %v5922 = vadd.f32 0.0, %v5921
    %5923 = vmatmul.f32.gmra.mxu0 %v4994
    %v5924 = vpop.f32.mrf.mxu0
    %v5925 = vadd.f32 0.0, %v5924
    %5926 = vmatmul.f32.gmra.mxu0 %v4996
    %v5927 = vpop.f32.mrf.mxu0
    %v5928 = vadd.f32 0.0, %v5927
    %5929 = vmatmul.f32.gmra.mxu0 %v4998
    %v5930 = vpop.f32.mrf.mxu0
    %v5931 = vadd.f32 0.0, %v5930
    %5932 = vmatmul.f32.gmra.mxu0 %v5000
    %v5933 = vpop.f32.mrf.mxu0
    %v5934 = vadd.f32 0.0, %v5933
    %5935 = vmatmul.f32.gmra.mxu0 %v5002
    %v5936 = vpop.f32.mrf.mxu0
    %v5937 = vadd.f32 0.0, %v5936
    %5938 = vmatmul.f32.gmra.mxu0 %v5004
    %v5939 = vpop.f32.mrf.mxu0
    %v5940 = vadd.f32 0.0, %v5939
    %5941 = vmatmul.f32.gmra.mxu0 %v5006
    %v5942 = vpop.f32.mrf.mxu0
    %v5943 = vadd.f32 0.0, %v5942
    %5944 = vmatmul.f32.gmra.mxu0 %v5008
    %v5945 = vpop.f32.mrf.mxu0
    %v5946 = vadd.f32 0.0, %v5945
    %5947 = vmatmul.f32.gmra.mxu0 %v5010
    %v5948 = vpop.f32.mrf.mxu0
    %v5949 = vadd.f32 0.0, %v5948
    %5950 = vmatmul.f32.gmra.mxu0 %v5012
    %v5951 = vpop.f32.mrf.mxu0
    %v5952 = vadd.f32 0.0, %v5951
    %5953 = vmatmul.f32.gmra.mxu0 %v5014
    %v5954 = vpop.f32.mrf.mxu0
    %v5955 = vadd.f32 0.0, %v5954
    %5956 = vmatmul.f32.gmra.mxu0 %v5016
    %v5957 = vpop.f32.mrf.mxu0
    %v5958 = vadd.f32 0.0, %v5957
    %5959 = vmatmul.f32.gmra.mxu0 %v5018
    %v5960 = vpop.f32.mrf.mxu0
    %v5961 = vadd.f32 0.0, %v5960
    %5962 = vmatmul.f32.gmra.mxu0 %v5020
    %v5963 = vpop.f32.mrf.mxu0
    %v5964 = vadd.f32 0.0, %v5963
    %5965 = vmatmul.f32.gmra.mxu0 %v5022
    %v5966 = vpop.f32.mrf.mxu0
    %v5967 = vadd.f32 0.0, %v5966
    %5968 = vmatmul.f32.gmra.mxu0 %v5024
    %v5969 = vpop.f32.mrf.mxu0
    %v5970 = vadd.f32 0.0, %v5969
    %5971 = vmatmul.f32.gmra.mxu0 %v5026
    %v5972 = vpop.f32.mrf.mxu0
    %v5973 = vadd.f32 0.0, %v5972
    %5974 = vmatmul.f32.gmra.mxu0 %v5028
    %v5975 = vpop.f32.mrf.mxu0
    %v5976 = vadd.f32 0.0, %v5975
    %5977 = vmatmul.f32.gmra.mxu0 %v5030
    %v5978 = vpop.f32.mrf.mxu0
    %v5979 = vadd.f32 0.0, %v5978
    %5980 = vmatmul.f32.gmra.mxu0 %v5032
    %v5981 = vpop.f32.mrf.mxu0
    %v5982 = vadd.f32 0.0, %v5981
    %5983 = vmatmul.f32.gmra.mxu0 %v5034
    %v5984 = vpop.f32.mrf.mxu0
    %v5985 = vadd.f32 0.0, %v5984
    %5986 = vmatmul.f32.gmra.mxu0 %v5036
    %v5987 = vpop.f32.mrf.mxu0
    %v5988 = vadd.f32 0.0, %v5987
    %5989 = vmatmul.f32.gmra.mxu0 %v5038
    %v5990 = vpop.f32.mrf.mxu0
    %v5991 = vadd.f32 0.0, %v5990
    %5992 = vmatmul.f32.gmra.mxu0 %v5040
    %v5993 = vpop.f32.mrf.mxu0
    %v5994 = vadd.f32 0.0, %v5993
    %5995 = vmatmul.f32.gmra.mxu0 %v5042
    %v5996 = vpop.f32.mrf.mxu0
    %v5997 = vadd.f32 0.0, %v5996
    %5998 = vmatmul.f32.gmra.mxu0 %v5044
    %v5999 = vpop.f32.mrf.mxu0
    %v6000 = vadd.f32 0.0, %v5999
    %6001 = vmatmul.f32.gmra.mxu0 %v5046
    %v6002 = vpop.f32.mrf.mxu0
    %v6003 = vadd.f32 0.0, %v6002
    %6004 = vmatmul.f32.gmra.mxu0 %v5887
    %v6005 = vpop.f32.mrf.mxu0
    %v6006 = vadd.f32 0.0, %v6005
    %6007 = vmatmul.f32.gmra.mxu0 %v5890
    %v6008 = vpop.f32.mrf.mxu0
    %v6009 = vadd.f32 0.0, %v6008
    %6010 = vmatmul.f32.gmra.mxu0 %v5052
    %v6011 = vpop.f32.mrf.mxu0
    %v6012 = vadd.f32 0.0, %v6011
    %6013 = vmatmul.f32.gmra.mxu0 %v5054
    %v6014 = vpop.f32.mrf.mxu0
    %v6015 = vadd.f32 0.0, %v6014
    %6016 = vmatmul.f32.gmra.mxu0 %v5056
    %v6017 = vpop.f32.mrf.mxu0
    %v6018 = vadd.f32 0.0, %v6017
    %6019 = vmatmul.f32.gmra.mxu0 %v5058
    %v6020 = vpop.f32.mrf.mxu0
    %v6021 = vadd.f32 0.0, %v6020
    %6022 = vmatmul.f32.gmra.mxu0 %v5060
    %v6023 = vpop.f32.mrf.mxu0
    %v6024 = vadd.f32 0.0, %v6023
    %6025 = vmatmul.f32.gmra.mxu0 %v5062
    %v6026 = vpop.f32.mrf.mxu0
    %v6027 = vadd.f32 0.0, %v6026
    %6028 = vmatmul.f32.gmra.mxu0 %v5064
    %v6029 = vpop.f32.mrf.mxu0
    %v6030 = vadd.f32 0.0, %v6029
    %6031 = vmatmul.f32.gmra.mxu0 %v5066
    %v6032 = vpop.f32.mrf.mxu0
    %v6033 = vadd.f32 0.0, %v6032
    %6034 = vmatmul.f32.gmra.mxu0 %v5068
    %v6035 = vpop.f32.mrf.mxu0
    %v6036 = vadd.f32 0.0, %v6035
    %6037 = vmatmul.f32.gmra.mxu0 %v5070
    %v6038 = vpop.f32.mrf.mxu0
    %v6039 = vadd.f32 0.0, %v6038
    %6040 = vmatmul.f32.gmra.mxu0 %v5072
    %v6041 = vpop.f32.mrf.mxu0
    %v6042 = vadd.f32 0.0, %v6041
    %6043 = vmatmul.f32.gmra.mxu0 %v5074
    %v6044 = vpop.f32.mrf.mxu0
    %v6045 = vadd.f32 0.0, %v6044
    %6046 = vmatmul.f32.gmra.mxu0 %v5076
    %v6047 = vpop.f32.mrf.mxu0
    %v6048 = vadd.f32 0.0, %v6047
    %6049 = vmatmul.f32.gmra.mxu0 %v5078
    %v6050 = vpop.f32.mrf.mxu0
    %v6051 = vadd.f32 0.0, %v6050
    %6052 = vmatmul.f32.gmra.mxu0 %v5080
    %v6053 = vpop.f32.mrf.mxu0
    %v6054 = vadd.f32 0.0, %v6053
    %6055 = vmatmul.f32.gmra.mxu0 %v5082
    %v6056 = vpop.f32.mrf.mxu0
    %v6057 = vadd.f32 0.0, %v6056
    %6058 = vmatmul.f32.gmra.mxu0 %v5084
    %v6059 = vpop.f32.mrf.mxu0
    %v6060 = vadd.f32 0.0, %v6059
    %6061 = vmatmul.f32.gmra.mxu0 %v5086
    %v6062 = vpop.f32.mrf.mxu0
    %v6063 = vadd.f32 0.0, %v6062
    %6064 = vmatmul.f32.gmra.mxu0 %v5088
    %v6065 = vpop.f32.mrf.mxu0
    %v6066 = vadd.f32 0.0, %v6065
    %6067 = vmatmul.f32.gmra.mxu0 %v5090
    %v6068 = vpop.f32.mrf.mxu0
    %v6069 = vadd.f32 0.0, %v6068
    %6070 = vmatmul.f32.gmra.mxu0 %v5092
    %v6071 = vpop.f32.mrf.mxu0
    %v6072 = vadd.f32 0.0, %v6071
    %6073 = vmatmul.f32.gmra.mxu0 %v5094
    %v6074 = vpop.f32.mrf.mxu0
    %v6075 = vadd.f32 0.0, %v6074
    %6076 = vmatmul.f32.gmra.mxu0 %v5096
    %v6077 = vpop.f32.mrf.mxu0
    %v6078 = vadd.f32 0.0, %v6077
    %6079 = vmatmul.f32.gmra.mxu0 %v5098
    %v6080 = vpop.f32.mrf.mxu0
    %v6081 = vadd.f32 0.0, %v6080
    %6082 = vmatmul.f32.gmra.mxu0 %v5100
    %v6083 = vpop.f32.mrf.mxu0
    %v6084 = vadd.f32 0.0, %v6083
    %6085 = vmatmul.f32.gmra.mxu0 %v5102
    %v6086 = vpop.f32.mrf.mxu0
    %v6087 = vadd.f32 0.0, %v6086
    %6088 = vmatmul.f32.gmra.mxu0 %v5104
    %v6089 = vpop.f32.mrf.mxu0
    %v6090 = vadd.f32 0.0, %v6089
    %6091 = vmatmul.f32.gmra.mxu0 %v5106
    %v6092 = vpop.f32.mrf.mxu0
    %v6093 = vadd.f32 0.0, %v6092
    %6094 = vmatmul.f32.gmra.mxu0 %v5108
    %v6095 = vpop.f32.mrf.mxu0
    %v6096 = vadd.f32 0.0, %v6095
    %6097 = vmatmul.f32.gmra.mxu0 %v5110
    %v6098 = vpop.f32.mrf.mxu0
    %v6099 = vadd.f32 0.0, %v6098
    %6100 = vmatmul.f32.gmra.mxu0 %v5893
    %v6101 = vpop.f32.mrf.mxu0
    %v6102 = vadd.f32 0.0, %v6101
    %6103 = vmatmul.f32.gmra.mxu0 %v5896
    %v6104 = vpop.f32.mrf.mxu0
    %v6105 = vadd.f32 0.0, %v6104
    %6106 = vdwg.mxu0
    %v6107 = vadd.f32 %v5820, %v5916
    %v6108 = vadd.f32 %v5821, %v5919
    %v6109 = vadd.f32 %v5822, %v5922
    %v6110 = vadd.f32 %v5823, %v5925
    %v6111 = vadd.f32 %v5824, %v5928
    %v6112 = vadd.f32 %v5825, %v5931
    %v6113 = vadd.f32 %v5826, %v5934
    %v6114 = vadd.f32 %v5827, %v5937
    %v6115 = vadd.f32 %v5828, %v5940
    %v6116 = vadd.f32 %v5829, %v5943
    %v6117 = vadd.f32 %v5830, %v5946
    %v6118 = vadd.f32 %v5831, %v5949
    %v6119 = vadd.f32 %v5832, %v5952
    %v6120 = vadd.f32 %v5833, %v5955
    %v6121 = vadd.f32 %v5834, %v5958
    %v6122 = vadd.f32 %v5835, %v5961
    %v6123 = vadd.f32 %v5836, %v5964
    %v6124 = vadd.f32 %v5837, %v5967
    %v6125 = vadd.f32 %v5838, %v5970
    %v6126 = vadd.f32 %v5839, %v5973
    %v6127 = vadd.f32 %v5840, %v5976
    %v6128 = vadd.f32 %v5841, %v5979
    %v6129 = vadd.f32 %v5842, %v5982
    %v6130 = vadd.f32 %v5843, %v5985
    %v6131 = vadd.f32 %v5844, %v5988
    %v6132 = vadd.f32 %v5845, %v5991
    %v6133 = vadd.f32 %v5846, %v5994
    %v6134 = vadd.f32 %v5847, %v5997
    %v6135 = vadd.f32 %v5848, %v6000
    %v6136 = vadd.f32 %v5849, %v6003
    %v6137 = vadd.f32 %v5850, %v6006
    %v6138 = vadd.f32 %v5851, %v6009
    %v6139 = vadd.f32 %v5852, %v6012
    %v6140 = vadd.f32 %v5853, %v6015
    %v6141 = vadd.f32 %v5854, %v6018
    %v6142 = vadd.f32 %v5855, %v6021
    %v6143 = vadd.f32 %v5856, %v6024
    %v6144 = vadd.f32 %v5857, %v6027
    %v6145 = vadd.f32 %v5858, %v6030
    %v6146 = vadd.f32 %v5859, %v6033
    %v6147 = vadd.f32 %v5860, %v6036
    %v6148 = vadd.f32 %v5861, %v6039
    %v6149 = vadd.f32 %v5862, %v6042
    %v6150 = vadd.f32 %v5863, %v6045
    %v6151 = vadd.f32 %v5864, %v6048
    %v6152 = vadd.f32 %v5865, %v6051
    %v6153 = vadd.f32 %v5866, %v6054
    %v6154 = vadd.f32 %v5867, %v6057
    %v6155 = vadd.f32 %v5868, %v6060
    %v6156 = vadd.f32 %v5869, %v6063
    %v6157 = vadd.f32 %v5870, %v6066
    %v6158 = vadd.f32 %v5871, %v6069
    %v6159 = vadd.f32 %v5872, %v6072
    %v6160 = vadd.f32 %v5873, %v6075
    %v6161 = vadd.f32 %v5874, %v6078
    %v6162 = vadd.f32 %v5875, %v6081
    %v6163 = vadd.f32 %v5876, %v6084
    %v6164 = vadd.f32 %v5877, %v6087
    %v6165 = vadd.f32 %v5878, %v6090
    %v6166 = vadd.f32 %v5879, %v6093
    %v6167 = vadd.f32 %v5880, %v6096
    %v6168 = vadd.f32 %v5881, %v6099
    %v6169 = vadd.f32 %v5882, %v6102
    %v6170 = vadd.f32 %v5883, %v6105
    %v6173 = vrot.slane %v4328, 1
    %v6174 = vrot.slane %v4329, 1
    %v6175 = vsel %vm523, %v6173, %v6174
    %v6176 = vrot.slane %v4330, 1
    %v6177 = vsel %vm523, %v6174, %v6176
    %v6178 = vrot.slane %v4382, 1
    %v6179 = vrot.slane %v4383, 1
    %v6180 = vsel %vm523, %v6178, %v6179
    %v6181 = vrot.slane %v4384, 1
    %v6182 = vsel %vm523, %v6179, %v6181
    %s6183 = scalar_lea.vmem %s2, 32
    %v6184 = vld [vmem:[%s6183] sm:$0xff]
    %v6185 = vsel %vm15, %v6175, 0
    %v6187 = vsel %vm15, %v6177, 0
    %v6189 = vsel %vm15, %v6180, 0
    %v6191 = vsel %vm15, %v6182, 0
    %6193 = vmatpush.msra.mxu0 0.0
    %6194 = vmatpush.msra.mxu0 0.0
    %6195 = vmatpush.msra.mxu0 0.0
    %6196 = vmatpush.msra.mxu0 0.0
    %6197 = vmatpush.msra.mxu0 0.0
    %6198 = vmatpush.msra.mxu0 0.0
    %6199 = vmatpush.msra.mxu0 0.0
    %6200 = vmatpush.msra.mxu0 0.0
    %6201 = vmatpush.msra.mxu0 0.0
    %6202 = vmatpush.msra.mxu0 0.0
    %6203 = vmatpush.msra.mxu0 0.0
    %6204 = vmatpush.msra.mxu0 0.0
    %6205 = vmatpush.msra.mxu0 0.0
    %6206 = vmatpush.msra.mxu0 0.0
    %6207 = vmatpush.msra.mxu0 0.0
    %6208 = vmatpush.msra.mxu0 %v6184
    %6209 = vmatmul.f32.gmra.mxu0 %v4651
    %v6210 = vpop.f32.mrf.mxu0
    %v6211 = vadd.f32 0.0, %v6210
    %6212 = vmatmul.f32.gmra.mxu0 %v4653
    %v6213 = vpop.f32.mrf.mxu0
    %v6214 = vadd.f32 0.0, %v6213
    %6215 = vmatmul.f32.gmra.mxu0 %v4655
    %v6216 = vpop.f32.mrf.mxu0
    %v6217 = vadd.f32 0.0, %v6216
    %6218 = vmatmul.f32.gmra.mxu0 %v4657
    %v6219 = vpop.f32.mrf.mxu0
    %v6220 = vadd.f32 0.0, %v6219
    %6221 = vmatmul.f32.gmra.mxu0 %v4659
    %v6222 = vpop.f32.mrf.mxu0
    %v6223 = vadd.f32 0.0, %v6222
    %6224 = vmatmul.f32.gmra.mxu0 %v4661
    %v6225 = vpop.f32.mrf.mxu0
    %v6226 = vadd.f32 0.0, %v6225
    %6227 = vmatmul.f32.gmra.mxu0 %v4663
    %v6228 = vpop.f32.mrf.mxu0
    %v6229 = vadd.f32 0.0, %v6228
    %6230 = vmatmul.f32.gmra.mxu0 %v4665
    %v6231 = vpop.f32.mrf.mxu0
    %v6232 = vadd.f32 0.0, %v6231
    %6233 = vmatmul.f32.gmra.mxu0 %v4667
    %v6234 = vpop.f32.mrf.mxu0
    %v6235 = vadd.f32 0.0, %v6234
    %6236 = vmatmul.f32.gmra.mxu0 %v4669
    %v6237 = vpop.f32.mrf.mxu0
    %v6238 = vadd.f32 0.0, %v6237
    %6239 = vmatmul.f32.gmra.mxu0 %v4671
    %v6240 = vpop.f32.mrf.mxu0
    %v6241 = vadd.f32 0.0, %v6240
    %6242 = vmatmul.f32.gmra.mxu0 %v4673
    %v6243 = vpop.f32.mrf.mxu0
    %v6244 = vadd.f32 0.0, %v6243
    %6245 = vmatmul.f32.gmra.mxu0 %v4675
    %v6246 = vpop.f32.mrf.mxu0
    %v6247 = vadd.f32 0.0, %v6246
    %6248 = vmatmul.f32.gmra.mxu0 %v4677
    %v6249 = vpop.f32.mrf.mxu0
    %v6250 = vadd.f32 0.0, %v6249
    %6251 = vmatmul.f32.gmra.mxu0 %v4679
    %v6252 = vpop.f32.mrf.mxu0
    %v6253 = vadd.f32 0.0, %v6252
    %6254 = vmatmul.f32.gmra.mxu0 %v4681
    %v6255 = vpop.f32.mrf.mxu0
    %v6256 = vadd.f32 0.0, %v6255
    %6257 = vmatmul.f32.gmra.mxu0 %v4683
    %v6258 = vpop.f32.mrf.mxu0
    %v6259 = vadd.f32 0.0, %v6258
    %6260 = vmatmul.f32.gmra.mxu0 %v4685
    %v6261 = vpop.f32.mrf.mxu0
    %v6262 = vadd.f32 0.0, %v6261
    %6263 = vmatmul.f32.gmra.mxu0 %v4687
    %v6264 = vpop.f32.mrf.mxu0
    %v6265 = vadd.f32 0.0, %v6264
    %6266 = vmatmul.f32.gmra.mxu0 %v4689
    %v6267 = vpop.f32.mrf.mxu0
    %v6268 = vadd.f32 0.0, %v6267
    %6269 = vmatmul.f32.gmra.mxu0 %v4691
    %v6270 = vpop.f32.mrf.mxu0
    %v6271 = vadd.f32 0.0, %v6270
    %6272 = vmatmul.f32.gmra.mxu0 %v4693
    %v6273 = vpop.f32.mrf.mxu0
    %v6274 = vadd.f32 0.0, %v6273
    %6275 = vmatmul.f32.gmra.mxu0 %v4695
    %v6276 = vpop.f32.mrf.mxu0
    %v6277 = vadd.f32 0.0, %v6276
    %6278 = vmatmul.f32.gmra.mxu0 %v4697
    %v6279 = vpop.f32.mrf.mxu0
    %v6280 = vadd.f32 0.0, %v6279
    %6281 = vmatmul.f32.gmra.mxu0 %v4699
    %v6282 = vpop.f32.mrf.mxu0
    %v6283 = vadd.f32 0.0, %v6282
    %6284 = vmatmul.f32.gmra.mxu0 %v4701
    %v6285 = vpop.f32.mrf.mxu0
    %v6286 = vadd.f32 0.0, %v6285
    %6287 = vmatmul.f32.gmra.mxu0 %v4703
    %v6288 = vpop.f32.mrf.mxu0
    %v6289 = vadd.f32 0.0, %v6288
    %6290 = vmatmul.f32.gmra.mxu0 %v4705
    %v6291 = vpop.f32.mrf.mxu0
    %v6292 = vadd.f32 0.0, %v6291
    %6293 = vmatmul.f32.gmra.mxu0 %v4707
    %v6294 = vpop.f32.mrf.mxu0
    %v6295 = vadd.f32 0.0, %v6294
    %6296 = vmatmul.f32.gmra.mxu0 %v4709
    %v6297 = vpop.f32.mrf.mxu0
    %v6298 = vadd.f32 0.0, %v6297
    %6299 = vmatmul.f32.gmra.mxu0 %v6185
    %v6300 = vpop.f32.mrf.mxu0
    %v6301 = vadd.f32 0.0, %v6300
    %6302 = vmatmul.f32.gmra.mxu0 %v6187
    %v6303 = vpop.f32.mrf.mxu0
    %v6304 = vadd.f32 0.0, %v6303
    %6305 = vmatmul.f32.gmra.mxu0 %v4715
    %v6306 = vpop.f32.mrf.mxu0
    %v6307 = vadd.f32 0.0, %v6306
    %6308 = vmatmul.f32.gmra.mxu0 %v4717
    %v6309 = vpop.f32.mrf.mxu0
    %v6310 = vadd.f32 0.0, %v6309
    %6311 = vmatmul.f32.gmra.mxu0 %v4719
    %v6312 = vpop.f32.mrf.mxu0
    %v6313 = vadd.f32 0.0, %v6312
    %6314 = vmatmul.f32.gmra.mxu0 %v4721
    %v6315 = vpop.f32.mrf.mxu0
    %v6316 = vadd.f32 0.0, %v6315
    %6317 = vmatmul.f32.gmra.mxu0 %v4723
    %v6318 = vpop.f32.mrf.mxu0
    %v6319 = vadd.f32 0.0, %v6318
    %6320 = vmatmul.f32.gmra.mxu0 %v4725
    %v6321 = vpop.f32.mrf.mxu0
    %v6322 = vadd.f32 0.0, %v6321
    %6323 = vmatmul.f32.gmra.mxu0 %v4727
    %v6324 = vpop.f32.mrf.mxu0
    %v6325 = vadd.f32 0.0, %v6324
    %6326 = vmatmul.f32.gmra.mxu0 %v4729
    %v6327 = vpop.f32.mrf.mxu0
    %v6328 = vadd.f32 0.0, %v6327
    %6329 = vmatmul.f32.gmra.mxu0 %v4731
    %v6330 = vpop.f32.mrf.mxu0
    %v6331 = vadd.f32 0.0, %v6330
    %6332 = vmatmul.f32.gmra.mxu0 %v4733
    %v6333 = vpop.f32.mrf.mxu0
    %v6334 = vadd.f32 0.0, %v6333
    %6335 = vmatmul.f32.gmra.mxu0 %v4735
    %v6336 = vpop.f32.mrf.mxu0
    %v6337 = vadd.f32 0.0, %v6336
    %6338 = vmatmul.f32.gmra.mxu0 %v4737
    %v6339 = vpop.f32.mrf.mxu0
    %v6340 = vadd.f32 0.0, %v6339
    %6341 = vmatmul.f32.gmra.mxu0 %v4739
    %v6342 = vpop.f32.mrf.mxu0
    %v6343 = vadd.f32 0.0, %v6342
    %6344 = vmatmul.f32.gmra.mxu0 %v4741
    %v6345 = vpop.f32.mrf.mxu0
    %v6346 = vadd.f32 0.0, %v6345
    %6347 = vmatmul.f32.gmra.mxu0 %v4743
    %v6348 = vpop.f32.mrf.mxu0
    %v6349 = vadd.f32 0.0, %v6348
    %6350 = vmatmul.f32.gmra.mxu0 %v4745
    %v6351 = vpop.f32.mrf.mxu0
    %v6352 = vadd.f32 0.0, %v6351
    %6353 = vmatmul.f32.gmra.mxu0 %v4747
    %v6354 = vpop.f32.mrf.mxu0
    %v6355 = vadd.f32 0.0, %v6354
    %6356 = vmatmul.f32.gmra.mxu0 %v4749
    %v6357 = vpop.f32.mrf.mxu0
    %v6358 = vadd.f32 0.0, %v6357
    %6359 = vmatmul.f32.gmra.mxu0 %v4751
    %v6360 = vpop.f32.mrf.mxu0
    %v6361 = vadd.f32 0.0, %v6360
    %6362 = vmatmul.f32.gmra.mxu0 %v4753
    %v6363 = vpop.f32.mrf.mxu0
    %v6364 = vadd.f32 0.0, %v6363
    %6365 = vmatmul.f32.gmra.mxu0 %v4755
    %v6366 = vpop.f32.mrf.mxu0
    %v6367 = vadd.f32 0.0, %v6366
    %6368 = vmatmul.f32.gmra.mxu0 %v4757
    %v6369 = vpop.f32.mrf.mxu0
    %v6370 = vadd.f32 0.0, %v6369
    %6371 = vmatmul.f32.gmra.mxu0 %v4759
    %v6372 = vpop.f32.mrf.mxu0
    %v6373 = vadd.f32 0.0, %v6372
    %6374 = vmatmul.f32.gmra.mxu0 %v4761
    %v6375 = vpop.f32.mrf.mxu0
    %v6376 = vadd.f32 0.0, %v6375
    %6377 = vmatmul.f32.gmra.mxu0 %v4763
    %v6378 = vpop.f32.mrf.mxu0
    %v6379 = vadd.f32 0.0, %v6378
    %6380 = vmatmul.f32.gmra.mxu0 %v4765
    %v6381 = vpop.f32.mrf.mxu0
    %v6382 = vadd.f32 0.0, %v6381
    %6383 = vmatmul.f32.gmra.mxu0 %v4767
    %v6384 = vpop.f32.mrf.mxu0
    %v6385 = vadd.f32 0.0, %v6384
    %6386 = vmatmul.f32.gmra.mxu0 %v4769
    %v6387 = vpop.f32.mrf.mxu0
    %v6388 = vadd.f32 0.0, %v6387
    %6389 = vmatmul.f32.gmra.mxu0 %v4771
    %v6390 = vpop.f32.mrf.mxu0
    %v6391 = vadd.f32 0.0, %v6390
    %6392 = vmatmul.f32.gmra.mxu0 %v4773
    %v6393 = vpop.f32.mrf.mxu0
    %v6394 = vadd.f32 0.0, %v6393
    %6395 = vmatmul.f32.gmra.mxu0 %v6189
    %v6396 = vpop.f32.mrf.mxu0
    %v6397 = vadd.f32 0.0, %v6396
    %6398 = vmatmul.f32.gmra.mxu0 %v6191
    %v6399 = vpop.f32.mrf.mxu0
    %v6400 = vadd.f32 0.0, %v6399
    %6401 = vdwg.mxu0
    %v6402 = vadd.f32 %v6107, %v6211
    %v6403 = vadd.f32 %v6108, %v6214
    %v6404 = vadd.f32 %v6109, %v6217
    %v6405 = vadd.f32 %v6110, %v6220
    %v6406 = vadd.f32 %v6111, %v6223
    %v6407 = vadd.f32 %v6112, %v6226
    %v6408 = vadd.f32 %v6113, %v6229
    %v6409 = vadd.f32 %v6114, %v6232
    %v6410 = vadd.f32 %v6115, %v6235
    %v6411 = vadd.f32 %v6116, %v6238
    %v6412 = vadd.f32 %v6117, %v6241
    %v6413 = vadd.f32 %v6118, %v6244
    %v6414 = vadd.f32 %v6119, %v6247
    %v6415 = vadd.f32 %v6120, %v6250
    %v6416 = vadd.f32 %v6121, %v6253
    %v6417 = vadd.f32 %v6122, %v6256
    %v6418 = vadd.f32 %v6123, %v6259
    %v6419 = vadd.f32 %v6124, %v6262
    %v6420 = vadd.f32 %v6125, %v6265
    %v6421 = vadd.f32 %v6126, %v6268
    %v6422 = vadd.f32 %v6127, %v6271
    %v6423 = vadd.f32 %v6128, %v6274
    %v6424 = vadd.f32 %v6129, %v6277
    %v6425 = vadd.f32 %v6130, %v6280
    %v6426 = vadd.f32 %v6131, %v6283
    %v6427 = vadd.f32 %v6132, %v6286
    %v6428 = vadd.f32 %v6133, %v6289
    %v6429 = vadd.f32 %v6134, %v6292
    %v6430 = vadd.f32 %v6135, %v6295
    %v6431 = vadd.f32 %v6136, %v6298
    %v6432 = vadd.f32 %v6137, %v6301
    %v6433 = vadd.f32 %v6138, %v6304
    %v6434 = vadd.f32 %v6139, %v6307
    %v6435 = vadd.f32 %v6140, %v6310
    %v6436 = vadd.f32 %v6141, %v6313
    %v6437 = vadd.f32 %v6142, %v6316
    %v6438 = vadd.f32 %v6143, %v6319
    %v6439 = vadd.f32 %v6144, %v6322
    %v6440 = vadd.f32 %v6145, %v6325
    %v6441 = vadd.f32 %v6146, %v6328
    %v6442 = vadd.f32 %v6147, %v6331
    %v6443 = vadd.f32 %v6148, %v6334
    %v6444 = vadd.f32 %v6149, %v6337
    %v6445 = vadd.f32 %v6150, %v6340
    %v6446 = vadd.f32 %v6151, %v6343
    %v6447 = vadd.f32 %v6152, %v6346
    %v6448 = vadd.f32 %v6153, %v6349
    %v6449 = vadd.f32 %v6154, %v6352
    %v6450 = vadd.f32 %v6155, %v6355
    %v6451 = vadd.f32 %v6156, %v6358
    %v6452 = vadd.f32 %v6157, %v6361
    %v6453 = vadd.f32 %v6158, %v6364
    %v6454 = vadd.f32 %v6159, %v6367
    %v6455 = vadd.f32 %v6160, %v6370
    %v6456 = vadd.f32 %v6161, %v6373
    %v6457 = vadd.f32 %v6162, %v6376
    %v6458 = vadd.f32 %v6163, %v6379
    %v6459 = vadd.f32 %v6164, %v6382
    %v6460 = vadd.f32 %v6165, %v6385
    %v6461 = vadd.f32 %v6166, %v6388
    %v6462 = vadd.f32 %v6167, %v6391
    %v6463 = vadd.f32 %v6168, %v6394
    %v6464 = vadd.f32 %v6169, %v6397
    %v6465 = vadd.f32 %v6170, %v6400
    %v6466 = vrot.slane %v4328, 2
    %v6467 = vrot.slane %v4329, 2
    %v6468 = vsel %vm1360, %v6466, %v6467
    %v6469 = vrot.slane %v4330, 2
    %v6470 = vsel %vm1360, %v6467, %v6469
    %v6471 = vrot.slane %v4382, 2
    %v6472 = vrot.slane %v4383, 2
    %v6473 = vsel %vm1360, %v6471, %v6472
    %v6474 = vrot.slane %v4384, 2
    %v6475 = vsel %vm1360, %v6472, %v6474
    %s6476 = scalar_lea.vmem %s2, 40
    %v6477 = vld [vmem:[%s6476] sm:$0xff]
    %v6478 = vsel %vm15, %v6468, 0
    %v6480 = vsel %vm15, %v6470, 0
    %v6482 = vsel %vm15, %v6473, 0
    %v6484 = vsel %vm15, %v6475, 0
    %6486 = vmatpush.msra.mxu0 0.0
    %6487 = vmatpush.msra.mxu0 0.0
    %6488 = vmatpush.msra.mxu0 0.0
    %6489 = vmatpush.msra.mxu0 0.0
    %6490 = vmatpush.msra.mxu0 0.0
    %6491 = vmatpush.msra.mxu0 0.0
    %6492 = vmatpush.msra.mxu0 0.0
    %6493 = vmatpush.msra.mxu0 0.0
    %6494 = vmatpush.msra.mxu0 0.0
    %6495 = vmatpush.msra.mxu0 0.0
    %6496 = vmatpush.msra.mxu0 0.0
    %6497 = vmatpush.msra.mxu0 0.0
    %6498 = vmatpush.msra.mxu0 0.0
    %6499 = vmatpush.msra.mxu0 0.0
    %6500 = vmatpush.msra.mxu0 0.0
    %6501 = vmatpush.msra.mxu0 %v6477
    %6502 = vmatmul.f32.gmra.mxu0 %v5487
    %v6503 = vpop.f32.mrf.mxu0
    %v6504 = vadd.f32 0.0, %v6503
    %6505 = vmatmul.f32.gmra.mxu0 %v5489
    %v6506 = vpop.f32.mrf.mxu0
    %v6507 = vadd.f32 0.0, %v6506
    %6508 = vmatmul.f32.gmra.mxu0 %v5491
    %v6509 = vpop.f32.mrf.mxu0
    %v6510 = vadd.f32 0.0, %v6509
    %6511 = vmatmul.f32.gmra.mxu0 %v5493
    %v6512 = vpop.f32.mrf.mxu0
    %v6513 = vadd.f32 0.0, %v6512
    %6514 = vmatmul.f32.gmra.mxu0 %v5495
    %v6515 = vpop.f32.mrf.mxu0
    %v6516 = vadd.f32 0.0, %v6515
    %6517 = vmatmul.f32.gmra.mxu0 %v5497
    %v6518 = vpop.f32.mrf.mxu0
    %v6519 = vadd.f32 0.0, %v6518
    %6520 = vmatmul.f32.gmra.mxu0 %v5499
    %v6521 = vpop.f32.mrf.mxu0
    %v6522 = vadd.f32 0.0, %v6521
    %6523 = vmatmul.f32.gmra.mxu0 %v5501
    %v6524 = vpop.f32.mrf.mxu0
    %v6525 = vadd.f32 0.0, %v6524
    %6526 = vmatmul.f32.gmra.mxu0 %v5503
    %v6527 = vpop.f32.mrf.mxu0
    %v6528 = vadd.f32 0.0, %v6527
    %6529 = vmatmul.f32.gmra.mxu0 %v5505
    %v6530 = vpop.f32.mrf.mxu0
    %v6531 = vadd.f32 0.0, %v6530
    %6532 = vmatmul.f32.gmra.mxu0 %v5507
    %v6533 = vpop.f32.mrf.mxu0
    %v6534 = vadd.f32 0.0, %v6533
    %6535 = vmatmul.f32.gmra.mxu0 %v5509
    %v6536 = vpop.f32.mrf.mxu0
    %v6537 = vadd.f32 0.0, %v6536
    %6538 = vmatmul.f32.gmra.mxu0 %v5511
    %v6539 = vpop.f32.mrf.mxu0
    %v6540 = vadd.f32 0.0, %v6539
    %6541 = vmatmul.f32.gmra.mxu0 %v5513
    %v6542 = vpop.f32.mrf.mxu0
    %v6543 = vadd.f32 0.0, %v6542
    %6544 = vmatmul.f32.gmra.mxu0 %v5515
    %v6545 = vpop.f32.mrf.mxu0
    %v6546 = vadd.f32 0.0, %v6545
    %6547 = vmatmul.f32.gmra.mxu0 %v5517
    %v6548 = vpop.f32.mrf.mxu0
    %v6549 = vadd.f32 0.0, %v6548
    %6550 = vmatmul.f32.gmra.mxu0 %v5519
    %v6551 = vpop.f32.mrf.mxu0
    %v6552 = vadd.f32 0.0, %v6551
    %6553 = vmatmul.f32.gmra.mxu0 %v5521
    %v6554 = vpop.f32.mrf.mxu0
    %v6555 = vadd.f32 0.0, %v6554
    %6556 = vmatmul.f32.gmra.mxu0 %v5523
    %v6557 = vpop.f32.mrf.mxu0
    %v6558 = vadd.f32 0.0, %v6557
    %6559 = vmatmul.f32.gmra.mxu0 %v5525
    %v6560 = vpop.f32.mrf.mxu0
    %v6561 = vadd.f32 0.0, %v6560
    %6562 = vmatmul.f32.gmra.mxu0 %v5527
    %v6563 = vpop.f32.mrf.mxu0
    %v6564 = vadd.f32 0.0, %v6563
    %6565 = vmatmul.f32.gmra.mxu0 %v5529
    %v6566 = vpop.f32.mrf.mxu0
    %v6567 = vadd.f32 0.0, %v6566
    %6568 = vmatmul.f32.gmra.mxu0 %v5531
    %v6569 = vpop.f32.mrf.mxu0
    %v6570 = vadd.f32 0.0, %v6569
    %6571 = vmatmul.f32.gmra.mxu0 %v5533
    %v6572 = vpop.f32.mrf.mxu0
    %v6573 = vadd.f32 0.0, %v6572
    %6574 = vmatmul.f32.gmra.mxu0 %v5535
    %v6575 = vpop.f32.mrf.mxu0
    %v6576 = vadd.f32 0.0, %v6575
    %6577 = vmatmul.f32.gmra.mxu0 %v5537
    %v6578 = vpop.f32.mrf.mxu0
    %v6579 = vadd.f32 0.0, %v6578
    %6580 = vmatmul.f32.gmra.mxu0 %v5539
    %v6581 = vpop.f32.mrf.mxu0
    %v6582 = vadd.f32 0.0, %v6581
    %6583 = vmatmul.f32.gmra.mxu0 %v5541
    %v6584 = vpop.f32.mrf.mxu0
    %v6585 = vadd.f32 0.0, %v6584
    %6586 = vmatmul.f32.gmra.mxu0 %v5543
    %v6587 = vpop.f32.mrf.mxu0
    %v6588 = vadd.f32 0.0, %v6587
    %6589 = vmatmul.f32.gmra.mxu0 %v5545
    %v6590 = vpop.f32.mrf.mxu0
    %v6591 = vadd.f32 0.0, %v6590
    %6592 = vmatmul.f32.gmra.mxu0 %v6478
    %v6593 = vpop.f32.mrf.mxu0
    %v6594 = vadd.f32 0.0, %v6593
    %6595 = vmatmul.f32.gmra.mxu0 %v6480
    %v6596 = vpop.f32.mrf.mxu0
    %v6597 = vadd.f32 0.0, %v6596
    %6598 = vmatmul.f32.gmra.mxu0 %v5551
    %v6599 = vpop.f32.mrf.mxu0
    %v6600 = vadd.f32 0.0, %v6599
    %6601 = vmatmul.f32.gmra.mxu0 %v5553
    %v6602 = vpop.f32.mrf.mxu0
    %v6603 = vadd.f32 0.0, %v6602
    %6604 = vmatmul.f32.gmra.mxu0 %v5555
    %v6605 = vpop.f32.mrf.mxu0
    %v6606 = vadd.f32 0.0, %v6605
    %6607 = vmatmul.f32.gmra.mxu0 %v5557
    %v6608 = vpop.f32.mrf.mxu0
    %v6609 = vadd.f32 0.0, %v6608
    %6610 = vmatmul.f32.gmra.mxu0 %v5559
    %v6611 = vpop.f32.mrf.mxu0
    %v6612 = vadd.f32 0.0, %v6611
    %6613 = vmatmul.f32.gmra.mxu0 %v5561
    %v6614 = vpop.f32.mrf.mxu0
    %v6615 = vadd.f32 0.0, %v6614
    %6616 = vmatmul.f32.gmra.mxu0 %v5563
    %v6617 = vpop.f32.mrf.mxu0
    %v6618 = vadd.f32 0.0, %v6617
    %6619 = vmatmul.f32.gmra.mxu0 %v5565
    %v6620 = vpop.f32.mrf.mxu0
    %v6621 = vadd.f32 0.0, %v6620
    %6622 = vmatmul.f32.gmra.mxu0 %v5567
    %v6623 = vpop.f32.mrf.mxu0
    %v6624 = vadd.f32 0.0, %v6623
    %6625 = vmatmul.f32.gmra.mxu0 %v5569
    %v6626 = vpop.f32.mrf.mxu0
    %v6627 = vadd.f32 0.0, %v6626
    %6628 = vmatmul.f32.gmra.mxu0 %v5571
    %v6629 = vpop.f32.mrf.mxu0
    %v6630 = vadd.f32 0.0, %v6629
    %6631 = vmatmul.f32.gmra.mxu0 %v5573
    %v6632 = vpop.f32.mrf.mxu0
    %v6633 = vadd.f32 0.0, %v6632
    %6634 = vmatmul.f32.gmra.mxu0 %v5575
    %v6635 = vpop.f32.mrf.mxu0
    %v6636 = vadd.f32 0.0, %v6635
    %6637 = vmatmul.f32.gmra.mxu0 %v5577
    %v6638 = vpop.f32.mrf.mxu0
    %v6639 = vadd.f32 0.0, %v6638
    %6640 = vmatmul.f32.gmra.mxu0 %v5579
    %v6641 = vpop.f32.mrf.mxu0
    %v6642 = vadd.f32 0.0, %v6641
    %6643 = vmatmul.f32.gmra.mxu0 %v5581
    %v6644 = vpop.f32.mrf.mxu0
    %v6645 = vadd.f32 0.0, %v6644
    %6646 = vmatmul.f32.gmra.mxu0 %v5583
    %v6647 = vpop.f32.mrf.mxu0
    %v6648 = vadd.f32 0.0, %v6647
    %6649 = vmatmul.f32.gmra.mxu0 %v5585
    %v6650 = vpop.f32.mrf.mxu0
    %v6651 = vadd.f32 0.0, %v6650
    %6652 = vmatmul.f32.gmra.mxu0 %v5587
    %v6653 = vpop.f32.mrf.mxu0
    %v6654 = vadd.f32 0.0, %v6653
    %6655 = vmatmul.f32.gmra.mxu0 %v5589
    %v6656 = vpop.f32.mrf.mxu0
    %v6657 = vadd.f32 0.0, %v6656
    %6658 = vmatmul.f32.gmra.mxu0 %v5591
    %v6659 = vpop.f32.mrf.mxu0
    %v6660 = vadd.f32 0.0, %v6659
    %6661 = vmatmul.f32.gmra.mxu0 %v5593
    %v6662 = vpop.f32.mrf.mxu0
    %v6663 = vadd.f32 0.0, %v6662
    %6664 = vmatmul.f32.gmra.mxu0 %v5595
    %v6665 = vpop.f32.mrf.mxu0
    %v6666 = vadd.f32 0.0, %v6665
    %6667 = vmatmul.f32.gmra.mxu0 %v5597
    %v6668 = vpop.f32.mrf.mxu0
    %v6669 = vadd.f32 0.0, %v6668
    %6670 = vmatmul.f32.gmra.mxu0 %v5599
    %v6671 = vpop.f32.mrf.mxu0
    %v6672 = vadd.f32 0.0, %v6671
    %6673 = vmatmul.f32.gmra.mxu0 %v5601
    %v6674 = vpop.f32.mrf.mxu0
    %v6675 = vadd.f32 0.0, %v6674
    %6676 = vmatmul.f32.gmra.mxu0 %v5603
    %v6677 = vpop.f32.mrf.mxu0
    %v6678 = vadd.f32 0.0, %v6677
    %6679 = vmatmul.f32.gmra.mxu0 %v5605
    %v6680 = vpop.f32.mrf.mxu0
    %v6681 = vadd.f32 0.0, %v6680
    %6682 = vmatmul.f32.gmra.mxu0 %v5607
    %v6683 = vpop.f32.mrf.mxu0
    %v6684 = vadd.f32 0.0, %v6683
    %6685 = vmatmul.f32.gmra.mxu0 %v5609
    %v6686 = vpop.f32.mrf.mxu0
    %v6687 = vadd.f32 0.0, %v6686
    %6688 = vmatmul.f32.gmra.mxu0 %v6482
    %v6689 = vpop.f32.mrf.mxu0
    %v6690 = vadd.f32 0.0, %v6689
    %6691 = vmatmul.f32.gmra.mxu0 %v6484
    %v6692 = vpop.f32.mrf.mxu0
    %v6693 = vadd.f32 0.0, %v6692
    %6694 = vdwg.mxu0
    %v6695 = vadd.f32 %v6402, %v6504
    %v6696 = vadd.f32 %v6403, %v6507
    %v6697 = vadd.f32 %v6404, %v6510
    %v6698 = vadd.f32 %v6405, %v6513
    %v6699 = vadd.f32 %v6406, %v6516
    %v6700 = vadd.f32 %v6407, %v6519
    %v6701 = vadd.f32 %v6408, %v6522
    %v6702 = vadd.f32 %v6409, %v6525
    %v6703 = vadd.f32 %v6410, %v6528
    %v6704 = vadd.f32 %v6411, %v6531
    %v6705 = vadd.f32 %v6412, %v6534
    %v6706 = vadd.f32 %v6413, %v6537
    %v6707 = vadd.f32 %v6414, %v6540
    %v6708 = vadd.f32 %v6415, %v6543
    %v6709 = vadd.f32 %v6416, %v6546
    %v6710 = vadd.f32 %v6417, %v6549
    %v6711 = vadd.f32 %v6418, %v6552
    %v6712 = vadd.f32 %v6419, %v6555
    %v6713 = vadd.f32 %v6420, %v6558
    %v6714 = vadd.f32 %v6421, %v6561
    %v6715 = vadd.f32 %v6422, %v6564
    %v6716 = vadd.f32 %v6423, %v6567
    %v6717 = vadd.f32 %v6424, %v6570
    %v6718 = vadd.f32 %v6425, %v6573
    %v6719 = vadd.f32 %v6426, %v6576
    %v6720 = vadd.f32 %v6427, %v6579
    %v6721 = vadd.f32 %v6428, %v6582
    %v6722 = vadd.f32 %v6429, %v6585
    %v6723 = vadd.f32 %v6430, %v6588
    %v6724 = vadd.f32 %v6431, %v6591
    %v6725 = vadd.f32 %v6432, %v6594
    %v6726 = vadd.f32 %v6433, %v6597
    %v6727 = vadd.f32 %v6434, %v6600
    %v6728 = vadd.f32 %v6435, %v6603
    %v6729 = vadd.f32 %v6436, %v6606
    %v6730 = vadd.f32 %v6437, %v6609
    %v6731 = vadd.f32 %v6438, %v6612
    %v6732 = vadd.f32 %v6439, %v6615
    %v6733 = vadd.f32 %v6440, %v6618
    %v6734 = vadd.f32 %v6441, %v6621
    %v6735 = vadd.f32 %v6442, %v6624
    %v6736 = vadd.f32 %v6443, %v6627
    %v6737 = vadd.f32 %v6444, %v6630
    %v6738 = vadd.f32 %v6445, %v6633
    %v6739 = vadd.f32 %v6446, %v6636
    %v6740 = vadd.f32 %v6447, %v6639
    %v6741 = vadd.f32 %v6448, %v6642
    %v6742 = vadd.f32 %v6449, %v6645
    %v6743 = vadd.f32 %v6450, %v6648
    %v6744 = vadd.f32 %v6451, %v6651
    %v6745 = vadd.f32 %v6452, %v6654
    %v6746 = vadd.f32 %v6453, %v6657
    %v6747 = vadd.f32 %v6454, %v6660
    %v6748 = vadd.f32 %v6455, %v6663
    %v6749 = vadd.f32 %v6456, %v6666
    %v6750 = vadd.f32 %v6457, %v6669
    %v6751 = vadd.f32 %v6458, %v6672
    %v6752 = vadd.f32 %v6459, %v6675
    %v6753 = vadd.f32 %v6460, %v6678
    %v6754 = vadd.f32 %v6461, %v6681
    %v6755 = vadd.f32 %v6462, %v6684
    %v6756 = vadd.f32 %v6463, %v6687
    %v6757 = vadd.f32 %v6464, %v6690
    %v6758 = vadd.f32 %v6465, %v6693
    %s6759 = scalar_lea.vmem %s2, 48
    %v6760 = vld [vmem:[%s6759] sm:$0xff]
    %v6762 = vsel %vm15, %v4331, 0
    %v6765 = vsel %vm15, %v4332, 0
    %v6768 = vsel %vm15, %v4385, 0
    %v6771 = vsel %vm15, %v4386, 0
    %6773 = vmatpush.msra.mxu0 0.0
    %6774 = vmatpush.msra.mxu0 0.0
    %6775 = vmatpush.msra.mxu0 0.0
    %6776 = vmatpush.msra.mxu0 0.0
    %6777 = vmatpush.msra.mxu0 0.0
    %6778 = vmatpush.msra.mxu0 0.0
    %6779 = vmatpush.msra.mxu0 0.0
    %6780 = vmatpush.msra.mxu0 0.0
    %6781 = vmatpush.msra.mxu0 0.0
    %6782 = vmatpush.msra.mxu0 0.0
    %6783 = vmatpush.msra.mxu0 0.0
    %6784 = vmatpush.msra.mxu0 0.0
    %6785 = vmatpush.msra.mxu0 0.0
    %6786 = vmatpush.msra.mxu0 0.0
    %6787 = vmatpush.msra.mxu0 0.0
    %6788 = vmatpush.msra.mxu0 %v6760
    %6789 = vmatmul.f32.gmra.mxu0 %v4992
    %v6790 = vpop.f32.mrf.mxu0
    %v6791 = vadd.f32 0.0, %v6790
    %6792 = vmatmul.f32.gmra.mxu0 %v4994
    %v6793 = vpop.f32.mrf.mxu0
    %v6794 = vadd.f32 0.0, %v6793
    %6795 = vmatmul.f32.gmra.mxu0 %v4996
    %v6796 = vpop.f32.mrf.mxu0
    %v6797 = vadd.f32 0.0, %v6796
    %6798 = vmatmul.f32.gmra.mxu0 %v4998
    %v6799 = vpop.f32.mrf.mxu0
    %v6800 = vadd.f32 0.0, %v6799
    %6801 = vmatmul.f32.gmra.mxu0 %v5000
    %v6802 = vpop.f32.mrf.mxu0
    %v6803 = vadd.f32 0.0, %v6802
    %6804 = vmatmul.f32.gmra.mxu0 %v5002
    %v6805 = vpop.f32.mrf.mxu0
    %v6806 = vadd.f32 0.0, %v6805
    %6807 = vmatmul.f32.gmra.mxu0 %v5004
    %v6808 = vpop.f32.mrf.mxu0
    %v6809 = vadd.f32 0.0, %v6808
    %6810 = vmatmul.f32.gmra.mxu0 %v5006
    %v6811 = vpop.f32.mrf.mxu0
    %v6812 = vadd.f32 0.0, %v6811
    %6813 = vmatmul.f32.gmra.mxu0 %v5008
    %v6814 = vpop.f32.mrf.mxu0
    %v6815 = vadd.f32 0.0, %v6814
    %6816 = vmatmul.f32.gmra.mxu0 %v5010
    %v6817 = vpop.f32.mrf.mxu0
    %v6818 = vadd.f32 0.0, %v6817
    %6819 = vmatmul.f32.gmra.mxu0 %v5012
    %v6820 = vpop.f32.mrf.mxu0
    %v6821 = vadd.f32 0.0, %v6820
    %6822 = vmatmul.f32.gmra.mxu0 %v5014
    %v6823 = vpop.f32.mrf.mxu0
    %v6824 = vadd.f32 0.0, %v6823
    %6825 = vmatmul.f32.gmra.mxu0 %v5016
    %v6826 = vpop.f32.mrf.mxu0
    %v6827 = vadd.f32 0.0, %v6826
    %6828 = vmatmul.f32.gmra.mxu0 %v5018
    %v6829 = vpop.f32.mrf.mxu0
    %v6830 = vadd.f32 0.0, %v6829
    %6831 = vmatmul.f32.gmra.mxu0 %v5020
    %v6832 = vpop.f32.mrf.mxu0
    %v6833 = vadd.f32 0.0, %v6832
    %6834 = vmatmul.f32.gmra.mxu0 %v5022
    %v6835 = vpop.f32.mrf.mxu0
    %v6836 = vadd.f32 0.0, %v6835
    %6837 = vmatmul.f32.gmra.mxu0 %v5024
    %v6838 = vpop.f32.mrf.mxu0
    %v6839 = vadd.f32 0.0, %v6838
    %6840 = vmatmul.f32.gmra.mxu0 %v5026
    %v6841 = vpop.f32.mrf.mxu0
    %v6842 = vadd.f32 0.0, %v6841
    %6843 = vmatmul.f32.gmra.mxu0 %v5028
    %v6844 = vpop.f32.mrf.mxu0
    %v6845 = vadd.f32 0.0, %v6844
    %6846 = vmatmul.f32.gmra.mxu0 %v5030
    %v6847 = vpop.f32.mrf.mxu0
    %v6848 = vadd.f32 0.0, %v6847
    %6849 = vmatmul.f32.gmra.mxu0 %v5032
    %v6850 = vpop.f32.mrf.mxu0
    %v6851 = vadd.f32 0.0, %v6850
    %6852 = vmatmul.f32.gmra.mxu0 %v5034
    %v6853 = vpop.f32.mrf.mxu0
    %v6854 = vadd.f32 0.0, %v6853
    %6855 = vmatmul.f32.gmra.mxu0 %v5036
    %v6856 = vpop.f32.mrf.mxu0
    %v6857 = vadd.f32 0.0, %v6856
    %6858 = vmatmul.f32.gmra.mxu0 %v5038
    %v6859 = vpop.f32.mrf.mxu0
    %v6860 = vadd.f32 0.0, %v6859
    %6861 = vmatmul.f32.gmra.mxu0 %v5040
    %v6862 = vpop.f32.mrf.mxu0
    %v6863 = vadd.f32 0.0, %v6862
    %6864 = vmatmul.f32.gmra.mxu0 %v5042
    %v6865 = vpop.f32.mrf.mxu0
    %v6866 = vadd.f32 0.0, %v6865
    %6867 = vmatmul.f32.gmra.mxu0 %v5044
    %v6868 = vpop.f32.mrf.mxu0
    %v6869 = vadd.f32 0.0, %v6868
    %6870 = vmatmul.f32.gmra.mxu0 %v5046
    %v6871 = vpop.f32.mrf.mxu0
    %v6872 = vadd.f32 0.0, %v6871
    %6873 = vmatmul.f32.gmra.mxu0 %v5887
    %v6874 = vpop.f32.mrf.mxu0
    %v6875 = vadd.f32 0.0, %v6874
    %6876 = vmatmul.f32.gmra.mxu0 %v5890
    %v6877 = vpop.f32.mrf.mxu0
    %v6878 = vadd.f32 0.0, %v6877
    %6879 = vmatmul.f32.gmra.mxu0 %v6762
    %v6880 = vpop.f32.mrf.mxu0
    %v6881 = vadd.f32 0.0, %v6880
    %6882 = vmatmul.f32.gmra.mxu0 %v6765
    %v6883 = vpop.f32.mrf.mxu0
    %v6884 = vadd.f32 0.0, %v6883
    %6885 = vmatmul.f32.gmra.mxu0 %v5056
    %v6886 = vpop.f32.mrf.mxu0
    %v6887 = vadd.f32 0.0, %v6886
    %6888 = vmatmul.f32.gmra.mxu0 %v5058
    %v6889 = vpop.f32.mrf.mxu0
    %v6890 = vadd.f32 0.0, %v6889
    %6891 = vmatmul.f32.gmra.mxu0 %v5060
    %v6892 = vpop.f32.mrf.mxu0
    %v6893 = vadd.f32 0.0, %v6892
    %6894 = vmatmul.f32.gmra.mxu0 %v5062
    %v6895 = vpop.f32.mrf.mxu0
    %v6896 = vadd.f32 0.0, %v6895
    %6897 = vmatmul.f32.gmra.mxu0 %v5064
    %v6898 = vpop.f32.mrf.mxu0
    %v6899 = vadd.f32 0.0, %v6898
    %6900 = vmatmul.f32.gmra.mxu0 %v5066
    %v6901 = vpop.f32.mrf.mxu0
    %v6902 = vadd.f32 0.0, %v6901
    %6903 = vmatmul.f32.gmra.mxu0 %v5068
    %v6904 = vpop.f32.mrf.mxu0
    %v6905 = vadd.f32 0.0, %v6904
    %6906 = vmatmul.f32.gmra.mxu0 %v5070
    %v6907 = vpop.f32.mrf.mxu0
    %v6908 = vadd.f32 0.0, %v6907
    %6909 = vmatmul.f32.gmra.mxu0 %v5072
    %v6910 = vpop.f32.mrf.mxu0
    %v6911 = vadd.f32 0.0, %v6910
    %6912 = vmatmul.f32.gmra.mxu0 %v5074
    %v6913 = vpop.f32.mrf.mxu0
    %v6914 = vadd.f32 0.0, %v6913
    %6915 = vmatmul.f32.gmra.mxu0 %v5076
    %v6916 = vpop.f32.mrf.mxu0
    %v6917 = vadd.f32 0.0, %v6916
    %6918 = vmatmul.f32.gmra.mxu0 %v5078
    %v6919 = vpop.f32.mrf.mxu0
    %v6920 = vadd.f32 0.0, %v6919
    %6921 = vmatmul.f32.gmra.mxu0 %v5080
    %v6922 = vpop.f32.mrf.mxu0
    %v6923 = vadd.f32 0.0, %v6922
    %6924 = vmatmul.f32.gmra.mxu0 %v5082
    %v6925 = vpop.f32.mrf.mxu0
    %v6926 = vadd.f32 0.0, %v6925
    %6927 = vmatmul.f32.gmra.mxu0 %v5084
    %v6928 = vpop.f32.mrf.mxu0
    %v6929 = vadd.f32 0.0, %v6928
    %6930 = vmatmul.f32.gmra.mxu0 %v5086
    %v6931 = vpop.f32.mrf.mxu0
    %v6932 = vadd.f32 0.0, %v6931
    %6933 = vmatmul.f32.gmra.mxu0 %v5088
    %v6934 = vpop.f32.mrf.mxu0
    %v6935 = vadd.f32 0.0, %v6934
    %6936 = vmatmul.f32.gmra.mxu0 %v5090
    %v6937 = vpop.f32.mrf.mxu0
    %v6938 = vadd.f32 0.0, %v6937
    %6939 = vmatmul.f32.gmra.mxu0 %v5092
    %v6940 = vpop.f32.mrf.mxu0
    %v6941 = vadd.f32 0.0, %v6940
    %6942 = vmatmul.f32.gmra.mxu0 %v5094
    %v6943 = vpop.f32.mrf.mxu0
    %v6944 = vadd.f32 0.0, %v6943
    %6945 = vmatmul.f32.gmra.mxu0 %v5096
    %v6946 = vpop.f32.mrf.mxu0
    %v6947 = vadd.f32 0.0, %v6946
    %6948 = vmatmul.f32.gmra.mxu0 %v5098
    %v6949 = vpop.f32.mrf.mxu0
    %v6950 = vadd.f32 0.0, %v6949
    %6951 = vmatmul.f32.gmra.mxu0 %v5100
    %v6952 = vpop.f32.mrf.mxu0
    %v6953 = vadd.f32 0.0, %v6952
    %6954 = vmatmul.f32.gmra.mxu0 %v5102
    %v6955 = vpop.f32.mrf.mxu0
    %v6956 = vadd.f32 0.0, %v6955
    %6957 = vmatmul.f32.gmra.mxu0 %v5104
    %v6958 = vpop.f32.mrf.mxu0
    %v6959 = vadd.f32 0.0, %v6958
    %6960 = vmatmul.f32.gmra.mxu0 %v5106
    %v6961 = vpop.f32.mrf.mxu0
    %v6962 = vadd.f32 0.0, %v6961
    %6963 = vmatmul.f32.gmra.mxu0 %v5108
    %v6964 = vpop.f32.mrf.mxu0
    %v6965 = vadd.f32 0.0, %v6964
    %6966 = vmatmul.f32.gmra.mxu0 %v5110
    %v6967 = vpop.f32.mrf.mxu0
    %v6968 = vadd.f32 0.0, %v6967
    %6969 = vmatmul.f32.gmra.mxu0 %v5893
    %v6970 = vpop.f32.mrf.mxu0
    %v6971 = vadd.f32 0.0, %v6970
    %6972 = vmatmul.f32.gmra.mxu0 %v5896
    %v6973 = vpop.f32.mrf.mxu0
    %v6974 = vadd.f32 0.0, %v6973
    %6975 = vmatmul.f32.gmra.mxu0 %v6768
    %v6976 = vpop.f32.mrf.mxu0
    %v6977 = vadd.f32 0.0, %v6976
    %6978 = vmatmul.f32.gmra.mxu0 %v6771
    %v6979 = vpop.f32.mrf.mxu0
    %v6980 = vadd.f32 0.0, %v6979
    %6981 = vdwg.mxu0
    %v6982 = vadd.f32 %v6695, %v6791
    %v6983 = vadd.f32 %v6696, %v6794
    %v6984 = vadd.f32 %v6697, %v6797
    %v6985 = vadd.f32 %v6698, %v6800
    %v6986 = vadd.f32 %v6699, %v6803
    %v6987 = vadd.f32 %v6700, %v6806
    %v6988 = vadd.f32 %v6701, %v6809
    %v6989 = vadd.f32 %v6702, %v6812
    %v6990 = vadd.f32 %v6703, %v6815
    %v6991 = vadd.f32 %v6704, %v6818
    %v6992 = vadd.f32 %v6705, %v6821
    %v6993 = vadd.f32 %v6706, %v6824
    %v6994 = vadd.f32 %v6707, %v6827
    %v6995 = vadd.f32 %v6708, %v6830
    %v6996 = vadd.f32 %v6709, %v6833
    %v6997 = vadd.f32 %v6710, %v6836
    %v6998 = vadd.f32 %v6711, %v6839
    %v6999 = vadd.f32 %v6712, %v6842
    %v7000 = vadd.f32 %v6713, %v6845
    %v7001 = vadd.f32 %v6714, %v6848
    %v7002 = vadd.f32 %v6715, %v6851
    %v7003 = vadd.f32 %v6716, %v6854
    %v7004 = vadd.f32 %v6717, %v6857
    %v7005 = vadd.f32 %v6718, %v6860
    %v7006 = vadd.f32 %v6719, %v6863
    %v7007 = vadd.f32 %v6720, %v6866
    %v7008 = vadd.f32 %v6721, %v6869
    %v7009 = vadd.f32 %v6722, %v6872
    %v7010 = vadd.f32 %v6723, %v6875
    %v7011 = vadd.f32 %v6724, %v6878
    %v7012 = vadd.f32 %v6725, %v6881
    %v7013 = vadd.f32 %v6726, %v6884
    %v7014 = vadd.f32 %v6727, %v6887
    %v7015 = vadd.f32 %v6728, %v6890
    %v7016 = vadd.f32 %v6729, %v6893
    %v7017 = vadd.f32 %v6730, %v6896
    %v7018 = vadd.f32 %v6731, %v6899
    %v7019 = vadd.f32 %v6732, %v6902
    %v7020 = vadd.f32 %v6733, %v6905
    %v7021 = vadd.f32 %v6734, %v6908
    %v7022 = vadd.f32 %v6735, %v6911
    %v7023 = vadd.f32 %v6736, %v6914
    %v7024 = vadd.f32 %v6737, %v6917
    %v7025 = vadd.f32 %v6738, %v6920
    %v7026 = vadd.f32 %v6739, %v6923
    %v7027 = vadd.f32 %v6740, %v6926
    %v7028 = vadd.f32 %v6741, %v6929
    %v7029 = vadd.f32 %v6742, %v6932
    %v7030 = vadd.f32 %v6743, %v6935
    %v7031 = vadd.f32 %v6744, %v6938
    %v7032 = vadd.f32 %v6745, %v6941
    %v7033 = vadd.f32 %v6746, %v6944
    %v7034 = vadd.f32 %v6747, %v6947
    %v7035 = vadd.f32 %v6748, %v6950
    %v7036 = vadd.f32 %v6749, %v6953
    %v7037 = vadd.f32 %v6750, %v6956
    %v7038 = vadd.f32 %v6751, %v6959
    %v7039 = vadd.f32 %v6752, %v6962
    %v7040 = vadd.f32 %v6753, %v6965
    %v7041 = vadd.f32 %v6754, %v6968
    %v7042 = vadd.f32 %v6755, %v6971
    %v7043 = vadd.f32 %v6756, %v6974
    %v7044 = vadd.f32 %v6757, %v6977
    %v7045 = vadd.f32 %v6758, %v6980
    %v7048 = vrot.slane %v4331, 1
    %v7049 = vrot.slane %v4332, 1
    %v7050 = vsel %vm523, %v7048, %v7049
    %v7051 = vrot.slane %v4333, 1
    %v7052 = vsel %vm523, %v7049, %v7051
    %v7053 = vrot.slane %v4385, 1
    %v7054 = vrot.slane %v4386, 1
    %v7055 = vsel %vm523, %v7053, %v7054
    %v7056 = vrot.slane %v4387, 1
    %v7057 = vsel %vm523, %v7054, %v7056
    %s7058 = scalar_lea.vmem %s2, 56
    %v7059 = vld [vmem:[%s7058] sm:$0xff]
    %v7060 = vsel %vm15, %v7050, 0
    %v7062 = vsel %vm15, %v7052, 0
    %v7064 = vsel %vm15, %v7055, 0
    %v7066 = vsel %vm15, %v7057, 0
    %7068 = vmatpush.msra.mxu0 0.0
    %7069 = vmatpush.msra.mxu0 0.0
    %7070 = vmatpush.msra.mxu0 0.0
    %7071 = vmatpush.msra.mxu0 0.0
    %7072 = vmatpush.msra.mxu0 0.0
    %7073 = vmatpush.msra.mxu0 0.0
    %7074 = vmatpush.msra.mxu0 0.0
    %7075 = vmatpush.msra.mxu0 0.0
    %7076 = vmatpush.msra.mxu0 0.0
    %7077 = vmatpush.msra.mxu0 0.0
    %7078 = vmatpush.msra.mxu0 0.0
    %7079 = vmatpush.msra.mxu0 0.0
    %7080 = vmatpush.msra.mxu0 0.0
    %7081 = vmatpush.msra.mxu0 0.0
    %7082 = vmatpush.msra.mxu0 0.0
    %7083 = vmatpush.msra.mxu0 %v7059
    %7084 = vmatmul.f32.gmra.mxu0 %v4655
    %v7085 = vpop.f32.mrf.mxu0
    %v7086 = vadd.f32 0.0, %v7085
    %7087 = vmatmul.f32.gmra.mxu0 %v4657
    %v7088 = vpop.f32.mrf.mxu0
    %v7089 = vadd.f32 0.0, %v7088
    %7090 = vmatmul.f32.gmra.mxu0 %v4659
    %v7091 = vpop.f32.mrf.mxu0
    %v7092 = vadd.f32 0.0, %v7091
    %7093 = vmatmul.f32.gmra.mxu0 %v4661
    %v7094 = vpop.f32.mrf.mxu0
    %v7095 = vadd.f32 0.0, %v7094
    %7096 = vmatmul.f32.gmra.mxu0 %v4663
    %v7097 = vpop.f32.mrf.mxu0
    %v7098 = vadd.f32 0.0, %v7097
    %7099 = vmatmul.f32.gmra.mxu0 %v4665
    %v7100 = vpop.f32.mrf.mxu0
    %v7101 = vadd.f32 0.0, %v7100
    %7102 = vmatmul.f32.gmra.mxu0 %v4667
    %v7103 = vpop.f32.mrf.mxu0
    %v7104 = vadd.f32 0.0, %v7103
    %7105 = vmatmul.f32.gmra.mxu0 %v4669
    %v7106 = vpop.f32.mrf.mxu0
    %v7107 = vadd.f32 0.0, %v7106
    %7108 = vmatmul.f32.gmra.mxu0 %v4671
    %v7109 = vpop.f32.mrf.mxu0
    %v7110 = vadd.f32 0.0, %v7109
    %7111 = vmatmul.f32.gmra.mxu0 %v4673
    %v7112 = vpop.f32.mrf.mxu0
    %v7113 = vadd.f32 0.0, %v7112
    %7114 = vmatmul.f32.gmra.mxu0 %v4675
    %v7115 = vpop.f32.mrf.mxu0
    %v7116 = vadd.f32 0.0, %v7115
    %7117 = vmatmul.f32.gmra.mxu0 %v4677
    %v7118 = vpop.f32.mrf.mxu0
    %v7119 = vadd.f32 0.0, %v7118
    %7120 = vmatmul.f32.gmra.mxu0 %v4679
    %v7121 = vpop.f32.mrf.mxu0
    %v7122 = vadd.f32 0.0, %v7121
    %7123 = vmatmul.f32.gmra.mxu0 %v4681
    %v7124 = vpop.f32.mrf.mxu0
    %v7125 = vadd.f32 0.0, %v7124
    %7126 = vmatmul.f32.gmra.mxu0 %v4683
    %v7127 = vpop.f32.mrf.mxu0
    %v7128 = vadd.f32 0.0, %v7127
    %7129 = vmatmul.f32.gmra.mxu0 %v4685
    %v7130 = vpop.f32.mrf.mxu0
    %v7131 = vadd.f32 0.0, %v7130
    %7132 = vmatmul.f32.gmra.mxu0 %v4687
    %v7133 = vpop.f32.mrf.mxu0
    %v7134 = vadd.f32 0.0, %v7133
    %7135 = vmatmul.f32.gmra.mxu0 %v4689
    %v7136 = vpop.f32.mrf.mxu0
    %v7137 = vadd.f32 0.0, %v7136
    %7138 = vmatmul.f32.gmra.mxu0 %v4691
    %v7139 = vpop.f32.mrf.mxu0
    %v7140 = vadd.f32 0.0, %v7139
    %7141 = vmatmul.f32.gmra.mxu0 %v4693
    %v7142 = vpop.f32.mrf.mxu0
    %v7143 = vadd.f32 0.0, %v7142
    %7144 = vmatmul.f32.gmra.mxu0 %v4695
    %v7145 = vpop.f32.mrf.mxu0
    %v7146 = vadd.f32 0.0, %v7145
    %7147 = vmatmul.f32.gmra.mxu0 %v4697
    %v7148 = vpop.f32.mrf.mxu0
    %v7149 = vadd.f32 0.0, %v7148
    %7150 = vmatmul.f32.gmra.mxu0 %v4699
    %v7151 = vpop.f32.mrf.mxu0
    %v7152 = vadd.f32 0.0, %v7151
    %7153 = vmatmul.f32.gmra.mxu0 %v4701
    %v7154 = vpop.f32.mrf.mxu0
    %v7155 = vadd.f32 0.0, %v7154
    %7156 = vmatmul.f32.gmra.mxu0 %v4703
    %v7157 = vpop.f32.mrf.mxu0
    %v7158 = vadd.f32 0.0, %v7157
    %7159 = vmatmul.f32.gmra.mxu0 %v4705
    %v7160 = vpop.f32.mrf.mxu0
    %v7161 = vadd.f32 0.0, %v7160
    %7162 = vmatmul.f32.gmra.mxu0 %v4707
    %v7163 = vpop.f32.mrf.mxu0
    %v7164 = vadd.f32 0.0, %v7163
    %7165 = vmatmul.f32.gmra.mxu0 %v4709
    %v7166 = vpop.f32.mrf.mxu0
    %v7167 = vadd.f32 0.0, %v7166
    %7168 = vmatmul.f32.gmra.mxu0 %v6185
    %v7169 = vpop.f32.mrf.mxu0
    %v7170 = vadd.f32 0.0, %v7169
    %7171 = vmatmul.f32.gmra.mxu0 %v6187
    %v7172 = vpop.f32.mrf.mxu0
    %v7173 = vadd.f32 0.0, %v7172
    %7174 = vmatmul.f32.gmra.mxu0 %v7060
    %v7175 = vpop.f32.mrf.mxu0
    %v7176 = vadd.f32 0.0, %v7175
    %7177 = vmatmul.f32.gmra.mxu0 %v7062
    %v7178 = vpop.f32.mrf.mxu0
    %v7179 = vadd.f32 0.0, %v7178
    %7180 = vmatmul.f32.gmra.mxu0 %v4719
    %v7181 = vpop.f32.mrf.mxu0
    %v7182 = vadd.f32 0.0, %v7181
    %7183 = vmatmul.f32.gmra.mxu0 %v4721
    %v7184 = vpop.f32.mrf.mxu0
    %v7185 = vadd.f32 0.0, %v7184
    %7186 = vmatmul.f32.gmra.mxu0 %v4723
    %v7187 = vpop.f32.mrf.mxu0
    %v7188 = vadd.f32 0.0, %v7187
    %7189 = vmatmul.f32.gmra.mxu0 %v4725
    %v7190 = vpop.f32.mrf.mxu0
    %v7191 = vadd.f32 0.0, %v7190
    %7192 = vmatmul.f32.gmra.mxu0 %v4727
    %v7193 = vpop.f32.mrf.mxu0
    %v7194 = vadd.f32 0.0, %v7193
    %7195 = vmatmul.f32.gmra.mxu0 %v4729
    %v7196 = vpop.f32.mrf.mxu0
    %v7197 = vadd.f32 0.0, %v7196
    %7198 = vmatmul.f32.gmra.mxu0 %v4731
    %v7199 = vpop.f32.mrf.mxu0
    %v7200 = vadd.f32 0.0, %v7199
    %7201 = vmatmul.f32.gmra.mxu0 %v4733
    %v7202 = vpop.f32.mrf.mxu0
    %v7203 = vadd.f32 0.0, %v7202
    %7204 = vmatmul.f32.gmra.mxu0 %v4735
    %v7205 = vpop.f32.mrf.mxu0
    %v7206 = vadd.f32 0.0, %v7205
    %7207 = vmatmul.f32.gmra.mxu0 %v4737
    %v7208 = vpop.f32.mrf.mxu0
    %v7209 = vadd.f32 0.0, %v7208
    %7210 = vmatmul.f32.gmra.mxu0 %v4739
    %v7211 = vpop.f32.mrf.mxu0
    %v7212 = vadd.f32 0.0, %v7211
    %7213 = vmatmul.f32.gmra.mxu0 %v4741
    %v7214 = vpop.f32.mrf.mxu0
    %v7215 = vadd.f32 0.0, %v7214
    %7216 = vmatmul.f32.gmra.mxu0 %v4743
    %v7217 = vpop.f32.mrf.mxu0
    %v7218 = vadd.f32 0.0, %v7217
    %7219 = vmatmul.f32.gmra.mxu0 %v4745
    %v7220 = vpop.f32.mrf.mxu0
    %v7221 = vadd.f32 0.0, %v7220
    %7222 = vmatmul.f32.gmra.mxu0 %v4747
    %v7223 = vpop.f32.mrf.mxu0
    %v7224 = vadd.f32 0.0, %v7223
    %7225 = vmatmul.f32.gmra.mxu0 %v4749
    %v7226 = vpop.f32.mrf.mxu0
    %v7227 = vadd.f32 0.0, %v7226
    %7228 = vmatmul.f32.gmra.mxu0 %v4751
    %v7229 = vpop.f32.mrf.mxu0
    %v7230 = vadd.f32 0.0, %v7229
    %7231 = vmatmul.f32.gmra.mxu0 %v4753
    %v7232 = vpop.f32.mrf.mxu0
    %v7233 = vadd.f32 0.0, %v7232
    %7234 = vmatmul.f32.gmra.mxu0 %v4755
    %v7235 = vpop.f32.mrf.mxu0
    %v7236 = vadd.f32 0.0, %v7235
    %7237 = vmatmul.f32.gmra.mxu0 %v4757
    %v7238 = vpop.f32.mrf.mxu0
    %v7239 = vadd.f32 0.0, %v7238
    %7240 = vmatmul.f32.gmra.mxu0 %v4759
    %v7241 = vpop.f32.mrf.mxu0
    %v7242 = vadd.f32 0.0, %v7241
    %7243 = vmatmul.f32.gmra.mxu0 %v4761
    %v7244 = vpop.f32.mrf.mxu0
    %v7245 = vadd.f32 0.0, %v7244
    %7246 = vmatmul.f32.gmra.mxu0 %v4763
    %v7247 = vpop.f32.mrf.mxu0
    %v7248 = vadd.f32 0.0, %v7247
    %7249 = vmatmul.f32.gmra.mxu0 %v4765
    %v7250 = vpop.f32.mrf.mxu0
    %v7251 = vadd.f32 0.0, %v7250
    %7252 = vmatmul.f32.gmra.mxu0 %v4767
    %v7253 = vpop.f32.mrf.mxu0
    %v7254 = vadd.f32 0.0, %v7253
    %7255 = vmatmul.f32.gmra.mxu0 %v4769
    %v7256 = vpop.f32.mrf.mxu0
    %v7257 = vadd.f32 0.0, %v7256
    %7258 = vmatmul.f32.gmra.mxu0 %v4771
    %v7259 = vpop.f32.mrf.mxu0
    %v7260 = vadd.f32 0.0, %v7259
    %7261 = vmatmul.f32.gmra.mxu0 %v4773
    %v7262 = vpop.f32.mrf.mxu0
    %v7263 = vadd.f32 0.0, %v7262
    %7264 = vmatmul.f32.gmra.mxu0 %v6189
    %v7265 = vpop.f32.mrf.mxu0
    %v7266 = vadd.f32 0.0, %v7265
    %7267 = vmatmul.f32.gmra.mxu0 %v6191
    %v7268 = vpop.f32.mrf.mxu0
    %v7269 = vadd.f32 0.0, %v7268
    %7270 = vmatmul.f32.gmra.mxu0 %v7064
    %v7271 = vpop.f32.mrf.mxu0
    %v7272 = vadd.f32 0.0, %v7271
    %7273 = vmatmul.f32.gmra.mxu0 %v7066
    %v7274 = vpop.f32.mrf.mxu0
    %v7275 = vadd.f32 0.0, %v7274
    %7276 = vdwg.mxu0
    %v7277 = vadd.f32 %v6982, %v7086
    %v7278 = vadd.f32 %v6983, %v7089
    %v7279 = vadd.f32 %v6984, %v7092
    %v7280 = vadd.f32 %v6985, %v7095
    %v7281 = vadd.f32 %v6986, %v7098
    %v7282 = vadd.f32 %v6987, %v7101
    %v7283 = vadd.f32 %v6988, %v7104
    %v7284 = vadd.f32 %v6989, %v7107
    %v7285 = vadd.f32 %v6990, %v7110
    %v7286 = vadd.f32 %v6991, %v7113
    %v7287 = vadd.f32 %v6992, %v7116
    %v7288 = vadd.f32 %v6993, %v7119
    %v7289 = vadd.f32 %v6994, %v7122
    %v7290 = vadd.f32 %v6995, %v7125
    %v7291 = vadd.f32 %v6996, %v7128
    %v7292 = vadd.f32 %v6997, %v7131
    %v7293 = vadd.f32 %v6998, %v7134
    %v7294 = vadd.f32 %v6999, %v7137
    %v7295 = vadd.f32 %v7000, %v7140
    %v7296 = vadd.f32 %v7001, %v7143
    %v7297 = vadd.f32 %v7002, %v7146
    %v7298 = vadd.f32 %v7003, %v7149
    %v7299 = vadd.f32 %v7004, %v7152
    %v7300 = vadd.f32 %v7005, %v7155
    %v7301 = vadd.f32 %v7006, %v7158
    %v7302 = vadd.f32 %v7007, %v7161
    %v7303 = vadd.f32 %v7008, %v7164
    %v7304 = vadd.f32 %v7009, %v7167
    %v7305 = vadd.f32 %v7010, %v7170
    %v7306 = vadd.f32 %v7011, %v7173
    %v7307 = vadd.f32 %v7012, %v7176
    %v7308 = vadd.f32 %v7013, %v7179
    %v7309 = vadd.f32 %v7014, %v7182
    %v7310 = vadd.f32 %v7015, %v7185
    %v7311 = vadd.f32 %v7016, %v7188
    %v7312 = vadd.f32 %v7017, %v7191
    %v7313 = vadd.f32 %v7018, %v7194
    %v7314 = vadd.f32 %v7019, %v7197
    %v7315 = vadd.f32 %v7020, %v7200
    %v7316 = vadd.f32 %v7021, %v7203
    %v7317 = vadd.f32 %v7022, %v7206
    %v7318 = vadd.f32 %v7023, %v7209
    %v7319 = vadd.f32 %v7024, %v7212
    %v7320 = vadd.f32 %v7025, %v7215
    %v7321 = vadd.f32 %v7026, %v7218
    %v7322 = vadd.f32 %v7027, %v7221
    %v7323 = vadd.f32 %v7028, %v7224
    %v7324 = vadd.f32 %v7029, %v7227
    %v7325 = vadd.f32 %v7030, %v7230
    %v7326 = vadd.f32 %v7031, %v7233
    %v7327 = vadd.f32 %v7032, %v7236
    %v7328 = vadd.f32 %v7033, %v7239
    %v7329 = vadd.f32 %v7034, %v7242
    %v7330 = vadd.f32 %v7035, %v7245
    %v7331 = vadd.f32 %v7036, %v7248
    %v7332 = vadd.f32 %v7037, %v7251
    %v7333 = vadd.f32 %v7038, %v7254
    %v7334 = vadd.f32 %v7039, %v7257
    %v7335 = vadd.f32 %v7040, %v7260
    %v7336 = vadd.f32 %v7041, %v7263
    %v7337 = vadd.f32 %v7042, %v7266
    %v7338 = vadd.f32 %v7043, %v7269
    %v7339 = vadd.f32 %v7044, %v7272
    %v7340 = vadd.f32 %v7045, %v7275
    %v7341 = vrot.slane %v4331, 2
    %v7342 = vrot.slane %v4332, 2
    %v7343 = vsel %vm1360, %v7341, %v7342
    %v7344 = vrot.slane %v4333, 2
    %v7345 = vsel %vm1360, %v7342, %v7344
    %v7346 = vrot.slane %v4385, 2
    %v7347 = vrot.slane %v4386, 2
    %v7348 = vsel %vm1360, %v7346, %v7347
    %v7349 = vrot.slane %v4387, 2
    %v7350 = vsel %vm1360, %v7347, %v7349
    %s7351 = scalar_lea.vmem %s2, 64
    %v7352 = vld [vmem:[%s7351] sm:$0xff]
    %v7353 = vsel %vm15, %v7343, 0
    %v7355 = vsel %vm15, %v7345, 0
    %v7357 = vsel %vm15, %v7348, 0
    %v7359 = vsel %vm15, %v7350, 0
    %7361 = vmatpush.msra.mxu0 0.0
    %7362 = vmatpush.msra.mxu0 0.0
    %7363 = vmatpush.msra.mxu0 0.0
    %7364 = vmatpush.msra.mxu0 0.0
    %7365 = vmatpush.msra.mxu0 0.0
    %7366 = vmatpush.msra.mxu0 0.0
    %7367 = vmatpush.msra.mxu0 0.0
    %7368 = vmatpush.msra.mxu0 0.0
    %7369 = vmatpush.msra.mxu0 0.0
    %7370 = vmatpush.msra.mxu0 0.0
    %7371 = vmatpush.msra.mxu0 0.0
    %7372 = vmatpush.msra.mxu0 0.0
    %7373 = vmatpush.msra.mxu0 0.0
    %7374 = vmatpush.msra.mxu0 0.0
    %7375 = vmatpush.msra.mxu0 0.0
    %7376 = vmatpush.msra.mxu0 %v7352
    %7377 = vmatmul.f32.gmra.mxu0 %v5491
    %v7378 = vpop.f32.mrf.mxu0
    %v7379 = vadd.f32 0.0, %v7378
    %7380 = vmatmul.f32.gmra.mxu0 %v5493
    %v7381 = vpop.f32.mrf.mxu0
    %v7382 = vadd.f32 0.0, %v7381
    %7383 = vmatmul.f32.gmra.mxu0 %v5495
    %v7384 = vpop.f32.mrf.mxu0
    %v7385 = vadd.f32 0.0, %v7384
    %7386 = vmatmul.f32.gmra.mxu0 %v5497
    %v7387 = vpop.f32.mrf.mxu0
    %v7388 = vadd.f32 0.0, %v7387
    %7389 = vmatmul.f32.gmra.mxu0 %v5499
    %v7390 = vpop.f32.mrf.mxu0
    %v7391 = vadd.f32 0.0, %v7390
    %7392 = vmatmul.f32.gmra.mxu0 %v5501
    %v7393 = vpop.f32.mrf.mxu0
    %v7394 = vadd.f32 0.0, %v7393
    %7395 = vmatmul.f32.gmra.mxu0 %v5503
    %v7396 = vpop.f32.mrf.mxu0
    %v7397 = vadd.f32 0.0, %v7396
    %7398 = vmatmul.f32.gmra.mxu0 %v5505
    %v7399 = vpop.f32.mrf.mxu0
    %v7400 = vadd.f32 0.0, %v7399
    %7401 = vmatmul.f32.gmra.mxu0 %v5507
    %v7402 = vpop.f32.mrf.mxu0
    %v7403 = vadd.f32 0.0, %v7402
    %7404 = vmatmul.f32.gmra.mxu0 %v5509
    %v7405 = vpop.f32.mrf.mxu0
    %v7406 = vadd.f32 0.0, %v7405
    %7407 = vmatmul.f32.gmra.mxu0 %v5511
    %v7408 = vpop.f32.mrf.mxu0
    %v7409 = vadd.f32 0.0, %v7408
    %7410 = vmatmul.f32.gmra.mxu0 %v5513
    %v7411 = vpop.f32.mrf.mxu0
    %v7412 = vadd.f32 0.0, %v7411
    %7413 = vmatmul.f32.gmra.mxu0 %v5515
    %v7414 = vpop.f32.mrf.mxu0
    %v7415 = vadd.f32 0.0, %v7414
    %7416 = vmatmul.f32.gmra.mxu0 %v5517
    %v7417 = vpop.f32.mrf.mxu0
    %v7418 = vadd.f32 0.0, %v7417
    %7419 = vmatmul.f32.gmra.mxu0 %v5519
    %v7420 = vpop.f32.mrf.mxu0
    %v7421 = vadd.f32 0.0, %v7420
    %7422 = vmatmul.f32.gmra.mxu0 %v5521
    %v7423 = vpop.f32.mrf.mxu0
    %v7424 = vadd.f32 0.0, %v7423
    %7425 = vmatmul.f32.gmra.mxu0 %v5523
    %v7426 = vpop.f32.mrf.mxu0
    %v7427 = vadd.f32 0.0, %v7426
    %7428 = vmatmul.f32.gmra.mxu0 %v5525
    %v7429 = vpop.f32.mrf.mxu0
    %v7430 = vadd.f32 0.0, %v7429
    %7431 = vmatmul.f32.gmra.mxu0 %v5527
    %v7432 = vpop.f32.mrf.mxu0
    %v7433 = vadd.f32 0.0, %v7432
    %7434 = vmatmul.f32.gmra.mxu0 %v5529
    %v7435 = vpop.f32.mrf.mxu0
    %v7436 = vadd.f32 0.0, %v7435
    %7437 = vmatmul.f32.gmra.mxu0 %v5531
    %v7438 = vpop.f32.mrf.mxu0
    %v7439 = vadd.f32 0.0, %v7438
    %7440 = vmatmul.f32.gmra.mxu0 %v5533
    %v7441 = vpop.f32.mrf.mxu0
    %v7442 = vadd.f32 0.0, %v7441
    %7443 = vmatmul.f32.gmra.mxu0 %v5535
    %v7444 = vpop.f32.mrf.mxu0
    %v7445 = vadd.f32 0.0, %v7444
    %7446 = vmatmul.f32.gmra.mxu0 %v5537
    %v7447 = vpop.f32.mrf.mxu0
    %v7448 = vadd.f32 0.0, %v7447
    %7449 = vmatmul.f32.gmra.mxu0 %v5539
    %v7450 = vpop.f32.mrf.mxu0
    %v7451 = vadd.f32 0.0, %v7450
    %7452 = vmatmul.f32.gmra.mxu0 %v5541
    %v7453 = vpop.f32.mrf.mxu0
    %v7454 = vadd.f32 0.0, %v7453
    %7455 = vmatmul.f32.gmra.mxu0 %v5543
    %v7456 = vpop.f32.mrf.mxu0
    %v7457 = vadd.f32 0.0, %v7456
    %7458 = vmatmul.f32.gmra.mxu0 %v5545
    %v7459 = vpop.f32.mrf.mxu0
    %v7460 = vadd.f32 0.0, %v7459
    %7461 = vmatmul.f32.gmra.mxu0 %v6478
    %v7462 = vpop.f32.mrf.mxu0
    %v7463 = vadd.f32 0.0, %v7462
    %7464 = vmatmul.f32.gmra.mxu0 %v6480
    %v7465 = vpop.f32.mrf.mxu0
    %v7466 = vadd.f32 0.0, %v7465
    %7467 = vmatmul.f32.gmra.mxu0 %v7353
    %v7468 = vpop.f32.mrf.mxu0
    %v7469 = vadd.f32 0.0, %v7468
    %7470 = vmatmul.f32.gmra.mxu0 %v7355
    %v7471 = vpop.f32.mrf.mxu0
    %v7472 = vadd.f32 0.0, %v7471
    %7473 = vmatmul.f32.gmra.mxu0 %v5555
    %v7474 = vpop.f32.mrf.mxu0
    %v7475 = vadd.f32 0.0, %v7474
    %7476 = vmatmul.f32.gmra.mxu0 %v5557
    %v7477 = vpop.f32.mrf.mxu0
    %v7478 = vadd.f32 0.0, %v7477
    %7479 = vmatmul.f32.gmra.mxu0 %v5559
    %v7480 = vpop.f32.mrf.mxu0
    %v7481 = vadd.f32 0.0, %v7480
    %7482 = vmatmul.f32.gmra.mxu0 %v5561
    %v7483 = vpop.f32.mrf.mxu0
    %v7484 = vadd.f32 0.0, %v7483
    %7485 = vmatmul.f32.gmra.mxu0 %v5563
    %v7486 = vpop.f32.mrf.mxu0
    %v7487 = vadd.f32 0.0, %v7486
    %7488 = vmatmul.f32.gmra.mxu0 %v5565
    %v7489 = vpop.f32.mrf.mxu0
    %v7490 = vadd.f32 0.0, %v7489
    %7491 = vmatmul.f32.gmra.mxu0 %v5567
    %v7492 = vpop.f32.mrf.mxu0
    %v7493 = vadd.f32 0.0, %v7492
    %7494 = vmatmul.f32.gmra.mxu0 %v5569
    %v7495 = vpop.f32.mrf.mxu0
    %v7496 = vadd.f32 0.0, %v7495
    %7497 = vmatmul.f32.gmra.mxu0 %v5571
    %v7498 = vpop.f32.mrf.mxu0
    %v7499 = vadd.f32 0.0, %v7498
    %7500 = vmatmul.f32.gmra.mxu0 %v5573
    %v7501 = vpop.f32.mrf.mxu0
    %v7502 = vadd.f32 0.0, %v7501
    %7503 = vmatmul.f32.gmra.mxu0 %v5575
    %v7504 = vpop.f32.mrf.mxu0
    %v7505 = vadd.f32 0.0, %v7504
    %7506 = vmatmul.f32.gmra.mxu0 %v5577
    %v7507 = vpop.f32.mrf.mxu0
    %v7508 = vadd.f32 0.0, %v7507
    %7509 = vmatmul.f32.gmra.mxu0 %v5579
    %v7510 = vpop.f32.mrf.mxu0
    %v7511 = vadd.f32 0.0, %v7510
    %7512 = vmatmul.f32.gmra.mxu0 %v5581
    %v7513 = vpop.f32.mrf.mxu0
    %v7514 = vadd.f32 0.0, %v7513
    %7515 = vmatmul.f32.gmra.mxu0 %v5583
    %v7516 = vpop.f32.mrf.mxu0
    %v7517 = vadd.f32 0.0, %v7516
    %7518 = vmatmul.f32.gmra.mxu0 %v5585
    %v7519 = vpop.f32.mrf.mxu0
    %v7520 = vadd.f32 0.0, %v7519
    %7521 = vmatmul.f32.gmra.mxu0 %v5587
    %v7522 = vpop.f32.mrf.mxu0
    %v7523 = vadd.f32 0.0, %v7522
    %7524 = vmatmul.f32.gmra.mxu0 %v5589
    %v7525 = vpop.f32.mrf.mxu0
    %v7526 = vadd.f32 0.0, %v7525
    %7527 = vmatmul.f32.gmra.mxu0 %v5591
    %v7528 = vpop.f32.mrf.mxu0
    %v7529 = vadd.f32 0.0, %v7528
    %7530 = vmatmul.f32.gmra.mxu0 %v5593
    %v7531 = vpop.f32.mrf.mxu0
    %v7532 = vadd.f32 0.0, %v7531
    %7533 = vmatmul.f32.gmra.mxu0 %v5595
    %v7534 = vpop.f32.mrf.mxu0
    %v7535 = vadd.f32 0.0, %v7534
    %7536 = vmatmul.f32.gmra.mxu0 %v5597
    %v7537 = vpop.f32.mrf.mxu0
    %v7538 = vadd.f32 0.0, %v7537
    %7539 = vmatmul.f32.gmra.mxu0 %v5599
    %v7540 = vpop.f32.mrf.mxu0
    %v7541 = vadd.f32 0.0, %v7540
    %7542 = vmatmul.f32.gmra.mxu0 %v5601
    %v7543 = vpop.f32.mrf.mxu0
    %v7544 = vadd.f32 0.0, %v7543
    %7545 = vmatmul.f32.gmra.mxu0 %v5603
    %v7546 = vpop.f32.mrf.mxu0
    %v7547 = vadd.f32 0.0, %v7546
    %7548 = vmatmul.f32.gmra.mxu0 %v5605
    %v7549 = vpop.f32.mrf.mxu0
    %v7550 = vadd.f32 0.0, %v7549
    %7551 = vmatmul.f32.gmra.mxu0 %v5607
    %v7552 = vpop.f32.mrf.mxu0
    %v7553 = vadd.f32 0.0, %v7552
    %7554 = vmatmul.f32.gmra.mxu0 %v5609
    %v7555 = vpop.f32.mrf.mxu0
    %v7556 = vadd.f32 0.0, %v7555
    %7557 = vmatmul.f32.gmra.mxu0 %v6482
    %v7558 = vpop.f32.mrf.mxu0
    %v7559 = vadd.f32 0.0, %v7558
    %7560 = vmatmul.f32.gmra.mxu0 %v6484
    %v7561 = vpop.f32.mrf.mxu0
    %v7562 = vadd.f32 0.0, %v7561
    %7563 = vmatmul.f32.gmra.mxu0 %v7357
    %v7564 = vpop.f32.mrf.mxu0
    %v7565 = vadd.f32 0.0, %v7564
    %7566 = vmatmul.f32.gmra.mxu0 %v7359
    %v7567 = vpop.f32.mrf.mxu0
    %v7568 = vadd.f32 0.0, %v7567
    %7569 = vdwg.mxu0
    %v7570 = vadd.f32 %v7277, %v7379
    %v7571 = vadd.f32 %v7278, %v7382
    %v7572 = vadd.f32 %v7279, %v7385
    %v7573 = vadd.f32 %v7280, %v7388
    %v7574 = vadd.f32 %v7281, %v7391
    %v7575 = vadd.f32 %v7282, %v7394
    %v7576 = vadd.f32 %v7283, %v7397
    %v7577 = vadd.f32 %v7284, %v7400
    %v7578 = vadd.f32 %v7285, %v7403
    %v7579 = vadd.f32 %v7286, %v7406
    %v7580 = vadd.f32 %v7287, %v7409
    %v7581 = vadd.f32 %v7288, %v7412
    %v7582 = vadd.f32 %v7289, %v7415
    %v7583 = vadd.f32 %v7290, %v7418
    %v7584 = vadd.f32 %v7291, %v7421
    %v7585 = vadd.f32 %v7292, %v7424
    %v7586 = vadd.f32 %v7293, %v7427
    %v7587 = vadd.f32 %v7294, %v7430
    %v7588 = vadd.f32 %v7295, %v7433
    %v7589 = vadd.f32 %v7296, %v7436
    %v7590 = vadd.f32 %v7297, %v7439
    %v7591 = vadd.f32 %v7298, %v7442
    %v7592 = vadd.f32 %v7299, %v7445
    %v7593 = vadd.f32 %v7300, %v7448
    %v7594 = vadd.f32 %v7301, %v7451
    %v7595 = vadd.f32 %v7302, %v7454
    %v7596 = vadd.f32 %v7303, %v7457
    %v7597 = vadd.f32 %v7304, %v7460
    %v7598 = vadd.f32 %v7305, %v7463
    %v7599 = vadd.f32 %v7306, %v7466
    %v7600 = vadd.f32 %v7307, %v7469
    %v7601 = vadd.f32 %v7308, %v7472
    %v7602 = vadd.f32 %v7309, %v7475
    %v7603 = vadd.f32 %v7310, %v7478
    %v7604 = vadd.f32 %v7311, %v7481
    %v7605 = vadd.f32 %v7312, %v7484
    %v7606 = vadd.f32 %v7313, %v7487
    %v7607 = vadd.f32 %v7314, %v7490
    %v7608 = vadd.f32 %v7315, %v7493
    %v7609 = vadd.f32 %v7316, %v7496
    %v7610 = vadd.f32 %v7317, %v7499
    %v7611 = vadd.f32 %v7318, %v7502
    %v7612 = vadd.f32 %v7319, %v7505
    %v7613 = vadd.f32 %v7320, %v7508
    %v7614 = vadd.f32 %v7321, %v7511
    %v7615 = vadd.f32 %v7322, %v7514
    %v7616 = vadd.f32 %v7323, %v7517
    %v7617 = vadd.f32 %v7324, %v7520
    %v7618 = vadd.f32 %v7325, %v7523
    %v7619 = vadd.f32 %v7326, %v7526
    %v7620 = vadd.f32 %v7327, %v7529
    %v7621 = vadd.f32 %v7328, %v7532
    %v7622 = vadd.f32 %v7329, %v7535
    %v7623 = vadd.f32 %v7330, %v7538
    %v7624 = vadd.f32 %v7331, %v7541
    %v7625 = vadd.f32 %v7332, %v7544
    %v7626 = vadd.f32 %v7333, %v7547
    %v7627 = vadd.f32 %v7334, %v7550
    %v7628 = vadd.f32 %v7335, %v7553
    %v7629 = vadd.f32 %v7336, %v7556
    %v7630 = vadd.f32 %v7337, %v7559
    %v7631 = vadd.f32 %v7338, %v7562
    %v7632 = vadd.f32 %v7339, %v7565
    %v7633 = vadd.f32 %v7340, %v7568
    %vm7634 = vcmask 130048
    %v7635 = vsel %vm7634, %v7570, 0.0
    %v7636 = vsel %vm7634, %v7571, 0.0
    %v7637 = vadd.f32 %v7635, %v7636
    %v7638 = vsel %vm7634, %v7572, 0.0
    %v7639 = vadd.f32 %v7637, %v7638
    %v7640 = vsel %vm7634, %v7573, 0.0
    %v7641 = vadd.f32 %v7639, %v7640
    %v7642 = vsel %vm7634, %v7574, 0.0
    %v7643 = vadd.f32 %v7641, %v7642
    %v7644 = vsel %vm7634, %v7575, 0.0
    %v7645 = vadd.f32 %v7643, %v7644
    %v7646 = vsel %vm7634, %v7576, 0.0
    %v7647 = vadd.f32 %v7645, %v7646
    %v7648 = vsel %vm7634, %v7577, 0.0
    %v7649 = vadd.f32 %v7647, %v7648
    %v7650 = vsel %vm7634, %v7578, 0.0
    %v7651 = vadd.f32 %v7649, %v7650
    %v7652 = vsel %vm7634, %v7579, 0.0
    %v7653 = vadd.f32 %v7651, %v7652
    %v7654 = vsel %vm7634, %v7580, 0.0
    %v7655 = vadd.f32 %v7653, %v7654
    %v7656 = vsel %vm7634, %v7581, 0.0
    %v7657 = vadd.f32 %v7655, %v7656
    %v7658 = vsel %vm7634, %v7582, 0.0
    %v7659 = vadd.f32 %v7657, %v7658
    %v7660 = vsel %vm7634, %v7583, 0.0
    %v7661 = vadd.f32 %v7659, %v7660
    %v7662 = vsel %vm7634, %v7584, 0.0
    %v7663 = vadd.f32 %v7661, %v7662
    %v7664 = vsel %vm7634, %v7585, 0.0
    %v7665 = vadd.f32 %v7663, %v7664
    %v7666 = vsel %vm7634, %v7586, 0.0
    %v7667 = vadd.f32 %v7665, %v7666
    %v7668 = vsel %vm7634, %v7587, 0.0
    %v7669 = vadd.f32 %v7667, %v7668
    %v7670 = vsel %vm7634, %v7588, 0.0
    %v7671 = vadd.f32 %v7669, %v7670
    %v7672 = vsel %vm7634, %v7589, 0.0
    %v7673 = vadd.f32 %v7671, %v7672
    %v7674 = vsel %vm7634, %v7590, 0.0
    %v7675 = vadd.f32 %v7673, %v7674
    %v7676 = vsel %vm7634, %v7591, 0.0
    %v7677 = vadd.f32 %v7675, %v7676
    %v7678 = vsel %vm7634, %v7592, 0.0
    %v7679 = vadd.f32 %v7677, %v7678
    %v7680 = vsel %vm7634, %v7593, 0.0
    %v7681 = vadd.f32 %v7679, %v7680
    %v7682 = vsel %vm7634, %v7594, 0.0
    %v7683 = vadd.f32 %v7681, %v7682
    %v7684 = vsel %vm7634, %v7595, 0.0
    %v7685 = vadd.f32 %v7683, %v7684
    %v7686 = vsel %vm7634, %v7596, 0.0
    %v7687 = vadd.f32 %v7685, %v7686
    %v7688 = vsel %vm7634, %v7597, 0.0
    %v7689 = vadd.f32 %v7687, %v7688
    %v7690 = vsel %vm7634, %v7598, 0.0
    %v7691 = vadd.f32 %v7689, %v7690
    %v7692 = vsel %vm7634, %v7599, 0.0
    %v7693 = vadd.f32 %v7691, %v7692
    %v7694 = vsel %vm7634, %v7600, 0.0
    %v7695 = vadd.f32 %v7693, %v7694
    %v7696 = vsel %vm7634, %v7601, 0.0
    %v7697 = vadd.f32 %v7695, %v7696
    %v7698 = vsel %vm7634, %v7602, 0.0
    %v7699 = vadd.f32 %v7697, %v7698
    %v7700 = vsel %vm7634, %v7603, 0.0
    %v7701 = vadd.f32 %v7699, %v7700
    %v7702 = vsel %vm7634, %v7604, 0.0
    %v7703 = vadd.f32 %v7701, %v7702
    %v7704 = vsel %vm7634, %v7605, 0.0
    %v7705 = vadd.f32 %v7703, %v7704
    %v7706 = vsel %vm7634, %v7606, 0.0
    %v7707 = vadd.f32 %v7705, %v7706
    %v7708 = vsel %vm7634, %v7607, 0.0
    %v7709 = vadd.f32 %v7707, %v7708
    %v7710 = vsel %vm7634, %v7608, 0.0
    %v7711 = vadd.f32 %v7709, %v7710
    %v7712 = vsel %vm7634, %v7609, 0.0
    %v7713 = vadd.f32 %v7711, %v7712
    %v7714 = vsel %vm7634, %v7610, 0.0
    %v7715 = vadd.f32 %v7713, %v7714
    %v7716 = vsel %vm7634, %v7611, 0.0
    %v7717 = vadd.f32 %v7715, %v7716
    %v7718 = vsel %vm7634, %v7612, 0.0
    %v7719 = vadd.f32 %v7717, %v7718
    %v7720 = vsel %vm7634, %v7613, 0.0
    %v7721 = vadd.f32 %v7719, %v7720
    %v7722 = vsel %vm7634, %v7614, 0.0
    %v7723 = vadd.f32 %v7721, %v7722
    %v7724 = vsel %vm7634, %v7615, 0.0
    %v7725 = vadd.f32 %v7723, %v7724
    %v7726 = vsel %vm7634, %v7616, 0.0
    %v7727 = vadd.f32 %v7725, %v7726
    %v7728 = vsel %vm7634, %v7617, 0.0
    %v7729 = vadd.f32 %v7727, %v7728
    %v7730 = vsel %vm7634, %v7618, 0.0
    %v7731 = vadd.f32 %v7729, %v7730
    %v7732 = vsel %vm7634, %v7619, 0.0
    %v7733 = vadd.f32 %v7731, %v7732
    %v7734 = vsel %vm7634, %v7620, 0.0
    %v7735 = vadd.f32 %v7733, %v7734
    %v7736 = vsel %vm7634, %v7621, 0.0
    %v7737 = vadd.f32 %v7735, %v7736
    %v7738 = vsel %vm7634, %v7622, 0.0
    %v7739 = vadd.f32 %v7737, %v7738
    %v7740 = vsel %vm7634, %v7623, 0.0
    %v7741 = vadd.f32 %v7739, %v7740
    %v7742 = vsel %vm7634, %v7624, 0.0
    %v7743 = vadd.f32 %v7741, %v7742
    %v7744 = vsel %vm7634, %v7625, 0.0
    %v7745 = vadd.f32 %v7743, %v7744
    %v7746 = vsel %vm7634, %v7626, 0.0
    %v7747 = vadd.f32 %v7745, %v7746
    %v7748 = vsel %vm7634, %v7627, 0.0
    %v7749 = vadd.f32 %v7747, %v7748
    %v7750 = vsel %vm7634, %v7628, 0.0
    %v7751 = vadd.f32 %v7749, %v7750
    %v7752 = vsel %vm7634, %v7629, 0.0
    %v7753 = vadd.f32 %v7751, %v7752
    %v7754 = vsel %vm7634, %v7630, 0.0
    %v7755 = vadd.f32 %v7753, %v7754
    %v7756 = vsel %vm7634, %v7631, 0.0
    %v7757 = vadd.f32 %v7755, %v7756
    %v7758 = vsel %vm7634, %v7632, 0.0
    %v7759 = vadd.f32 %v7757, %v7758
    %v7760 = vsel %vm7634, %v7633, 0.0
    %v7761 = vadd.f32 %v7759, %v7760
    %v7762 = vrot.slane %v7761, 4
    %v7763 = vadd.f32 %v7761, %v7762
    %v7764 = vrot.slane %v7763, 2
    %v7765 = vadd.f32 %v7763, %v7764
    %v7766 = vrot.slane %v7765, 1
    %v7767 = vadd.f32 %v7765, %v7766
    %v7768 = vmul.f32 %v7767, %v3813
    %v7769 = vsub.f32 %v7570, %v7768
    %v7770 = vsub.f32 %v7571, %v7768
    %v7771 = vsub.f32 %v7572, %v7768
    %v7772 = vsub.f32 %v7573, %v7768
    %v7773 = vsub.f32 %v7574, %v7768
    %v7774 = vsub.f32 %v7575, %v7768
    %v7775 = vsub.f32 %v7576, %v7768
    %v7776 = vsub.f32 %v7577, %v7768
    %v7777 = vsub.f32 %v7578, %v7768
    %v7778 = vsub.f32 %v7579, %v7768
    %v7779 = vsub.f32 %v7580, %v7768
    %v7780 = vsub.f32 %v7581, %v7768
    %v7781 = vsub.f32 %v7582, %v7768
    %v7782 = vsub.f32 %v7583, %v7768
    %v7783 = vsub.f32 %v7584, %v7768
    %v7784 = vsub.f32 %v7585, %v7768
    %v7785 = vsub.f32 %v7586, %v7768
    %v7786 = vsub.f32 %v7587, %v7768
    %v7787 = vsub.f32 %v7588, %v7768
    %v7788 = vsub.f32 %v7589, %v7768
    %v7789 = vsub.f32 %v7590, %v7768
    %v7790 = vsub.f32 %v7591, %v7768
    %v7791 = vsub.f32 %v7592, %v7768
    %v7792 = vsub.f32 %v7593, %v7768
    %v7793 = vsub.f32 %v7594, %v7768
    %v7794 = vsub.f32 %v7595, %v7768
    %v7795 = vsub.f32 %v7596, %v7768
    %v7796 = vsub.f32 %v7597, %v7768
    %v7797 = vsub.f32 %v7598, %v7768
    %v7798 = vsub.f32 %v7599, %v7768
    %v7799 = vsub.f32 %v7600, %v7768
    %v7800 = vsub.f32 %v7601, %v7768
    %v7801 = vsub.f32 %v7602, %v7768
    %v7802 = vsub.f32 %v7603, %v7768
    %v7803 = vsub.f32 %v7604, %v7768
    %v7804 = vsub.f32 %v7605, %v7768
    %v7805 = vsub.f32 %v7606, %v7768
    %v7806 = vsub.f32 %v7607, %v7768
    %v7807 = vsub.f32 %v7608, %v7768
    %v7808 = vsub.f32 %v7609, %v7768
    %v7809 = vsub.f32 %v7610, %v7768
    %v7810 = vsub.f32 %v7611, %v7768
    %v7811 = vsub.f32 %v7612, %v7768
    %v7812 = vsub.f32 %v7613, %v7768
    %v7813 = vsub.f32 %v7614, %v7768
    %v7814 = vsub.f32 %v7615, %v7768
    %v7815 = vsub.f32 %v7616, %v7768
    %v7816 = vsub.f32 %v7617, %v7768
    %v7817 = vsub.f32 %v7618, %v7768
    %v7818 = vsub.f32 %v7619, %v7768
    %v7819 = vsub.f32 %v7620, %v7768
    %v7820 = vsub.f32 %v7621, %v7768
    %v7821 = vsub.f32 %v7622, %v7768
    %v7822 = vsub.f32 %v7623, %v7768
    %v7823 = vsub.f32 %v7624, %v7768
    %v7824 = vsub.f32 %v7625, %v7768
    %v7825 = vsub.f32 %v7626, %v7768
    %v7826 = vsub.f32 %v7627, %v7768
    %v7827 = vsub.f32 %v7628, %v7768
    %v7828 = vsub.f32 %v7629, %v7768
    %v7829 = vsub.f32 %v7630, %v7768
    %v7830 = vsub.f32 %v7631, %v7768
    %v7831 = vsub.f32 %v7632, %v7768
    %v7832 = vsub.f32 %v7633, %v7768
    %v7833 = vmul.f32 %v7769, %v7769
    %v7834 = vmul.f32 %v7770, %v7770
    %v7835 = vmul.f32 %v7771, %v7771
    %v7836 = vmul.f32 %v7772, %v7772
    %v7837 = vmul.f32 %v7773, %v7773
    %v7838 = vmul.f32 %v7774, %v7774
    %v7839 = vmul.f32 %v7775, %v7775
    %v7840 = vmul.f32 %v7776, %v7776
    %v7841 = vmul.f32 %v7777, %v7777
    %v7842 = vmul.f32 %v7778, %v7778
    %v7843 = vmul.f32 %v7779, %v7779
    %v7844 = vmul.f32 %v7780, %v7780
    %v7845 = vmul.f32 %v7781, %v7781
    %v7846 = vmul.f32 %v7782, %v7782
    %v7847 = vmul.f32 %v7783, %v7783
    %v7848 = vmul.f32 %v7784, %v7784
    %v7849 = vmul.f32 %v7785, %v7785
    %v7850 = vmul.f32 %v7786, %v7786
    %v7851 = vmul.f32 %v7787, %v7787
    %v7852 = vmul.f32 %v7788, %v7788
    %v7853 = vmul.f32 %v7789, %v7789
    %v7854 = vmul.f32 %v7790, %v7790
    %v7855 = vmul.f32 %v7791, %v7791
    %v7856 = vmul.f32 %v7792, %v7792
    %v7857 = vmul.f32 %v7793, %v7793
    %v7858 = vmul.f32 %v7794, %v7794
    %v7859 = vmul.f32 %v7795, %v7795
    %v7860 = vmul.f32 %v7796, %v7796
    %v7861 = vmul.f32 %v7797, %v7797
    %v7862 = vmul.f32 %v7798, %v7798
    %v7863 = vmul.f32 %v7799, %v7799
    %v7864 = vmul.f32 %v7800, %v7800
    %v7865 = vmul.f32 %v7801, %v7801
    %v7866 = vmul.f32 %v7802, %v7802
    %v7867 = vmul.f32 %v7803, %v7803
    %v7868 = vmul.f32 %v7804, %v7804
    %v7869 = vmul.f32 %v7805, %v7805
    %v7870 = vmul.f32 %v7806, %v7806
    %v7871 = vmul.f32 %v7807, %v7807
    %v7872 = vmul.f32 %v7808, %v7808
    %v7873 = vmul.f32 %v7809, %v7809
    %v7874 = vmul.f32 %v7810, %v7810
    %v7875 = vmul.f32 %v7811, %v7811
    %v7876 = vmul.f32 %v7812, %v7812
    %v7877 = vmul.f32 %v7813, %v7813
    %v7878 = vmul.f32 %v7814, %v7814
    %v7879 = vmul.f32 %v7815, %v7815
    %v7880 = vmul.f32 %v7816, %v7816
    %v7881 = vmul.f32 %v7817, %v7817
    %v7882 = vmul.f32 %v7818, %v7818
    %v7883 = vmul.f32 %v7819, %v7819
    %v7884 = vmul.f32 %v7820, %v7820
    %v7885 = vmul.f32 %v7821, %v7821
    %v7886 = vmul.f32 %v7822, %v7822
    %v7887 = vmul.f32 %v7823, %v7823
    %v7888 = vmul.f32 %v7824, %v7824
    %v7889 = vmul.f32 %v7825, %v7825
    %v7890 = vmul.f32 %v7826, %v7826
    %v7891 = vmul.f32 %v7827, %v7827
    %v7892 = vmul.f32 %v7828, %v7828
    %v7893 = vmul.f32 %v7829, %v7829
    %v7894 = vmul.f32 %v7830, %v7830
    %v7895 = vmul.f32 %v7831, %v7831
    %v7896 = vmul.f32 %v7832, %v7832
    %v7897 = vsel %vm7634, %v7833, 0.0
    %v7898 = vsel %vm7634, %v7834, 0.0
    %v7899 = vadd.f32 %v7897, %v7898
    %v7900 = vsel %vm7634, %v7835, 0.0
    %v7901 = vadd.f32 %v7899, %v7900
    %v7902 = vsel %vm7634, %v7836, 0.0
    %v7903 = vadd.f32 %v7901, %v7902
    %v7904 = vsel %vm7634, %v7837, 0.0
    %v7905 = vadd.f32 %v7903, %v7904
    %v7906 = vsel %vm7634, %v7838, 0.0
    %v7907 = vadd.f32 %v7905, %v7906
    %v7908 = vsel %vm7634, %v7839, 0.0
    %v7909 = vadd.f32 %v7907, %v7908
    %v7910 = vsel %vm7634, %v7840, 0.0
    %v7911 = vadd.f32 %v7909, %v7910
    %v7912 = vsel %vm7634, %v7841, 0.0
    %v7913 = vadd.f32 %v7911, %v7912
    %v7914 = vsel %vm7634, %v7842, 0.0
    %v7915 = vadd.f32 %v7913, %v7914
    %v7916 = vsel %vm7634, %v7843, 0.0
    %v7917 = vadd.f32 %v7915, %v7916
    %v7918 = vsel %vm7634, %v7844, 0.0
    %v7919 = vadd.f32 %v7917, %v7918
    %v7920 = vsel %vm7634, %v7845, 0.0
    %v7921 = vadd.f32 %v7919, %v7920
    %v7922 = vsel %vm7634, %v7846, 0.0
    %v7923 = vadd.f32 %v7921, %v7922
    %v7924 = vsel %vm7634, %v7847, 0.0
    %v7925 = vadd.f32 %v7923, %v7924
    %v7926 = vsel %vm7634, %v7848, 0.0
    %v7927 = vadd.f32 %v7925, %v7926
    %v7928 = vsel %vm7634, %v7849, 0.0
    %v7929 = vadd.f32 %v7927, %v7928
    %v7930 = vsel %vm7634, %v7850, 0.0
    %v7931 = vadd.f32 %v7929, %v7930
    %v7932 = vsel %vm7634, %v7851, 0.0
    %v7933 = vadd.f32 %v7931, %v7932
    %v7934 = vsel %vm7634, %v7852, 0.0
    %v7935 = vadd.f32 %v7933, %v7934
    %v7936 = vsel %vm7634, %v7853, 0.0
    %v7937 = vadd.f32 %v7935, %v7936
    %v7938 = vsel %vm7634, %v7854, 0.0
    %v7939 = vadd.f32 %v7937, %v7938
    %v7940 = vsel %vm7634, %v7855, 0.0
    %v7941 = vadd.f32 %v7939, %v7940
    %v7942 = vsel %vm7634, %v7856, 0.0
    %v7943 = vadd.f32 %v7941, %v7942
    %v7944 = vsel %vm7634, %v7857, 0.0
    %v7945 = vadd.f32 %v7943, %v7944
    %v7946 = vsel %vm7634, %v7858, 0.0
    %v7947 = vadd.f32 %v7945, %v7946
    %v7948 = vsel %vm7634, %v7859, 0.0
    %v7949 = vadd.f32 %v7947, %v7948
    %v7950 = vsel %vm7634, %v7860, 0.0
    %v7951 = vadd.f32 %v7949, %v7950
    %v7952 = vsel %vm7634, %v7861, 0.0
    %v7953 = vadd.f32 %v7951, %v7952
    %v7954 = vsel %vm7634, %v7862, 0.0
    %v7955 = vadd.f32 %v7953, %v7954
    %v7956 = vsel %vm7634, %v7863, 0.0
    %v7957 = vadd.f32 %v7955, %v7956
    %v7958 = vsel %vm7634, %v7864, 0.0
    %v7959 = vadd.f32 %v7957, %v7958
    %v7960 = vsel %vm7634, %v7865, 0.0
    %v7961 = vadd.f32 %v7959, %v7960
    %v7962 = vsel %vm7634, %v7866, 0.0
    %v7963 = vadd.f32 %v7961, %v7962
    %v7964 = vsel %vm7634, %v7867, 0.0
    %v7965 = vadd.f32 %v7963, %v7964
    %v7966 = vsel %vm7634, %v7868, 0.0
    %v7967 = vadd.f32 %v7965, %v7966
    %v7968 = vsel %vm7634, %v7869, 0.0
    %v7969 = vadd.f32 %v7967, %v7968
    %v7970 = vsel %vm7634, %v7870, 0.0
    %v7971 = vadd.f32 %v7969, %v7970
    %v7972 = vsel %vm7634, %v7871, 0.0
    %v7973 = vadd.f32 %v7971, %v7972
    %v7974 = vsel %vm7634, %v7872, 0.0
    %v7975 = vadd.f32 %v7973, %v7974
    %v7976 = vsel %vm7634, %v7873, 0.0
    %v7977 = vadd.f32 %v7975, %v7976
    %v7978 = vsel %vm7634, %v7874, 0.0
    %v7979 = vadd.f32 %v7977, %v7978
    %v7980 = vsel %vm7634, %v7875, 0.0
    %v7981 = vadd.f32 %v7979, %v7980
    %v7982 = vsel %vm7634, %v7876, 0.0
    %v7983 = vadd.f32 %v7981, %v7982
    %v7984 = vsel %vm7634, %v7877, 0.0
    %v7985 = vadd.f32 %v7983, %v7984
    %v7986 = vsel %vm7634, %v7878, 0.0
    %v7987 = vadd.f32 %v7985, %v7986
    %v7988 = vsel %vm7634, %v7879, 0.0
    %v7989 = vadd.f32 %v7987, %v7988
    %v7990 = vsel %vm7634, %v7880, 0.0
    %v7991 = vadd.f32 %v7989, %v7990
    %v7992 = vsel %vm7634, %v7881, 0.0
    %v7993 = vadd.f32 %v7991, %v7992
    %v7994 = vsel %vm7634, %v7882, 0.0
    %v7995 = vadd.f32 %v7993, %v7994
    %v7996 = vsel %vm7634, %v7883, 0.0
    %v7997 = vadd.f32 %v7995, %v7996
    %v7998 = vsel %vm7634, %v7884, 0.0
    %v7999 = vadd.f32 %v7997, %v7998
    %v8000 = vsel %vm7634, %v7885, 0.0
    %v8001 = vadd.f32 %v7999, %v8000
    %v8002 = vsel %vm7634, %v7886, 0.0
    %v8003 = vadd.f32 %v8001, %v8002
    %v8004 = vsel %vm7634, %v7887, 0.0
    %v8005 = vadd.f32 %v8003, %v8004
    %v8006 = vsel %vm7634, %v7888, 0.0
    %v8007 = vadd.f32 %v8005, %v8006
    %v8008 = vsel %vm7634, %v7889, 0.0
    %v8009 = vadd.f32 %v8007, %v8008
    %v8010 = vsel %vm7634, %v7890, 0.0
    %v8011 = vadd.f32 %v8009, %v8010
    %v8012 = vsel %vm7634, %v7891, 0.0
    %v8013 = vadd.f32 %v8011, %v8012
    %v8014 = vsel %vm7634, %v7892, 0.0
    %v8015 = vadd.f32 %v8013, %v8014
    %v8016 = vsel %vm7634, %v7893, 0.0
    %v8017 = vadd.f32 %v8015, %v8016
    %v8018 = vsel %vm7634, %v7894, 0.0
    %v8019 = vadd.f32 %v8017, %v8018
    %v8020 = vsel %vm7634, %v7895, 0.0
    %v8021 = vadd.f32 %v8019, %v8020
    %v8022 = vsel %vm7634, %v7896, 0.0
    %v8023 = vadd.f32 %v8021, %v8022
    %v8024 = vrot.slane %v8023, 4
    %v8025 = vadd.f32 %v8023, %v8024
    %v8026 = vrot.slane %v8025, 2
    %v8027 = vadd.f32 %v8025, %v8026
    %v8028 = vrot.slane %v8027, 1
    %v8029 = vadd.f32 %v8027, %v8028
    %v8030 = vmul.f32 %v8029, %v3813
    %v8031 = vadd.f32 %v8030, 1e-05
    %v8032 = vrsqrt.pop %v8031
    %v8033 = vmul.f32 %v8032, %v8031
    %v8034 = vmul.f32 %v8033, %v8032
    %v8035 = vmul.f32 0.5, %v8034
    %v8036 = vsub.f32 1.5, %v8035
    %v8037 = vmul.f32 %v8032, %v8036
    %vm8038 = vweird.f32 %v8031
    %vm8039 = vweird.f32 %v8032
    %vm8040 = vmor %vm8038, %vm8039
    %v8041 = vsel %vm8040, %v8032, %v8037
    %v8042 = vmul.f32 %v7769, %v8041
    %v8043 = vmul.f32 %v7770, %v8041
    %v8044 = vmul.f32 %v7771, %v8041
    %v8045 = vmul.f32 %v7772, %v8041
    %v8046 = vmul.f32 %v7773, %v8041
    %v8047 = vmul.f32 %v7774, %v8041
    %v8048 = vmul.f32 %v7775, %v8041
    %v8049 = vmul.f32 %v7776, %v8041
    %v8050 = vmul.f32 %v7777, %v8041
    %v8051 = vmul.f32 %v7778, %v8041
    %v8052 = vmul.f32 %v7779, %v8041
    %v8053 = vmul.f32 %v7780, %v8041
    %v8054 = vmul.f32 %v7781, %v8041
    %v8055 = vmul.f32 %v7782, %v8041
    %v8056 = vmul.f32 %v7783, %v8041
    %v8057 = vmul.f32 %v7784, %v8041
    %v8058 = vmul.f32 %v7785, %v8041
    %v8059 = vmul.f32 %v7786, %v8041
    %v8060 = vmul.f32 %v7787, %v8041
    %v8061 = vmul.f32 %v7788, %v8041
    %v8062 = vmul.f32 %v7789, %v8041
    %v8063 = vmul.f32 %v7790, %v8041
    %v8064 = vmul.f32 %v7791, %v8041
    %v8065 = vmul.f32 %v7792, %v8041
    %v8066 = vmul.f32 %v7793, %v8041
    %v8067 = vmul.f32 %v7794, %v8041
    %v8068 = vmul.f32 %v7795, %v8041
    %v8069 = vmul.f32 %v7796, %v8041
    %v8070 = vmul.f32 %v7797, %v8041
    %v8071 = vmul.f32 %v7798, %v8041
    %v8072 = vmul.f32 %v7799, %v8041
    %v8073 = vmul.f32 %v7800, %v8041
    %v8074 = vmul.f32 %v7801, %v8041
    %v8075 = vmul.f32 %v7802, %v8041
    %v8076 = vmul.f32 %v7803, %v8041
    %v8077 = vmul.f32 %v7804, %v8041
    %v8078 = vmul.f32 %v7805, %v8041
    %v8079 = vmul.f32 %v7806, %v8041
    %v8080 = vmul.f32 %v7807, %v8041
    %v8081 = vmul.f32 %v7808, %v8041
    %v8082 = vmul.f32 %v7809, %v8041
    %v8083 = vmul.f32 %v7810, %v8041
    %v8084 = vmul.f32 %v7811, %v8041
    %v8085 = vmul.f32 %v7812, %v8041
    %v8086 = vmul.f32 %v7813, %v8041
    %v8087 = vmul.f32 %v7814, %v8041
    %v8088 = vmul.f32 %v7815, %v8041
    %v8089 = vmul.f32 %v7816, %v8041
    %v8090 = vmul.f32 %v7817, %v8041
    %v8091 = vmul.f32 %v7818, %v8041
    %v8092 = vmul.f32 %v7819, %v8041
    %v8093 = vmul.f32 %v7820, %v8041
    %v8094 = vmul.f32 %v7821, %v8041
    %v8095 = vmul.f32 %v7822, %v8041
    %v8096 = vmul.f32 %v7823, %v8041
    %v8097 = vmul.f32 %v7824, %v8041
    %v8098 = vmul.f32 %v7825, %v8041
    %v8099 = vmul.f32 %v7826, %v8041
    %v8100 = vmul.f32 %v7827, %v8041
    %v8101 = vmul.f32 %v7828, %v8041
    %v8102 = vmul.f32 %v7829, %v8041
    %v8103 = vmul.f32 %v7830, %v8041
    %v8104 = vmul.f32 %v7831, %v8041
    %v8105 = vmul.f32 %v7832, %v8041
    %8106 = vxpose.xlu0.b32.start [1/16] %v8042, 128
    %8107 = vxpose.xlu0.b32.cont [2/16] %v8043, 128
    %8108 = vxpose.xlu0.b32.cont [3/16] %v8044, 128
    %8109 = vxpose.xlu0.b32.cont [4/16] %v8045, 128
    %8110 = vxpose.xlu0.b32.cont [5/16] %v8046, 128
    %8111 = vxpose.xlu0.b32.cont [6/16] %v8047, 128
    %8112 = vxpose.xlu0.b32.cont [7/16] %v8048, 128
    %8113 = vxpose.xlu0.b32.cont [8/16] %v8049, 128
    %8114 = vxpose.xlu0.b32.cont [9/16] %v8050, 128
    %8115 = vxpose.xlu0.b32.cont [10/16] %v8051, 128
    %8116 = vxpose.xlu0.b32.cont [11/16] %v8052, 128
    %8117 = vxpose.xlu0.b32.cont [12/16] %v8053, 128
    %8118 = vxpose.xlu0.b32.cont [13/16] %v8054, 128
    %8119 = vxpose.xlu0.b32.cont [14/16] %v8055, 128
    %8120 = vxpose.xlu0.b32.cont [15/16] %v8056, 128
    %8121 = vxpose.xlu0.b32.end [16/16] %v8057, 128
    %v8122 = vpop.trf.xlu0
    %v8123 = vpop.trf.xlu0
    %v8124 = vpop.trf.xlu0
    %v8125 = vpop.trf.xlu0
    %v8126 = vpop.trf.xlu0
    %v8127 = vpop.trf.xlu0
    %v8128 = vpop.trf.xlu0
    %v8129 = vpop.trf.xlu0
    %v8130 = vpop.trf.xlu0
    %v8131 = vpop.trf.xlu0
    %v8132 = vpop.trf.xlu0
    %v8133 = vpop.trf.xlu0
    %v8134 = vpop.trf.xlu0
    %v8135 = vpop.trf.xlu0
    %v8136 = vpop.trf.xlu0
    %v8137 = vpop.trf.xlu0
    %8138 = vxpose.xlu0.b32.start [1/16] %v8058, 128
    %8139 = vxpose.xlu0.b32.cont [2/16] %v8059, 128
    %8140 = vxpose.xlu0.b32.cont [3/16] %v8060, 128
    %8141 = vxpose.xlu0.b32.cont [4/16] %v8061, 128
    %8142 = vxpose.xlu0.b32.cont [5/16] %v8062, 128
    %8143 = vxpose.xlu0.b32.cont [6/16] %v8063, 128
    %8144 = vxpose.xlu0.b32.cont [7/16] %v8064, 128
    %8145 = vxpose.xlu0.b32.cont [8/16] %v8065, 128
    %8146 = vxpose.xlu0.b32.cont [9/16] %v8066, 128
    %8147 = vxpose.xlu0.b32.cont [10/16] %v8067, 128
    %8148 = vxpose.xlu0.b32.cont [11/16] %v8068, 128
    %8149 = vxpose.xlu0.b32.cont [12/16] %v8069, 128
    %8150 = vxpose.xlu0.b32.cont [13/16] %v8070, 128
    %8151 = vxpose.xlu0.b32.cont [14/16] %v8071, 128
    %8152 = vxpose.xlu0.b32.cont [15/16] %v8072, 128
    %8153 = vxpose.xlu0.b32.end [16/16] %v8073, 128
    %v8154 = vpop.trf.xlu0
    %v8155 = vpop.trf.xlu0
    %v8156 = vpop.trf.xlu0
    %v8157 = vpop.trf.xlu0
    %v8158 = vpop.trf.xlu0
    %v8159 = vpop.trf.xlu0
    %v8160 = vpop.trf.xlu0
    %v8161 = vpop.trf.xlu0
    %v8162 = vpop.trf.xlu0
    %v8163 = vpop.trf.xlu0
    %v8164 = vpop.trf.xlu0
    %v8165 = vpop.trf.xlu0
    %v8166 = vpop.trf.xlu0
    %v8167 = vpop.trf.xlu0
    %v8168 = vpop.trf.xlu0
    %v8169 = vpop.trf.xlu0
    %8170 = vxpose.xlu0.b32.start [1/16] %v8074, 128
    %8171 = vxpose.xlu0.b32.cont [2/16] %v8075, 128
    %8172 = vxpose.xlu0.b32.cont [3/16] %v8076, 128
    %8173 = vxpose.xlu0.b32.cont [4/16] %v8077, 128
    %8174 = vxpose.xlu0.b32.cont [5/16] %v8078, 128
    %8175 = vxpose.xlu0.b32.cont [6/16] %v8079, 128
    %8176 = vxpose.xlu0.b32.cont [7/16] %v8080, 128
    %8177 = vxpose.xlu0.b32.cont [8/16] %v8081, 128
    %8178 = vxpose.xlu0.b32.cont [9/16] %v8082, 128
    %8179 = vxpose.xlu0.b32.cont [10/16] %v8083, 128
    %8180 = vxpose.xlu0.b32.cont [11/16] %v8084, 128
    %8181 = vxpose.xlu0.b32.cont [12/16] %v8085, 128
    %8182 = vxpose.xlu0.b32.cont [13/16] %v8086, 128
    %8183 = vxpose.xlu0.b32.cont [14/16] %v8087, 128
    %8184 = vxpose.xlu0.b32.cont [15/16] %v8088, 128
    %8185 = vxpose.xlu0.b32.end [16/16] %v8089, 128
    %v8186 = vpop.trf.xlu0
    %v8187 = vpop.trf.xlu0
    %v8188 = vpop.trf.xlu0
    %v8189 = vpop.trf.xlu0
    %v8190 = vpop.trf.xlu0
    %v8191 = vpop.trf.xlu0
    %v8192 = vpop.trf.xlu0
    %v8193 = vpop.trf.xlu0
    %v8194 = vpop.trf.xlu0
    %v8195 = vpop.trf.xlu0
    %v8196 = vpop.trf.xlu0
    %v8197 = vpop.trf.xlu0
    %v8198 = vpop.trf.xlu0
    %v8199 = vpop.trf.xlu0
    %v8200 = vpop.trf.xlu0
    %v8201 = vpop.trf.xlu0
    %8202 = vxpose.xlu0.b32.start [1/16] %v8090, 128
    %8203 = vxpose.xlu0.b32.cont [2/16] %v8091, 128
    %8204 = vxpose.xlu0.b32.cont [3/16] %v8092, 128
    %8205 = vxpose.xlu0.b32.cont [4/16] %v8093, 128
    %8206 = vxpose.xlu0.b32.cont [5/16] %v8094, 128
    %8207 = vxpose.xlu0.b32.cont [6/16] %v8095, 128
    %8208 = vxpose.xlu0.b32.cont [7/16] %v8096, 128
    %8209 = vxpose.xlu0.b32.cont [8/16] %v8097, 128
    %8210 = vxpose.xlu0.b32.cont [9/16] %v8098, 128
    %8211 = vxpose.xlu0.b32.cont [10/16] %v8099, 128
    %8212 = vxpose.xlu0.b32.cont [11/16] %v8100, 128
    %8213 = vxpose.xlu0.b32.cont [12/16] %v8101, 128
    %8214 = vxpose.xlu0.b32.cont [13/16] %v8102, 128
    %8215 = vxpose.xlu0.b32.cont [14/16] %v8103, 128
    %8216 = vxpose.xlu0.b32.cont [15/16] %v8104, 128
    %8217 = vxpose.xlu0.b32.end [16/16] %v8105, 128
    %v8218 = vpop.trf.xlu0
    %v8219 = vpop.trf.xlu0
    %v8220 = vpop.trf.xlu0
    %v8221 = vpop.trf.xlu0
    %v8222 = vpop.trf.xlu0
    %v8223 = vpop.trf.xlu0
    %v8224 = vpop.trf.xlu0
    %v8225 = vpop.trf.xlu0
    %v8226 = vpop.trf.xlu0
    %v8227 = vpop.trf.xlu0
    %v8228 = vpop.trf.xlu0
    %v8229 = vpop.trf.xlu0
    %v8230 = vpop.trf.xlu0
    %v8231 = vpop.trf.xlu0
    %v8232 = vpop.trf.xlu0
    %v8233 = vpop.trf.xlu0
    %8234 = vst [vmem:[#allocation3] sm:$0xff] %v8122
    %8235 = vst [vmem:[#allocation3 + $0x8] sm:$0xff] %v8154
    %8236 = vst [vmem:[#allocation3 + $0x10] sm:$0xff] %v8123
    %8237 = vst [vmem:[#allocation3 + $0x18] sm:$0xff] %v8155
    %8238 = vst [vmem:[#allocation3 + $0x20] sm:$0xff] %v8186
    %8239 = vst [vmem:[#allocation3 + $0x28] sm:$0xff] %v8218
    %8240 = vst [vmem:[#allocation3 + $0x30] sm:$0xff] %v8187
    %8241 = vst [vmem:[#allocation3 + $0x38] sm:$0xff] %v8219
    // Predicated region
    $region14: #{tpu_custom_call.1} parent=1 // pred_check
      _
    $region15: #{tpu_custom_call.1} parent=1 // pred_check_branch
      %8243 = sbr.rel (0) target = $region17
    $region16: #{tpu_custom_call.1} parent=1 // pred_region
      %8245 = vsyncadd [#allocation4], 0
      %s8246 = sshll.u32 [#allocation3], 4
      %s8247 = int_to_ptr.vmem [resolvable:$true] %s8246
      %s8248 = sshll.u32 %s3, 4
      %s8249 = int_to_ptr.hbm [resolvable:$true] %s8248
      %8254 = dma.vmem_to_hbm [thread:$0]  %s8247, 1024, %s8249, [#allocation4], 256, 256, 16
    $region17: #{tpu_custom_call.1} parent=1 // pred_fallthru
      _
    // Predicated region
    $region18: #{tpu_custom_call.1} parent=1 // pred_check
      _
    $region19: #{tpu_custom_call.1} parent=1 // pred_check_branch
      %8256 = sbr.rel (0) target = $region21
    $region20: #{tpu_custom_call.1} parent=1 // pred_region
      %8258 = dma.done [#allocation4], 1024
    $region21: #{tpu_custom_call.1} parent=1 // pred_fallthru
      _
    %8259 = vsyncpa [#allocation4], 1

</llo_original>
